<compile_context>
chip_gen: v7x
topology: tpu7x:2x2x1
jax: 0.10.0
libtpu: 0.0.40
codegen_flags: <defaults>
</compile_context>

<pallas_src>
import functools

import jax
import jax.numpy as jnp
from jax import lax
from jax.experimental import pallas as pl
from jax.experimental.pallas import tpu as pltpu

_LN_EPS = 1e-5
_SQRT2 = 1.4142135623730951
_GELU_C = 0.7978845608028654          # sqrt(2 / pi)
_TARGET_MXU_COLS = 512                # aim for >= 512-wide MXU RHS per matmul


# ----------------------------- math helpers ---------------------------------

def _gelu_tanh(x):
    """tanh-approx GELU: jnp.tanh lowers to the EUP (separate bundle slot),
    unlike lax.erf's long VALU polynomial.  ~1e-3-level numerics change vs the
    exact (erf) PyTorch default — the exact reference is kept for validation."""
    c = jnp.asarray(_GELU_C, x.dtype)
    k = jnp.asarray(0.044715, x.dtype)
    half = jnp.asarray(0.5, x.dtype)
    one = jnp.asarray(1.0, x.dtype)
    return half * x * (one + jnp.tanh(c * (x + k * x * x * x)))


def _gelu_erf(x):
    # PyTorch nn.GELU() default (exact erf) — reference path only.
    return 0.5 * x * (1.0 + lax.erf(x / _SQRT2))


def _ln_onepass(x, axis, gamma, beta, eps=_LN_EPS):
    """One-pass LayerNorm: sum and sum-of-squares in a single traversal,
    var = E[x^2] - E[x]^2, so no (x - mu)^2 full pass is materialized."""
    n = x.shape[axis]
    s = jnp.sum(x, axis=axis, keepdims=True)
    s2 = jnp.sum(x * x, axis=axis, keepdims=True)
    mu = s * (1.0 / n)
    var = s2 * (1.0 / n) - mu * mu
    inv = lax.rsqrt(var + eps)
    return (x - mu) * inv * gamma + beta


# ------------------------------- kernel --------------------------------------

def mixer_block_kernel(x_ref,
                       w11_ref, b11_ref, w12_ref, b12_ref, g1_ref, be1_ref,
                       w21_ref, b21_ref, w22_ref, b22_ref, g2_ref, be2_ref,
                       o_ref, *, btile, seg_n, ew_dtype):
    x = x_ref[...]                                    # (D, btile*N), f32
    x_bf = x.astype(jnp.bfloat16)                     # cast once per stage

    # ---- branch 1: MLP over the feature axis D; f32 element-wise (small) ----
    h = jnp.dot(w11_ref[...], x_bf,
                preferred_element_type=jnp.float32) + b11_ref[...]
    h = _gelu_tanh(h)
    h = jnp.dot(w12_ref[...], h.astype(jnp.bfloat16),
                preferred_element_type=jnp.float32) + b12_ref[...]
    # LayerNorm1 over D (axis 0, sublane reduce), one-pass stats.
    h = _ln_onepass(h, 0, g1_ref[...], be1_ref[...])
    u = x + h                                         # U = T_in + out   (f32)

    # ---- branch 2: expand to 768 and back.  Bias add + GELU on the hot
    #      (768, cols) tile run in bf16 on v6e/v7x (bf16 VPU/EUP), f32 on v5e.
    h2 = jnp.dot(w21_ref[...], u.astype(jnp.bfloat16),
                 preferred_element_type=jnp.float32)          # (768, cols)
    h2 = _gelu_tanh(h2.astype(ew_dtype) + b21_ref[...].astype(ew_dtype))
    h3 = jnp.dot(w22_ref[...], h2.astype(jnp.bfloat16),
                 preferred_element_type=jnp.float32) + b22_ref[...]   # (D, cols)

    # ---- LayerNorm2 over the token axis, per batch segment of exactly seg_n
    #      columns (static lane-aligned slices, so batches never mix) ----
    g2 = g2_ref[...]
    be2 = be2_ref[...]
    for s in range(btile):
        sl = slice(s * seg_n, (s + 1) * seg_n)
        z = _ln_onepass(h3[:, sl], -1, g2, be2)
        o_ref[:, sl] = (x[:, sl] + z).astype(o_ref.dtype)     # out = T_in + LN2


# ------------------------------ wrapper ---------------------------------------

def _device_kind():
    try:
        return jax.devices()[0].device_kind.lower()
    except Exception:
        return ""


def _elementwise_dtype():
    kind = _device_kind()
    # bf16 VPU/EUP exists on v6e / v7x; v5e and older keep f32 element-wise.
    if ("v6" in kind) or ("v7" in kind) or ("7x" in kind):
        return jnp.bfloat16
    return jnp.float32


def _vmem_capacity_bytes():
    try:
        return int(pltpu.get_tpu_info().vmem_capacity_bytes)
    except Exception:
        return 64 * 1024 * 1024       # conservative (v7x per-TC VMEM)


def _choose_btile(B, N, D, H2, vmem_budget):
    """Columns per grid step = btile * N.  Target a wide MXU RHS while keeping
    the per-step live set comfortably under the VMEM budget."""
    bt = max(1, min(B, max(1, _TARGET_MXU_COLS // max(N, 1))))
    while B % bt:
        bt -= 1

    def live_bytes(b):
        cols = b * N
        acts = cols * (2 * 2 * D * 4          # x / out tiles, double-buffered f32
                       + H2 * 4 + H2 * 2      # (H2, cols) f32 + bf16 copy
                       + 5 * D * 4)           # h / u / z temporaries
        weights = 2 * (D * D * 2 + D * H2 * 2) + 4 * (D + H2) * 4
        return acts + weights

    while bt > 1 and live_bytes(bt) > vmem_budget // 2:
        nb = bt - 1
        while B % nb:
            nb -= 1
        bt = nb
    return bt


def mixer_block(T_in, kp):
    """kp = kernel-layout params from prepare_params().  T_in: (B, D, N) f32."""
    B, D, N = T_in.shape
    H2 = kp["w21"].shape[0]

    ew_dtype = _elementwise_dtype()
    vmem_cap = _vmem_capacity_bytes()
    vmem_limit = min(int(vmem_cap * 3 // 4), 100 * 1024 * 1024)

    btile = _choose_btile(B, N, D, H2, vmem_limit)
    cols = btile * N
    n_tiles = (B * N) // cols

    # Lane-dense (feature, token) layout: fold batch into the token/lane axis
    # in the wrapper (layout plumbing only).  Every matmul then sees a wide RHS
    # and every store is an unmasked, lane-dense vst.
    x2d = jnp.transpose(T_in, (1, 0, 2)).reshape(D, B * N)

    act_spec = pl.BlockSpec((D, cols), lambda j: (0, j))

    def const_spec(arr):
        nd = arr.ndim
        idx = lambda j, _nd=nd: (0,) * _nd     # constant block -> fetched once
        try:
            # Weights never change: single-buffer them to halve their VMEM use.
            return pl.BlockSpec(arr.shape, idx, pipeline_mode=pl.Buffered(1))
        except TypeError:                       # older signature fallback
            return pl.BlockSpec(arr.shape, idx)

    weight_args = (
        kp["w11"], kp["b11"], kp["w12"], kp["b12"], kp["g1"], kp["be1"],
        kp["w21"], kp["b21"], kp["w22"], kp["b22"], kp["g2"], kp["be2"],
    )

    flops = 4 * B * N * D * (D + H2)                 # 4 matmuls, 2*M*K*N each
    transcendentals = B * N * (D + H2)               # one tanh per GELU element
    bytes_accessed = (2 * T_in.size * T_in.dtype.itemsize
                      + sum(a.size * a.dtype.itemsize for a in weight_args))

    kernel = functools.partial(mixer_block_kernel,
                               btile=btile, seg_n=N, ew_dtype=ew_dtype)

    out2d = pl.pallas_call(
        kernel,
        out_shape=jax.ShapeDtypeStruct((D, B * N), T_in.dtype),
        grid_spec=pltpu.PrefetchScalarGridSpec(
            num_scalar_prefetch=0,
            grid=(n_tiles,),
            in_specs=[act_spec] + [const_spec(a) for a in weight_args],
            out_specs=act_spec,
        ),
        compiler_params=pltpu.CompilerParams(
            dimension_semantics=("parallel",),        # token tiles independent
            vmem_limit_bytes=vmem_limit,              # sized per generation
        ),
        cost_estimate=pl.CostEstimate(
            flops=flops, transcendentals=transcendentals,
            bytes_accessed=bytes_accessed),
    )(x2d, *weight_args)

    return jnp.transpose(out2d.reshape(D, B, N), (1, 0, 2))


# ----------------------------- parameters ------------------------------------

def init_params_pytorch_style(key, D, N, hidden2=768, dtype=jnp.float32):
    """Parameters in PyTorch nn.Linear / nn.LayerNorm native layout."""
    ks = jax.random.split(key, 8)
    s = 0.02
    return {
        "w11": jax.random.normal(ks[0], (D, D), dtype) * s,        # (out, in)
        "b11": jax.random.normal(ks[1], (D,), dtype) * s,
        "w12": jax.random.normal(ks[2], (D, D), dtype) * s,
        "b12": jax.random.normal(ks[3], (D,), dtype) * s,
        "g1":  jnp.ones((D,), dtype),  "be1": jnp.zeros((D,), dtype),
        "w21": jax.random.normal(ks[4], (hidden2, D), dtype) * s,  # (768, D)
        "b21": jax.random.normal(ks[5], (hidden2,), dtype) * s,
        "w22": jax.random.normal(ks[6], (D, hidden2), dtype) * s,  # (D, 768)
        "b22": jax.random.normal(ks[7], (D,), dtype) * s,
        "g2":  jnp.ones((N,), dtype),  "be2": jnp.zeros((N,), dtype),
    }


def prepare_params(p):
    """Kernel layout: matmul weights bf16 (MXU operands only); biases / LN
    params stay f32, shaped as column/row vectors for the (D, cols) layout."""
    col = lambda v: v.reshape(-1, 1).astype(jnp.float32)
    row = lambda v: v.reshape(1, -1).astype(jnp.float32)
    return {
        "w11": p["w11"].astype(jnp.bfloat16), "b11": col(p["b11"]),
        "w12": p["w12"].astype(jnp.bfloat16), "b12": col(p["b12"]),
        "g1": col(p["g1"]), "be1": col(p["be1"]),
        "w21": p["w21"].astype(jnp.bfloat16), "b21": col(p["b21"]),
        "w22": p["w22"].astype(jnp.bfloat16), "b22": col(p["b22"]),
        "g2": row(p["g2"]), "be2": row(p["be2"]),
    }


# ----------------------------- references ------------------------------------

def _layernorm_lastdim(x, gamma, beta, eps=_LN_EPS):
    mu = jnp.mean(x, axis=-1, keepdims=True)
    var = jnp.mean((x - mu) ** 2, axis=-1, keepdims=True)
    return (x - mu) * lax.rsqrt(var + eps) * gamma + beta


def mixer_block_reference(T_in, p, *, matmul_dtype=jnp.float32,
                          gelu=_gelu_erf, h2_ew_dtype=jnp.float32):
    """Pure-JAX mirror of the PyTorch forward.  Defaults = exact f32 / erf-GELU
    PyTorch semantics; with matmul_dtype=bf16, gelu=_gelu_tanh and h2_ew_dtype
    matching the kernel it mirrors the kernel's arithmetic."""
    def linear(x, w, b):                       # x (..., in), w (out, in)
        y = jnp.dot(x.astype(matmul_dtype).reshape(-1, x.shape[-1]),
                    w.astype(matmul_dtype).T,
                    preferred_element_type=jnp.float32)
        return y.reshape(*x.shape[:-1], w.shape[0]) + b

    x = jnp.transpose(T_in, (0, 2, 1))                       # (B, N, D)
    h = gelu(linear(x, p["w11"], p["b11"]))
    h = linear(h, p["w12"], p["b12"])
    h = _layernorm_lastdim(h, p["g1"], p["be1"])
    U = T_in + jnp.transpose(h, (0, 2, 1))
    v = jnp.transpose(U, (0, 2, 1))                          # (B, N, D)
    h2 = jnp.dot(v.astype(matmul_dtype).reshape(-1, v.shape[-1]),
                 p["w21"].astype(matmul_dtype).T,
                 preferred_element_type=jnp.float32)
    h2 = h2.reshape(*v.shape[:-1], p["w21"].shape[0])
    h2 = gelu(h2.astype(h2_ew_dtype) + p["b21"].astype(h2_ew_dtype))
    h2 = linear(h2.astype(jnp.float32), p["w22"], p["b22"])
    z = jnp.transpose(h2, (0, 2, 1))                         # (B, D, N)
    z = _layernorm_lastdim(z, p["g2"], p["be2"])
    return T_in + z


# -------------------------------- test ----------------------------------------

if __name__ == "__main__":
    # D = hidden_token_dim (small demo value), N = token axis (the module
    # hard-codes LayerNorm2(512) => N = 512), 768 = hard-coded expansion width.
    B, D, N, HIDDEN2 = 2, 64, 512, 768

    key = jax.random.PRNGKey(0)
    k_x, k_p, k_g = jax.random.split(key, 3)
    params = init_params_pytorch_style(k_p, D, N, HIDDEN2)
    # Non-trivial LayerNorm affine params so the test exercises them.
    kg = jax.random.split(k_g, 4)
    params["g1"] = 1.0 + 0.1 * jax.random.normal(kg[0], (D,), jnp.float32)
    params["be1"] = 0.1 * jax.random.normal(kg[1], (D,), jnp.float32)
    params["g2"] = 1.0 + 0.1 * jax.random.normal(kg[2], (N,), jnp.float32)
    params["be2"] = 0.1 * jax.random.normal(kg[3], (N,), jnp.float32)

    T_in = jax.random.normal(k_x, (B, D, N), jnp.float32)

    kparams = prepare_params(params)
    out = jax.block_until_ready(mixer_block(T_in, kparams))
    assert out.shape == (B, D, N)

    ew_dtype = _elementwise_dtype()

    # Primary check: pure-JAX reference mirroring the kernel's arithmetic
    # (bf16 MXU operands, tanh-GELU, matching element-wise dtype on the
    # 768-wide intermediate).
    ref_mirror = mixer_block_reference(
        T_in, params, matmul_dtype=jnp.bfloat16,
        gelu=_gelu_tanh, h2_ew_dtype=ew_dtype)
    err_m = float(jnp.max(jnp.abs(out - ref_mirror)))
    assert jnp.allclose(out, ref_mirror, atol=3e-2, rtol=3e-2), (
        "mismatch vs kernel-mirroring reference, max abs err %e" % err_m)

    # Sanity check vs the exact f32 / erf-GELU PyTorch-equivalent forward
    # (differences: bf16 MXU operands + tanh-GELU, amplified by the LayerNorms).
    ref_exact = mixer_block_reference(T_in, params)
    err_e = float(jnp.max(jnp.abs(out - ref_exact)))
    assert jnp.allclose(out, ref_exact, atol=2e-1, rtol=2e-1), (
        "mismatch vs exact f32 reference, max abs err %e" % err_e)

    print("KERNEL_OK")
</pallas_src>

<mosaic_0001>
module attributes {stable_mosaic.version = 11 : i64} {
  func.func @mixer_block_kernel(%arg0: i32, %arg1: memref<64x512xf32, #tpu.memory_space<vmem>>, %arg2: memref<64x64xbf16, #tpu.memory_space<vmem>>, %arg3: memref<64x1xf32, #tpu.memory_space<vmem>>, %arg4: memref<64x64xbf16, #tpu.memory_space<vmem>>, %arg5: memref<64x1xf32, #tpu.memory_space<vmem>>, %arg6: memref<64x1xf32, #tpu.memory_space<vmem>>, %arg7: memref<64x1xf32, #tpu.memory_space<vmem>>, %arg8: memref<768x64xbf16, #tpu.memory_space<vmem>>, %arg9: memref<768x1xf32, #tpu.memory_space<vmem>>, %arg10: memref<64x768xbf16, #tpu.memory_space<vmem>>, %arg11: memref<64x1xf32, #tpu.memory_space<vmem>>, %arg12: memref<1x512xf32, #tpu.memory_space<vmem>>, %arg13: memref<1x512xf32, #tpu.memory_space<vmem>>, %arg14: memref<64x512xf32, #tpu.memory_space<vmem>>) attributes {dimension_semantics = [#tpu.dimension_semantics<parallel>], iteration_bounds = array<i64: 2>, scalar_prefetch = 0 : i64, scratch_operands = 0 : i64, tpu.core_type = #tpu.core_type<tc>, window_params = [{transform_indices = @transform_0, window_bounds = array<i64: 64, 512>}, {pipeline_mode = #tpu.pipeline_mode<synchronous>, transform_indices = @transform_1, window_bounds = array<i64: 64, 64>}, {pipeline_mode = #tpu.pipeline_mode<synchronous>, transform_indices = @transform_2, window_bounds = array<i64: 64, 1>}, {pipeline_mode = #tpu.pipeline_mode<synchronous>, transform_indices = @transform_3, window_bounds = array<i64: 64, 64>}, {pipeline_mode = #tpu.pipeline_mode<synchronous>, transform_indices = @transform_4, window_bounds = array<i64: 64, 1>}, {pipeline_mode = #tpu.pipeline_mode<synchronous>, transform_indices = @transform_5, window_bounds = array<i64: 64, 1>}, {pipeline_mode = #tpu.pipeline_mode<synchronous>, transform_indices = @transform_6, window_bounds = array<i64: 64, 1>}, {pipeline_mode = #tpu.pipeline_mode<synchronous>, transform_indices = @transform_7, window_bounds = array<i64: 768, 64>}, {pipeline_mode = #tpu.pipeline_mode<synchronous>, transform_indices = @transform_8, window_bounds = array<i64: 768, 1>}, {pipeline_mode = #tpu.pipeline_mode<synchronous>, transform_indices = @transform_9, window_bounds = array<i64: 64, 768>}, {pipeline_mode = #tpu.pipeline_mode<synchronous>, transform_indices = @transform_10, window_bounds = array<i64: 64, 1>}, {pipeline_mode = #tpu.pipeline_mode<synchronous>, transform_indices = @transform_11, window_bounds = array<i64: 1, 512>}, {pipeline_mode = #tpu.pipeline_mode<synchronous>, transform_indices = @transform_12, window_bounds = array<i64: 1, 512>}, {transform_indices = @transform_13, window_bounds = array<i64: 64, 512>}]} {
    %c0 = arith.constant 0 : index
    %c0_0 = arith.constant 0 : index
    %0 = vector.load %arg1[%c0, %c0_0] : memref<64x512xf32, #tpu.memory_space<vmem>>, vector<64x512xf32>
    %1 = arith.truncf %0 : vector<64x512xf32> to vector<64x512xbf16>
    %c0_1 = arith.constant 0 : index
    %c0_2 = arith.constant 0 : index
    %2 = vector.load %arg2[%c0_1, %c0_2] : memref<64x64xbf16, #tpu.memory_space<vmem>>, vector<64x64xbf16>
    %cst = arith.constant dense<0.000000e+00> : vector<64x512xf32>
    %3 = tpu.matmul %2, %1, %cst {dimension_numbers = #tpu.dot_dimension_numbers<[1], [0], [0], [1], [0, 0, 1, 1], [], []>} : vector<64x64xbf16>, vector<64x512xbf16>, vector<64x512xf32> -> vector<64x512xf32>
    %c0_3 = arith.constant 0 : index
    %c0_4 = arith.constant 0 : index
    %4 = vector.load %arg3[%c0_3, %c0_4] : memref<64x1xf32, #tpu.memory_space<vmem>>, vector<64x1xf32>
    %5 = vector.broadcast %4 : vector<64x1xf32> to vector<64x512xf32>
    %6 = arith.addf %3, %5 : vector<64x512xf32>
    %cst_5 = arith.constant 5.000000e-01 : f32
    %7 = vector.broadcast %cst_5 : f32 to vector<64x512xf32>
    %8 = arith.mulf %7, %6 : vector<64x512xf32>
    %cst_6 = arith.constant 4.471500e-02 : f32
    %9 = vector.broadcast %cst_6 : f32 to vector<64x512xf32>
    %10 = arith.mulf %9, %6 : vector<64x512xf32>
    %11 = arith.mulf %10, %6 : vector<64x512xf32>
    %12 = arith.mulf %11, %6 : vector<64x512xf32>
    %13 = arith.addf %6, %12 : vector<64x512xf32>
    %cst_7 = arith.constant 0.797884583 : f32
    %14 = vector.broadcast %cst_7 : f32 to vector<64x512xf32>
    %15 = arith.mulf %14, %13 : vector<64x512xf32>
    %16 = math.tanh %15 : vector<64x512xf32>
    %cst_8 = arith.constant 1.000000e+00 : f32
    %17 = vector.broadcast %cst_8 : f32 to vector<64x512xf32>
    %18 = arith.addf %17, %16 : vector<64x512xf32>
    %19 = arith.mulf %8, %18 : vector<64x512xf32>
    %c0_9 = arith.constant 0 : index
    %c0_10 = arith.constant 0 : index
    %20 = vector.load %arg4[%c0_9, %c0_10] : memref<64x64xbf16, #tpu.memory_space<vmem>>, vector<64x64xbf16>
    %21 = arith.truncf %19 : vector<64x512xf32> to vector<64x512xbf16>
    %cst_11 = arith.constant dense<0.000000e+00> : vector<64x512xf32>
    %22 = tpu.matmul %20, %21, %cst_11 {dimension_numbers = #tpu.dot_dimension_numbers<[1], [0], [0], [1], [0, 0, 1, 1], [], []>} : vector<64x64xbf16>, vector<64x512xbf16>, vector<64x512xf32> -> vector<64x512xf32>
    %c0_12 = arith.constant 0 : index
    %c0_13 = arith.constant 0 : index
    %23 = vector.load %arg5[%c0_12, %c0_13] : memref<64x1xf32, #tpu.memory_space<vmem>>, vector<64x1xf32>
    %24 = vector.broadcast %23 : vector<64x1xf32> to vector<64x512xf32>
    %25 = arith.addf %22, %24 : vector<64x512xf32>
    %c0_14 = arith.constant 0 : index
    %c0_15 = arith.constant 0 : index
    %26 = vector.load %arg6[%c0_14, %c0_15] : memref<64x1xf32, #tpu.memory_space<vmem>>, vector<64x1xf32>
    %c0_16 = arith.constant 0 : index
    %c0_17 = arith.constant 0 : index
    %27 = vector.load %arg7[%c0_16, %c0_17] : memref<64x1xf32, #tpu.memory_space<vmem>>, vector<64x1xf32>
    %cst_18 = arith.constant dense<0.000000e+00> : vector<512xf32>
    %28 = vector.multi_reduction <add>, %25, %cst_18 [0] : vector<64x512xf32> to vector<512xf32>
    %29 = vector.shape_cast %28 : vector<512xf32> to vector<1x512xf32>
    %30 = arith.mulf %25, %25 : vector<64x512xf32>
    %cst_19 = arith.constant dense<0.000000e+00> : vector<512xf32>
    %31 = vector.multi_reduction <add>, %30, %cst_19 [0] : vector<64x512xf32> to vector<512xf32>
    %32 = vector.shape_cast %31 : vector<512xf32> to vector<1x512xf32>
    %cst_20 = arith.constant 1.562500e-02 : f32
    %33 = vector.broadcast %cst_20 : f32 to vector<1x512xf32>
    %34 = arith.mulf %29, %33 : vector<1x512xf32>
    %cst_21 = arith.constant 1.562500e-02 : f32
    %35 = vector.broadcast %cst_21 : f32 to vector<1x512xf32>
    %36 = arith.mulf %32, %35 : vector<1x512xf32>
    %37 = arith.mulf %34, %34 : vector<1x512xf32>
    %38 = arith.subf %36, %37 : vector<1x512xf32>
    %cst_22 = arith.constant 9.99999974E-6 : f32
    %39 = vector.broadcast %cst_22 : f32 to vector<1x512xf32>
    %40 = arith.addf %38, %39 : vector<1x512xf32>
    %41 = math.rsqrt %40 : vector<1x512xf32>
    %42 = vector.broadcast %34 : vector<1x512xf32> to vector<64x512xf32>
    %43 = arith.subf %25, %42 : vector<64x512xf32>
    %44 = vector.broadcast %41 : vector<1x512xf32> to vector<64x512xf32>
    %45 = arith.mulf %43, %44 : vector<64x512xf32>
    %46 = vector.broadcast %26 : vector<64x1xf32> to vector<64x512xf32>
    %47 = arith.mulf %45, %46 : vector<64x512xf32>
    %48 = vector.broadcast %27 : vector<64x1xf32> to vector<64x512xf32>
    %49 = arith.addf %47, %48 : vector<64x512xf32>
    %50 = arith.addf %0, %49 : vector<64x512xf32>
    %c0_23 = arith.constant 0 : index
    %c0_24 = arith.constant 0 : index
    %51 = vector.load %arg8[%c0_23, %c0_24] : memref<768x64xbf16, #tpu.memory_space<vmem>>, vector<768x64xbf16>
    %52 = arith.truncf %50 : vector<64x512xf32> to vector<64x512xbf16>
    %cst_25 = arith.constant dense<0.000000e+00> : vector<768x512xf32>
    %53 = tpu.matmul %51, %52, %cst_25 {dimension_numbers = #tpu.dot_dimension_numbers<[1], [0], [0], [1], [0, 0, 1, 1], [], []>} : vector<768x64xbf16>, vector<64x512xbf16>, vector<768x512xf32> -> vector<768x512xf32>
    %c0_26 = arith.constant 0 : index
    %c0_27 = arith.constant 0 : index
    %54 = vector.load %arg9[%c0_26, %c0_27] : memref<768x1xf32, #tpu.memory_space<vmem>>, vector<768x1xf32>
    %55 = vector.broadcast %54 : vector<768x1xf32> to vector<768x512xf32>
    %56 = arith.addf %53, %55 : vector<768x512xf32>
    %cst_28 = arith.constant 5.000000e-01 : f32
    %57 = vector.broadcast %cst_28 : f32 to vector<768x512xf32>
    %58 = arith.mulf %57, %56 : vector<768x512xf32>
    %cst_29 = arith.constant 4.471500e-02 : f32
    %59 = vector.broadcast %cst_29 : f32 to vector<768x512xf32>
    %60 = arith.mulf %59, %56 : vector<768x512xf32>
    %61 = arith.mulf %60, %56 : vector<768x512xf32>
    %62 = arith.mulf %61, %56 : vector<768x512xf32>
    %63 = arith.addf %56, %62 : vector<768x512xf32>
    %cst_30 = arith.constant 0.797884583 : f32
    %64 = vector.broadcast %cst_30 : f32 to vector<768x512xf32>
    %65 = arith.mulf %64, %63 : vector<768x512xf32>
    %66 = math.tanh %65 : vector<768x512xf32>
    %cst_31 = arith.constant 1.000000e+00 : f32
    %67 = vector.broadcast %cst_31 : f32 to vector<768x512xf32>
    %68 = arith.addf %67, %66 : vector<768x512xf32>
    %69 = arith.mulf %58, %68 : vector<768x512xf32>
    %c0_32 = arith.constant 0 : index
    %c0_33 = arith.constant 0 : index
    %70 = vector.load %arg10[%c0_32, %c0_33] : memref<64x768xbf16, #tpu.memory_space<vmem>>, vector<64x768xbf16>
    %71 = arith.truncf %69 : vector<768x512xf32> to vector<768x512xbf16>
    %cst_34 = arith.constant dense<0.000000e+00> : vector<64x512xf32>
    %72 = tpu.matmul %70, %71, %cst_34 {dimension_numbers = #tpu.dot_dimension_numbers<[1], [0], [0], [1], [0, 0, 1, 1], [], []>} : vector<64x768xbf16>, vector<768x512xbf16>, vector<64x512xf32> -> vector<64x512xf32>
    %c0_35 = arith.constant 0 : index
    %c0_36 = arith.constant 0 : index
    %73 = vector.load %arg11[%c0_35, %c0_36] : memref<64x1xf32, #tpu.memory_space<vmem>>, vector<64x1xf32>
    %74 = vector.broadcast %73 : vector<64x1xf32> to vector<64x512xf32>
    %75 = arith.addf %72, %74 : vector<64x512xf32>
    %c0_37 = arith.constant 0 : index
    %c0_38 = arith.constant 0 : index
    %76 = vector.load %arg12[%c0_37, %c0_38] : memref<1x512xf32, #tpu.memory_space<vmem>>, vector<1x512xf32>
    %c0_39 = arith.constant 0 : index
    %c0_40 = arith.constant 0 : index
    %77 = vector.load %arg13[%c0_39, %c0_40] : memref<1x512xf32, #tpu.memory_space<vmem>>, vector<1x512xf32>
    %cst_41 = arith.constant dense<0.000000e+00> : vector<64xf32>
    %78 = vector.multi_reduction <add>, %75, %cst_41 [1] : vector<64x512xf32> to vector<64xf32>
    %79 = vector.shape_cast %78 : vector<64xf32> to vector<64x1xf32>
    %80 = arith.mulf %75, %75 : vector<64x512xf32>
    %cst_42 = arith.constant dense<0.000000e+00> : vector<64xf32>
    %81 = vector.multi_reduction <add>, %80, %cst_42 [1] : vector<64x512xf32> to vector<64xf32>
    %82 = vector.shape_cast %81 : vector<64xf32> to vector<64x1xf32>
    %cst_43 = arith.constant 0.001953125 : f32
    %83 = vector.broadcast %cst_43 : f32 to vector<64x1xf32>
    %84 = arith.mulf %79, %83 : vector<64x1xf32>
    %cst_44 = arith.constant 0.001953125 : f32
    %85 = vector.broadcast %cst_44 : f32 to vector<64x1xf32>
    %86 = arith.mulf %82, %85 : vector<64x1xf32>
    %87 = arith.mulf %84, %84 : vector<64x1xf32>
    %88 = arith.subf %86, %87 : vector<64x1xf32>
    %cst_45 = arith.constant 9.99999974E-6 : f32
    %89 = vector.broadcast %cst_45 : f32 to vector<64x1xf32>
    %90 = arith.addf %88, %89 : vector<64x1xf32>
    %91 = math.rsqrt %90 : vector<64x1xf32>
    %92 = vector.broadcast %84 : vector<64x1xf32> to vector<64x512xf32>
    %93 = arith.subf %75, %92 : vector<64x512xf32>
    %94 = vector.broadcast %91 : vector<64x1xf32> to vector<64x512xf32>
    %95 = arith.mulf %93, %94 : vector<64x512xf32>
    %96 = vector.broadcast %76 : vector<1x512xf32> to vector<64x512xf32>
    %97 = arith.mulf %95, %96 : vector<64x512xf32>
    %98 = vector.broadcast %77 : vector<1x512xf32> to vector<64x512xf32>
    %99 = arith.addf %97, %98 : vector<64x512xf32>
    %100 = arith.addf %0, %99 : vector<64x512xf32>
    %c0_46 = arith.constant 0 : index
    %c0_47 = arith.constant 0 : index
    %101 = vector.load %arg14[%c0_46, %c0_47] : memref<64x512xf32, #tpu.memory_space<vmem>>, vector<64x512xf32>
    tpu.vector_store %arg14[%c0_46, %c0_47], %100 {strides = array<i32>} : memref<64x512xf32, #tpu.memory_space<vmem>>, vector<64x512xf32>,
    return
  }
  func.func @transform_0(%arg0: i32) -> (i32, i32) {
    %c0_i32 = arith.constant 0 : i32
    %c0_i32_0 = arith.constant 0 : i32
    return %c0_i32, %arg0 : i32, i32
  }
  func.func @transform_1(%arg0: i32) -> (i32, i32) {
    %c0_i32 = arith.constant 0 : i32
    %c0_i32_0 = arith.constant 0 : i32
    %c0_i32_1 = arith.constant 0 : i32
    return %c0_i32, %c0_i32_0 : i32, i32
  }
  func.func @transform_2(%arg0: i32) -> (i32, i32) {
    %c0_i32 = arith.constant 0 : i32
    %c0_i32_0 = arith.constant 0 : i32
    %c0_i32_1 = arith.constant 0 : i32
    return %c0_i32, %c0_i32_0 : i32, i32
  }
  func.func @transform_3(%arg0: i32) -> (i32, i32) {
    %c0_i32 = arith.constant 0 : i32
    %c0_i32_0 = arith.constant 0 : i32
    %c0_i32_1 = arith.constant 0 : i32
    return %c0_i32, %c0_i32_0 : i32, i32
  }
  func.func @transform_4(%arg0: i32) -> (i32, i32) {
    %c0_i32 = arith.constant 0 : i32
    %c0_i32_0 = arith.constant 0 : i32
    %c0_i32_1 = arith.constant 0 : i32
    return %c0_i32, %c0_i32_0 : i32, i32
  }
  func.func @transform_5(%arg0: i32) -> (i32, i32) {
    %c0_i32 = arith.constant 0 : i32
    %c0_i32_0 = arith.constant 0 : i32
    %c0_i32_1 = arith.constant 0 : i32
    return %c0_i32, %c0_i32_0 : i32, i32
  }
  func.func @transform_6(%arg0: i32) -> (i32, i32) {
    %c0_i32 = arith.constant 0 : i32
    %c0_i32_0 = arith.constant 0 : i32
    %c0_i32_1 = arith.constant 0 : i32
    return %c0_i32, %c0_i32_0 : i32, i32
  }
  func.func @transform_7(%arg0: i32) -> (i32, i32) {
    %c0_i32 = arith.constant 0 : i32
    %c0_i32_0 = arith.constant 0 : i32
    %c0_i32_1 = arith.constant 0 : i32
    return %c0_i32, %c0_i32_0 : i32, i32
  }
  func.func @transform_8(%arg0: i32) -> (i32, i32) {
    %c0_i32 = arith.constant 0 : i32
    %c0_i32_0 = arith.constant 0 : i32
    %c0_i32_1 = arith.constant 0 : i32
    return %c0_i32, %c0_i32_0 : i32, i32
  }
  func.func @transform_9(%arg0: i32) -> (i32, i32) {
    %c0_i32 = arith.constant 0 : i32
    %c0_i32_0 = arith.constant 0 : i32
    %c0_i32_1 = arith.constant 0 : i32
    return %c0_i32, %c0_i32_0 : i32, i32
  }
  func.func @transform_10(%arg0: i32) -> (i32, i32) {
    %c0_i32 = arith.constant 0 : i32
    %c0_i32_0 = arith.constant 0 : i32
    %c0_i32_1 = arith.constant 0 : i32
    return %c0_i32, %c0_i32_0 : i32, i32
  }
  func.func @transform_11(%arg0: i32) -> (i32, i32) {
    %c0_i32 = arith.constant 0 : i32
    %c0_i32_0 = arith.constant 0 : i32
    %c0_i32_1 = arith.constant 0 : i32
    return %c0_i32, %c0_i32_0 : i32, i32
  }
  func.func @transform_12(%arg0: i32) -> (i32, i32) {
    %c0_i32 = arith.constant 0 : i32
    %c0_i32_0 = arith.constant 0 : i32
    %c0_i32_1 = arith.constant 0 : i32
    return %c0_i32, %c0_i32_0 : i32, i32
  }
  func.func @transform_13(%arg0: i32) -> (i32, i32) {
    %c0_i32 = arith.constant 0 : i32
    %c0_i32_0 = arith.constant 0 : i32
    return %c0_i32, %arg0 : i32, i32
  }
}

</mosaic_0001>

<llo_original>
// kernel: tpu_custom_call.1
$region0: #{tpu_custom_call.1}
  #allocation0 [shape = 'u32[]', space=smem, size = 0x4, offset = 0x4, fixed_abs, tag = 'smem constant byte address 0x4 - core index']
  #allocation1 [shape = 'u32[144,128]{1,0:T(1,128)}', space=vmem, size = 0x12000, scoped, tag = 'internal scratch']
  %s0 = inlined_call_operand.vmem [shape: f32[64,1024], index: 0, kind: input, shape index: {}]
  %s1 = inlined_call_operand.vmem [shape: bf16[64,64], index: 1, kind: input, shape index: {}]
  %s2 = inlined_call_operand.vmem [shape: f32[64,1], index: 2, kind: input, shape index: {}]
  %s3 = inlined_call_operand.vmem [shape: bf16[64,64], index: 3, kind: input, shape index: {}]
  %s4 = inlined_call_operand.vmem [shape: f32[64,1], index: 4, kind: input, shape index: {}]
  %s5 = inlined_call_operand.vmem [shape: f32[64,1], index: 5, kind: input, shape index: {}]
  %s6 = inlined_call_operand.vmem [shape: f32[64,1], index: 6, kind: input, shape index: {}]
  %s7 = inlined_call_operand.vmem [shape: bf16[768,64], index: 7, kind: input, shape index: {}]
  %s8 = inlined_call_operand.vmem [shape: f32[768,1], index: 8, kind: input, shape index: {}]
  %s9 = inlined_call_operand.vmem [shape: bf16[64,768], index: 9, kind: input, shape index: {}]
  %s10 = inlined_call_operand.vmem [shape: f32[64,1], index: 10, kind: input, shape index: {}]
  %s11 = inlined_call_operand.vmem [shape: f32[1,512], index: 11, kind: input, shape index: {}]
  %s12 = inlined_call_operand.vmem [shape: f32[1,512], index: 12, kind: input, shape index: {}]
  %s13 = inlined_call_operand.hbm [shape: f32[64,1024], index: 13, kind: output, shape index: {}]
  %s14 = sld [smem:[#allocation0]]
  $region108: #{tpu_custom_call.1} parent=0
    _
  %s16 = ssub.s32 1, %s14
  %s17 = scalar_select 0, %s16, %s14
  $region1: #{tpu_custom_call.1} parent=0
    #allocation2 [shape = 'u8[262144]{0}', space=vmem, size = 0x40000, scoped, tag = 'input window, operand 0']
    #allocation3 [shape = 'u8[262144]{0}', space=vmem, size = 0x40000, scoped, tag = 'output window, operand 0']
    #allocation4 [shape = 's32[2]{0}', space=sflag, size = 0x8, scoped, tag = 'scoped memory for tpu_custom_call.1']
    %18 = vsyncpa [#allocation4], 0
    %s19 = scalar_lea.sflag [#allocation4], 1
    %20 = vsyncpa %s19, 0
    loop: start=0, step=1, limit=4
    $region2: #{tpu_custom_call.1} parent=1 // loop_pre_header
      _
    $region3: #{tpu_custom_call.1} parent=1 // loop_header
      %s22 = sphi 0, %s26
      %p23 = scmp.ge.s32.totalorder %s22, 4
      %s32 = sphi 0, %s34
      %s35 = sphi 0, %s32
      %s36 = sphi 0, %s35
      %s52 = sphi 0, %s36
      %s56 = sphi 0, %s56
      %s58 = sphi 0, %s56
      %s59 = sphi 0, %s58
      %s73 = sphi 0, %s59
      %s77 = sphi 0, %s77
      %s79 = sphi 0, %s77
      %s80 = sphi 0, %s79
      %s94 = sphi 0, %s80
      %s98 = sphi 0, %s98
      %s100 = sphi 0, %s98
      %s101 = sphi 0, %s100
      %s115 = sphi 0, %s101
      %s119 = sphi 0, %s119
      %s121 = sphi 0, %s119
      %s122 = sphi 0, %s121
      %s136 = sphi 0, %s122
      %s140 = sphi 0, %s140
      %s142 = sphi 0, %s140
      %s143 = sphi 0, %s142
      %s157 = sphi 0, %s143
      %s161 = sphi 0, %s161
      %s163 = sphi 0, %s161
      %s164 = sphi 0, %s163
      %s178 = sphi 0, %s164
      %s182 = sphi 0, %s182
      %s184 = sphi 0, %s182
      %s185 = sphi 0, %s184
      %s199 = sphi 0, %s185
      %s203 = sphi 0, %s203
      %s205 = sphi 0, %s203
      %s206 = sphi 0, %s205
      %s220 = sphi 0, %s206
      %s224 = sphi 0, %s224
      %s226 = sphi 0, %s224
      %s227 = sphi 0, %s226
      %s241 = sphi 0, %s227
      %s245 = sphi 0, %s245
      %s247 = sphi 0, %s245
      %s248 = sphi 0, %s247
      %s262 = sphi 0, %s248
      %s266 = sphi 0, %s266
      %s268 = sphi 0, %s266
      %s269 = sphi 0, %s268
      %s283 = sphi 0, %s269
      %s287 = sphi 0, %s287
      %s289 = sphi 0, %s287
      %s290 = sphi 0, %s289
      %s304 = sphi 0, %s290
      %s310 = sphi 0, %s312
      %s313 = sphi 0, %s310
      %s314 = sphi 0, %s313
      %s330 = sphi 0, %s314
    $region4: #{tpu_custom_call.1} parent=1 // loop_header_branch
      %25 = sbr.rel (%p23) target = $region8
    $region5: #{tpu_custom_call.1} parent=1 // loop_body
      %s27 = ssub.s32 %s22, 1
      %s28 = ssub.s32 %s22, 2
      %s29 = sadd.s32 %s22, 1
      %s30 = ssub.s32 %s22, %s29
      %p31 = scmp.eq.s32.totalorder %s30, 0
      %s33 = sadd.s32 %s32, 1
      %s34 = scalar_select %p31, %s32, %s33
      %p37 = pneg %p31
      %p38 = scmp.eq.s32.totalorder %s22, 1
      %p39 = por %p37, %p38
      %p40 = scmp.ne.s32.totalorder %s32, %s35
      %p41 = scmp.eq.s32.totalorder %s22, 0
      %p42 = por %p40, %p41
      %p43 = scmp.ne.s32.totalorder %s32, %s35
      %p44 = scmp.eq.s32.totalorder %s27, 1
      %p45 = por %p43, %p44
      %p46 = scmp.ne.s32.totalorder %s35, %s36
      %p47 = scmp.eq.s32.totalorder %s27, 0
      %p48 = por %p46, %p47
      %p49 = scmp.ne.s32.totalorder %s35, %s36
      %p50 = scmp.eq.s32.totalorder %s28, 1
      %p51 = por %p49, %p50
      %p53 = scmp.ne.s32.totalorder %s36, %s52
      %p54 = scmp.eq.s32.totalorder %s28, 0
      %p55 = por %p53, %p54
      %s57 = sadd.s32 %s56, 1
      %p60 = scmp.eq.s32.totalorder %s22, 1
      %p61 = scmp.ne.s32.totalorder %s56, %s58
      %p62 = scmp.eq.s32.totalorder %s22, 0
      %p63 = por %p61, %p62
      %p64 = scmp.ne.s32.totalorder %s56, %s58
      %p65 = scmp.eq.s32.totalorder %s27, 1
      %p66 = por %p64, %p65
      %p67 = scmp.ne.s32.totalorder %s58, %s59
      %p68 = scmp.eq.s32.totalorder %s27, 0
      %p69 = por %p67, %p68
      %p70 = scmp.ne.s32.totalorder %s58, %s59
      %p71 = scmp.eq.s32.totalorder %s28, 1
      %p72 = por %p70, %p71
      %p74 = scmp.ne.s32.totalorder %s59, %s73
      %p75 = scmp.eq.s32.totalorder %s28, 0
      %p76 = por %p74, %p75
      %s78 = sadd.s32 %s77, 1
      %p81 = scmp.eq.s32.totalorder %s22, 1
      %p82 = scmp.ne.s32.totalorder %s77, %s79
      %p83 = scmp.eq.s32.totalorder %s22, 0
      %p84 = por %p82, %p83
      %p85 = scmp.ne.s32.totalorder %s77, %s79
      %p86 = scmp.eq.s32.totalorder %s27, 1
      %p87 = por %p85, %p86
      %p88 = scmp.ne.s32.totalorder %s79, %s80
      %p89 = scmp.eq.s32.totalorder %s27, 0
      %p90 = por %p88, %p89
      %p91 = scmp.ne.s32.totalorder %s79, %s80
      %p92 = scmp.eq.s32.totalorder %s28, 1
      %p93 = por %p91, %p92
      %p95 = scmp.ne.s32.totalorder %s80, %s94
      %p96 = scmp.eq.s32.totalorder %s28, 0
      %p97 = por %p95, %p96
      %s99 = sadd.s32 %s98, 1
      %p102 = scmp.eq.s32.totalorder %s22, 1
      %p103 = scmp.ne.s32.totalorder %s98, %s100
      %p104 = scmp.eq.s32.totalorder %s22, 0
      %p105 = por %p103, %p104
      %p106 = scmp.ne.s32.totalorder %s98, %s100
      %p107 = scmp.eq.s32.totalorder %s27, 1
      %p108 = por %p106, %p107
      %p109 = scmp.ne.s32.totalorder %s100, %s101
      %p110 = scmp.eq.s32.totalorder %s27, 0
      %p111 = por %p109, %p110
      %p112 = scmp.ne.s32.totalorder %s100, %s101
      %p113 = scmp.eq.s32.totalorder %s28, 1
      %p114 = por %p112, %p113
      %p116 = scmp.ne.s32.totalorder %s101, %s115
      %p117 = scmp.eq.s32.totalorder %s28, 0
      %p118 = por %p116, %p117
      %s120 = sadd.s32 %s119, 1
      %p123 = scmp.eq.s32.totalorder %s22, 1
      %p124 = scmp.ne.s32.totalorder %s119, %s121
      %p125 = scmp.eq.s32.totalorder %s22, 0
      %p126 = por %p124, %p125
      %p127 = scmp.ne.s32.totalorder %s119, %s121
      %p128 = scmp.eq.s32.totalorder %s27, 1
      %p129 = por %p127, %p128
      %p130 = scmp.ne.s32.totalorder %s121, %s122
      %p131 = scmp.eq.s32.totalorder %s27, 0
      %p132 = por %p130, %p131
      %p133 = scmp.ne.s32.totalorder %s121, %s122
      %p134 = scmp.eq.s32.totalorder %s28, 1
      %p135 = por %p133, %p134
      %p137 = scmp.ne.s32.totalorder %s122, %s136
      %p138 = scmp.eq.s32.totalorder %s28, 0
      %p139 = por %p137, %p138
      %s141 = sadd.s32 %s140, 1
      %p144 = scmp.eq.s32.totalorder %s22, 1
      %p145 = scmp.ne.s32.totalorder %s140, %s142
      %p146 = scmp.eq.s32.totalorder %s22, 0
      %p147 = por %p145, %p146
      %p148 = scmp.ne.s32.totalorder %s140, %s142
      %p149 = scmp.eq.s32.totalorder %s27, 1
      %p150 = por %p148, %p149
      %p151 = scmp.ne.s32.totalorder %s142, %s143
      %p152 = scmp.eq.s32.totalorder %s27, 0
      %p153 = por %p151, %p152
      %p154 = scmp.ne.s32.totalorder %s142, %s143
      %p155 = scmp.eq.s32.totalorder %s28, 1
      %p156 = por %p154, %p155
      %p158 = scmp.ne.s32.totalorder %s143, %s157
      %p159 = scmp.eq.s32.totalorder %s28, 0
      %p160 = por %p158, %p159
      %s162 = sadd.s32 %s161, 1
      %p165 = scmp.eq.s32.totalorder %s22, 1
      %p166 = scmp.ne.s32.totalorder %s161, %s163
      %p167 = scmp.eq.s32.totalorder %s22, 0
      %p168 = por %p166, %p167
      %p169 = scmp.ne.s32.totalorder %s161, %s163
      %p170 = scmp.eq.s32.totalorder %s27, 1
      %p171 = por %p169, %p170
      %p172 = scmp.ne.s32.totalorder %s163, %s164
      %p173 = scmp.eq.s32.totalorder %s27, 0
      %p174 = por %p172, %p173
      %p175 = scmp.ne.s32.totalorder %s163, %s164
      %p176 = scmp.eq.s32.totalorder %s28, 1
      %p177 = por %p175, %p176
      %p179 = scmp.ne.s32.totalorder %s164, %s178
      %p180 = scmp.eq.s32.totalorder %s28, 0
      %p181 = por %p179, %p180
      %s183 = sadd.s32 %s182, 1
      %p186 = scmp.eq.s32.totalorder %s22, 1
      %p187 = scmp.ne.s32.totalorder %s182, %s184
      %p188 = scmp.eq.s32.totalorder %s22, 0
      %p189 = por %p187, %p188
      %p190 = scmp.ne.s32.totalorder %s182, %s184
      %p191 = scmp.eq.s32.totalorder %s27, 1
      %p192 = por %p190, %p191
      %p193 = scmp.ne.s32.totalorder %s184, %s185
      %p194 = scmp.eq.s32.totalorder %s27, 0
      %p195 = por %p193, %p194
      %p196 = scmp.ne.s32.totalorder %s184, %s185
      %p197 = scmp.eq.s32.totalorder %s28, 1
      %p198 = por %p196, %p197
      %p200 = scmp.ne.s32.totalorder %s185, %s199
      %p201 = scmp.eq.s32.totalorder %s28, 0
      %p202 = por %p200, %p201
      %s204 = sadd.s32 %s203, 1
      %p207 = scmp.eq.s32.totalorder %s22, 1
      %p208 = scmp.ne.s32.totalorder %s203, %s205
      %p209 = scmp.eq.s32.totalorder %s22, 0
      %p210 = por %p208, %p209
      %p211 = scmp.ne.s32.totalorder %s203, %s205
      %p212 = scmp.eq.s32.totalorder %s27, 1
      %p213 = por %p211, %p212
      %p214 = scmp.ne.s32.totalorder %s205, %s206
      %p215 = scmp.eq.s32.totalorder %s27, 0
      %p216 = por %p214, %p215
      %p217 = scmp.ne.s32.totalorder %s205, %s206
      %p218 = scmp.eq.s32.totalorder %s28, 1
      %p219 = por %p217, %p218
      %p221 = scmp.ne.s32.totalorder %s206, %s220
      %p222 = scmp.eq.s32.totalorder %s28, 0
      %p223 = por %p221, %p222
      %s225 = sadd.s32 %s224, 1
      %p228 = scmp.eq.s32.totalorder %s22, 1
      %p229 = scmp.ne.s32.totalorder %s224, %s226
      %p230 = scmp.eq.s32.totalorder %s22, 0
      %p231 = por %p229, %p230
      %p232 = scmp.ne.s32.totalorder %s224, %s226
      %p233 = scmp.eq.s32.totalorder %s27, 1
      %p234 = por %p232, %p233
      %p235 = scmp.ne.s32.totalorder %s226, %s227
      %p236 = scmp.eq.s32.totalorder %s27, 0
      %p237 = por %p235, %p236
      %p238 = scmp.ne.s32.totalorder %s226, %s227
      %p239 = scmp.eq.s32.totalorder %s28, 1
      %p240 = por %p238, %p239
      %p242 = scmp.ne.s32.totalorder %s227, %s241
      %p243 = scmp.eq.s32.totalorder %s28, 0
      %p244 = por %p242, %p243
      %s246 = sadd.s32 %s245, 1
      %p249 = scmp.eq.s32.totalorder %s22, 1
      %p250 = scmp.ne.s32.totalorder %s245, %s247
      %p251 = scmp.eq.s32.totalorder %s22, 0
      %p252 = por %p250, %p251
      %p253 = scmp.ne.s32.totalorder %s245, %s247
      %p254 = scmp.eq.s32.totalorder %s27, 1
      %p255 = por %p253, %p254
      %p256 = scmp.ne.s32.totalorder %s247, %s248
      %p257 = scmp.eq.s32.totalorder %s27, 0
      %p258 = por %p256, %p257
      %p259 = scmp.ne.s32.totalorder %s247, %s248
      %p260 = scmp.eq.s32.totalorder %s28, 1
      %p261 = por %p259, %p260
      %p263 = scmp.ne.s32.totalorder %s248, %s262
      %p264 = scmp.eq.s32.totalorder %s28, 0
      %p265 = por %p263, %p264
      %s267 = sadd.s32 %s266, 1
      %p270 = scmp.eq.s32.totalorder %s22, 1
      %p271 = scmp.ne.s32.totalorder %s266, %s268
      %p272 = scmp.eq.s32.totalorder %s22, 0
      %p273 = por %p271, %p272
      %p274 = scmp.ne.s32.totalorder %s266, %s268
      %p275 = scmp.eq.s32.totalorder %s27, 1
      %p276 = por %p274, %p275
      %p277 = scmp.ne.s32.totalorder %s268, %s269
      %p278 = scmp.eq.s32.totalorder %s27, 0
      %p279 = por %p277, %p278
      %p280 = scmp.ne.s32.totalorder %s268, %s269
      %p281 = scmp.eq.s32.totalorder %s28, 1
      %p282 = por %p280, %p281
      %p284 = scmp.ne.s32.totalorder %s269, %s283
      %p285 = scmp.eq.s32.totalorder %s28, 0
      %p286 = por %p284, %p285
      %s288 = sadd.s32 %s287, 1
      %p291 = scmp.eq.s32.totalorder %s22, 1
      %p292 = scmp.ne.s32.totalorder %s287, %s289
      %p293 = scmp.eq.s32.totalorder %s22, 0
      %p294 = por %p292, %p293
      %p295 = scmp.ne.s32.totalorder %s287, %s289
      %p296 = scmp.eq.s32.totalorder %s27, 1
      %p297 = por %p295, %p296
      %p298 = scmp.ne.s32.totalorder %s289, %s290
      %p299 = scmp.eq.s32.totalorder %s27, 0
      %p300 = por %p298, %p299
      %p301 = scmp.ne.s32.totalorder %s289, %s290
      %p302 = scmp.eq.s32.totalorder %s28, 1
      %p303 = por %p301, %p302
      %p305 = scmp.ne.s32.totalorder %s290, %s304
      %p306 = scmp.eq.s32.totalorder %s28, 0
      %p307 = por %p305, %p306
      %s308 = ssub.s32 %s22, %s29
      %p309 = scmp.eq.s32.totalorder %s308, 0
      %s311 = sadd.s32 %s310, 1
      %s312 = scalar_select %p309, %s310, %s311
      %p315 = pneg %p309
      %p316 = scmp.eq.s32.totalorder %s22, 1
      %p317 = por %p315, %p316
      %p318 = scmp.ne.s32.totalorder %s310, %s313
      %p319 = scmp.eq.s32.totalorder %s22, 0
      %p320 = por %p318, %p319
      %p321 = scmp.ne.s32.totalorder %s310, %s313
      %p322 = scmp.eq.s32.totalorder %s27, 1
      %p323 = por %p321, %p322
      %p324 = scmp.ne.s32.totalorder %s313, %s314
      %p325 = scmp.eq.s32.totalorder %s27, 0
      %p326 = por %p324, %p325
      %p327 = scmp.ne.s32.totalorder %s313, %s314
      %p328 = scmp.eq.s32.totalorder %s28, 1
      %p329 = por %p327, %p328
      %p331 = scmp.ne.s32.totalorder %s314, %s330
      %p332 = scmp.eq.s32.totalorder %s28, 0
      %p333 = por %p331, %p332
      %p334 = scmp.le.s32.totalorder 1, %s22
      %p335 = scmp.lt.s32.totalorder %s22, 3
      %p336 = pnand %p334, %p335
      %p337 = pneg %p336
      // Predicated region
      $region9: #{tpu_custom_call.1} parent=5 // pred_check
        _
      $region10: #{tpu_custom_call.1} parent=5 // pred_check_branch
        %339 = sbr.rel (%p336) target = $region12
      $region11: #{tpu_custom_call.1} parent=5 // pred_region
        %s340 = ssub.s32 %s22, 1
        // Predicated region
        $region13: #{tpu_custom_call.1} parent=11 // pred_check
          %p341 = pneg %p69
        $region14: #{tpu_custom_call.1} parent=11 // pred_check_branch
          %343 = sbr.rel (%p341) target = $region16
        $region15: #{tpu_custom_call.1} parent=11 // pred_region
          _
        $region16: #{tpu_custom_call.1} parent=11 // pred_fallthru
          _
        // Predicated region
        $region17: #{tpu_custom_call.1} parent=11 // pred_check
          %p344 = pneg %p90
        $region18: #{tpu_custom_call.1} parent=11 // pred_check_branch
          %346 = sbr.rel (%p344) target = $region20
        $region19: #{tpu_custom_call.1} parent=11 // pred_region
          _
        $region20: #{tpu_custom_call.1} parent=11 // pred_fallthru
          _
        // Predicated region
        $region21: #{tpu_custom_call.1} parent=11 // pred_check
          %p347 = pneg %p111
        $region22: #{tpu_custom_call.1} parent=11 // pred_check_branch
          %349 = sbr.rel (%p347) target = $region24
        $region23: #{tpu_custom_call.1} parent=11 // pred_region
          _
        $region24: #{tpu_custom_call.1} parent=11 // pred_fallthru
          _
        // Predicated region
        $region25: #{tpu_custom_call.1} parent=11 // pred_check
          %p350 = pneg %p132
        $region26: #{tpu_custom_call.1} parent=11 // pred_check_branch
          %352 = sbr.rel (%p350) target = $region28
        $region27: #{tpu_custom_call.1} parent=11 // pred_region
          _
        $region28: #{tpu_custom_call.1} parent=11 // pred_fallthru
          _
        // Predicated region
        $region29: #{tpu_custom_call.1} parent=11 // pred_check
          %p353 = pneg %p153
        $region30: #{tpu_custom_call.1} parent=11 // pred_check_branch
          %355 = sbr.rel (%p353) target = $region32
        $region31: #{tpu_custom_call.1} parent=11 // pred_region
          _
        $region32: #{tpu_custom_call.1} parent=11 // pred_fallthru
          _
        // Predicated region
        $region33: #{tpu_custom_call.1} parent=11 // pred_check
          %p356 = pneg %p174
        $region34: #{tpu_custom_call.1} parent=11 // pred_check_branch
          %358 = sbr.rel (%p356) target = $region36
        $region35: #{tpu_custom_call.1} parent=11 // pred_region
          _
        $region36: #{tpu_custom_call.1} parent=11 // pred_fallthru
          _
        // Predicated region
        $region37: #{tpu_custom_call.1} parent=11 // pred_check
          %p359 = pneg %p195
        $region38: #{tpu_custom_call.1} parent=11 // pred_check_branch
          %361 = sbr.rel (%p359) target = $region40
        $region39: #{tpu_custom_call.1} parent=11 // pred_region
          _
        $region40: #{tpu_custom_call.1} parent=11 // pred_fallthru
          _
        // Predicated region
        $region41: #{tpu_custom_call.1} parent=11 // pred_check
          %p362 = pneg %p216
        $region42: #{tpu_custom_call.1} parent=11 // pred_check_branch
          %364 = sbr.rel (%p362) target = $region44
        $region43: #{tpu_custom_call.1} parent=11 // pred_region
          _
        $region44: #{tpu_custom_call.1} parent=11 // pred_fallthru
          _
        // Predicated region
        $region45: #{tpu_custom_call.1} parent=11 // pred_check
          %p365 = pneg %p237
        $region46: #{tpu_custom_call.1} parent=11 // pred_check_branch
          %367 = sbr.rel (%p365) target = $region48
        $region47: #{tpu_custom_call.1} parent=11 // pred_region
          _
        $region48: #{tpu_custom_call.1} parent=11 // pred_fallthru
          _
        // Predicated region
        $region49: #{tpu_custom_call.1} parent=11 // pred_check
          %p368 = pneg %p258
        $region50: #{tpu_custom_call.1} parent=11 // pred_check_branch
          %370 = sbr.rel (%p368) target = $region52
        $region51: #{tpu_custom_call.1} parent=11 // pred_region
          _
        $region52: #{tpu_custom_call.1} parent=11 // pred_fallthru
          _
        // Predicated region
        $region53: #{tpu_custom_call.1} parent=11 // pred_check
          %p371 = pneg %p279
        $region54: #{tpu_custom_call.1} parent=11 // pred_check_branch
          %373 = sbr.rel (%p371) target = $region56
        $region55: #{tpu_custom_call.1} parent=11 // pred_region
          _
        $region56: #{tpu_custom_call.1} parent=11 // pred_fallthru
          _
        // Predicated region
        $region57: #{tpu_custom_call.1} parent=11 // pred_check
          %p374 = pneg %p300
        $region58: #{tpu_custom_call.1} parent=11 // pred_check_branch
          %376 = sbr.rel (%p374) target = $region60
        $region59: #{tpu_custom_call.1} parent=11 // pred_region
          _
        $region60: #{tpu_custom_call.1} parent=11 // pred_fallthru
          _
      $region12: #{tpu_custom_call.1} parent=5 // pred_fallthru
        _
      %p377 = scmp.lt.s32.totalorder %s22, 2
      // Predicated region
      $region61: #{tpu_custom_call.1} parent=5 // pred_check
        %p378 = pneg %p377
      $region62: #{tpu_custom_call.1} parent=5 // pred_check_branch
        %380 = sbr.rel (%p378) target = $region64
      $region63: #{tpu_custom_call.1} parent=5 // pred_region
        // Predicated region
        $region65: #{tpu_custom_call.1} parent=63 // pred_check
          %p381 = pneg %p42
        $region66: #{tpu_custom_call.1} parent=63 // pred_check_branch
          %383 = sbr.rel (%p381) target = $region68
        $region67: #{tpu_custom_call.1} parent=63 // pred_region
          %s384 = sand.u32 %s32, 1
          %s385 = sand.u32 %s32, 1
          %s386 = smul.addr %s385, 256
          %s387 = scalar_lea.vmem [#allocation2], %s386
          %s388 = smul.u32 4, %s22
          %s389 = smul.addr %s388, 8
          %s390 = scalar_lea.vmem %s0, %s389
          // Predicated region
          $region69: #{tpu_custom_call.1} parent=67 // pred_check
            _
          $region70: #{tpu_custom_call.1} parent=67 // pred_check_branch
            %392 = sbr.rel (0) target = $region72
          $region71: #{tpu_custom_call.1} parent=67 // pred_region
            // Predicated region
            $region73: #{tpu_custom_call.1} parent=71 // pred_check
              _
            $region74: #{tpu_custom_call.1} parent=71 // pred_check_branch
              %394 = sbr.rel (0) target = $region76
            $region75: #{tpu_custom_call.1} parent=71 // pred_region
              loop: start=0, step=1, limit=1
              $region77: #{tpu_custom_call.1} parent=75 // loop_pre_header
                _
              $region78: #{tpu_custom_call.1} parent=75 // loop_header
                %s396 = sphi 0, %s400
                %p397 = scmp.ge.s32.totalorder %s396, 1
                %s401 = sphi %s390, %s390
                %s402 = sphi %s387, %s387
              $region79: #{tpu_custom_call.1} parent=75 // loop_header_branch
                %399 = sbr.rel (%p397) target = $region83
              $region80: #{tpu_custom_call.1} parent=75 // loop_body
                %v403 = vld [vmem:[%s401] sm:$0xff]
                %404 = vst [vmem:[%s402] sm:$0xff] %v403
                %v405 = vld [vmem:[%s401 + $0x8] sm:$0xff]
                %406 = vst [vmem:[%s402 + $0x8] sm:$0xff] %v405
                %v407 = vld [vmem:[%s401 + $0x10] sm:$0xff]
                %408 = vst [vmem:[%s402 + $0x10] sm:$0xff] %v407
                %v409 = vld [vmem:[%s401 + $0x18] sm:$0xff]
                %410 = vst [vmem:[%s402 + $0x18] sm:$0xff] %v409
                %v411 = vld [vmem:[%s401 + $0x40] sm:$0xff]
                %412 = vst [vmem:[%s402 + $0x20] sm:$0xff] %v411
                %v413 = vld [vmem:[%s401 + $0x48] sm:$0xff]
                %414 = vst [vmem:[%s402 + $0x28] sm:$0xff] %v413
                %v415 = vld [vmem:[%s401 + $0x50] sm:$0xff]
                %416 = vst [vmem:[%s402 + $0x30] sm:$0xff] %v415
                %v417 = vld [vmem:[%s401 + $0x58] sm:$0xff]
                %418 = vst [vmem:[%s402 + $0x38] sm:$0xff] %v417
                %v419 = vld [vmem:[%s401 + $0x80] sm:$0xff]
                %420 = vst [vmem:[%s402 + $0x40] sm:$0xff] %v419
                %v421 = vld [vmem:[%s401 + $0x88] sm:$0xff]
                %422 = vst [vmem:[%s402 + $0x48] sm:$0xff] %v421
                %v423 = vld [vmem:[%s401 + $0x90] sm:$0xff]
                %424 = vst [vmem:[%s402 + $0x50] sm:$0xff] %v423
                %v425 = vld [vmem:[%s401 + $0x98] sm:$0xff]
                %426 = vst [vmem:[%s402 + $0x58] sm:$0xff] %v425
                %v427 = vld [vmem:[%s401 + $0xc0] sm:$0xff]
                %428 = vst [vmem:[%s402 + $0x60] sm:$0xff] %v427
                %v429 = vld [vmem:[%s401 + $0xc8] sm:$0xff]
                %430 = vst [vmem:[%s402 + $0x68] sm:$0xff] %v429
                %v431 = vld [vmem:[%s401 + $0xd0] sm:$0xff]
                %432 = vst [vmem:[%s402 + $0x70] sm:$0xff] %v431
                %v433 = vld [vmem:[%s401 + $0xd8] sm:$0xff]
                %434 = vst [vmem:[%s402 + $0x78] sm:$0xff] %v433
                %v435 = vld [vmem:[%s401 + $0x100] sm:$0xff]
                %436 = vst [vmem:[%s402 + $0x80] sm:$0xff] %v435
                %v437 = vld [vmem:[%s401 + $0x108] sm:$0xff]
                %438 = vst [vmem:[%s402 + $0x88] sm:$0xff] %v437
                %v439 = vld [vmem:[%s401 + $0x110] sm:$0xff]
                %440 = vst [vmem:[%s402 + $0x90] sm:$0xff] %v439
                %v441 = vld [vmem:[%s401 + $0x118] sm:$0xff]
                %442 = vst [vmem:[%s402 + $0x98] sm:$0xff] %v441
                %v443 = vld [vmem:[%s401 + $0x140] sm:$0xff]
                %444 = vst [vmem:[%s402 + $0xa0] sm:$0xff] %v443
                %v445 = vld [vmem:[%s401 + $0x148] sm:$0xff]
                %446 = vst [vmem:[%s402 + $0xa8] sm:$0xff] %v445
                %v447 = vld [vmem:[%s401 + $0x150] sm:$0xff]
                %448 = vst [vmem:[%s402 + $0xb0] sm:$0xff] %v447
                %v449 = vld [vmem:[%s401 + $0x158] sm:$0xff]
                %450 = vst [vmem:[%s402 + $0xb8] sm:$0xff] %v449
                %v451 = vld [vmem:[%s401 + $0x180] sm:$0xff]
                %452 = vst [vmem:[%s402 + $0xc0] sm:$0xff] %v451
                %v453 = vld [vmem:[%s401 + $0x188] sm:$0xff]
                %454 = vst [vmem:[%s402 + $0xc8] sm:$0xff] %v453
                %v455 = vld [vmem:[%s401 + $0x190] sm:$0xff]
                %456 = vst [vmem:[%s402 + $0xd0] sm:$0xff] %v455
                %v457 = vld [vmem:[%s401 + $0x198] sm:$0xff]
                %458 = vst [vmem:[%s402 + $0xd8] sm:$0xff] %v457
                %v459 = vld [vmem:[%s401 + $0x1c0] sm:$0xff]
                %460 = vst [vmem:[%s402 + $0xe0] sm:$0xff] %v459
                %v461 = vld [vmem:[%s401 + $0x1c8] sm:$0xff]
                %462 = vst [vmem:[%s402 + $0xe8] sm:$0xff] %v461
                %v463 = vld [vmem:[%s401 + $0x1d0] sm:$0xff]
                %464 = vst [vmem:[%s402 + $0xf0] sm:$0xff] %v463
                %v465 = vld [vmem:[%s401 + $0x1d8] sm:$0xff]
                %466 = vst [vmem:[%s402 + $0xf8] sm:$0xff] %v465
              $region81: #{tpu_custom_call.1} parent=75 // loop_footer
                %s400 = sadd.s32 1, %s396
              $region82: #{tpu_custom_call.1} parent=75 // loop_footer_branch
                %395 = sbr.rel target = $region78
              $region83: #{tpu_custom_call.1} parent=75 // loop_exit
                _
            $region76: #{tpu_custom_call.1} parent=71 // pred_fallthru
              _
            // Predicated region
            $region84: #{tpu_custom_call.1} parent=71 // pred_check
              _
            $region85: #{tpu_custom_call.1} parent=71 // pred_check_branch
              %468 = sbr.rel target = $region87
            $region86: #{tpu_custom_call.1} parent=71 // pred_region
              _
            $region87: #{tpu_custom_call.1} parent=71 // pred_fallthru
              _
          $region72: #{tpu_custom_call.1} parent=67 // pred_fallthru
            _
          %469 = vnop
        $region68: #{tpu_custom_call.1} parent=63 // pred_fallthru
          _
      $region64: #{tpu_custom_call.1} parent=5 // pred_fallthru
        _
      %p470 = scmp.le.s32.totalorder 1, %s22
      %p471 = scmp.lt.s32.totalorder %s22, 3
      %p472 = pnand %p470, %p471
      %p473 = pneg %p472
      // Predicated region
      $region88: #{tpu_custom_call.1} parent=5 // pred_check
        _
      $region89: #{tpu_custom_call.1} parent=5 // pred_check_branch
        %475 = sbr.rel (%p472) target = $region91
      $region90: #{tpu_custom_call.1} parent=5 // pred_region
        %s476 = ssub.s32 %s22, 1
        %s477 = sand.u32 %s35, 1
        %s478 = sand.u32 %s35, 1
        %s479 = smul.addr %s478, 256
        %s480 = scalar_lea.vmem [#allocation2], %s479
        // Predicated region
        $region92: #{tpu_custom_call.1} parent=90 // pred_check
          %p481 = pneg %p48
        $region93: #{tpu_custom_call.1} parent=90 // pred_check_branch
          %483 = sbr.rel (%p481) target = $region95
        $region94: #{tpu_custom_call.1} parent=90 // pred_region
          _
        $region95: #{tpu_custom_call.1} parent=90 // pred_fallthru
          _
        %s484 = sand.u32 %s35, 1
        %s485 = sand.u32 %s35, 1
        %s486 = smul.addr %s485, 256
        %s487 = scalar_lea.vmem [#allocation2], %s486
        %p488 = pneg %p48
        %p489 = pneg %p45
        %p490 = pneg %p69
        %p491 = pneg %p66
        %p492 = pneg %p90
        %p493 = pneg %p87
        %p494 = pneg %p111
        %p495 = pneg %p108
        %p496 = pneg %p132
        %p497 = pneg %p129
        %p498 = pneg %p153
        %p499 = pneg %p150
        %p500 = pneg %p174
        %p501 = pneg %p171
        %p502 = pneg %p195
        %p503 = pneg %p192
        %p504 = pneg %p216
        %p505 = pneg %p213
        %p506 = pneg %p237
        %p507 = pneg %p234
        %p508 = pneg %p258
        %p509 = pneg %p255
        %p510 = pneg %p279
        %p511 = pneg %p276
        %p512 = pneg %p300
        %p513 = pneg %p297
        %p514 = pneg %p326
        %p515 = pneg %p323
        %s516 = sand.u32 %s313, 1
        %s517 = scalar_lea.sflag [#allocation4], %s516
        %s518 = sand.u32 %s313, 1
        %s519 = smul.addr %s518, 256
        %s520 = scalar_lea.vmem [#allocation3], %s519
        %s521 = smul.u32 4, %s27
        %s522 = smul.u32 4, %s27
        %v524 = vld [vmem:[%s480] sm:$0xff]
        %v525 = vld [vmem:[%s480 + $0x8] sm:$0xff]
        %v526 = vld [vmem:[%s480 + $0x10] sm:$0xff]
        %v527 = vld [vmem:[%s480 + $0x18] sm:$0xff]
        %v528 = vld [vmem:[%s480 + $0x20] sm:$0xff]
        %v529 = vld [vmem:[%s480 + $0x28] sm:$0xff]
        %v530 = vld [vmem:[%s480 + $0x30] sm:$0xff]
        %v531 = vld [vmem:[%s480 + $0x38] sm:$0xff]
        %v532 = vld [vmem:[%s480 + $0x40] sm:$0xff]
        %v533 = vld [vmem:[%s480 + $0x48] sm:$0xff]
        %v534 = vld [vmem:[%s480 + $0x50] sm:$0xff]
        %v535 = vld [vmem:[%s480 + $0x58] sm:$0xff]
        %v536 = vld [vmem:[%s480 + $0x60] sm:$0xff]
        %v537 = vld [vmem:[%s480 + $0x68] sm:$0xff]
        %v538 = vld [vmem:[%s480 + $0x70] sm:$0xff]
        %v539 = vld [vmem:[%s480 + $0x78] sm:$0xff]
        %v540 = vld [vmem:[%s480 + $0x80] sm:$0xff]
        %v541 = vld [vmem:[%s480 + $0x88] sm:$0xff]
        %v542 = vld [vmem:[%s480 + $0x90] sm:$0xff]
        %v543 = vld [vmem:[%s480 + $0x98] sm:$0xff]
        %v544 = vld [vmem:[%s480 + $0xa0] sm:$0xff]
        %v545 = vld [vmem:[%s480 + $0xa8] sm:$0xff]
        %v546 = vld [vmem:[%s480 + $0xb0] sm:$0xff]
        %v547 = vld [vmem:[%s480 + $0xb8] sm:$0xff]
        %v548 = vld [vmem:[%s480 + $0xc0] sm:$0xff]
        %v549 = vld [vmem:[%s480 + $0xc8] sm:$0xff]
        %v550 = vld [vmem:[%s480 + $0xd0] sm:$0xff]
        %v551 = vld [vmem:[%s480 + $0xd8] sm:$0xff]
        %v552 = vld [vmem:[%s480 + $0xe0] sm:$0xff]
        %v553 = vld [vmem:[%s480 + $0xe8] sm:$0xff]
        %v554 = vld [vmem:[%s480 + $0xf0] sm:$0xff]
        %v555 = vld [vmem:[%s480 + $0xf8] sm:$0xff]
        %v556 = vpack.c.bf16 %v528, %v524
        %v557 = vpack.c.bf16 %v529, %v525
        %v558 = vpack.c.bf16 %v530, %v526
        %v559 = vpack.c.bf16 %v531, %v527
        %v560 = vpack.c.bf16 %v536, %v532
        %v561 = vpack.c.bf16 %v537, %v533
        %v562 = vpack.c.bf16 %v538, %v534
        %v563 = vpack.c.bf16 %v539, %v535
        %v564 = vpack.c.bf16 %v544, %v540
        %v565 = vpack.c.bf16 %v545, %v541
        %v566 = vpack.c.bf16 %v546, %v542
        %v567 = vpack.c.bf16 %v547, %v543
        %v568 = vpack.c.bf16 %v552, %v548
        %v569 = vpack.c.bf16 %v553, %v549
        %v570 = vpack.c.bf16 %v554, %v550
        %v571 = vpack.c.bf16 %v555, %v551
        %v572 = vld [vmem:[%s1] sm:$0xf]
        %v573 = vld [vmem:[%s1 + $0x4] sm:$0xf]
        %v574 = vld [vmem:[%s1 + $0x8] sm:$0xf]
        %v575 = vld [vmem:[%s1 + $0xc] sm:$0xf]
        %v576 = vld [vmem:[%s1 + $0x10] sm:$0xf]
        %v577 = vld [vmem:[%s1 + $0x14] sm:$0xf]
        %v578 = vld [vmem:[%s1 + $0x18] sm:$0xf]
        %v579 = vld [vmem:[%s1 + $0x1c] sm:$0xf]
        %v580 = vld [vmem:[%s2] sm:$0xff]
        %v581 = vld [vmem:[%s2 + $0x8] sm:$0xff]
        %v582 = vld [vmem:[%s2 + $0x10] sm:$0xff]
        %v583 = vld [vmem:[%s2 + $0x18] sm:$0xff]
        %v584 = vld [vmem:[%s2 + $0x20] sm:$0xff]
        %v585 = vld [vmem:[%s2 + $0x28] sm:$0xff]
        %v586 = vld [vmem:[%s2 + $0x30] sm:$0xff]
        %v587 = vld [vmem:[%s2 + $0x38] sm:$0xff]
        %589 = vset.pattern.permute.xlu0 0
        %590 = vperm.xlu0 %589, %v580
        %v591 = vpop.permute.xlu0 %590
        %594 = vset.pattern.permute.xlu0 0
        %595 = vperm.xlu0 %594, %v581
        %v596 = vpop.permute.xlu0 %595
        %599 = vset.pattern.permute.xlu0 0
        %600 = vperm.xlu0 %599, %v582
        %v601 = vpop.permute.xlu0 %600
        %604 = vset.pattern.permute.xlu0 0
        %605 = vperm.xlu0 %604, %v583
        %v606 = vpop.permute.xlu0 %605
        %609 = vset.pattern.permute.xlu0 0
        %610 = vperm.xlu0 %609, %v584
        %v611 = vpop.permute.xlu0 %610
        %614 = vset.pattern.permute.xlu0 0
        %615 = vperm.xlu0 %614, %v585
        %v616 = vpop.permute.xlu0 %615
        %619 = vset.pattern.permute.xlu0 0
        %620 = vperm.xlu0 %619, %v586
        %v621 = vpop.permute.xlu0 %620
        %624 = vset.pattern.permute.xlu0 0
        %625 = vperm.xlu0 %624, %v587
        %v626 = vpop.permute.xlu0 %625
        %v636 = vunpack.c.l.b16 %v572
        %v637 = vunpack.c.l.b16 %v573
        %v638 = vunpack.c.l.b16 %v574
        %v639 = vunpack.c.l.b16 %v575
        %v640 = vunpack.c.l.b16 %v576
        %v641 = vunpack.c.l.b16 %v577
        %v642 = vunpack.c.l.b16 %v578
        %v643 = vunpack.c.l.b16 %v579
        %v644 = vpack.c.b16 %v637, %v636
        %v645 = vpack.c.b16 %v639, %v638
        %v646 = vpack.c.b16 %v641, %v640
        %v647 = vpack.c.b16 %v643, %v642
        %vm648 = vcmask 523264
        %v650 = vsel %vm648, %v644, 0
        %v653 = vsel %vm648, %v645, 0
        %v656 = vsel %vm648, %v646, 0
        %v659 = vsel %vm648, %v647, 0
        %661 = vmatprep.subr.bf16.mxu0 %v557
        %662 = vmatpush1.bf16.msra.mxu0 %v556
        %663 = vmatprep.subr.bf16.mxu0 %v561
        %664 = vmatpush1.bf16.msra.mxu0 %v560
        %665 = vmatprep.subr.bf16.mxu0 %v565
        %666 = vmatpush1.bf16.msra.mxu0 %v564
        %667 = vmatprep.subr.bf16.mxu0 %v569
        %668 = vmatpush1.bf16.msra.mxu0 %v568
        %669 = vmatprep.subr.bf16.mxu0 0
        %670 = vmatpush1.bf16.msra.mxu0 0
        %671 = vmatprep.subr.bf16.mxu0 0
        %672 = vmatpush1.bf16.msra.mxu0 0
        %673 = vmatprep.subr.bf16.mxu0 0
        %674 = vmatpush1.bf16.msra.mxu0 0
        %675 = vmatprep.subr.bf16.mxu0 0
        %676 = vmatpush1.bf16.msra.mxu0 0
        %677 = vmatprep.subr.bf16.mxu0 0
        %678 = vmatpush1.bf16.msra.mxu0 0
        %679 = vmatprep.subr.bf16.mxu0 0
        %680 = vmatpush1.bf16.msra.mxu0 0
        %681 = vmatprep.subr.bf16.mxu0 0
        %682 = vmatpush1.bf16.msra.mxu0 0
        %683 = vmatprep.subr.bf16.mxu0 0
        %684 = vmatpush1.bf16.msra.mxu0 0
        %685 = vmatprep.subr.bf16.mxu0 0
        %686 = vmatpush1.bf16.msra.mxu0 0
        %687 = vmatprep.subr.bf16.mxu0 0
        %688 = vmatpush1.bf16.msra.mxu0 0
        %689 = vmatprep.subr.bf16.mxu0 0
        %690 = vmatpush1.bf16.msra.mxu0 0
        %691 = vmatprep.subr.bf16.mxu0 0
        %692 = vmatpush1.bf16.msra.mxu0 0
        %693 = vmatprep.mubr.bf16.mxu0 0
        %694 = vmatmul.mubr.bf16.gmra.mrb[0].mxu0 %v650
        %v695 = vpop.f32.mrb[0].mxu0
        %v696 = vadd.f32 %v591, %v695
        %v697 = vpop.f32.mrb[0].mxu0
        %v698 = vadd.f32 %v591, %v697
        %v699 = vpop.f32.mrb[0].mxu0
        %v700 = vadd.f32 %v596, %v699
        %v701 = vpop.f32.mrb[0].mxu0
        %v702 = vadd.f32 %v596, %v701
        %703 = vmatprep.mubr.bf16.mxu0 0
        %704 = vmatmul.mubr.bf16.gmra.mrb[0].mxu0 %v653
        %v705 = vpop.f32.mrb[0].mxu0
        %v706 = vadd.f32 %v601, %v705
        %v707 = vpop.f32.mrb[0].mxu0
        %v708 = vadd.f32 %v601, %v707
        %v709 = vpop.f32.mrb[0].mxu0
        %v710 = vadd.f32 %v606, %v709
        %v711 = vpop.f32.mrb[0].mxu0
        %v712 = vadd.f32 %v606, %v711
        %713 = vmatprep.mubr.bf16.mxu0 0
        %714 = vmatmul.mubr.bf16.gmra.mrb[0].mxu0 %v656
        %v715 = vpop.f32.mrb[0].mxu0
        %v716 = vadd.f32 %v611, %v715
        %v717 = vpop.f32.mrb[0].mxu0
        %v718 = vadd.f32 %v611, %v717
        %v719 = vpop.f32.mrb[0].mxu0
        %v720 = vadd.f32 %v616, %v719
        %v721 = vpop.f32.mrb[0].mxu0
        %v722 = vadd.f32 %v616, %v721
        %723 = vmatprep.mubr.bf16.mxu0 0
        %724 = vmatmul.mubr.bf16.gmra.mrb[0].mxu0 %v659
        %v725 = vpop.f32.mrb[0].mxu0
        %v726 = vadd.f32 %v621, %v725
        %v727 = vpop.f32.mrb[0].mxu0
        %v728 = vadd.f32 %v621, %v727
        %v729 = vpop.f32.mrb[0].mxu0
        %v730 = vadd.f32 %v626, %v729
        %v731 = vpop.f32.mrb[0].mxu0
        %v732 = vadd.f32 %v626, %v731
        %733 = vdwg.mxu0
        %734 = vmatprep.subr.bf16.mxu0 %v559
        %735 = vmatpush1.bf16.msra.mxu0 %v558
        %736 = vmatprep.subr.bf16.mxu0 %v563
        %737 = vmatpush1.bf16.msra.mxu0 %v562
        %738 = vmatprep.subr.bf16.mxu0 %v567
        %739 = vmatpush1.bf16.msra.mxu0 %v566
        %740 = vmatprep.subr.bf16.mxu0 %v571
        %741 = vmatpush1.bf16.msra.mxu0 %v570
        %742 = vmatprep.subr.bf16.mxu0 0
        %743 = vmatpush1.bf16.msra.mxu0 0
        %744 = vmatprep.subr.bf16.mxu0 0
        %745 = vmatpush1.bf16.msra.mxu0 0
        %746 = vmatprep.subr.bf16.mxu0 0
        %747 = vmatpush1.bf16.msra.mxu0 0
        %748 = vmatprep.subr.bf16.mxu0 0
        %749 = vmatpush1.bf16.msra.mxu0 0
        %750 = vmatprep.subr.bf16.mxu0 0
        %751 = vmatpush1.bf16.msra.mxu0 0
        %752 = vmatprep.subr.bf16.mxu0 0
        %753 = vmatpush1.bf16.msra.mxu0 0
        %754 = vmatprep.subr.bf16.mxu0 0
        %755 = vmatpush1.bf16.msra.mxu0 0
        %756 = vmatprep.subr.bf16.mxu0 0
        %757 = vmatpush1.bf16.msra.mxu0 0
        %758 = vmatprep.subr.bf16.mxu0 0
        %759 = vmatpush1.bf16.msra.mxu0 0
        %760 = vmatprep.subr.bf16.mxu0 0
        %761 = vmatpush1.bf16.msra.mxu0 0
        %762 = vmatprep.subr.bf16.mxu0 0
        %763 = vmatpush1.bf16.msra.mxu0 0
        %764 = vmatprep.subr.bf16.mxu0 0
        %765 = vmatpush1.bf16.msra.mxu0 0
        %766 = vmatprep.mubr.bf16.mxu0 0
        %767 = vmatmul.mubr.bf16.gmra.mrb[0].mxu0 %v650
        %v768 = vpop.f32.mrb[0].mxu0
        %v769 = vadd.f32 %v591, %v768
        %v770 = vpop.f32.mrb[0].mxu0
        %v771 = vadd.f32 %v591, %v770
        %v772 = vpop.f32.mrb[0].mxu0
        %v773 = vadd.f32 %v596, %v772
        %v774 = vpop.f32.mrb[0].mxu0
        %v775 = vadd.f32 %v596, %v774
        %776 = vmatprep.mubr.bf16.mxu0 0
        %777 = vmatmul.mubr.bf16.gmra.mrb[0].mxu0 %v653
        %v778 = vpop.f32.mrb[0].mxu0
        %v779 = vadd.f32 %v601, %v778
        %v780 = vpop.f32.mrb[0].mxu0
        %v781 = vadd.f32 %v601, %v780
        %v782 = vpop.f32.mrb[0].mxu0
        %v783 = vadd.f32 %v606, %v782
        %v784 = vpop.f32.mrb[0].mxu0
        %v785 = vadd.f32 %v606, %v784
        %786 = vmatprep.mubr.bf16.mxu0 0
        %787 = vmatmul.mubr.bf16.gmra.mrb[0].mxu0 %v656
        %v788 = vpop.f32.mrb[0].mxu0
        %v789 = vadd.f32 %v611, %v788
        %v790 = vpop.f32.mrb[0].mxu0
        %v791 = vadd.f32 %v611, %v790
        %v792 = vpop.f32.mrb[0].mxu0
        %v793 = vadd.f32 %v616, %v792
        %v794 = vpop.f32.mrb[0].mxu0
        %v795 = vadd.f32 %v616, %v794
        %796 = vmatprep.mubr.bf16.mxu0 0
        %797 = vmatmul.mubr.bf16.gmra.mrb[0].mxu0 %v659
        %v798 = vpop.f32.mrb[0].mxu0
        %v799 = vadd.f32 %v621, %v798
        %v800 = vpop.f32.mrb[0].mxu0
        %v801 = vadd.f32 %v621, %v800
        %v802 = vpop.f32.mrb[0].mxu0
        %v803 = vadd.f32 %v626, %v802
        %v804 = vpop.f32.mrb[0].mxu0
        %v805 = vadd.f32 %v626, %v804
        %806 = vdwg.mxu0
        %v807 = vmul.f32 %v696, 0.5
        %v808 = vmul.f32 %v698, 0.5
        %v809 = vmul.f32 %v769, 0.5
        %v810 = vmul.f32 %v771, 0.5
        %v811 = vmul.f32 %v700, 0.5
        %v812 = vmul.f32 %v702, 0.5
        %v813 = vmul.f32 %v773, 0.5
        %v814 = vmul.f32 %v775, 0.5
        %v815 = vmul.f32 %v706, 0.5
        %v816 = vmul.f32 %v708, 0.5
        %v817 = vmul.f32 %v779, 0.5
        %v818 = vmul.f32 %v781, 0.5
        %v819 = vmul.f32 %v710, 0.5
        %v820 = vmul.f32 %v712, 0.5
        %v821 = vmul.f32 %v783, 0.5
        %v822 = vmul.f32 %v785, 0.5
        %v823 = vmul.f32 %v716, 0.5
        %v824 = vmul.f32 %v718, 0.5
        %v825 = vmul.f32 %v789, 0.5
        %v826 = vmul.f32 %v791, 0.5
        %v827 = vmul.f32 %v720, 0.5
        %v828 = vmul.f32 %v722, 0.5
        %v829 = vmul.f32 %v793, 0.5
        %v830 = vmul.f32 %v795, 0.5
        %v831 = vmul.f32 %v726, 0.5
        %v832 = vmul.f32 %v728, 0.5
        %v833 = vmul.f32 %v799, 0.5
        %v834 = vmul.f32 %v801, 0.5
        %v835 = vmul.f32 %v730, 0.5
        %v836 = vmul.f32 %v732, 0.5
        %v837 = vmul.f32 %v803, 0.5
        %v838 = vmul.f32 %v805, 0.5
        %v839 = vmul.f32 %v696, 0.044715
        %v840 = vmul.f32 %v698, 0.044715
        %v841 = vmul.f32 %v769, 0.044715
        %v842 = vmul.f32 %v771, 0.044715
        %v843 = vmul.f32 %v700, 0.044715
        %v844 = vmul.f32 %v702, 0.044715
        %v845 = vmul.f32 %v773, 0.044715
        %v846 = vmul.f32 %v775, 0.044715
        %v847 = vmul.f32 %v706, 0.044715
        %v848 = vmul.f32 %v708, 0.044715
        %v849 = vmul.f32 %v779, 0.044715
        %v850 = vmul.f32 %v781, 0.044715
        %v851 = vmul.f32 %v710, 0.044715
        %v852 = vmul.f32 %v712, 0.044715
        %v853 = vmul.f32 %v783, 0.044715
        %v854 = vmul.f32 %v785, 0.044715
        %v855 = vmul.f32 %v716, 0.044715
        %v856 = vmul.f32 %v718, 0.044715
        %v857 = vmul.f32 %v789, 0.044715
        %v858 = vmul.f32 %v791, 0.044715
        %v859 = vmul.f32 %v720, 0.044715
        %v860 = vmul.f32 %v722, 0.044715
        %v861 = vmul.f32 %v793, 0.044715
        %v862 = vmul.f32 %v795, 0.044715
        %v863 = vmul.f32 %v726, 0.044715
        %v864 = vmul.f32 %v728, 0.044715
        %v865 = vmul.f32 %v799, 0.044715
        %v866 = vmul.f32 %v801, 0.044715
        %v867 = vmul.f32 %v730, 0.044715
        %v868 = vmul.f32 %v732, 0.044715
        %v869 = vmul.f32 %v803, 0.044715
        %v870 = vmul.f32 %v805, 0.044715
        %v871 = vmul.f32 %v839, %v696
        %v872 = vmul.f32 %v840, %v698
        %v873 = vmul.f32 %v841, %v769
        %v874 = vmul.f32 %v842, %v771
        %v875 = vmul.f32 %v843, %v700
        %v876 = vmul.f32 %v844, %v702
        %v877 = vmul.f32 %v845, %v773
        %v878 = vmul.f32 %v846, %v775
        %v879 = vmul.f32 %v847, %v706
        %v880 = vmul.f32 %v848, %v708
        %v881 = vmul.f32 %v849, %v779
        %v882 = vmul.f32 %v850, %v781
        %v883 = vmul.f32 %v851, %v710
        %v884 = vmul.f32 %v852, %v712
        %v885 = vmul.f32 %v853, %v783
        %v886 = vmul.f32 %v854, %v785
        %v887 = vmul.f32 %v855, %v716
        %v888 = vmul.f32 %v856, %v718
        %v889 = vmul.f32 %v857, %v789
        %v890 = vmul.f32 %v858, %v791
        %v891 = vmul.f32 %v859, %v720
        %v892 = vmul.f32 %v860, %v722
        %v893 = vmul.f32 %v861, %v793
        %v894 = vmul.f32 %v862, %v795
        %v895 = vmul.f32 %v863, %v726
        %v896 = vmul.f32 %v864, %v728
        %v897 = vmul.f32 %v865, %v799
        %v898 = vmul.f32 %v866, %v801
        %v899 = vmul.f32 %v867, %v730
        %v900 = vmul.f32 %v868, %v732
        %v901 = vmul.f32 %v869, %v803
        %v902 = vmul.f32 %v870, %v805
        %v903 = vmul.f32 %v871, %v696
        %v904 = vmul.f32 %v872, %v698
        %v905 = vmul.f32 %v873, %v769
        %v906 = vmul.f32 %v874, %v771
        %v907 = vmul.f32 %v875, %v700
        %v908 = vmul.f32 %v876, %v702
        %v909 = vmul.f32 %v877, %v773
        %v910 = vmul.f32 %v878, %v775
        %v911 = vmul.f32 %v879, %v706
        %v912 = vmul.f32 %v880, %v708
        %v913 = vmul.f32 %v881, %v779
        %v914 = vmul.f32 %v882, %v781
        %v915 = vmul.f32 %v883, %v710
        %v916 = vmul.f32 %v884, %v712
        %v917 = vmul.f32 %v885, %v783
        %v918 = vmul.f32 %v886, %v785
        %v919 = vmul.f32 %v887, %v716
        %v920 = vmul.f32 %v888, %v718
        %v921 = vmul.f32 %v889, %v789
        %v922 = vmul.f32 %v890, %v791
        %v923 = vmul.f32 %v891, %v720
        %v924 = vmul.f32 %v892, %v722
        %v925 = vmul.f32 %v893, %v793
        %v926 = vmul.f32 %v894, %v795
        %v927 = vmul.f32 %v895, %v726
        %v928 = vmul.f32 %v896, %v728
        %v929 = vmul.f32 %v897, %v799
        %v930 = vmul.f32 %v898, %v801
        %v931 = vmul.f32 %v899, %v730
        %v932 = vmul.f32 %v900, %v732
        %v933 = vmul.f32 %v901, %v803
        %v934 = vmul.f32 %v902, %v805
        %v935 = vadd.f32 %v696, %v903
        %v936 = vadd.f32 %v698, %v904
        %v937 = vadd.f32 %v769, %v905
        %v938 = vadd.f32 %v771, %v906
        %v939 = vadd.f32 %v700, %v907
        %v940 = vadd.f32 %v702, %v908
        %v941 = vadd.f32 %v773, %v909
        %v942 = vadd.f32 %v775, %v910
        %v943 = vadd.f32 %v706, %v911
        %v944 = vadd.f32 %v708, %v912
        %v945 = vadd.f32 %v779, %v913
        %v946 = vadd.f32 %v781, %v914
        %v947 = vadd.f32 %v710, %v915
        %v948 = vadd.f32 %v712, %v916
        %v949 = vadd.f32 %v783, %v917
        %v950 = vadd.f32 %v785, %v918
        %v951 = vadd.f32 %v716, %v919
        %v952 = vadd.f32 %v718, %v920
        %v953 = vadd.f32 %v789, %v921
        %v954 = vadd.f32 %v791, %v922
        %v955 = vadd.f32 %v720, %v923
        %v956 = vadd.f32 %v722, %v924
        %v957 = vadd.f32 %v793, %v925
        %v958 = vadd.f32 %v795, %v926
        %v959 = vadd.f32 %v726, %v927
        %v960 = vadd.f32 %v728, %v928
        %v961 = vadd.f32 %v799, %v929
        %v962 = vadd.f32 %v801, %v930
        %v963 = vadd.f32 %v730, %v931
        %v964 = vadd.f32 %v732, %v932
        %v965 = vadd.f32 %v803, %v933
        %v966 = vadd.f32 %v805, %v934
        %v967 = vmul.f32 %v935, 0.7978846
        %v968 = vmul.f32 %v936, 0.7978846
        %v969 = vmul.f32 %v937, 0.7978846
        %v970 = vmul.f32 %v938, 0.7978846
        %v971 = vmul.f32 %v939, 0.7978846
        %v972 = vmul.f32 %v940, 0.7978846
        %v973 = vmul.f32 %v941, 0.7978846
        %v974 = vmul.f32 %v942, 0.7978846
        %v975 = vmul.f32 %v943, 0.7978846
        %v976 = vmul.f32 %v944, 0.7978846
        %v977 = vmul.f32 %v945, 0.7978846
        %v978 = vmul.f32 %v946, 0.7978846
        %v979 = vmul.f32 %v947, 0.7978846
        %v980 = vmul.f32 %v948, 0.7978846
        %v981 = vmul.f32 %v949, 0.7978846
        %v982 = vmul.f32 %v950, 0.7978846
        %v983 = vmul.f32 %v951, 0.7978846
        %v984 = vmul.f32 %v952, 0.7978846
        %v985 = vmul.f32 %v953, 0.7978846
        %v986 = vmul.f32 %v954, 0.7978846
        %v987 = vmul.f32 %v955, 0.7978846
        %v988 = vmul.f32 %v956, 0.7978846
        %v989 = vmul.f32 %v957, 0.7978846
        %v990 = vmul.f32 %v958, 0.7978846
        %v991 = vmul.f32 %v959, 0.7978846
        %v992 = vmul.f32 %v960, 0.7978846
        %v993 = vmul.f32 %v961, 0.7978846
        %v994 = vmul.f32 %v962, 0.7978846
        %v995 = vmul.f32 %v963, 0.7978846
        %v996 = vmul.f32 %v964, 0.7978846
        %v997 = vmul.f32 %v965, 0.7978846
        %v998 = vmul.f32 %v966, 0.7978846
        %v999 = vtanh.pop %v967
        %v1000 = vtanh.pop %v968
        %v1001 = vtanh.pop %v969
        %v1002 = vtanh.pop %v970
        %v1003 = vtanh.pop %v971
        %v1004 = vtanh.pop %v972
        %v1005 = vtanh.pop %v973
        %v1006 = vtanh.pop %v974
        %v1007 = vtanh.pop %v975
        %v1008 = vtanh.pop %v976
        %v1009 = vtanh.pop %v977
        %v1010 = vtanh.pop %v978
        %v1011 = vtanh.pop %v979
        %v1012 = vtanh.pop %v980
        %v1013 = vtanh.pop %v981
        %v1014 = vtanh.pop %v982
        %v1015 = vtanh.pop %v983
        %v1016 = vtanh.pop %v984
        %v1017 = vtanh.pop %v985
        %v1018 = vtanh.pop %v986
        %v1019 = vtanh.pop %v987
        %v1020 = vtanh.pop %v988
        %v1021 = vtanh.pop %v989
        %v1022 = vtanh.pop %v990
        %v1023 = vtanh.pop %v991
        %v1024 = vtanh.pop %v992
        %v1025 = vtanh.pop %v993
        %v1026 = vtanh.pop %v994
        %v1027 = vtanh.pop %v995
        %v1028 = vtanh.pop %v996
        %v1029 = vtanh.pop %v997
        %v1030 = vtanh.pop %v998
        %v1031 = vadd.f32 %v999, 1.0
        %v1032 = vadd.f32 %v1000, 1.0
        %v1033 = vadd.f32 %v1001, 1.0
        %v1034 = vadd.f32 %v1002, 1.0
        %v1035 = vadd.f32 %v1003, 1.0
        %v1036 = vadd.f32 %v1004, 1.0
        %v1037 = vadd.f32 %v1005, 1.0
        %v1038 = vadd.f32 %v1006, 1.0
        %v1039 = vadd.f32 %v1007, 1.0
        %v1040 = vadd.f32 %v1008, 1.0
        %v1041 = vadd.f32 %v1009, 1.0
        %v1042 = vadd.f32 %v1010, 1.0
        %v1043 = vadd.f32 %v1011, 1.0
        %v1044 = vadd.f32 %v1012, 1.0
        %v1045 = vadd.f32 %v1013, 1.0
        %v1046 = vadd.f32 %v1014, 1.0
        %v1047 = vadd.f32 %v1015, 1.0
        %v1048 = vadd.f32 %v1016, 1.0
        %v1049 = vadd.f32 %v1017, 1.0
        %v1050 = vadd.f32 %v1018, 1.0
        %v1051 = vadd.f32 %v1019, 1.0
        %v1052 = vadd.f32 %v1020, 1.0
        %v1053 = vadd.f32 %v1021, 1.0
        %v1054 = vadd.f32 %v1022, 1.0
        %v1055 = vadd.f32 %v1023, 1.0
        %v1056 = vadd.f32 %v1024, 1.0
        %v1057 = vadd.f32 %v1025, 1.0
        %v1058 = vadd.f32 %v1026, 1.0
        %v1059 = vadd.f32 %v1027, 1.0
        %v1060 = vadd.f32 %v1028, 1.0
        %v1061 = vadd.f32 %v1029, 1.0
        %v1062 = vadd.f32 %v1030, 1.0
        %v1063 = vmul.f32 %v807, %v1031
        %v1064 = vmul.f32 %v808, %v1032
        %v1065 = vmul.f32 %v809, %v1033
        %v1066 = vmul.f32 %v810, %v1034
        %v1067 = vmul.f32 %v811, %v1035
        %v1068 = vmul.f32 %v812, %v1036
        %v1069 = vmul.f32 %v813, %v1037
        %v1070 = vmul.f32 %v814, %v1038
        %v1071 = vmul.f32 %v815, %v1039
        %v1072 = vmul.f32 %v816, %v1040
        %v1073 = vmul.f32 %v817, %v1041
        %v1074 = vmul.f32 %v818, %v1042
        %v1075 = vmul.f32 %v819, %v1043
        %v1076 = vmul.f32 %v820, %v1044
        %v1077 = vmul.f32 %v821, %v1045
        %v1078 = vmul.f32 %v822, %v1046
        %v1079 = vmul.f32 %v823, %v1047
        %v1080 = vmul.f32 %v824, %v1048
        %v1081 = vmul.f32 %v825, %v1049
        %v1082 = vmul.f32 %v826, %v1050
        %v1083 = vmul.f32 %v827, %v1051
        %v1084 = vmul.f32 %v828, %v1052
        %v1085 = vmul.f32 %v829, %v1053
        %v1086 = vmul.f32 %v830, %v1054
        %v1087 = vmul.f32 %v831, %v1055
        %v1088 = vmul.f32 %v832, %v1056
        %v1089 = vmul.f32 %v833, %v1057
        %v1090 = vmul.f32 %v834, %v1058
        %v1091 = vmul.f32 %v835, %v1059
        %v1092 = vmul.f32 %v836, %v1060
        %v1093 = vmul.f32 %v837, %v1061
        %v1094 = vmul.f32 %v838, %v1062
        %v1095 = vld [vmem:[%s3] sm:$0xf]
        %v1096 = vld [vmem:[%s3 + $0x4] sm:$0xf]
        %v1097 = vld [vmem:[%s3 + $0x8] sm:$0xf]
        %v1098 = vld [vmem:[%s3 + $0xc] sm:$0xf]
        %v1099 = vld [vmem:[%s3 + $0x10] sm:$0xf]
        %v1100 = vld [vmem:[%s3 + $0x14] sm:$0xf]
        %v1101 = vld [vmem:[%s3 + $0x18] sm:$0xf]
        %v1102 = vld [vmem:[%s3 + $0x1c] sm:$0xf]
        %v1103 = vpack.c.bf16 %v1067, %v1063
        %v1104 = vpack.c.bf16 %v1068, %v1064
        %v1105 = vpack.c.bf16 %v1069, %v1065
        %v1106 = vpack.c.bf16 %v1070, %v1066
        %v1107 = vpack.c.bf16 %v1075, %v1071
        %v1108 = vpack.c.bf16 %v1076, %v1072
        %v1109 = vpack.c.bf16 %v1077, %v1073
        %v1110 = vpack.c.bf16 %v1078, %v1074
        %v1111 = vpack.c.bf16 %v1083, %v1079
        %v1112 = vpack.c.bf16 %v1084, %v1080
        %v1113 = vpack.c.bf16 %v1085, %v1081
        %v1114 = vpack.c.bf16 %v1086, %v1082
        %v1115 = vpack.c.bf16 %v1091, %v1087
        %v1116 = vpack.c.bf16 %v1092, %v1088
        %v1117 = vpack.c.bf16 %v1093, %v1089
        %v1118 = vpack.c.bf16 %v1094, %v1090
        %v1119 = vld [vmem:[%s4] sm:$0xff]
        %v1120 = vld [vmem:[%s4 + $0x8] sm:$0xff]
        %v1121 = vld [vmem:[%s4 + $0x10] sm:$0xff]
        %v1122 = vld [vmem:[%s4 + $0x18] sm:$0xff]
        %v1123 = vld [vmem:[%s4 + $0x20] sm:$0xff]
        %v1124 = vld [vmem:[%s4 + $0x28] sm:$0xff]
        %v1125 = vld [vmem:[%s4 + $0x30] sm:$0xff]
        %v1126 = vld [vmem:[%s4 + $0x38] sm:$0xff]
        %1128 = vset.pattern.permute.xlu0 0
        %1129 = vperm.xlu0 %1128, %v1119
        %v1130 = vpop.permute.xlu0 %1129
        %1133 = vset.pattern.permute.xlu0 0
        %1134 = vperm.xlu0 %1133, %v1120
        %v1135 = vpop.permute.xlu0 %1134
        %1138 = vset.pattern.permute.xlu0 0
        %1139 = vperm.xlu0 %1138, %v1121
        %v1140 = vpop.permute.xlu0 %1139
        %1143 = vset.pattern.permute.xlu0 0
        %1144 = vperm.xlu0 %1143, %v1122
        %v1145 = vpop.permute.xlu0 %1144
        %1148 = vset.pattern.permute.xlu0 0
        %1149 = vperm.xlu0 %1148, %v1123
        %v1150 = vpop.permute.xlu0 %1149
        %1153 = vset.pattern.permute.xlu0 0
        %1154 = vperm.xlu0 %1153, %v1124
        %v1155 = vpop.permute.xlu0 %1154
        %1158 = vset.pattern.permute.xlu0 0
        %1159 = vperm.xlu0 %1158, %v1125
        %v1160 = vpop.permute.xlu0 %1159
        %1163 = vset.pattern.permute.xlu0 0
        %1164 = vperm.xlu0 %1163, %v1126
        %v1165 = vpop.permute.xlu0 %1164
        %v1175 = vunpack.c.l.b16 %v1095
        %v1176 = vunpack.c.l.b16 %v1096
        %v1177 = vunpack.c.l.b16 %v1097
        %v1178 = vunpack.c.l.b16 %v1098
        %v1179 = vunpack.c.l.b16 %v1099
        %v1180 = vunpack.c.l.b16 %v1100
        %v1181 = vunpack.c.l.b16 %v1101
        %v1182 = vunpack.c.l.b16 %v1102
        %v1183 = vpack.c.b16 %v1176, %v1175
        %v1184 = vpack.c.b16 %v1178, %v1177
        %v1185 = vpack.c.b16 %v1180, %v1179
        %v1186 = vpack.c.b16 %v1182, %v1181
        %v1188 = vsel %vm648, %v1183, 0
        %v1191 = vsel %vm648, %v1184, 0
        %v1194 = vsel %vm648, %v1185, 0
        %v1197 = vsel %vm648, %v1186, 0
        %1199 = vmatprep.subr.bf16.mxu0 %v1104
        %1200 = vmatpush1.bf16.msra.mxu0 %v1103
        %1201 = vmatprep.subr.bf16.mxu0 %v1108
        %1202 = vmatpush1.bf16.msra.mxu0 %v1107
        %1203 = vmatprep.subr.bf16.mxu0 %v1112
        %1204 = vmatpush1.bf16.msra.mxu0 %v1111
        %1205 = vmatprep.subr.bf16.mxu0 %v1116
        %1206 = vmatpush1.bf16.msra.mxu0 %v1115
        %1207 = vmatprep.subr.bf16.mxu0 0
        %1208 = vmatpush1.bf16.msra.mxu0 0
        %1209 = vmatprep.subr.bf16.mxu0 0
        %1210 = vmatpush1.bf16.msra.mxu0 0
        %1211 = vmatprep.subr.bf16.mxu0 0
        %1212 = vmatpush1.bf16.msra.mxu0 0
        %1213 = vmatprep.subr.bf16.mxu0 0
        %1214 = vmatpush1.bf16.msra.mxu0 0
        %1215 = vmatprep.subr.bf16.mxu0 0
        %1216 = vmatpush1.bf16.msra.mxu0 0
        %1217 = vmatprep.subr.bf16.mxu0 0
        %1218 = vmatpush1.bf16.msra.mxu0 0
        %1219 = vmatprep.subr.bf16.mxu0 0
        %1220 = vmatpush1.bf16.msra.mxu0 0
        %1221 = vmatprep.subr.bf16.mxu0 0
        %1222 = vmatpush1.bf16.msra.mxu0 0
        %1223 = vmatprep.subr.bf16.mxu0 0
        %1224 = vmatpush1.bf16.msra.mxu0 0
        %1225 = vmatprep.subr.bf16.mxu0 0
        %1226 = vmatpush1.bf16.msra.mxu0 0
        %1227 = vmatprep.subr.bf16.mxu0 0
        %1228 = vmatpush1.bf16.msra.mxu0 0
        %1229 = vmatprep.subr.bf16.mxu0 0
        %1230 = vmatpush1.bf16.msra.mxu0 0
        %1231 = vmatprep.mubr.bf16.mxu0 0
        %1232 = vmatmul.mubr.bf16.gmra.mrb[0].mxu0 %v1188
        %v1233 = vpop.f32.mrb[0].mxu0
        %v1234 = vadd.f32 %v1130, %v1233
        %v1235 = vpop.f32.mrb[0].mxu0
        %v1236 = vadd.f32 %v1130, %v1235
        %v1237 = vpop.f32.mrb[0].mxu0
        %v1238 = vadd.f32 %v1135, %v1237
        %v1239 = vpop.f32.mrb[0].mxu0
        %v1240 = vadd.f32 %v1135, %v1239
        %1241 = vmatprep.mubr.bf16.mxu0 0
        %1242 = vmatmul.mubr.bf16.gmra.mrb[0].mxu0 %v1191
        %v1243 = vpop.f32.mrb[0].mxu0
        %v1244 = vadd.f32 %v1140, %v1243
        %v1245 = vpop.f32.mrb[0].mxu0
        %v1246 = vadd.f32 %v1140, %v1245
        %v1247 = vpop.f32.mrb[0].mxu0
        %v1248 = vadd.f32 %v1145, %v1247
        %v1249 = vpop.f32.mrb[0].mxu0
        %v1250 = vadd.f32 %v1145, %v1249
        %1251 = vmatprep.mubr.bf16.mxu0 0
        %1252 = vmatmul.mubr.bf16.gmra.mrb[0].mxu0 %v1194
        %v1253 = vpop.f32.mrb[0].mxu0
        %v1254 = vadd.f32 %v1150, %v1253
        %v1255 = vpop.f32.mrb[0].mxu0
        %v1256 = vadd.f32 %v1150, %v1255
        %v1257 = vpop.f32.mrb[0].mxu0
        %v1258 = vadd.f32 %v1155, %v1257
        %v1259 = vpop.f32.mrb[0].mxu0
        %v1260 = vadd.f32 %v1155, %v1259
        %1261 = vmatprep.mubr.bf16.mxu0 0
        %1262 = vmatmul.mubr.bf16.gmra.mrb[0].mxu0 %v1197
        %v1263 = vpop.f32.mrb[0].mxu0
        %v1264 = vadd.f32 %v1160, %v1263
        %v1265 = vpop.f32.mrb[0].mxu0
        %v1266 = vadd.f32 %v1160, %v1265
        %v1267 = vpop.f32.mrb[0].mxu0
        %v1268 = vadd.f32 %v1165, %v1267
        %v1269 = vpop.f32.mrb[0].mxu0
        %v1270 = vadd.f32 %v1165, %v1269
        %1271 = vdwg.mxu0
        %1272 = vmatprep.subr.bf16.mxu0 %v1106
        %1273 = vmatpush1.bf16.msra.mxu0 %v1105
        %1274 = vmatprep.subr.bf16.mxu0 %v1110
        %1275 = vmatpush1.bf16.msra.mxu0 %v1109
        %1276 = vmatprep.subr.bf16.mxu0 %v1114
        %1277 = vmatpush1.bf16.msra.mxu0 %v1113
        %1278 = vmatprep.subr.bf16.mxu0 %v1118
        %1279 = vmatpush1.bf16.msra.mxu0 %v1117
        %1280 = vmatprep.subr.bf16.mxu0 0
        %1281 = vmatpush1.bf16.msra.mxu0 0
        %1282 = vmatprep.subr.bf16.mxu0 0
        %1283 = vmatpush1.bf16.msra.mxu0 0
        %1284 = vmatprep.subr.bf16.mxu0 0
        %1285 = vmatpush1.bf16.msra.mxu0 0
        %1286 = vmatprep.subr.bf16.mxu0 0
        %1287 = vmatpush1.bf16.msra.mxu0 0
        %1288 = vmatprep.subr.bf16.mxu0 0
        %1289 = vmatpush1.bf16.msra.mxu0 0
        %1290 = vmatprep.subr.bf16.mxu0 0
        %1291 = vmatpush1.bf16.msra.mxu0 0
        %1292 = vmatprep.subr.bf16.mxu0 0
        %1293 = vmatpush1.bf16.msra.mxu0 0
        %1294 = vmatprep.subr.bf16.mxu0 0
        %1295 = vmatpush1.bf16.msra.mxu0 0
        %1296 = vmatprep.subr.bf16.mxu0 0
        %1297 = vmatpush1.bf16.msra.mxu0 0
        %1298 = vmatprep.subr.bf16.mxu0 0
        %1299 = vmatpush1.bf16.msra.mxu0 0
        %1300 = vmatprep.subr.bf16.mxu0 0
        %1301 = vmatpush1.bf16.msra.mxu0 0
        %1302 = vmatprep.subr.bf16.mxu0 0
        %1303 = vmatpush1.bf16.msra.mxu0 0
        %1304 = vmatprep.mubr.bf16.mxu0 0
        %1305 = vmatmul.mubr.bf16.gmra.mrb[0].mxu0 %v1188
        %v1306 = vpop.f32.mrb[0].mxu0
        %v1307 = vadd.f32 %v1130, %v1306
        %v1308 = vpop.f32.mrb[0].mxu0
        %v1309 = vadd.f32 %v1130, %v1308
        %v1310 = vpop.f32.mrb[0].mxu0
        %v1311 = vadd.f32 %v1135, %v1310
        %v1312 = vpop.f32.mrb[0].mxu0
        %v1313 = vadd.f32 %v1135, %v1312
        %1314 = vmatprep.mubr.bf16.mxu0 0
        %1315 = vmatmul.mubr.bf16.gmra.mrb[0].mxu0 %v1191
        %v1316 = vpop.f32.mrb[0].mxu0
        %v1317 = vadd.f32 %v1140, %v1316
        %v1318 = vpop.f32.mrb[0].mxu0
        %v1319 = vadd.f32 %v1140, %v1318
        %v1320 = vpop.f32.mrb[0].mxu0
        %v1321 = vadd.f32 %v1145, %v1320
        %v1322 = vpop.f32.mrb[0].mxu0
        %v1323 = vadd.f32 %v1145, %v1322
        %1324 = vmatprep.mubr.bf16.mxu0 0
        %1325 = vmatmul.mubr.bf16.gmra.mrb[0].mxu0 %v1194
        %v1326 = vpop.f32.mrb[0].mxu0
        %v1327 = vadd.f32 %v1150, %v1326
        %v1328 = vpop.f32.mrb[0].mxu0
        %v1329 = vadd.f32 %v1150, %v1328
        %v1330 = vpop.f32.mrb[0].mxu0
        %v1331 = vadd.f32 %v1155, %v1330
        %v1332 = vpop.f32.mrb[0].mxu0
        %v1333 = vadd.f32 %v1155, %v1332
        %1334 = vmatprep.mubr.bf16.mxu0 0
        %1335 = vmatmul.mubr.bf16.gmra.mrb[0].mxu0 %v1197
        %v1336 = vpop.f32.mrb[0].mxu0
        %v1337 = vadd.f32 %v1160, %v1336
        %v1338 = vpop.f32.mrb[0].mxu0
        %v1339 = vadd.f32 %v1160, %v1338
        %v1340 = vpop.f32.mrb[0].mxu0
        %v1341 = vadd.f32 %v1165, %v1340
        %v1342 = vpop.f32.mrb[0].mxu0
        %v1343 = vadd.f32 %v1165, %v1342
        %1344 = vdwg.mxu0
        %v1345 = vld [vmem:[%s5] sm:$0xff]
        %v1346 = vld [vmem:[%s5 + $0x8] sm:$0xff]
        %v1347 = vld [vmem:[%s5 + $0x10] sm:$0xff]
        %v1348 = vld [vmem:[%s5 + $0x18] sm:$0xff]
        %v1349 = vld [vmem:[%s5 + $0x20] sm:$0xff]
        %v1350 = vld [vmem:[%s5 + $0x28] sm:$0xff]
        %v1351 = vld [vmem:[%s5 + $0x30] sm:$0xff]
        %v1352 = vld [vmem:[%s5 + $0x38] sm:$0xff]
        %v1353 = vld [vmem:[%s6] sm:$0xff]
        %v1354 = vld [vmem:[%s6 + $0x8] sm:$0xff]
        %v1355 = vld [vmem:[%s6 + $0x10] sm:$0xff]
        %v1356 = vld [vmem:[%s6 + $0x18] sm:$0xff]
        %v1357 = vld [vmem:[%s6 + $0x20] sm:$0xff]
        %v1358 = vld [vmem:[%s6 + $0x28] sm:$0xff]
        %v1359 = vld [vmem:[%s6 + $0x30] sm:$0xff]
        %v1360 = vld [vmem:[%s6 + $0x38] sm:$0xff]
        %v1361 = vadd.f32 %v1234, %v1238
        %v1362 = vadd.f32 %v1361, %v1244
        %v1363 = vadd.f32 %v1362, %v1248
        %v1364 = vadd.f32 %v1363, %v1254
        %v1365 = vadd.f32 %v1364, %v1258
        %v1366 = vadd.f32 %v1365, %v1264
        %v1367 = vadd.f32 %v1366, %v1268
        %v1368 = vrot.slane %v1367, 4
        %v1369 = vadd.f32 %v1367, %v1368
        %v1370 = vrot.slane %v1369, 2
        %v1371 = vadd.f32 %v1369, %v1370
        %v1372 = vrot.slane %v1371, 1
        %v1373 = vadd.f32 %v1371, %v1372
        %v1374 = vadd.f32 %v1236, %v1240
        %v1375 = vadd.f32 %v1374, %v1246
        %v1376 = vadd.f32 %v1375, %v1250
        %v1377 = vadd.f32 %v1376, %v1256
        %v1378 = vadd.f32 %v1377, %v1260
        %v1379 = vadd.f32 %v1378, %v1266
        %v1380 = vadd.f32 %v1379, %v1270
        %v1381 = vrot.slane %v1380, 4
        %v1382 = vadd.f32 %v1380, %v1381
        %v1383 = vrot.slane %v1382, 2
        %v1384 = vadd.f32 %v1382, %v1383
        %v1385 = vrot.slane %v1384, 1
        %v1386 = vadd.f32 %v1384, %v1385
        %v1387 = vadd.f32 %v1307, %v1311
        %v1388 = vadd.f32 %v1387, %v1317
        %v1389 = vadd.f32 %v1388, %v1321
        %v1390 = vadd.f32 %v1389, %v1327
        %v1391 = vadd.f32 %v1390, %v1331
        %v1392 = vadd.f32 %v1391, %v1337
        %v1393 = vadd.f32 %v1392, %v1341
        %v1394 = vrot.slane %v1393, 4
        %v1395 = vadd.f32 %v1393, %v1394
        %v1396 = vrot.slane %v1395, 2
        %v1397 = vadd.f32 %v1395, %v1396
        %v1398 = vrot.slane %v1397, 1
        %v1399 = vadd.f32 %v1397, %v1398
        %v1400 = vadd.f32 %v1309, %v1313
        %v1401 = vadd.f32 %v1400, %v1319
        %v1402 = vadd.f32 %v1401, %v1323
        %v1403 = vadd.f32 %v1402, %v1329
        %v1404 = vadd.f32 %v1403, %v1333
        %v1405 = vadd.f32 %v1404, %v1339
        %v1406 = vadd.f32 %v1405, %v1343
        %v1407 = vrot.slane %v1406, 4
        %v1408 = vadd.f32 %v1406, %v1407
        %v1409 = vrot.slane %v1408, 2
        %v1410 = vadd.f32 %v1408, %v1409
        %v1411 = vrot.slane %v1410, 1
        %v1412 = vadd.f32 %v1410, %v1411
        %v1413 = vmul.f32 %v1234, %v1234
        %v1414 = vmul.f32 %v1236, %v1236
        %v1415 = vmul.f32 %v1307, %v1307
        %v1416 = vmul.f32 %v1309, %v1309
        %v1417 = vmul.f32 %v1238, %v1238
        %v1418 = vmul.f32 %v1240, %v1240
        %v1419 = vmul.f32 %v1311, %v1311
        %v1420 = vmul.f32 %v1313, %v1313
        %v1421 = vmul.f32 %v1244, %v1244
        %v1422 = vmul.f32 %v1246, %v1246
        %v1423 = vmul.f32 %v1317, %v1317
        %v1424 = vmul.f32 %v1319, %v1319
        %v1425 = vmul.f32 %v1248, %v1248
        %v1426 = vmul.f32 %v1250, %v1250
        %v1427 = vmul.f32 %v1321, %v1321
        %v1428 = vmul.f32 %v1323, %v1323
        %v1429 = vmul.f32 %v1254, %v1254
        %v1430 = vmul.f32 %v1256, %v1256
        %v1431 = vmul.f32 %v1327, %v1327
        %v1432 = vmul.f32 %v1329, %v1329
        %v1433 = vmul.f32 %v1258, %v1258
        %v1434 = vmul.f32 %v1260, %v1260
        %v1435 = vmul.f32 %v1331, %v1331
        %v1436 = vmul.f32 %v1333, %v1333
        %v1437 = vmul.f32 %v1264, %v1264
        %v1438 = vmul.f32 %v1266, %v1266
        %v1439 = vmul.f32 %v1337, %v1337
        %v1440 = vmul.f32 %v1339, %v1339
        %v1441 = vmul.f32 %v1268, %v1268
        %v1442 = vmul.f32 %v1270, %v1270
        %v1443 = vmul.f32 %v1341, %v1341
        %v1444 = vmul.f32 %v1343, %v1343
        %v1445 = vadd.f32 %v1413, %v1417
        %v1446 = vadd.f32 %v1445, %v1421
        %v1447 = vadd.f32 %v1446, %v1425
        %v1448 = vadd.f32 %v1447, %v1429
        %v1449 = vadd.f32 %v1448, %v1433
        %v1450 = vadd.f32 %v1449, %v1437
        %v1451 = vadd.f32 %v1450, %v1441
        %v1452 = vrot.slane %v1451, 4
        %v1453 = vadd.f32 %v1451, %v1452
        %v1454 = vrot.slane %v1453, 2
        %v1455 = vadd.f32 %v1453, %v1454
        %v1456 = vrot.slane %v1455, 1
        %v1457 = vadd.f32 %v1455, %v1456
        %v1458 = vadd.f32 %v1414, %v1418
        %v1459 = vadd.f32 %v1458, %v1422
        %v1460 = vadd.f32 %v1459, %v1426
        %v1461 = vadd.f32 %v1460, %v1430
        %v1462 = vadd.f32 %v1461, %v1434
        %v1463 = vadd.f32 %v1462, %v1438
        %v1464 = vadd.f32 %v1463, %v1442
        %v1465 = vrot.slane %v1464, 4
        %v1466 = vadd.f32 %v1464, %v1465
        %v1467 = vrot.slane %v1466, 2
        %v1468 = vadd.f32 %v1466, %v1467
        %v1469 = vrot.slane %v1468, 1
        %v1470 = vadd.f32 %v1468, %v1469
        %v1471 = vadd.f32 %v1415, %v1419
        %v1472 = vadd.f32 %v1471, %v1423
        %v1473 = vadd.f32 %v1472, %v1427
        %v1474 = vadd.f32 %v1473, %v1431
        %v1475 = vadd.f32 %v1474, %v1435
        %v1476 = vadd.f32 %v1475, %v1439
        %v1477 = vadd.f32 %v1476, %v1443
        %v1478 = vrot.slane %v1477, 4
        %v1479 = vadd.f32 %v1477, %v1478
        %v1480 = vrot.slane %v1479, 2
        %v1481 = vadd.f32 %v1479, %v1480
        %v1482 = vrot.slane %v1481, 1
        %v1483 = vadd.f32 %v1481, %v1482
        %v1484 = vadd.f32 %v1416, %v1420
        %v1485 = vadd.f32 %v1484, %v1424
        %v1486 = vadd.f32 %v1485, %v1428
        %v1487 = vadd.f32 %v1486, %v1432
        %v1488 = vadd.f32 %v1487, %v1436
        %v1489 = vadd.f32 %v1488, %v1440
        %v1490 = vadd.f32 %v1489, %v1444
        %v1491 = vrot.slane %v1490, 4
        %v1492 = vadd.f32 %v1490, %v1491
        %v1493 = vrot.slane %v1492, 2
        %v1494 = vadd.f32 %v1492, %v1493
        %v1495 = vrot.slane %v1494, 1
        %v1496 = vadd.f32 %v1494, %v1495
        %v1497 = vmul.f32 %v1373, 0.015625
        %v1498 = vmul.f32 %v1386, 0.015625
        %v1499 = vmul.f32 %v1399, 0.015625
        %v1500 = vmul.f32 %v1412, 0.015625
        %v1501 = vmul.f32 %v1457, 0.015625
        %v1502 = vmul.f32 %v1470, 0.015625
        %v1503 = vmul.f32 %v1483, 0.015625
        %v1504 = vmul.f32 %v1496, 0.015625
        %v1505 = vmul.f32 %v1497, %v1497
        %v1506 = vmul.f32 %v1498, %v1498
        %v1507 = vmul.f32 %v1499, %v1499
        %v1508 = vmul.f32 %v1500, %v1500
        %v1509 = vsub.f32 %v1501, %v1505
        %v1510 = vsub.f32 %v1502, %v1506
        %v1511 = vsub.f32 %v1503, %v1507
        %v1512 = vsub.f32 %v1504, %v1508
        %v1513 = vadd.f32 %v1509, 1e-05
        %v1514 = vadd.f32 %v1510, 1e-05
        %v1515 = vadd.f32 %v1511, 1e-05
        %v1516 = vadd.f32 %v1512, 1e-05
        %v1517 = vrsqrt.pop %v1513
        %v1518 = vrsqrt.pop %v1514
        %v1519 = vrsqrt.pop %v1515
        %v1520 = vrsqrt.pop %v1516
        %v1521 = vsub.f32 %v1234, %v1497
        %v1522 = vsub.f32 %v1236, %v1498
        %v1523 = vsub.f32 %v1307, %v1499
        %v1524 = vsub.f32 %v1309, %v1500
        %v1525 = vsub.f32 %v1238, %v1497
        %v1526 = vsub.f32 %v1240, %v1498
        %v1527 = vsub.f32 %v1311, %v1499
        %v1528 = vsub.f32 %v1313, %v1500
        %v1529 = vsub.f32 %v1244, %v1497
        %v1530 = vsub.f32 %v1246, %v1498
        %v1531 = vsub.f32 %v1317, %v1499
        %v1532 = vsub.f32 %v1319, %v1500
        %v1533 = vsub.f32 %v1248, %v1497
        %v1534 = vsub.f32 %v1250, %v1498
        %v1535 = vsub.f32 %v1321, %v1499
        %v1536 = vsub.f32 %v1323, %v1500
        %v1537 = vsub.f32 %v1254, %v1497
        %v1538 = vsub.f32 %v1256, %v1498
        %v1539 = vsub.f32 %v1327, %v1499
        %v1540 = vsub.f32 %v1329, %v1500
        %v1541 = vsub.f32 %v1258, %v1497
        %v1542 = vsub.f32 %v1260, %v1498
        %v1543 = vsub.f32 %v1331, %v1499
        %v1544 = vsub.f32 %v1333, %v1500
        %v1545 = vsub.f32 %v1264, %v1497
        %v1546 = vsub.f32 %v1266, %v1498
        %v1547 = vsub.f32 %v1337, %v1499
        %v1548 = vsub.f32 %v1339, %v1500
        %v1549 = vsub.f32 %v1268, %v1497
        %v1550 = vsub.f32 %v1270, %v1498
        %v1551 = vsub.f32 %v1341, %v1499
        %v1552 = vsub.f32 %v1343, %v1500
        %v1553 = vmul.f32 %v1521, %v1517
        %v1554 = vmul.f32 %v1522, %v1518
        %v1555 = vmul.f32 %v1523, %v1519
        %v1556 = vmul.f32 %v1524, %v1520
        %v1557 = vmul.f32 %v1525, %v1517
        %v1558 = vmul.f32 %v1526, %v1518
        %v1559 = vmul.f32 %v1527, %v1519
        %v1560 = vmul.f32 %v1528, %v1520
        %v1561 = vmul.f32 %v1529, %v1517
        %v1562 = vmul.f32 %v1530, %v1518
        %v1563 = vmul.f32 %v1531, %v1519
        %v1564 = vmul.f32 %v1532, %v1520
        %v1565 = vmul.f32 %v1533, %v1517
        %v1566 = vmul.f32 %v1534, %v1518
        %v1567 = vmul.f32 %v1535, %v1519
        %v1568 = vmul.f32 %v1536, %v1520
        %v1569 = vmul.f32 %v1537, %v1517
        %v1570 = vmul.f32 %v1538, %v1518
        %v1571 = vmul.f32 %v1539, %v1519
        %v1572 = vmul.f32 %v1540, %v1520
        %v1573 = vmul.f32 %v1541, %v1517
        %v1574 = vmul.f32 %v1542, %v1518
        %v1575 = vmul.f32 %v1543, %v1519
        %v1576 = vmul.f32 %v1544, %v1520
        %v1577 = vmul.f32 %v1545, %v1517
        %v1578 = vmul.f32 %v1546, %v1518
        %v1579 = vmul.f32 %v1547, %v1519
        %v1580 = vmul.f32 %v1548, %v1520
        %v1581 = vmul.f32 %v1549, %v1517
        %v1582 = vmul.f32 %v1550, %v1518
        %v1583 = vmul.f32 %v1551, %v1519
        %v1584 = vmul.f32 %v1552, %v1520
        %1586 = vset.pattern.permute.xlu0 0
        %1587 = vperm.xlu0 %1586, %v1345
        %v1588 = vpop.permute.xlu0 %1587
        %1591 = vset.pattern.permute.xlu0 0
        %1592 = vperm.xlu0 %1591, %v1346
        %v1593 = vpop.permute.xlu0 %1592
        %1596 = vset.pattern.permute.xlu0 0
        %1597 = vperm.xlu0 %1596, %v1347
        %v1598 = vpop.permute.xlu0 %1597
        %1601 = vset.pattern.permute.xlu0 0
        %1602 = vperm.xlu0 %1601, %v1348
        %v1603 = vpop.permute.xlu0 %1602
        %1606 = vset.pattern.permute.xlu0 0
        %1607 = vperm.xlu0 %1606, %v1349
        %v1608 = vpop.permute.xlu0 %1607
        %1611 = vset.pattern.permute.xlu0 0
        %1612 = vperm.xlu0 %1611, %v1350
        %v1613 = vpop.permute.xlu0 %1612
        %1616 = vset.pattern.permute.xlu0 0
        %1617 = vperm.xlu0 %1616, %v1351
        %v1618 = vpop.permute.xlu0 %1617
        %1621 = vset.pattern.permute.xlu0 0
        %1622 = vperm.xlu0 %1621, %v1352
        %v1623 = vpop.permute.xlu0 %1622
        %v1625 = vmul.f32 %v1553, %v1588
        %v1626 = vmul.f32 %v1554, %v1588
        %v1627 = vmul.f32 %v1555, %v1588
        %v1628 = vmul.f32 %v1556, %v1588
        %v1629 = vmul.f32 %v1557, %v1593
        %v1630 = vmul.f32 %v1558, %v1593
        %v1631 = vmul.f32 %v1559, %v1593
        %v1632 = vmul.f32 %v1560, %v1593
        %v1633 = vmul.f32 %v1561, %v1598
        %v1634 = vmul.f32 %v1562, %v1598
        %v1635 = vmul.f32 %v1563, %v1598
        %v1636 = vmul.f32 %v1564, %v1598
        %v1637 = vmul.f32 %v1565, %v1603
        %v1638 = vmul.f32 %v1566, %v1603
        %v1639 = vmul.f32 %v1567, %v1603
        %v1640 = vmul.f32 %v1568, %v1603
        %v1641 = vmul.f32 %v1569, %v1608
        %v1642 = vmul.f32 %v1570, %v1608
        %v1643 = vmul.f32 %v1571, %v1608
        %v1644 = vmul.f32 %v1572, %v1608
        %v1645 = vmul.f32 %v1573, %v1613
        %v1646 = vmul.f32 %v1574, %v1613
        %v1647 = vmul.f32 %v1575, %v1613
        %v1648 = vmul.f32 %v1576, %v1613
        %v1649 = vmul.f32 %v1577, %v1618
        %v1650 = vmul.f32 %v1578, %v1618
        %v1651 = vmul.f32 %v1579, %v1618
        %v1652 = vmul.f32 %v1580, %v1618
        %v1653 = vmul.f32 %v1581, %v1623
        %v1654 = vmul.f32 %v1582, %v1623
        %v1655 = vmul.f32 %v1583, %v1623
        %v1656 = vmul.f32 %v1584, %v1623
        %1658 = vset.pattern.permute.xlu0 0
        %1659 = vperm.xlu0 %1658, %v1353
        %v1660 = vpop.permute.xlu0 %1659
        %1663 = vset.pattern.permute.xlu0 0
        %1664 = vperm.xlu0 %1663, %v1354
        %v1665 = vpop.permute.xlu0 %1664
        %1668 = vset.pattern.permute.xlu0 0
        %1669 = vperm.xlu0 %1668, %v1355
        %v1670 = vpop.permute.xlu0 %1669
        %1673 = vset.pattern.permute.xlu0 0
        %1674 = vperm.xlu0 %1673, %v1356
        %v1675 = vpop.permute.xlu0 %1674
        %1678 = vset.pattern.permute.xlu0 0
        %1679 = vperm.xlu0 %1678, %v1357
        %v1680 = vpop.permute.xlu0 %1679
        %1683 = vset.pattern.permute.xlu0 0
        %1684 = vperm.xlu0 %1683, %v1358
        %v1685 = vpop.permute.xlu0 %1684
        %1688 = vset.pattern.permute.xlu0 0
        %1689 = vperm.xlu0 %1688, %v1359
        %v1690 = vpop.permute.xlu0 %1689
        %1693 = vset.pattern.permute.xlu0 0
        %1694 = vperm.xlu0 %1693, %v1360
        %v1695 = vpop.permute.xlu0 %1694
        %v1697 = vadd.f32 %v1625, %v1660
        %v1698 = vadd.f32 %v1626, %v1660
        %v1699 = vadd.f32 %v1627, %v1660
        %v1700 = vadd.f32 %v1628, %v1660
        %v1701 = vadd.f32 %v1629, %v1665
        %v1702 = vadd.f32 %v1630, %v1665
        %v1703 = vadd.f32 %v1631, %v1665
        %v1704 = vadd.f32 %v1632, %v1665
        %v1705 = vadd.f32 %v1633, %v1670
        %v1706 = vadd.f32 %v1634, %v1670
        %v1707 = vadd.f32 %v1635, %v1670
        %v1708 = vadd.f32 %v1636, %v1670
        %v1709 = vadd.f32 %v1637, %v1675
        %v1710 = vadd.f32 %v1638, %v1675
        %v1711 = vadd.f32 %v1639, %v1675
        %v1712 = vadd.f32 %v1640, %v1675
        %v1713 = vadd.f32 %v1641, %v1680
        %v1714 = vadd.f32 %v1642, %v1680
        %v1715 = vadd.f32 %v1643, %v1680
        %v1716 = vadd.f32 %v1644, %v1680
        %v1717 = vadd.f32 %v1645, %v1685
        %v1718 = vadd.f32 %v1646, %v1685
        %v1719 = vadd.f32 %v1647, %v1685
        %v1720 = vadd.f32 %v1648, %v1685
        %v1721 = vadd.f32 %v1649, %v1690
        %v1722 = vadd.f32 %v1650, %v1690
        %v1723 = vadd.f32 %v1651, %v1690
        %v1724 = vadd.f32 %v1652, %v1690
        %v1725 = vadd.f32 %v1653, %v1695
        %v1726 = vadd.f32 %v1654, %v1695
        %v1727 = vadd.f32 %v1655, %v1695
        %v1728 = vadd.f32 %v1656, %v1695
        %v1729 = vadd.f32 %v524, %v1697
        %v1730 = vadd.f32 %v525, %v1698
        %v1731 = vadd.f32 %v526, %v1699
        %v1732 = vadd.f32 %v527, %v1700
        %v1733 = vadd.f32 %v528, %v1701
        %v1734 = vadd.f32 %v529, %v1702
        %v1735 = vadd.f32 %v530, %v1703
        %v1736 = vadd.f32 %v531, %v1704
        %v1737 = vadd.f32 %v532, %v1705
        %v1738 = vadd.f32 %v533, %v1706
        %v1739 = vadd.f32 %v534, %v1707
        %v1740 = vadd.f32 %v535, %v1708
        %v1741 = vadd.f32 %v536, %v1709
        %v1742 = vadd.f32 %v537, %v1710
        %v1743 = vadd.f32 %v538, %v1711
        %v1744 = vadd.f32 %v539, %v1712
        %v1745 = vadd.f32 %v540, %v1713
        %v1746 = vadd.f32 %v541, %v1714
        %v1747 = vadd.f32 %v542, %v1715
        %v1748 = vadd.f32 %v543, %v1716
        %v1749 = vadd.f32 %v544, %v1717
        %v1750 = vadd.f32 %v545, %v1718
        %v1751 = vadd.f32 %v546, %v1719
        %v1752 = vadd.f32 %v547, %v1720
        %v1753 = vadd.f32 %v548, %v1721
        %v1754 = vadd.f32 %v549, %v1722
        %v1755 = vadd.f32 %v550, %v1723
        %v1756 = vadd.f32 %v551, %v1724
        %v1757 = vadd.f32 %v552, %v1725
        %v1758 = vadd.f32 %v553, %v1726
        %v1759 = vadd.f32 %v554, %v1727
        %v1760 = vadd.f32 %v555, %v1728
        %v1761 = vld [vmem:[%s7] sm:$0xf]
        %v1762 = vld [vmem:[%s7 + $0x4] sm:$0xf]
        %v1763 = vld [vmem:[%s7 + $0x8] sm:$0xf]
        %v1764 = vld [vmem:[%s7 + $0xc] sm:$0xf]
        %v1765 = vld [vmem:[%s7 + $0x10] sm:$0xf]
        %v1766 = vld [vmem:[%s7 + $0x14] sm:$0xf]
        %v1767 = vld [vmem:[%s7 + $0x18] sm:$0xf]
        %v1768 = vld [vmem:[%s7 + $0x1c] sm:$0xf]
        %v1769 = vld [vmem:[%s7 + $0x20] sm:$0xf]
        %v1770 = vld [vmem:[%s7 + $0x24] sm:$0xf]
        %v1771 = vld [vmem:[%s7 + $0x28] sm:$0xf]
        %v1772 = vld [vmem:[%s7 + $0x2c] sm:$0xf]
        %v1773 = vld [vmem:[%s7 + $0x30] sm:$0xf]
        %v1774 = vld [vmem:[%s7 + $0x34] sm:$0xf]
        %v1775 = vld [vmem:[%s7 + $0x38] sm:$0xf]
        %v1776 = vld [vmem:[%s7 + $0x3c] sm:$0xf]
        %v1777 = vld [vmem:[%s7 + $0x40] sm:$0xf]
        %v1778 = vld [vmem:[%s7 + $0x44] sm:$0xf]
        %v1779 = vld [vmem:[%s7 + $0x48] sm:$0xf]
        %v1780 = vld [vmem:[%s7 + $0x4c] sm:$0xf]
        %v1781 = vld [vmem:[%s7 + $0x50] sm:$0xf]
        %v1782 = vld [vmem:[%s7 + $0x54] sm:$0xf]
        %v1783 = vld [vmem:[%s7 + $0x58] sm:$0xf]
        %v1784 = vld [vmem:[%s7 + $0x5c] sm:$0xf]
        %v1785 = vld [vmem:[%s7 + $0x60] sm:$0xf]
        %v1786 = vld [vmem:[%s7 + $0x64] sm:$0xf]
        %v1787 = vld [vmem:[%s7 + $0x68] sm:$0xf]
        %v1788 = vld [vmem:[%s7 + $0x6c] sm:$0xf]
        %v1789 = vld [vmem:[%s7 + $0x70] sm:$0xf]
        %v1790 = vld [vmem:[%s7 + $0x74] sm:$0xf]
        %v1791 = vld [vmem:[%s7 + $0x78] sm:$0xf]
        %v1792 = vld [vmem:[%s7 + $0x7c] sm:$0xf]
        %v1793 = vld [vmem:[%s7 + $0x80] sm:$0xf]
        %v1794 = vld [vmem:[%s7 + $0x84] sm:$0xf]
        %v1795 = vld [vmem:[%s7 + $0x88] sm:$0xf]
        %v1796 = vld [vmem:[%s7 + $0x8c] sm:$0xf]
        %v1797 = vld [vmem:[%s7 + $0x90] sm:$0xf]
        %v1798 = vld [vmem:[%s7 + $0x94] sm:$0xf]
        %v1799 = vld [vmem:[%s7 + $0x98] sm:$0xf]
        %v1800 = vld [vmem:[%s7 + $0x9c] sm:$0xf]
        %v1801 = vld [vmem:[%s7 + $0xa0] sm:$0xf]
        %v1802 = vld [vmem:[%s7 + $0xa4] sm:$0xf]
        %v1803 = vld [vmem:[%s7 + $0xa8] sm:$0xf]
        %v1804 = vld [vmem:[%s7 + $0xac] sm:$0xf]
        %v1805 = vld [vmem:[%s7 + $0xb0] sm:$0xf]
        %v1806 = vld [vmem:[%s7 + $0xb4] sm:$0xf]
        %v1807 = vld [vmem:[%s7 + $0xb8] sm:$0xf]
        %v1808 = vld [vmem:[%s7 + $0xbc] sm:$0xf]
        %v1809 = vld [vmem:[%s7 + $0xc0] sm:$0xf]
        %v1810 = vld [vmem:[%s7 + $0xc4] sm:$0xf]
        %v1811 = vld [vmem:[%s7 + $0xc8] sm:$0xf]
        %v1812 = vld [vmem:[%s7 + $0xcc] sm:$0xf]
        %v1813 = vld [vmem:[%s7 + $0xd0] sm:$0xf]
        %v1814 = vld [vmem:[%s7 + $0xd4] sm:$0xf]
        %v1815 = vld [vmem:[%s7 + $0xd8] sm:$0xf]
        %v1816 = vld [vmem:[%s7 + $0xdc] sm:$0xf]
        %v1817 = vld [vmem:[%s7 + $0xe0] sm:$0xf]
        %v1818 = vld [vmem:[%s7 + $0xe4] sm:$0xf]
        %v1819 = vld [vmem:[%s7 + $0xe8] sm:$0xf]
        %v1820 = vld [vmem:[%s7 + $0xec] sm:$0xf]
        %v1821 = vld [vmem:[%s7 + $0xf0] sm:$0xf]
        %v1822 = vld [vmem:[%s7 + $0xf4] sm:$0xf]
        %v1823 = vld [vmem:[%s7 + $0xf8] sm:$0xf]
        %v1824 = vld [vmem:[%s7 + $0xfc] sm:$0xf]
        %v1825 = vld [vmem:[%s7 + $0x100] sm:$0xf]
        %v1826 = vld [vmem:[%s7 + $0x104] sm:$0xf]
        %v1827 = vld [vmem:[%s7 + $0x108] sm:$0xf]
        %v1828 = vld [vmem:[%s7 + $0x10c] sm:$0xf]
        %v1829 = vld [vmem:[%s7 + $0x110] sm:$0xf]
        %v1830 = vld [vmem:[%s7 + $0x114] sm:$0xf]
        %v1831 = vld [vmem:[%s7 + $0x118] sm:$0xf]
        %v1832 = vld [vmem:[%s7 + $0x11c] sm:$0xf]
        %v1833 = vld [vmem:[%s7 + $0x120] sm:$0xf]
        %v1834 = vld [vmem:[%s7 + $0x124] sm:$0xf]
        %v1835 = vld [vmem:[%s7 + $0x128] sm:$0xf]
        %v1836 = vld [vmem:[%s7 + $0x12c] sm:$0xf]
        %v1837 = vld [vmem:[%s7 + $0x130] sm:$0xf]
        %v1838 = vld [vmem:[%s7 + $0x134] sm:$0xf]
        %v1839 = vld [vmem:[%s7 + $0x138] sm:$0xf]
        %v1840 = vld [vmem:[%s7 + $0x13c] sm:$0xf]
        %v1841 = vld [vmem:[%s7 + $0x140] sm:$0xf]
        %v1842 = vld [vmem:[%s7 + $0x144] sm:$0xf]
        %v1843 = vld [vmem:[%s7 + $0x148] sm:$0xf]
        %v1844 = vld [vmem:[%s7 + $0x14c] sm:$0xf]
        %v1845 = vld [vmem:[%s7 + $0x150] sm:$0xf]
        %v1846 = vld [vmem:[%s7 + $0x154] sm:$0xf]
        %v1847 = vld [vmem:[%s7 + $0x158] sm:$0xf]
        %v1848 = vld [vmem:[%s7 + $0x15c] sm:$0xf]
        %v1849 = vld [vmem:[%s7 + $0x160] sm:$0xf]
        %v1850 = vld [vmem:[%s7 + $0x164] sm:$0xf]
        %v1851 = vld [vmem:[%s7 + $0x168] sm:$0xf]
        %v1852 = vld [vmem:[%s7 + $0x16c] sm:$0xf]
        %v1853 = vld [vmem:[%s7 + $0x170] sm:$0xf]
        %v1854 = vld [vmem:[%s7 + $0x174] sm:$0xf]
        %v1855 = vld [vmem:[%s7 + $0x178] sm:$0xf]
        %v1856 = vld [vmem:[%s7 + $0x17c] sm:$0xf]
        %v1857 = vpack.c.bf16 %v1733, %v1729
        %v1858 = vpack.c.bf16 %v1734, %v1730
        %v1859 = vpack.c.bf16 %v1735, %v1731
        %v1860 = vpack.c.bf16 %v1736, %v1732
        %v1861 = vpack.c.bf16 %v1741, %v1737
        %v1862 = vpack.c.bf16 %v1742, %v1738
        %v1863 = vpack.c.bf16 %v1743, %v1739
        %v1864 = vpack.c.bf16 %v1744, %v1740
        %v1865 = vpack.c.bf16 %v1749, %v1745
        %v1866 = vpack.c.bf16 %v1750, %v1746
        %v1867 = vpack.c.bf16 %v1751, %v1747
        %v1868 = vpack.c.bf16 %v1752, %v1748
        %v1869 = vpack.c.bf16 %v1757, %v1753
        %v1870 = vpack.c.bf16 %v1758, %v1754
        %v1871 = vpack.c.bf16 %v1759, %v1755
        %v1872 = vpack.c.bf16 %v1760, %v1756
        %v1873 = vld [vmem:[%s8] sm:$0xff]
        %v1874 = vld [vmem:[%s8 + $0x8] sm:$0xff]
        %v1875 = vld [vmem:[%s8 + $0x10] sm:$0xff]
        %v1876 = vld [vmem:[%s8 + $0x18] sm:$0xff]
        %v1877 = vld [vmem:[%s8 + $0x20] sm:$0xff]
        %v1878 = vld [vmem:[%s8 + $0x28] sm:$0xff]
        %v1879 = vld [vmem:[%s8 + $0x30] sm:$0xff]
        %v1880 = vld [vmem:[%s8 + $0x38] sm:$0xff]
        %v1881 = vld [vmem:[%s8 + $0x40] sm:$0xff]
        %v1882 = vld [vmem:[%s8 + $0x48] sm:$0xff]
        %v1883 = vld [vmem:[%s8 + $0x50] sm:$0xff]
        %v1884 = vld [vmem:[%s8 + $0x58] sm:$0xff]
        %v1885 = vld [vmem:[%s8 + $0x60] sm:$0xff]
        %v1886 = vld [vmem:[%s8 + $0x68] sm:$0xff]
        %v1887 = vld [vmem:[%s8 + $0x70] sm:$0xff]
        %v1888 = vld [vmem:[%s8 + $0x78] sm:$0xff]
        %v1889 = vld [vmem:[%s8 + $0x80] sm:$0xff]
        %v1890 = vld [vmem:[%s8 + $0x88] sm:$0xff]
        %v1891 = vld [vmem:[%s8 + $0x90] sm:$0xff]
        %v1892 = vld [vmem:[%s8 + $0x98] sm:$0xff]
        %v1893 = vld [vmem:[%s8 + $0xa0] sm:$0xff]
        %v1894 = vld [vmem:[%s8 + $0xa8] sm:$0xff]
        %v1895 = vld [vmem:[%s8 + $0xb0] sm:$0xff]
        %v1896 = vld [vmem:[%s8 + $0xb8] sm:$0xff]
        %v1897 = vld [vmem:[%s8 + $0xc0] sm:$0xff]
        %v1898 = vld [vmem:[%s8 + $0xc8] sm:$0xff]
        %v1899 = vld [vmem:[%s8 + $0xd0] sm:$0xff]
        %v1900 = vld [vmem:[%s8 + $0xd8] sm:$0xff]
        %v1901 = vld [vmem:[%s8 + $0xe0] sm:$0xff]
        %v1902 = vld [vmem:[%s8 + $0xe8] sm:$0xff]
        %v1903 = vld [vmem:[%s8 + $0xf0] sm:$0xff]
        %v1904 = vld [vmem:[%s8 + $0xf8] sm:$0xff]
        %v1905 = vld [vmem:[%s8 + $0x100] sm:$0xff]
        %v1906 = vld [vmem:[%s8 + $0x108] sm:$0xff]
        %v1907 = vld [vmem:[%s8 + $0x110] sm:$0xff]
        %v1908 = vld [vmem:[%s8 + $0x118] sm:$0xff]
        %v1909 = vld [vmem:[%s8 + $0x120] sm:$0xff]
        %v1910 = vld [vmem:[%s8 + $0x128] sm:$0xff]
        %v1911 = vld [vmem:[%s8 + $0x130] sm:$0xff]
        %v1912 = vld [vmem:[%s8 + $0x138] sm:$0xff]
        %v1913 = vld [vmem:[%s8 + $0x140] sm:$0xff]
        %v1914 = vld [vmem:[%s8 + $0x148] sm:$0xff]
        %v1915 = vld [vmem:[%s8 + $0x150] sm:$0xff]
        %v1916 = vld [vmem:[%s8 + $0x158] sm:$0xff]
        %v1917 = vld [vmem:[%s8 + $0x160] sm:$0xff]
        %v1918 = vld [vmem:[%s8 + $0x168] sm:$0xff]
        %v1919 = vld [vmem:[%s8 + $0x170] sm:$0xff]
        %v1920 = vld [vmem:[%s8 + $0x178] sm:$0xff]
        %v1921 = vld [vmem:[%s8 + $0x180] sm:$0xff]
        %v1922 = vld [vmem:[%s8 + $0x188] sm:$0xff]
        %v1923 = vld [vmem:[%s8 + $0x190] sm:$0xff]
        %v1924 = vld [vmem:[%s8 + $0x198] sm:$0xff]
        %v1925 = vld [vmem:[%s8 + $0x1a0] sm:$0xff]
        %v1926 = vld [vmem:[%s8 + $0x1a8] sm:$0xff]
        %v1927 = vld [vmem:[%s8 + $0x1b0] sm:$0xff]
        %v1928 = vld [vmem:[%s8 + $0x1b8] sm:$0xff]
        %v1929 = vld [vmem:[%s8 + $0x1c0] sm:$0xff]
        %v1930 = vld [vmem:[%s8 + $0x1c8] sm:$0xff]
        %v1931 = vld [vmem:[%s8 + $0x1d0] sm:$0xff]
        %v1932 = vld [vmem:[%s8 + $0x1d8] sm:$0xff]
        %v1933 = vld [vmem:[%s8 + $0x1e0] sm:$0xff]
        %v1934 = vld [vmem:[%s8 + $0x1e8] sm:$0xff]
        %v1935 = vld [vmem:[%s8 + $0x1f0] sm:$0xff]
        %v1936 = vld [vmem:[%s8 + $0x1f8] sm:$0xff]
        %v1937 = vld [vmem:[%s8 + $0x200] sm:$0xff]
        %v1938 = vld [vmem:[%s8 + $0x208] sm:$0xff]
        %v1939 = vld [vmem:[%s8 + $0x210] sm:$0xff]
        %v1940 = vld [vmem:[%s8 + $0x218] sm:$0xff]
        %v1941 = vld [vmem:[%s8 + $0x220] sm:$0xff]
        %v1942 = vld [vmem:[%s8 + $0x228] sm:$0xff]
        %v1943 = vld [vmem:[%s8 + $0x230] sm:$0xff]
        %v1944 = vld [vmem:[%s8 + $0x238] sm:$0xff]
        %v1945 = vld [vmem:[%s8 + $0x240] sm:$0xff]
        %v1946 = vld [vmem:[%s8 + $0x248] sm:$0xff]
        %v1947 = vld [vmem:[%s8 + $0x250] sm:$0xff]
        %v1948 = vld [vmem:[%s8 + $0x258] sm:$0xff]
        %v1949 = vld [vmem:[%s8 + $0x260] sm:$0xff]
        %v1950 = vld [vmem:[%s8 + $0x268] sm:$0xff]
        %v1951 = vld [vmem:[%s8 + $0x270] sm:$0xff]
        %v1952 = vld [vmem:[%s8 + $0x278] sm:$0xff]
        %v1953 = vld [vmem:[%s8 + $0x280] sm:$0xff]
        %v1954 = vld [vmem:[%s8 + $0x288] sm:$0xff]
        %v1955 = vld [vmem:[%s8 + $0x290] sm:$0xff]
        %v1956 = vld [vmem:[%s8 + $0x298] sm:$0xff]
        %v1957 = vld [vmem:[%s8 + $0x2a0] sm:$0xff]
        %v1958 = vld [vmem:[%s8 + $0x2a8] sm:$0xff]
        %v1959 = vld [vmem:[%s8 + $0x2b0] sm:$0xff]
        %v1960 = vld [vmem:[%s8 + $0x2b8] sm:$0xff]
        %v1961 = vld [vmem:[%s8 + $0x2c0] sm:$0xff]
        %v1962 = vld [vmem:[%s8 + $0x2c8] sm:$0xff]
        %v1963 = vld [vmem:[%s8 + $0x2d0] sm:$0xff]
        %v1964 = vld [vmem:[%s8 + $0x2d8] sm:$0xff]
        %v1965 = vld [vmem:[%s8 + $0x2e0] sm:$0xff]
        %v1966 = vld [vmem:[%s8 + $0x2e8] sm:$0xff]
        %v1967 = vld [vmem:[%s8 + $0x2f0] sm:$0xff]
        %v1968 = vld [vmem:[%s8 + $0x2f8] sm:$0xff]
        %1970 = vset.pattern.permute.xlu0 0
        %1971 = vperm.xlu0 %1970, %v1873
        %v1972 = vpop.permute.xlu0 %1971
        %1975 = vset.pattern.permute.xlu0 0
        %1976 = vperm.xlu0 %1975, %v1874
        %v1977 = vpop.permute.xlu0 %1976
        %1980 = vset.pattern.permute.xlu0 0
        %1981 = vperm.xlu0 %1980, %v1875
        %v1982 = vpop.permute.xlu0 %1981
        %1985 = vset.pattern.permute.xlu0 0
        %1986 = vperm.xlu0 %1985, %v1876
        %v1987 = vpop.permute.xlu0 %1986
        %1990 = vset.pattern.permute.xlu0 0
        %1991 = vperm.xlu0 %1990, %v1877
        %v1992 = vpop.permute.xlu0 %1991
        %1995 = vset.pattern.permute.xlu0 0
        %1996 = vperm.xlu0 %1995, %v1878
        %v1997 = vpop.permute.xlu0 %1996
        %2000 = vset.pattern.permute.xlu0 0
        %2001 = vperm.xlu0 %2000, %v1879
        %v2002 = vpop.permute.xlu0 %2001
        %2005 = vset.pattern.permute.xlu0 0
        %2006 = vperm.xlu0 %2005, %v1880
        %v2007 = vpop.permute.xlu0 %2006
        %2010 = vset.pattern.permute.xlu0 0
        %2011 = vperm.xlu0 %2010, %v1881
        %v2012 = vpop.permute.xlu0 %2011
        %2015 = vset.pattern.permute.xlu0 0
        %2016 = vperm.xlu0 %2015, %v1882
        %v2017 = vpop.permute.xlu0 %2016
        %2020 = vset.pattern.permute.xlu0 0
        %2021 = vperm.xlu0 %2020, %v1883
        %v2022 = vpop.permute.xlu0 %2021
        %2025 = vset.pattern.permute.xlu0 0
        %2026 = vperm.xlu0 %2025, %v1884
        %v2027 = vpop.permute.xlu0 %2026
        %2030 = vset.pattern.permute.xlu0 0
        %2031 = vperm.xlu0 %2030, %v1885
        %v2032 = vpop.permute.xlu0 %2031
        %2035 = vset.pattern.permute.xlu0 0
        %2036 = vperm.xlu0 %2035, %v1886
        %v2037 = vpop.permute.xlu0 %2036
        %2040 = vset.pattern.permute.xlu0 0
        %2041 = vperm.xlu0 %2040, %v1887
        %v2042 = vpop.permute.xlu0 %2041
        %2045 = vset.pattern.permute.xlu0 0
        %2046 = vperm.xlu0 %2045, %v1888
        %v2047 = vpop.permute.xlu0 %2046
        %2050 = vset.pattern.permute.xlu0 0
        %2051 = vperm.xlu0 %2050, %v1889
        %v2052 = vpop.permute.xlu0 %2051
        %2055 = vset.pattern.permute.xlu0 0
        %2056 = vperm.xlu0 %2055, %v1890
        %v2057 = vpop.permute.xlu0 %2056
        %2060 = vset.pattern.permute.xlu0 0
        %2061 = vperm.xlu0 %2060, %v1891
        %v2062 = vpop.permute.xlu0 %2061
        %2065 = vset.pattern.permute.xlu0 0
        %2066 = vperm.xlu0 %2065, %v1892
        %v2067 = vpop.permute.xlu0 %2066
        %2070 = vset.pattern.permute.xlu0 0
        %2071 = vperm.xlu0 %2070, %v1893
        %v2072 = vpop.permute.xlu0 %2071
        %2075 = vset.pattern.permute.xlu0 0
        %2076 = vperm.xlu0 %2075, %v1894
        %v2077 = vpop.permute.xlu0 %2076
        %2080 = vset.pattern.permute.xlu0 0
        %2081 = vperm.xlu0 %2080, %v1895
        %v2082 = vpop.permute.xlu0 %2081
        %2085 = vset.pattern.permute.xlu0 0
        %2086 = vperm.xlu0 %2085, %v1896
        %v2087 = vpop.permute.xlu0 %2086
        %2090 = vset.pattern.permute.xlu0 0
        %2091 = vperm.xlu0 %2090, %v1897
        %v2092 = vpop.permute.xlu0 %2091
        %2095 = vset.pattern.permute.xlu0 0
        %2096 = vperm.xlu0 %2095, %v1898
        %v2097 = vpop.permute.xlu0 %2096
        %2100 = vset.pattern.permute.xlu0 0
        %2101 = vperm.xlu0 %2100, %v1899
        %v2102 = vpop.permute.xlu0 %2101
        %2105 = vset.pattern.permute.xlu0 0
        %2106 = vperm.xlu0 %2105, %v1900
        %v2107 = vpop.permute.xlu0 %2106
        %2110 = vset.pattern.permute.xlu0 0
        %2111 = vperm.xlu0 %2110, %v1901
        %v2112 = vpop.permute.xlu0 %2111
        %2115 = vset.pattern.permute.xlu0 0
        %2116 = vperm.xlu0 %2115, %v1902
        %v2117 = vpop.permute.xlu0 %2116
        %2120 = vset.pattern.permute.xlu0 0
        %2121 = vperm.xlu0 %2120, %v1903
        %v2122 = vpop.permute.xlu0 %2121
        %2125 = vset.pattern.permute.xlu0 0
        %2126 = vperm.xlu0 %2125, %v1904
        %v2127 = vpop.permute.xlu0 %2126
        %2130 = vset.pattern.permute.xlu0 0
        %2131 = vperm.xlu0 %2130, %v1905
        %v2132 = vpop.permute.xlu0 %2131
        %2135 = vset.pattern.permute.xlu0 0
        %2136 = vperm.xlu0 %2135, %v1906
        %v2137 = vpop.permute.xlu0 %2136
        %2140 = vset.pattern.permute.xlu0 0
        %2141 = vperm.xlu0 %2140, %v1907
        %v2142 = vpop.permute.xlu0 %2141
        %2145 = vset.pattern.permute.xlu0 0
        %2146 = vperm.xlu0 %2145, %v1908
        %v2147 = vpop.permute.xlu0 %2146
        %2150 = vset.pattern.permute.xlu0 0
        %2151 = vperm.xlu0 %2150, %v1909
        %v2152 = vpop.permute.xlu0 %2151
        %2155 = vset.pattern.permute.xlu0 0
        %2156 = vperm.xlu0 %2155, %v1910
        %v2157 = vpop.permute.xlu0 %2156
        %2160 = vset.pattern.permute.xlu0 0
        %2161 = vperm.xlu0 %2160, %v1911
        %v2162 = vpop.permute.xlu0 %2161
        %2165 = vset.pattern.permute.xlu0 0
        %2166 = vperm.xlu0 %2165, %v1912
        %v2167 = vpop.permute.xlu0 %2166
        %2170 = vset.pattern.permute.xlu0 0
        %2171 = vperm.xlu0 %2170, %v1913
        %v2172 = vpop.permute.xlu0 %2171
        %2175 = vset.pattern.permute.xlu0 0
        %2176 = vperm.xlu0 %2175, %v1914
        %v2177 = vpop.permute.xlu0 %2176
        %2180 = vset.pattern.permute.xlu0 0
        %2181 = vperm.xlu0 %2180, %v1915
        %v2182 = vpop.permute.xlu0 %2181
        %2185 = vset.pattern.permute.xlu0 0
        %2186 = vperm.xlu0 %2185, %v1916
        %v2187 = vpop.permute.xlu0 %2186
        %2190 = vset.pattern.permute.xlu0 0
        %2191 = vperm.xlu0 %2190, %v1917
        %v2192 = vpop.permute.xlu0 %2191
        %2195 = vset.pattern.permute.xlu0 0
        %2196 = vperm.xlu0 %2195, %v1918
        %v2197 = vpop.permute.xlu0 %2196
        %2200 = vset.pattern.permute.xlu0 0
        %2201 = vperm.xlu0 %2200, %v1919
        %v2202 = vpop.permute.xlu0 %2201
        %2205 = vset.pattern.permute.xlu0 0
        %2206 = vperm.xlu0 %2205, %v1920
        %v2207 = vpop.permute.xlu0 %2206
        %2210 = vset.pattern.permute.xlu0 0
        %2211 = vperm.xlu0 %2210, %v1921
        %v2212 = vpop.permute.xlu0 %2211
        %2215 = vset.pattern.permute.xlu0 0
        %2216 = vperm.xlu0 %2215, %v1922
        %v2217 = vpop.permute.xlu0 %2216
        %2220 = vset.pattern.permute.xlu0 0
        %2221 = vperm.xlu0 %2220, %v1923
        %v2222 = vpop.permute.xlu0 %2221
        %2225 = vset.pattern.permute.xlu0 0
        %2226 = vperm.xlu0 %2225, %v1924
        %v2227 = vpop.permute.xlu0 %2226
        %2230 = vset.pattern.permute.xlu0 0
        %2231 = vperm.xlu0 %2230, %v1925
        %v2232 = vpop.permute.xlu0 %2231
        %2235 = vset.pattern.permute.xlu0 0
        %2236 = vperm.xlu0 %2235, %v1926
        %v2237 = vpop.permute.xlu0 %2236
        %2240 = vset.pattern.permute.xlu0 0
        %2241 = vperm.xlu0 %2240, %v1927
        %v2242 = vpop.permute.xlu0 %2241
        %2245 = vset.pattern.permute.xlu0 0
        %2246 = vperm.xlu0 %2245, %v1928
        %v2247 = vpop.permute.xlu0 %2246
        %2250 = vset.pattern.permute.xlu0 0
        %2251 = vperm.xlu0 %2250, %v1929
        %v2252 = vpop.permute.xlu0 %2251
        %2255 = vset.pattern.permute.xlu0 0
        %2256 = vperm.xlu0 %2255, %v1930
        %v2257 = vpop.permute.xlu0 %2256
        %2260 = vset.pattern.permute.xlu0 0
        %2261 = vperm.xlu0 %2260, %v1931
        %v2262 = vpop.permute.xlu0 %2261
        %2265 = vset.pattern.permute.xlu0 0
        %2266 = vperm.xlu0 %2265, %v1932
        %v2267 = vpop.permute.xlu0 %2266
        %2270 = vset.pattern.permute.xlu0 0
        %2271 = vperm.xlu0 %2270, %v1933
        %v2272 = vpop.permute.xlu0 %2271
        %2275 = vset.pattern.permute.xlu0 0
        %2276 = vperm.xlu0 %2275, %v1934
        %v2277 = vpop.permute.xlu0 %2276
        %2280 = vset.pattern.permute.xlu0 0
        %2281 = vperm.xlu0 %2280, %v1935
        %v2282 = vpop.permute.xlu0 %2281
        %2285 = vset.pattern.permute.xlu0 0
        %2286 = vperm.xlu0 %2285, %v1936
        %v2287 = vpop.permute.xlu0 %2286
        %2290 = vset.pattern.permute.xlu0 0
        %2291 = vperm.xlu0 %2290, %v1937
        %v2292 = vpop.permute.xlu0 %2291
        %2295 = vset.pattern.permute.xlu0 0
        %2296 = vperm.xlu0 %2295, %v1938
        %v2297 = vpop.permute.xlu0 %2296
        %2300 = vset.pattern.permute.xlu0 0
        %2301 = vperm.xlu0 %2300, %v1939
        %v2302 = vpop.permute.xlu0 %2301
        %2305 = vset.pattern.permute.xlu0 0
        %2306 = vperm.xlu0 %2305, %v1940
        %v2307 = vpop.permute.xlu0 %2306
        %2310 = vset.pattern.permute.xlu0 0
        %2311 = vperm.xlu0 %2310, %v1941
        %v2312 = vpop.permute.xlu0 %2311
        %2315 = vset.pattern.permute.xlu0 0
        %2316 = vperm.xlu0 %2315, %v1942
        %v2317 = vpop.permute.xlu0 %2316
        %2320 = vset.pattern.permute.xlu0 0
        %2321 = vperm.xlu0 %2320, %v1943
        %v2322 = vpop.permute.xlu0 %2321
        %2325 = vset.pattern.permute.xlu0 0
        %2326 = vperm.xlu0 %2325, %v1944
        %v2327 = vpop.permute.xlu0 %2326
        %2330 = vset.pattern.permute.xlu0 0
        %2331 = vperm.xlu0 %2330, %v1945
        %v2332 = vpop.permute.xlu0 %2331
        %2335 = vset.pattern.permute.xlu0 0
        %2336 = vperm.xlu0 %2335, %v1946
        %v2337 = vpop.permute.xlu0 %2336
        %2340 = vset.pattern.permute.xlu0 0
        %2341 = vperm.xlu0 %2340, %v1947
        %v2342 = vpop.permute.xlu0 %2341
        %2345 = vset.pattern.permute.xlu0 0
        %2346 = vperm.xlu0 %2345, %v1948
        %v2347 = vpop.permute.xlu0 %2346
        %2350 = vset.pattern.permute.xlu0 0
        %2351 = vperm.xlu0 %2350, %v1949
        %v2352 = vpop.permute.xlu0 %2351
        %2355 = vset.pattern.permute.xlu0 0
        %2356 = vperm.xlu0 %2355, %v1950
        %v2357 = vpop.permute.xlu0 %2356
        %2360 = vset.pattern.permute.xlu0 0
        %2361 = vperm.xlu0 %2360, %v1951
        %v2362 = vpop.permute.xlu0 %2361
        %2365 = vset.pattern.permute.xlu0 0
        %2366 = vperm.xlu0 %2365, %v1952
        %v2367 = vpop.permute.xlu0 %2366
        %2370 = vset.pattern.permute.xlu0 0
        %2371 = vperm.xlu0 %2370, %v1953
        %v2372 = vpop.permute.xlu0 %2371
        %2375 = vset.pattern.permute.xlu0 0
        %2376 = vperm.xlu0 %2375, %v1954
        %v2377 = vpop.permute.xlu0 %2376
        %2380 = vset.pattern.permute.xlu0 0
        %2381 = vperm.xlu0 %2380, %v1955
        %v2382 = vpop.permute.xlu0 %2381
        %2385 = vset.pattern.permute.xlu0 0
        %2386 = vperm.xlu0 %2385, %v1956
        %v2387 = vpop.permute.xlu0 %2386
        %2390 = vset.pattern.permute.xlu0 0
        %2391 = vperm.xlu0 %2390, %v1957
        %v2392 = vpop.permute.xlu0 %2391
        %2395 = vset.pattern.permute.xlu0 0
        %2396 = vperm.xlu0 %2395, %v1958
        %v2397 = vpop.permute.xlu0 %2396
        %2400 = vset.pattern.permute.xlu0 0
        %2401 = vperm.xlu0 %2400, %v1959
        %v2402 = vpop.permute.xlu0 %2401
        %2405 = vset.pattern.permute.xlu0 0
        %2406 = vperm.xlu0 %2405, %v1960
        %v2407 = vpop.permute.xlu0 %2406
        %2410 = vset.pattern.permute.xlu0 0
        %2411 = vperm.xlu0 %2410, %v1961
        %v2412 = vpop.permute.xlu0 %2411
        %2415 = vset.pattern.permute.xlu0 0
        %2416 = vperm.xlu0 %2415, %v1962
        %v2417 = vpop.permute.xlu0 %2416
        %2420 = vset.pattern.permute.xlu0 0
        %2421 = vperm.xlu0 %2420, %v1963
        %v2422 = vpop.permute.xlu0 %2421
        %2425 = vset.pattern.permute.xlu0 0
        %2426 = vperm.xlu0 %2425, %v1964
        %v2427 = vpop.permute.xlu0 %2426
        %2430 = vset.pattern.permute.xlu0 0
        %2431 = vperm.xlu0 %2430, %v1965
        %v2432 = vpop.permute.xlu0 %2431
        %2435 = vset.pattern.permute.xlu0 0
        %2436 = vperm.xlu0 %2435, %v1966
        %v2437 = vpop.permute.xlu0 %2436
        %2440 = vset.pattern.permute.xlu0 0
        %2441 = vperm.xlu0 %2440, %v1967
        %v2442 = vpop.permute.xlu0 %2441
        %2445 = vset.pattern.permute.xlu0 0
        %2446 = vperm.xlu0 %2445, %v1968
        %v2447 = vpop.permute.xlu0 %2446
        %v2545 = vunpack.c.l.b16 %v1761
        %v2546 = vunpack.c.l.b16 %v1762
        %v2547 = vunpack.c.l.b16 %v1763
        %v2548 = vunpack.c.l.b16 %v1764
        %v2549 = vunpack.c.l.b16 %v1765
        %v2550 = vunpack.c.l.b16 %v1766
        %v2551 = vunpack.c.l.b16 %v1767
        %v2552 = vunpack.c.l.b16 %v1768
        %v2553 = vunpack.c.l.b16 %v1769
        %v2554 = vunpack.c.l.b16 %v1770
        %v2555 = vunpack.c.l.b16 %v1771
        %v2556 = vunpack.c.l.b16 %v1772
        %v2557 = vunpack.c.l.b16 %v1773
        %v2558 = vunpack.c.l.b16 %v1774
        %v2559 = vunpack.c.l.b16 %v1775
        %v2560 = vunpack.c.l.b16 %v1776
        %v2561 = vunpack.c.l.b16 %v1777
        %v2562 = vunpack.c.l.b16 %v1778
        %v2563 = vunpack.c.l.b16 %v1779
        %v2564 = vunpack.c.l.b16 %v1780
        %v2565 = vunpack.c.l.b16 %v1781
        %v2566 = vunpack.c.l.b16 %v1782
        %v2567 = vunpack.c.l.b16 %v1783
        %v2568 = vunpack.c.l.b16 %v1784
        %v2569 = vunpack.c.l.b16 %v1785
        %v2570 = vunpack.c.l.b16 %v1786
        %v2571 = vunpack.c.l.b16 %v1787
        %v2572 = vunpack.c.l.b16 %v1788
        %v2573 = vunpack.c.l.b16 %v1789
        %v2574 = vunpack.c.l.b16 %v1790
        %v2575 = vunpack.c.l.b16 %v1791
        %v2576 = vunpack.c.l.b16 %v1792
        %v2577 = vunpack.c.l.b16 %v1793
        %v2578 = vunpack.c.l.b16 %v1794
        %v2579 = vunpack.c.l.b16 %v1795
        %v2580 = vunpack.c.l.b16 %v1796
        %v2581 = vunpack.c.l.b16 %v1797
        %v2582 = vunpack.c.l.b16 %v1798
        %v2583 = vunpack.c.l.b16 %v1799
        %v2584 = vunpack.c.l.b16 %v1800
        %v2585 = vunpack.c.l.b16 %v1801
        %v2586 = vunpack.c.l.b16 %v1802
        %v2587 = vunpack.c.l.b16 %v1803
        %v2588 = vunpack.c.l.b16 %v1804
        %v2589 = vunpack.c.l.b16 %v1805
        %v2590 = vunpack.c.l.b16 %v1806
        %v2591 = vunpack.c.l.b16 %v1807
        %v2592 = vunpack.c.l.b16 %v1808
        %v2593 = vunpack.c.l.b16 %v1809
        %v2594 = vunpack.c.l.b16 %v1810
        %v2595 = vunpack.c.l.b16 %v1811
        %v2596 = vunpack.c.l.b16 %v1812
        %v2597 = vunpack.c.l.b16 %v1813
        %v2598 = vunpack.c.l.b16 %v1814
        %v2599 = vunpack.c.l.b16 %v1815
        %v2600 = vunpack.c.l.b16 %v1816
        %v2601 = vunpack.c.l.b16 %v1817
        %v2602 = vunpack.c.l.b16 %v1818
        %v2603 = vunpack.c.l.b16 %v1819
        %v2604 = vunpack.c.l.b16 %v1820
        %v2605 = vunpack.c.l.b16 %v1821
        %v2606 = vunpack.c.l.b16 %v1822
        %v2607 = vunpack.c.l.b16 %v1823
        %v2608 = vunpack.c.l.b16 %v1824
        %v2609 = vunpack.c.l.b16 %v1825
        %v2610 = vunpack.c.l.b16 %v1826
        %v2611 = vunpack.c.l.b16 %v1827
        %v2612 = vunpack.c.l.b16 %v1828
        %v2613 = vunpack.c.l.b16 %v1829
        %v2614 = vunpack.c.l.b16 %v1830
        %v2615 = vunpack.c.l.b16 %v1831
        %v2616 = vunpack.c.l.b16 %v1832
        %v2617 = vunpack.c.l.b16 %v1833
        %v2618 = vunpack.c.l.b16 %v1834
        %v2619 = vunpack.c.l.b16 %v1835
        %v2620 = vunpack.c.l.b16 %v1836
        %v2621 = vunpack.c.l.b16 %v1837
        %v2622 = vunpack.c.l.b16 %v1838
        %v2623 = vunpack.c.l.b16 %v1839
        %v2624 = vunpack.c.l.b16 %v1840
        %v2625 = vunpack.c.l.b16 %v1841
        %v2626 = vunpack.c.l.b16 %v1842
        %v2627 = vunpack.c.l.b16 %v1843
        %v2628 = vunpack.c.l.b16 %v1844
        %v2629 = vunpack.c.l.b16 %v1845
        %v2630 = vunpack.c.l.b16 %v1846
        %v2631 = vunpack.c.l.b16 %v1847
        %v2632 = vunpack.c.l.b16 %v1848
        %v2633 = vunpack.c.l.b16 %v1849
        %v2634 = vunpack.c.l.b16 %v1850
        %v2635 = vunpack.c.l.b16 %v1851
        %v2636 = vunpack.c.l.b16 %v1852
        %v2637 = vunpack.c.l.b16 %v1853
        %v2638 = vunpack.c.l.b16 %v1854
        %v2639 = vunpack.c.l.b16 %v1855
        %v2640 = vunpack.c.l.b16 %v1856
        %v2641 = vpack.c.b16 %v2546, %v2545
        %v2642 = vpack.c.b16 %v2548, %v2547
        %v2643 = vpack.c.b16 %v2550, %v2549
        %v2644 = vpack.c.b16 %v2552, %v2551
        %v2645 = vpack.c.b16 %v2554, %v2553
        %v2646 = vpack.c.b16 %v2556, %v2555
        %v2647 = vpack.c.b16 %v2558, %v2557
        %v2648 = vpack.c.b16 %v2560, %v2559
        %v2649 = vpack.c.b16 %v2562, %v2561
        %v2650 = vpack.c.b16 %v2564, %v2563
        %v2651 = vpack.c.b16 %v2566, %v2565
        %v2652 = vpack.c.b16 %v2568, %v2567
        %v2653 = vpack.c.b16 %v2570, %v2569
        %v2654 = vpack.c.b16 %v2572, %v2571
        %v2655 = vpack.c.b16 %v2574, %v2573
        %v2656 = vpack.c.b16 %v2576, %v2575
        %v2657 = vpack.c.b16 %v2578, %v2577
        %v2658 = vpack.c.b16 %v2580, %v2579
        %v2659 = vpack.c.b16 %v2582, %v2581
        %v2660 = vpack.c.b16 %v2584, %v2583
        %v2661 = vpack.c.b16 %v2586, %v2585
        %v2662 = vpack.c.b16 %v2588, %v2587
        %v2663 = vpack.c.b16 %v2590, %v2589
        %v2664 = vpack.c.b16 %v2592, %v2591
        %v2665 = vpack.c.b16 %v2594, %v2593
        %v2666 = vpack.c.b16 %v2596, %v2595
        %v2667 = vpack.c.b16 %v2598, %v2597
        %v2668 = vpack.c.b16 %v2600, %v2599
        %v2669 = vpack.c.b16 %v2602, %v2601
        %v2670 = vpack.c.b16 %v2604, %v2603
        %v2671 = vpack.c.b16 %v2606, %v2605
        %v2672 = vpack.c.b16 %v2608, %v2607
        %v2673 = vpack.c.b16 %v2610, %v2609
        %v2674 = vpack.c.b16 %v2612, %v2611
        %v2675 = vpack.c.b16 %v2614, %v2613
        %v2676 = vpack.c.b16 %v2616, %v2615
        %v2677 = vpack.c.b16 %v2618, %v2617
        %v2678 = vpack.c.b16 %v2620, %v2619
        %v2679 = vpack.c.b16 %v2622, %v2621
        %v2680 = vpack.c.b16 %v2624, %v2623
        %v2681 = vpack.c.b16 %v2626, %v2625
        %v2682 = vpack.c.b16 %v2628, %v2627
        %v2683 = vpack.c.b16 %v2630, %v2629
        %v2684 = vpack.c.b16 %v2632, %v2631
        %v2685 = vpack.c.b16 %v2634, %v2633
        %v2686 = vpack.c.b16 %v2636, %v2635
        %v2687 = vpack.c.b16 %v2638, %v2637
        %v2688 = vpack.c.b16 %v2640, %v2639
        %v2690 = vsel %vm648, %v2641, 0
        %v2693 = vsel %vm648, %v2642, 0
        %v2696 = vsel %vm648, %v2643, 0
        %v2699 = vsel %vm648, %v2644, 0
        %v2702 = vsel %vm648, %v2645, 0
        %v2705 = vsel %vm648, %v2646, 0
        %v2708 = vsel %vm648, %v2647, 0
        %v2711 = vsel %vm648, %v2648, 0
        %v2714 = vsel %vm648, %v2649, 0
        %v2717 = vsel %vm648, %v2650, 0
        %v2720 = vsel %vm648, %v2651, 0
        %v2723 = vsel %vm648, %v2652, 0
        %v2726 = vsel %vm648, %v2653, 0
        %v2729 = vsel %vm648, %v2654, 0
        %v2732 = vsel %vm648, %v2655, 0
        %v2735 = vsel %vm648, %v2656, 0
        %v2738 = vsel %vm648, %v2657, 0
        %v2741 = vsel %vm648, %v2658, 0
        %v2744 = vsel %vm648, %v2659, 0
        %v2747 = vsel %vm648, %v2660, 0
        %v2750 = vsel %vm648, %v2661, 0
        %v2753 = vsel %vm648, %v2662, 0
        %v2756 = vsel %vm648, %v2663, 0
        %v2759 = vsel %vm648, %v2664, 0
        %v2762 = vsel %vm648, %v2665, 0
        %v2765 = vsel %vm648, %v2666, 0
        %v2768 = vsel %vm648, %v2667, 0
        %v2771 = vsel %vm648, %v2668, 0
        %v2774 = vsel %vm648, %v2669, 0
        %v2777 = vsel %vm648, %v2670, 0
        %v2780 = vsel %vm648, %v2671, 0
        %v2783 = vsel %vm648, %v2672, 0
        %v2786 = vsel %vm648, %v2673, 0
        %v2789 = vsel %vm648, %v2674, 0
        %v2792 = vsel %vm648, %v2675, 0
        %v2795 = vsel %vm648, %v2676, 0
        %v2798 = vsel %vm648, %v2677, 0
        %v2801 = vsel %vm648, %v2678, 0
        %v2804 = vsel %vm648, %v2679, 0
        %v2807 = vsel %vm648, %v2680, 0
        %v2810 = vsel %vm648, %v2681, 0
        %v2813 = vsel %vm648, %v2682, 0
        %v2816 = vsel %vm648, %v2683, 0
        %v2819 = vsel %vm648, %v2684, 0
        %v2822 = vsel %vm648, %v2685, 0
        %v2825 = vsel %vm648, %v2686, 0
        %v2828 = vsel %vm648, %v2687, 0
        %v2831 = vsel %vm648, %v2688, 0
        %2833 = vmatprep.subr.bf16.mxu0 %v1858
        %2834 = vmatpush1.bf16.msra.mxu0 %v1857
        %2835 = vmatprep.subr.bf16.mxu0 %v1862
        %2836 = vmatpush1.bf16.msra.mxu0 %v1861
        %2837 = vmatprep.subr.bf16.mxu0 %v1866
        %2838 = vmatpush1.bf16.msra.mxu0 %v1865
        %2839 = vmatprep.subr.bf16.mxu0 %v1870
        %2840 = vmatpush1.bf16.msra.mxu0 %v1869
        %2841 = vmatprep.subr.bf16.mxu0 0
        %2842 = vmatpush1.bf16.msra.mxu0 0
        %2843 = vmatprep.subr.bf16.mxu0 0
        %2844 = vmatpush1.bf16.msra.mxu0 0
        %2845 = vmatprep.subr.bf16.mxu0 0
        %2846 = vmatpush1.bf16.msra.mxu0 0
        %2847 = vmatprep.subr.bf16.mxu0 0
        %2848 = vmatpush1.bf16.msra.mxu0 0
        %2849 = vmatprep.subr.bf16.mxu0 0
        %2850 = vmatpush1.bf16.msra.mxu0 0
        %2851 = vmatprep.subr.bf16.mxu0 0
        %2852 = vmatpush1.bf16.msra.mxu0 0
        %2853 = vmatprep.subr.bf16.mxu0 0
        %2854 = vmatpush1.bf16.msra.mxu0 0
        %2855 = vmatprep.subr.bf16.mxu0 0
        %2856 = vmatpush1.bf16.msra.mxu0 0
        %2857 = vmatprep.subr.bf16.mxu0 0
        %2858 = vmatpush1.bf16.msra.mxu0 0
        %2859 = vmatprep.subr.bf16.mxu0 0
        %2860 = vmatpush1.bf16.msra.mxu0 0
        %2861 = vmatprep.subr.bf16.mxu0 0
        %2862 = vmatpush1.bf16.msra.mxu0 0
        %2863 = vmatprep.subr.bf16.mxu0 0
        %2864 = vmatpush1.bf16.msra.mxu0 0
        %2865 = vmatprep.mubr.bf16.mxu0 0
        %2866 = vmatmul.mubr.bf16.gmra.mrb[0].mxu0 %v2690
        %v2867 = vpop.f32.mrb[0].mxu0
        %v2868 = vadd.f32 %v1972, %v2867
        %v2869 = vpop.f32.mrb[0].mxu0
        %v2870 = vadd.f32 %v1972, %v2869
        %v2871 = vpop.f32.mrb[0].mxu0
        %v2872 = vadd.f32 %v1977, %v2871
        %v2873 = vpop.f32.mrb[0].mxu0
        %v2874 = vadd.f32 %v1977, %v2873
        %2875 = vmatprep.mubr.bf16.mxu0 0
        %2876 = vmatmul.mubr.bf16.gmra.mrb[0].mxu0 %v2693
        %v2877 = vpop.f32.mrb[0].mxu0
        %v2878 = vadd.f32 %v1982, %v2877
        %v2879 = vpop.f32.mrb[0].mxu0
        %v2880 = vadd.f32 %v1982, %v2879
        %v2881 = vpop.f32.mrb[0].mxu0
        %v2882 = vadd.f32 %v1987, %v2881
        %v2883 = vpop.f32.mrb[0].mxu0
        %v2884 = vadd.f32 %v1987, %v2883
        %2885 = vmatprep.mubr.bf16.mxu0 0
        %2886 = vmatmul.mubr.bf16.gmra.mrb[0].mxu0 %v2696
        %v2887 = vpop.f32.mrb[0].mxu0
        %v2888 = vadd.f32 %v1992, %v2887
        %v2889 = vpop.f32.mrb[0].mxu0
        %v2890 = vadd.f32 %v1992, %v2889
        %v2891 = vpop.f32.mrb[0].mxu0
        %v2892 = vadd.f32 %v1997, %v2891
        %v2893 = vpop.f32.mrb[0].mxu0
        %v2894 = vadd.f32 %v1997, %v2893
        %2895 = vmatprep.mubr.bf16.mxu0 0
        %2896 = vmatmul.mubr.bf16.gmra.mrb[0].mxu0 %v2699
        %v2897 = vpop.f32.mrb[0].mxu0
        %v2898 = vadd.f32 %v2002, %v2897
        %v2899 = vpop.f32.mrb[0].mxu0
        %v2900 = vadd.f32 %v2002, %v2899
        %v2901 = vpop.f32.mrb[0].mxu0
        %v2902 = vadd.f32 %v2007, %v2901
        %v2903 = vpop.f32.mrb[0].mxu0
        %v2904 = vadd.f32 %v2007, %v2903
        %2905 = vmatprep.mubr.bf16.mxu0 0
        %2906 = vmatmul.mubr.bf16.gmra.mrb[0].mxu0 %v2702
        %v2907 = vpop.f32.mrb[0].mxu0
        %v2908 = vadd.f32 %v2012, %v2907
        %v2909 = vpop.f32.mrb[0].mxu0
        %v2910 = vadd.f32 %v2012, %v2909
        %v2911 = vpop.f32.mrb[0].mxu0
        %v2912 = vadd.f32 %v2017, %v2911
        %v2913 = vpop.f32.mrb[0].mxu0
        %v2914 = vadd.f32 %v2017, %v2913
        %2915 = vmatprep.mubr.bf16.mxu0 0
        %2916 = vmatmul.mubr.bf16.gmra.mrb[0].mxu0 %v2705
        %v2917 = vpop.f32.mrb[0].mxu0
        %v2918 = vadd.f32 %v2022, %v2917
        %v2919 = vpop.f32.mrb[0].mxu0
        %v2920 = vadd.f32 %v2022, %v2919
        %v2921 = vpop.f32.mrb[0].mxu0
        %v2922 = vadd.f32 %v2027, %v2921
        %v2923 = vpop.f32.mrb[0].mxu0
        %v2924 = vadd.f32 %v2027, %v2923
        %2925 = vmatprep.mubr.bf16.mxu0 0
        %2926 = vmatmul.mubr.bf16.gmra.mrb[0].mxu0 %v2708
        %v2927 = vpop.f32.mrb[0].mxu0
        %v2928 = vadd.f32 %v2032, %v2927
        %v2929 = vpop.f32.mrb[0].mxu0
        %v2930 = vadd.f32 %v2032, %v2929
        %v2931 = vpop.f32.mrb[0].mxu0
        %v2932 = vadd.f32 %v2037, %v2931
        %v2933 = vpop.f32.mrb[0].mxu0
        %v2934 = vadd.f32 %v2037, %v2933
        %2935 = vmatprep.mubr.bf16.mxu0 0
        %2936 = vmatmul.mubr.bf16.gmra.mrb[0].mxu0 %v2711
        %v2937 = vpop.f32.mrb[0].mxu0
        %v2938 = vadd.f32 %v2042, %v2937
        %v2939 = vpop.f32.mrb[0].mxu0
        %v2940 = vadd.f32 %v2042, %v2939
        %v2941 = vpop.f32.mrb[0].mxu0
        %v2942 = vadd.f32 %v2047, %v2941
        %v2943 = vpop.f32.mrb[0].mxu0
        %v2944 = vadd.f32 %v2047, %v2943
        %2945 = vmatprep.mubr.bf16.mxu0 0
        %2946 = vmatmul.mubr.bf16.gmra.mrb[0].mxu0 %v2714
        %v2947 = vpop.f32.mrb[0].mxu0
        %v2948 = vadd.f32 %v2052, %v2947
        %v2949 = vpop.f32.mrb[0].mxu0
        %v2950 = vadd.f32 %v2052, %v2949
        %v2951 = vpop.f32.mrb[0].mxu0
        %v2952 = vadd.f32 %v2057, %v2951
        %v2953 = vpop.f32.mrb[0].mxu0
        %v2954 = vadd.f32 %v2057, %v2953
        %2955 = vmatprep.mubr.bf16.mxu0 0
        %2956 = vmatmul.mubr.bf16.gmra.mrb[0].mxu0 %v2717
        %v2957 = vpop.f32.mrb[0].mxu0
        %v2958 = vadd.f32 %v2062, %v2957
        %v2959 = vpop.f32.mrb[0].mxu0
        %v2960 = vadd.f32 %v2062, %v2959
        %v2961 = vpop.f32.mrb[0].mxu0
        %v2962 = vadd.f32 %v2067, %v2961
        %v2963 = vpop.f32.mrb[0].mxu0
        %v2964 = vadd.f32 %v2067, %v2963
        %2965 = vmatprep.mubr.bf16.mxu0 0
        %2966 = vmatmul.mubr.bf16.gmra.mrb[0].mxu0 %v2720
        %v2967 = vpop.f32.mrb[0].mxu0
        %v2968 = vadd.f32 %v2072, %v2967
        %v2969 = vpop.f32.mrb[0].mxu0
        %v2970 = vadd.f32 %v2072, %v2969
        %v2971 = vpop.f32.mrb[0].mxu0
        %v2972 = vadd.f32 %v2077, %v2971
        %v2973 = vpop.f32.mrb[0].mxu0
        %v2974 = vadd.f32 %v2077, %v2973
        %2975 = vmatprep.mubr.bf16.mxu0 0
        %2976 = vmatmul.mubr.bf16.gmra.mrb[0].mxu0 %v2723
        %v2977 = vpop.f32.mrb[0].mxu0
        %v2978 = vadd.f32 %v2082, %v2977
        %v2979 = vpop.f32.mrb[0].mxu0
        %v2980 = vadd.f32 %v2082, %v2979
        %v2981 = vpop.f32.mrb[0].mxu0
        %v2982 = vadd.f32 %v2087, %v2981
        %v2983 = vpop.f32.mrb[0].mxu0
        %v2984 = vadd.f32 %v2087, %v2983
        %2985 = vmatprep.mubr.bf16.mxu0 0
        %2986 = vmatmul.mubr.bf16.gmra.mrb[0].mxu0 %v2726
        %v2987 = vpop.f32.mrb[0].mxu0
        %v2988 = vadd.f32 %v2092, %v2987
        %v2989 = vpop.f32.mrb[0].mxu0
        %v2990 = vadd.f32 %v2092, %v2989
        %v2991 = vpop.f32.mrb[0].mxu0
        %v2992 = vadd.f32 %v2097, %v2991
        %v2993 = vpop.f32.mrb[0].mxu0
        %v2994 = vadd.f32 %v2097, %v2993
        %2995 = vmatprep.mubr.bf16.mxu0 0
        %2996 = vmatmul.mubr.bf16.gmra.mrb[0].mxu0 %v2729
        %v2997 = vpop.f32.mrb[0].mxu0
        %v2998 = vadd.f32 %v2102, %v2997
        %v2999 = vpop.f32.mrb[0].mxu0
        %v3000 = vadd.f32 %v2102, %v2999
        %v3001 = vpop.f32.mrb[0].mxu0
        %v3002 = vadd.f32 %v2107, %v3001
        %v3003 = vpop.f32.mrb[0].mxu0
        %v3004 = vadd.f32 %v2107, %v3003
        %3005 = vmatprep.mubr.bf16.mxu0 0
        %3006 = vmatmul.mubr.bf16.gmra.mrb[0].mxu0 %v2732
        %v3007 = vpop.f32.mrb[0].mxu0
        %v3008 = vadd.f32 %v2112, %v3007
        %v3009 = vpop.f32.mrb[0].mxu0
        %v3010 = vadd.f32 %v2112, %v3009
        %v3011 = vpop.f32.mrb[0].mxu0
        %v3012 = vadd.f32 %v2117, %v3011
        %v3013 = vpop.f32.mrb[0].mxu0
        %v3014 = vadd.f32 %v2117, %v3013
        %3015 = vmatprep.mubr.bf16.mxu0 0
        %3016 = vmatmul.mubr.bf16.gmra.mrb[0].mxu0 %v2735
        %v3017 = vpop.f32.mrb[0].mxu0
        %v3018 = vadd.f32 %v2122, %v3017
        %v3019 = vpop.f32.mrb[0].mxu0
        %v3020 = vadd.f32 %v2122, %v3019
        %v3021 = vpop.f32.mrb[0].mxu0
        %v3022 = vadd.f32 %v2127, %v3021
        %v3023 = vpop.f32.mrb[0].mxu0
        %v3024 = vadd.f32 %v2127, %v3023
        %3025 = vmatprep.mubr.bf16.mxu0 0
        %3026 = vmatmul.mubr.bf16.gmra.mrb[0].mxu0 %v2738
        %v3027 = vpop.f32.mrb[0].mxu0
        %v3028 = vadd.f32 %v2132, %v3027
        %v3029 = vpop.f32.mrb[0].mxu0
        %v3030 = vadd.f32 %v2132, %v3029
        %v3031 = vpop.f32.mrb[0].mxu0
        %v3032 = vadd.f32 %v2137, %v3031
        %v3033 = vpop.f32.mrb[0].mxu0
        %v3034 = vadd.f32 %v2137, %v3033
        %3035 = vmatprep.mubr.bf16.mxu0 0
        %3036 = vmatmul.mubr.bf16.gmra.mrb[0].mxu0 %v2741
        %v3037 = vpop.f32.mrb[0].mxu0
        %v3038 = vadd.f32 %v2142, %v3037
        %v3039 = vpop.f32.mrb[0].mxu0
        %v3040 = vadd.f32 %v2142, %v3039
        %v3041 = vpop.f32.mrb[0].mxu0
        %v3042 = vadd.f32 %v2147, %v3041
        %v3043 = vpop.f32.mrb[0].mxu0
        %v3044 = vadd.f32 %v2147, %v3043
        %3045 = vmatprep.mubr.bf16.mxu0 0
        %3046 = vmatmul.mubr.bf16.gmra.mrb[0].mxu0 %v2744
        %v3047 = vpop.f32.mrb[0].mxu0
        %v3048 = vadd.f32 %v2152, %v3047
        %v3049 = vpop.f32.mrb[0].mxu0
        %v3050 = vadd.f32 %v2152, %v3049
        %v3051 = vpop.f32.mrb[0].mxu0
        %v3052 = vadd.f32 %v2157, %v3051
        %v3053 = vpop.f32.mrb[0].mxu0
        %v3054 = vadd.f32 %v2157, %v3053
        %3055 = vmatprep.mubr.bf16.mxu0 0
        %3056 = vmatmul.mubr.bf16.gmra.mrb[0].mxu0 %v2747
        %v3057 = vpop.f32.mrb[0].mxu0
        %v3058 = vadd.f32 %v2162, %v3057
        %v3059 = vpop.f32.mrb[0].mxu0
        %v3060 = vadd.f32 %v2162, %v3059
        %v3061 = vpop.f32.mrb[0].mxu0
        %v3062 = vadd.f32 %v2167, %v3061
        %v3063 = vpop.f32.mrb[0].mxu0
        %v3064 = vadd.f32 %v2167, %v3063
        %3065 = vmatprep.mubr.bf16.mxu0 0
        %3066 = vmatmul.mubr.bf16.gmra.mrb[0].mxu0 %v2750
        %v3067 = vpop.f32.mrb[0].mxu0
        %v3068 = vadd.f32 %v2172, %v3067
        %v3069 = vpop.f32.mrb[0].mxu0
        %v3070 = vadd.f32 %v2172, %v3069
        %v3071 = vpop.f32.mrb[0].mxu0
        %v3072 = vadd.f32 %v2177, %v3071
        %v3073 = vpop.f32.mrb[0].mxu0
        %v3074 = vadd.f32 %v2177, %v3073
        %3075 = vmatprep.mubr.bf16.mxu0 0
        %3076 = vmatmul.mubr.bf16.gmra.mrb[0].mxu0 %v2753
        %v3077 = vpop.f32.mrb[0].mxu0
        %v3078 = vadd.f32 %v2182, %v3077
        %v3079 = vpop.f32.mrb[0].mxu0
        %v3080 = vadd.f32 %v2182, %v3079
        %v3081 = vpop.f32.mrb[0].mxu0
        %v3082 = vadd.f32 %v2187, %v3081
        %v3083 = vpop.f32.mrb[0].mxu0
        %v3084 = vadd.f32 %v2187, %v3083
        %3085 = vmatprep.mubr.bf16.mxu0 0
        %3086 = vmatmul.mubr.bf16.gmra.mrb[0].mxu0 %v2756
        %v3087 = vpop.f32.mrb[0].mxu0
        %v3088 = vadd.f32 %v2192, %v3087
        %v3089 = vpop.f32.mrb[0].mxu0
        %v3090 = vadd.f32 %v2192, %v3089
        %v3091 = vpop.f32.mrb[0].mxu0
        %v3092 = vadd.f32 %v2197, %v3091
        %v3093 = vpop.f32.mrb[0].mxu0
        %v3094 = vadd.f32 %v2197, %v3093
        %3095 = vmatprep.mubr.bf16.mxu0 0
        %3096 = vmatmul.mubr.bf16.gmra.mrb[0].mxu0 %v2759
        %v3097 = vpop.f32.mrb[0].mxu0
        %v3098 = vadd.f32 %v2202, %v3097
        %v3099 = vpop.f32.mrb[0].mxu0
        %v3100 = vadd.f32 %v2202, %v3099
        %v3101 = vpop.f32.mrb[0].mxu0
        %v3102 = vadd.f32 %v2207, %v3101
        %v3103 = vpop.f32.mrb[0].mxu0
        %v3104 = vadd.f32 %v2207, %v3103
        %3105 = vmatprep.mubr.bf16.mxu0 0
        %3106 = vmatmul.mubr.bf16.gmra.mrb[0].mxu0 %v2762
        %v3107 = vpop.f32.mrb[0].mxu0
        %v3108 = vadd.f32 %v2212, %v3107
        %v3109 = vpop.f32.mrb[0].mxu0
        %v3110 = vadd.f32 %v2212, %v3109
        %v3111 = vpop.f32.mrb[0].mxu0
        %v3112 = vadd.f32 %v2217, %v3111
        %v3113 = vpop.f32.mrb[0].mxu0
        %v3114 = vadd.f32 %v2217, %v3113
        %3115 = vmatprep.mubr.bf16.mxu0 0
        %3116 = vmatmul.mubr.bf16.gmra.mrb[0].mxu0 %v2765
        %v3117 = vpop.f32.mrb[0].mxu0
        %v3118 = vadd.f32 %v2222, %v3117
        %v3119 = vpop.f32.mrb[0].mxu0
        %v3120 = vadd.f32 %v2222, %v3119
        %v3121 = vpop.f32.mrb[0].mxu0
        %v3122 = vadd.f32 %v2227, %v3121
        %v3123 = vpop.f32.mrb[0].mxu0
        %v3124 = vadd.f32 %v2227, %v3123
        %3125 = vmatprep.mubr.bf16.mxu0 0
        %3126 = vmatmul.mubr.bf16.gmra.mrb[0].mxu0 %v2768
        %v3127 = vpop.f32.mrb[0].mxu0
        %v3128 = vadd.f32 %v2232, %v3127
        %v3129 = vpop.f32.mrb[0].mxu0
        %v3130 = vadd.f32 %v2232, %v3129
        %v3131 = vpop.f32.mrb[0].mxu0
        %v3132 = vadd.f32 %v2237, %v3131
        %v3133 = vpop.f32.mrb[0].mxu0
        %v3134 = vadd.f32 %v2237, %v3133
        %3135 = vmatprep.mubr.bf16.mxu0 0
        %3136 = vmatmul.mubr.bf16.gmra.mrb[0].mxu0 %v2771
        %v3137 = vpop.f32.mrb[0].mxu0
        %v3138 = vadd.f32 %v2242, %v3137
        %v3139 = vpop.f32.mrb[0].mxu0
        %v3140 = vadd.f32 %v2242, %v3139
        %v3141 = vpop.f32.mrb[0].mxu0
        %v3142 = vadd.f32 %v2247, %v3141
        %v3143 = vpop.f32.mrb[0].mxu0
        %v3144 = vadd.f32 %v2247, %v3143
        %3145 = vmatprep.mubr.bf16.mxu0 0
        %3146 = vmatmul.mubr.bf16.gmra.mrb[0].mxu0 %v2774
        %v3147 = vpop.f32.mrb[0].mxu0
        %v3148 = vadd.f32 %v2252, %v3147
        %v3149 = vpop.f32.mrb[0].mxu0
        %v3150 = vadd.f32 %v2252, %v3149
        %v3151 = vpop.f32.mrb[0].mxu0
        %v3152 = vadd.f32 %v2257, %v3151
        %v3153 = vpop.f32.mrb[0].mxu0
        %v3154 = vadd.f32 %v2257, %v3153
        %3155 = vmatprep.mubr.bf16.mxu0 0
        %3156 = vmatmul.mubr.bf16.gmra.mrb[0].mxu0 %v2777
        %v3157 = vpop.f32.mrb[0].mxu0
        %v3158 = vadd.f32 %v2262, %v3157
        %v3159 = vpop.f32.mrb[0].mxu0
        %v3160 = vadd.f32 %v2262, %v3159
        %v3161 = vpop.f32.mrb[0].mxu0
        %v3162 = vadd.f32 %v2267, %v3161
        %v3163 = vpop.f32.mrb[0].mxu0
        %v3164 = vadd.f32 %v2267, %v3163
        %3165 = vmatprep.mubr.bf16.mxu0 0
        %3166 = vmatmul.mubr.bf16.gmra.mrb[0].mxu0 %v2780
        %v3167 = vpop.f32.mrb[0].mxu0
        %v3168 = vadd.f32 %v2272, %v3167
        %v3169 = vpop.f32.mrb[0].mxu0
        %v3170 = vadd.f32 %v2272, %v3169
        %v3171 = vpop.f32.mrb[0].mxu0
        %v3172 = vadd.f32 %v2277, %v3171
        %v3173 = vpop.f32.mrb[0].mxu0
        %v3174 = vadd.f32 %v2277, %v3173
        %3175 = vmatprep.mubr.bf16.mxu0 0
        %3176 = vmatmul.mubr.bf16.gmra.mrb[0].mxu0 %v2783
        %v3177 = vpop.f32.mrb[0].mxu0
        %v3178 = vadd.f32 %v2282, %v3177
        %v3179 = vpop.f32.mrb[0].mxu0
        %v3180 = vadd.f32 %v2282, %v3179
        %v3181 = vpop.f32.mrb[0].mxu0
        %v3182 = vadd.f32 %v2287, %v3181
        %v3183 = vpop.f32.mrb[0].mxu0
        %v3184 = vadd.f32 %v2287, %v3183
        %3185 = vmatprep.mubr.bf16.mxu0 0
        %3186 = vmatmul.mubr.bf16.gmra.mrb[0].mxu0 %v2786
        %v3187 = vpop.f32.mrb[0].mxu0
        %v3188 = vadd.f32 %v2292, %v3187
        %v3189 = vpop.f32.mrb[0].mxu0
        %v3190 = vadd.f32 %v2292, %v3189
        %v3191 = vpop.f32.mrb[0].mxu0
        %v3192 = vadd.f32 %v2297, %v3191
        %v3193 = vpop.f32.mrb[0].mxu0
        %v3194 = vadd.f32 %v2297, %v3193
        %3195 = vmatprep.mubr.bf16.mxu0 0
        %3196 = vmatmul.mubr.bf16.gmra.mrb[0].mxu0 %v2789
        %v3197 = vpop.f32.mrb[0].mxu0
        %v3198 = vadd.f32 %v2302, %v3197
        %v3199 = vpop.f32.mrb[0].mxu0
        %v3200 = vadd.f32 %v2302, %v3199
        %v3201 = vpop.f32.mrb[0].mxu0
        %v3202 = vadd.f32 %v2307, %v3201
        %v3203 = vpop.f32.mrb[0].mxu0
        %v3204 = vadd.f32 %v2307, %v3203
        %3205 = vmatprep.mubr.bf16.mxu0 0
        %3206 = vmatmul.mubr.bf16.gmra.mrb[0].mxu0 %v2792
        %v3207 = vpop.f32.mrb[0].mxu0
        %v3208 = vadd.f32 %v2312, %v3207
        %v3209 = vpop.f32.mrb[0].mxu0
        %v3210 = vadd.f32 %v2312, %v3209
        %v3211 = vpop.f32.mrb[0].mxu0
        %v3212 = vadd.f32 %v2317, %v3211
        %v3213 = vpop.f32.mrb[0].mxu0
        %v3214 = vadd.f32 %v2317, %v3213
        %3215 = vmatprep.mubr.bf16.mxu0 0
        %3216 = vmatmul.mubr.bf16.gmra.mrb[0].mxu0 %v2795
        %v3217 = vpop.f32.mrb[0].mxu0
        %v3218 = vadd.f32 %v2322, %v3217
        %v3219 = vpop.f32.mrb[0].mxu0
        %v3220 = vadd.f32 %v2322, %v3219
        %v3221 = vpop.f32.mrb[0].mxu0
        %v3222 = vadd.f32 %v2327, %v3221
        %v3223 = vpop.f32.mrb[0].mxu0
        %v3224 = vadd.f32 %v2327, %v3223
        %3225 = vmatprep.mubr.bf16.mxu0 0
        %3226 = vmatmul.mubr.bf16.gmra.mrb[0].mxu0 %v2798
        %v3227 = vpop.f32.mrb[0].mxu0
        %v3228 = vadd.f32 %v2332, %v3227
        %v3229 = vpop.f32.mrb[0].mxu0
        %v3230 = vadd.f32 %v2332, %v3229
        %v3231 = vpop.f32.mrb[0].mxu0
        %v3232 = vadd.f32 %v2337, %v3231
        %v3233 = vpop.f32.mrb[0].mxu0
        %v3234 = vadd.f32 %v2337, %v3233
        %3235 = vmatprep.mubr.bf16.mxu0 0
        %3236 = vmatmul.mubr.bf16.gmra.mrb[0].mxu0 %v2801
        %v3237 = vpop.f32.mrb[0].mxu0
        %v3238 = vadd.f32 %v2342, %v3237
        %v3239 = vpop.f32.mrb[0].mxu0
        %v3240 = vadd.f32 %v2342, %v3239
        %v3241 = vpop.f32.mrb[0].mxu0
        %v3242 = vadd.f32 %v2347, %v3241
        %v3243 = vpop.f32.mrb[0].mxu0
        %v3244 = vadd.f32 %v2347, %v3243
        %3245 = vmatprep.mubr.bf16.mxu0 0
        %3246 = vmatmul.mubr.bf16.gmra.mrb[0].mxu0 %v2804
        %v3247 = vpop.f32.mrb[0].mxu0
        %v3248 = vadd.f32 %v2352, %v3247
        %v3249 = vpop.f32.mrb[0].mxu0
        %v3250 = vadd.f32 %v2352, %v3249
        %v3251 = vpop.f32.mrb[0].mxu0
        %v3252 = vadd.f32 %v2357, %v3251
        %v3253 = vpop.f32.mrb[0].mxu0
        %v3254 = vadd.f32 %v2357, %v3253
        %3255 = vmatprep.mubr.bf16.mxu0 0
        %3256 = vmatmul.mubr.bf16.gmra.mrb[0].mxu0 %v2807
        %v3257 = vpop.f32.mrb[0].mxu0
        %v3258 = vadd.f32 %v2362, %v3257
        %v3259 = vpop.f32.mrb[0].mxu0
        %v3260 = vadd.f32 %v2362, %v3259
        %v3261 = vpop.f32.mrb[0].mxu0
        %v3262 = vadd.f32 %v2367, %v3261
        %v3263 = vpop.f32.mrb[0].mxu0
        %v3264 = vadd.f32 %v2367, %v3263
        %3265 = vmatprep.mubr.bf16.mxu0 0
        %3266 = vmatmul.mubr.bf16.gmra.mrb[0].mxu0 %v2810
        %v3267 = vpop.f32.mrb[0].mxu0
        %v3268 = vadd.f32 %v2372, %v3267
        %v3269 = vpop.f32.mrb[0].mxu0
        %v3270 = vadd.f32 %v2372, %v3269
        %v3271 = vpop.f32.mrb[0].mxu0
        %v3272 = vadd.f32 %v2377, %v3271
        %v3273 = vpop.f32.mrb[0].mxu0
        %v3274 = vadd.f32 %v2377, %v3273
        %3275 = vmatprep.mubr.bf16.mxu0 0
        %3276 = vmatmul.mubr.bf16.gmra.mrb[0].mxu0 %v2813
        %v3277 = vpop.f32.mrb[0].mxu0
        %v3278 = vadd.f32 %v2382, %v3277
        %v3279 = vpop.f32.mrb[0].mxu0
        %v3280 = vadd.f32 %v2382, %v3279
        %v3281 = vpop.f32.mrb[0].mxu0
        %v3282 = vadd.f32 %v2387, %v3281
        %v3283 = vpop.f32.mrb[0].mxu0
        %v3284 = vadd.f32 %v2387, %v3283
        %3285 = vmatprep.mubr.bf16.mxu0 0
        %3286 = vmatmul.mubr.bf16.gmra.mrb[0].mxu0 %v2816
        %v3287 = vpop.f32.mrb[0].mxu0
        %v3288 = vadd.f32 %v2392, %v3287
        %v3289 = vpop.f32.mrb[0].mxu0
        %v3290 = vadd.f32 %v2392, %v3289
        %v3291 = vpop.f32.mrb[0].mxu0
        %v3292 = vadd.f32 %v2397, %v3291
        %v3293 = vpop.f32.mrb[0].mxu0
        %v3294 = vadd.f32 %v2397, %v3293
        %3295 = vmatprep.mubr.bf16.mxu0 0
        %3296 = vmatmul.mubr.bf16.gmra.mrb[0].mxu0 %v2819
        %v3297 = vpop.f32.mrb[0].mxu0
        %v3298 = vadd.f32 %v2402, %v3297
        %v3299 = vpop.f32.mrb[0].mxu0
        %v3300 = vadd.f32 %v2402, %v3299
        %v3301 = vpop.f32.mrb[0].mxu0
        %v3302 = vadd.f32 %v2407, %v3301
        %v3303 = vpop.f32.mrb[0].mxu0
        %v3304 = vadd.f32 %v2407, %v3303
        %3305 = vmatprep.mubr.bf16.mxu0 0
        %3306 = vmatmul.mubr.bf16.gmra.mrb[0].mxu0 %v2822
        %v3307 = vpop.f32.mrb[0].mxu0
        %v3308 = vadd.f32 %v2412, %v3307
        %v3309 = vpop.f32.mrb[0].mxu0
        %v3310 = vadd.f32 %v2412, %v3309
        %v3311 = vpop.f32.mrb[0].mxu0
        %v3312 = vadd.f32 %v2417, %v3311
        %v3313 = vpop.f32.mrb[0].mxu0
        %v3314 = vadd.f32 %v2417, %v3313
        %3315 = vmatprep.mubr.bf16.mxu0 0
        %3316 = vmatmul.mubr.bf16.gmra.mrb[0].mxu0 %v2825
        %v3317 = vpop.f32.mrb[0].mxu0
        %v3318 = vadd.f32 %v2422, %v3317
        %v3319 = vpop.f32.mrb[0].mxu0
        %v3320 = vadd.f32 %v2422, %v3319
        %v3321 = vpop.f32.mrb[0].mxu0
        %v3322 = vadd.f32 %v2427, %v3321
        %v3323 = vpop.f32.mrb[0].mxu0
        %v3324 = vadd.f32 %v2427, %v3323
        %3325 = vmatprep.mubr.bf16.mxu0 0
        %3326 = vmatmul.mubr.bf16.gmra.mrb[0].mxu0 %v2828
        %v3327 = vpop.f32.mrb[0].mxu0
        %v3328 = vadd.f32 %v2432, %v3327
        %v3329 = vpop.f32.mrb[0].mxu0
        %v3330 = vadd.f32 %v2432, %v3329
        %v3331 = vpop.f32.mrb[0].mxu0
        %v3332 = vadd.f32 %v2437, %v3331
        %v3333 = vpop.f32.mrb[0].mxu0
        %v3334 = vadd.f32 %v2437, %v3333
        %3335 = vmatprep.mubr.bf16.mxu0 0
        %3336 = vmatmul.mubr.bf16.gmra.mrb[0].mxu0 %v2831
        %v3337 = vpop.f32.mrb[0].mxu0
        %v3338 = vadd.f32 %v2442, %v3337
        %v3339 = vpop.f32.mrb[0].mxu0
        %v3340 = vadd.f32 %v2442, %v3339
        %v3341 = vpop.f32.mrb[0].mxu0
        %v3342 = vadd.f32 %v2447, %v3341
        %v3343 = vpop.f32.mrb[0].mxu0
        %v3344 = vadd.f32 %v2447, %v3343
        %3345 = vdwg.mxu0
        %3346 = vmatprep.subr.bf16.mxu0 %v1860
        %3347 = vmatpush1.bf16.msra.mxu0 %v1859
        %3348 = vmatprep.subr.bf16.mxu0 %v1864
        %3349 = vmatpush1.bf16.msra.mxu0 %v1863
        %3350 = vmatprep.subr.bf16.mxu0 %v1868
        %3351 = vmatpush1.bf16.msra.mxu0 %v1867
        %3352 = vmatprep.subr.bf16.mxu0 %v1872
        %3353 = vmatpush1.bf16.msra.mxu0 %v1871
        %3354 = vmatprep.subr.bf16.mxu0 0
        %3355 = vmatpush1.bf16.msra.mxu0 0
        %3356 = vmatprep.subr.bf16.mxu0 0
        %3357 = vmatpush1.bf16.msra.mxu0 0
        %3358 = vmatprep.subr.bf16.mxu0 0
        %3359 = vmatpush1.bf16.msra.mxu0 0
        %3360 = vmatprep.subr.bf16.mxu0 0
        %3361 = vmatpush1.bf16.msra.mxu0 0
        %3362 = vmatprep.subr.bf16.mxu0 0
        %3363 = vmatpush1.bf16.msra.mxu0 0
        %3364 = vmatprep.subr.bf16.mxu0 0
        %3365 = vmatpush1.bf16.msra.mxu0 0
        %3366 = vmatprep.subr.bf16.mxu0 0
        %3367 = vmatpush1.bf16.msra.mxu0 0
        %3368 = vmatprep.subr.bf16.mxu0 0
        %3369 = vmatpush1.bf16.msra.mxu0 0
        %3370 = vmatprep.subr.bf16.mxu0 0
        %3371 = vmatpush1.bf16.msra.mxu0 0
        %3372 = vmatprep.subr.bf16.mxu0 0
        %3373 = vmatpush1.bf16.msra.mxu0 0
        %3374 = vmatprep.subr.bf16.mxu0 0
        %3375 = vmatpush1.bf16.msra.mxu0 0
        %3376 = vmatprep.subr.bf16.mxu0 0
        %3377 = vmatpush1.bf16.msra.mxu0 0
        %3378 = vmatprep.mubr.bf16.mxu0 0
        %3379 = vmatmul.mubr.bf16.gmra.mrb[0].mxu0 %v2690
        %v3380 = vpop.f32.mrb[0].mxu0
        %v3381 = vadd.f32 %v1972, %v3380
        %v3382 = vpop.f32.mrb[0].mxu0
        %v3383 = vadd.f32 %v1972, %v3382
        %v3384 = vpop.f32.mrb[0].mxu0
        %v3385 = vadd.f32 %v1977, %v3384
        %v3386 = vpop.f32.mrb[0].mxu0
        %v3387 = vadd.f32 %v1977, %v3386
        %3388 = vmatprep.mubr.bf16.mxu0 0
        %3389 = vmatmul.mubr.bf16.gmra.mrb[0].mxu0 %v2693
        %v3390 = vpop.f32.mrb[0].mxu0
        %v3391 = vadd.f32 %v1982, %v3390
        %v3392 = vpop.f32.mrb[0].mxu0
        %v3393 = vadd.f32 %v1982, %v3392
        %v3394 = vpop.f32.mrb[0].mxu0
        %v3395 = vadd.f32 %v1987, %v3394
        %v3396 = vpop.f32.mrb[0].mxu0
        %v3397 = vadd.f32 %v1987, %v3396
        %3398 = vmatprep.mubr.bf16.mxu0 0
        %3399 = vmatmul.mubr.bf16.gmra.mrb[0].mxu0 %v2696
        %v3400 = vpop.f32.mrb[0].mxu0
        %v3401 = vadd.f32 %v1992, %v3400
        %v3402 = vpop.f32.mrb[0].mxu0
        %v3403 = vadd.f32 %v1992, %v3402
        %v3404 = vpop.f32.mrb[0].mxu0
        %v3405 = vadd.f32 %v1997, %v3404
        %v3406 = vpop.f32.mrb[0].mxu0
        %v3407 = vadd.f32 %v1997, %v3406
        %3408 = vmatprep.mubr.bf16.mxu0 0
        %3409 = vmatmul.mubr.bf16.gmra.mrb[0].mxu0 %v2699
        %v3410 = vpop.f32.mrb[0].mxu0
        %v3411 = vadd.f32 %v2002, %v3410
        %v3412 = vpop.f32.mrb[0].mxu0
        %v3413 = vadd.f32 %v2002, %v3412
        %v3414 = vpop.f32.mrb[0].mxu0
        %v3415 = vadd.f32 %v2007, %v3414
        %v3416 = vpop.f32.mrb[0].mxu0
        %v3417 = vadd.f32 %v2007, %v3416
        %3418 = vmatprep.mubr.bf16.mxu0 0
        %3419 = vmatmul.mubr.bf16.gmra.mrb[0].mxu0 %v2702
        %v3420 = vpop.f32.mrb[0].mxu0
        %v3421 = vadd.f32 %v2012, %v3420
        %v3422 = vpop.f32.mrb[0].mxu0
        %v3423 = vadd.f32 %v2012, %v3422
        %v3424 = vpop.f32.mrb[0].mxu0
        %v3425 = vadd.f32 %v2017, %v3424
        %v3426 = vpop.f32.mrb[0].mxu0
        %v3427 = vadd.f32 %v2017, %v3426
        %3428 = vmatprep.mubr.bf16.mxu0 0
        %3429 = vmatmul.mubr.bf16.gmra.mrb[0].mxu0 %v2705
        %v3430 = vpop.f32.mrb[0].mxu0
        %v3431 = vadd.f32 %v2022, %v3430
        %v3432 = vpop.f32.mrb[0].mxu0
        %v3433 = vadd.f32 %v2022, %v3432
        %v3434 = vpop.f32.mrb[0].mxu0
        %v3435 = vadd.f32 %v2027, %v3434
        %v3436 = vpop.f32.mrb[0].mxu0
        %v3437 = vadd.f32 %v2027, %v3436
        %3438 = vmatprep.mubr.bf16.mxu0 0
        %3439 = vmatmul.mubr.bf16.gmra.mrb[0].mxu0 %v2708
        %v3440 = vpop.f32.mrb[0].mxu0
        %v3441 = vadd.f32 %v2032, %v3440
        %v3442 = vpop.f32.mrb[0].mxu0
        %v3443 = vadd.f32 %v2032, %v3442
        %v3444 = vpop.f32.mrb[0].mxu0
        %v3445 = vadd.f32 %v2037, %v3444
        %v3446 = vpop.f32.mrb[0].mxu0
        %v3447 = vadd.f32 %v2037, %v3446
        %3448 = vmatprep.mubr.bf16.mxu0 0
        %3449 = vmatmul.mubr.bf16.gmra.mrb[0].mxu0 %v2711
        %v3450 = vpop.f32.mrb[0].mxu0
        %v3451 = vadd.f32 %v2042, %v3450
        %v3452 = vpop.f32.mrb[0].mxu0
        %v3453 = vadd.f32 %v2042, %v3452
        %v3454 = vpop.f32.mrb[0].mxu0
        %v3455 = vadd.f32 %v2047, %v3454
        %v3456 = vpop.f32.mrb[0].mxu0
        %v3457 = vadd.f32 %v2047, %v3456
        %3458 = vmatprep.mubr.bf16.mxu0 0
        %3459 = vmatmul.mubr.bf16.gmra.mrb[0].mxu0 %v2714
        %v3460 = vpop.f32.mrb[0].mxu0
        %v3461 = vadd.f32 %v2052, %v3460
        %v3462 = vpop.f32.mrb[0].mxu0
        %v3463 = vadd.f32 %v2052, %v3462
        %v3464 = vpop.f32.mrb[0].mxu0
        %v3465 = vadd.f32 %v2057, %v3464
        %v3466 = vpop.f32.mrb[0].mxu0
        %v3467 = vadd.f32 %v2057, %v3466
        %3468 = vmatprep.mubr.bf16.mxu0 0
        %3469 = vmatmul.mubr.bf16.gmra.mrb[0].mxu0 %v2717
        %v3470 = vpop.f32.mrb[0].mxu0
        %v3471 = vadd.f32 %v2062, %v3470
        %v3472 = vpop.f32.mrb[0].mxu0
        %v3473 = vadd.f32 %v2062, %v3472
        %v3474 = vpop.f32.mrb[0].mxu0
        %v3475 = vadd.f32 %v2067, %v3474
        %v3476 = vpop.f32.mrb[0].mxu0
        %v3477 = vadd.f32 %v2067, %v3476
        %3478 = vmatprep.mubr.bf16.mxu0 0
        %3479 = vmatmul.mubr.bf16.gmra.mrb[0].mxu0 %v2720
        %v3480 = vpop.f32.mrb[0].mxu0
        %v3481 = vadd.f32 %v2072, %v3480
        %v3482 = vpop.f32.mrb[0].mxu0
        %v3483 = vadd.f32 %v2072, %v3482
        %v3484 = vpop.f32.mrb[0].mxu0
        %v3485 = vadd.f32 %v2077, %v3484
        %v3486 = vpop.f32.mrb[0].mxu0
        %v3487 = vadd.f32 %v2077, %v3486
        %3488 = vmatprep.mubr.bf16.mxu0 0
        %3489 = vmatmul.mubr.bf16.gmra.mrb[0].mxu0 %v2723
        %v3490 = vpop.f32.mrb[0].mxu0
        %v3491 = vadd.f32 %v2082, %v3490
        %v3492 = vpop.f32.mrb[0].mxu0
        %v3493 = vadd.f32 %v2082, %v3492
        %v3494 = vpop.f32.mrb[0].mxu0
        %v3495 = vadd.f32 %v2087, %v3494
        %v3496 = vpop.f32.mrb[0].mxu0
        %v3497 = vadd.f32 %v2087, %v3496
        %3498 = vmatprep.mubr.bf16.mxu0 0
        %3499 = vmatmul.mubr.bf16.gmra.mrb[0].mxu0 %v2726
        %v3500 = vpop.f32.mrb[0].mxu0
        %v3501 = vadd.f32 %v2092, %v3500
        %v3502 = vpop.f32.mrb[0].mxu0
        %v3503 = vadd.f32 %v2092, %v3502
        %v3504 = vpop.f32.mrb[0].mxu0
        %v3505 = vadd.f32 %v2097, %v3504
        %v3506 = vpop.f32.mrb[0].mxu0
        %v3507 = vadd.f32 %v2097, %v3506
        %3508 = vmatprep.mubr.bf16.mxu0 0
        %3509 = vmatmul.mubr.bf16.gmra.mrb[0].mxu0 %v2729
        %v3510 = vpop.f32.mrb[0].mxu0
        %v3511 = vadd.f32 %v2102, %v3510
        %v3512 = vpop.f32.mrb[0].mxu0
        %v3513 = vadd.f32 %v2102, %v3512
        %v3514 = vpop.f32.mrb[0].mxu0
        %v3515 = vadd.f32 %v2107, %v3514
        %v3516 = vpop.f32.mrb[0].mxu0
        %v3517 = vadd.f32 %v2107, %v3516
        %3518 = vmatprep.mubr.bf16.mxu0 0
        %3519 = vmatmul.mubr.bf16.gmra.mrb[0].mxu0 %v2732
        %v3520 = vpop.f32.mrb[0].mxu0
        %v3521 = vadd.f32 %v2112, %v3520
        %v3522 = vpop.f32.mrb[0].mxu0
        %v3523 = vadd.f32 %v2112, %v3522
        %v3524 = vpop.f32.mrb[0].mxu0
        %v3525 = vadd.f32 %v2117, %v3524
        %v3526 = vpop.f32.mrb[0].mxu0
        %v3527 = vadd.f32 %v2117, %v3526
        %3528 = vmatprep.mubr.bf16.mxu0 0
        %3529 = vmatmul.mubr.bf16.gmra.mrb[0].mxu0 %v2735
        %v3530 = vpop.f32.mrb[0].mxu0
        %v3531 = vadd.f32 %v2122, %v3530
        %v3532 = vpop.f32.mrb[0].mxu0
        %v3533 = vadd.f32 %v2122, %v3532
        %v3534 = vpop.f32.mrb[0].mxu0
        %v3535 = vadd.f32 %v2127, %v3534
        %v3536 = vpop.f32.mrb[0].mxu0
        %v3537 = vadd.f32 %v2127, %v3536
        %3538 = vmatprep.mubr.bf16.mxu0 0
        %3539 = vmatmul.mubr.bf16.gmra.mrb[0].mxu0 %v2738
        %v3540 = vpop.f32.mrb[0].mxu0
        %v3541 = vadd.f32 %v2132, %v3540
        %v3542 = vpop.f32.mrb[0].mxu0
        %v3543 = vadd.f32 %v2132, %v3542
        %v3544 = vpop.f32.mrb[0].mxu0
        %v3545 = vadd.f32 %v2137, %v3544
        %v3546 = vpop.f32.mrb[0].mxu0
        %v3547 = vadd.f32 %v2137, %v3546
        %3548 = vmatprep.mubr.bf16.mxu0 0
        %3549 = vmatmul.mubr.bf16.gmra.mrb[0].mxu0 %v2741
        %v3550 = vpop.f32.mrb[0].mxu0
        %v3551 = vadd.f32 %v2142, %v3550
        %v3552 = vpop.f32.mrb[0].mxu0
        %v3553 = vadd.f32 %v2142, %v3552
        %v3554 = vpop.f32.mrb[0].mxu0
        %v3555 = vadd.f32 %v2147, %v3554
        %v3556 = vpop.f32.mrb[0].mxu0
        %v3557 = vadd.f32 %v2147, %v3556
        %3558 = vmatprep.mubr.bf16.mxu0 0
        %3559 = vmatmul.mubr.bf16.gmra.mrb[0].mxu0 %v2744
        %v3560 = vpop.f32.mrb[0].mxu0
        %v3561 = vadd.f32 %v2152, %v3560
        %v3562 = vpop.f32.mrb[0].mxu0
        %v3563 = vadd.f32 %v2152, %v3562
        %v3564 = vpop.f32.mrb[0].mxu0
        %v3565 = vadd.f32 %v2157, %v3564
        %v3566 = vpop.f32.mrb[0].mxu0
        %v3567 = vadd.f32 %v2157, %v3566
        %3568 = vmatprep.mubr.bf16.mxu0 0
        %3569 = vmatmul.mubr.bf16.gmra.mrb[0].mxu0 %v2747
        %v3570 = vpop.f32.mrb[0].mxu0
        %v3571 = vadd.f32 %v2162, %v3570
        %v3572 = vpop.f32.mrb[0].mxu0
        %v3573 = vadd.f32 %v2162, %v3572
        %v3574 = vpop.f32.mrb[0].mxu0
        %v3575 = vadd.f32 %v2167, %v3574
        %v3576 = vpop.f32.mrb[0].mxu0
        %v3577 = vadd.f32 %v2167, %v3576
        %3578 = vmatprep.mubr.bf16.mxu0 0
        %3579 = vmatmul.mubr.bf16.gmra.mrb[0].mxu0 %v2750
        %v3580 = vpop.f32.mrb[0].mxu0
        %v3581 = vadd.f32 %v2172, %v3580
        %v3582 = vpop.f32.mrb[0].mxu0
        %v3583 = vadd.f32 %v2172, %v3582
        %v3584 = vpop.f32.mrb[0].mxu0
        %v3585 = vadd.f32 %v2177, %v3584
        %v3586 = vpop.f32.mrb[0].mxu0
        %v3587 = vadd.f32 %v2177, %v3586
        %3588 = vmatprep.mubr.bf16.mxu0 0
        %3589 = vmatmul.mubr.bf16.gmra.mrb[0].mxu0 %v2753
        %v3590 = vpop.f32.mrb[0].mxu0
        %v3591 = vadd.f32 %v2182, %v3590
        %v3592 = vpop.f32.mrb[0].mxu0
        %v3593 = vadd.f32 %v2182, %v3592
        %v3594 = vpop.f32.mrb[0].mxu0
        %v3595 = vadd.f32 %v2187, %v3594
        %v3596 = vpop.f32.mrb[0].mxu0
        %v3597 = vadd.f32 %v2187, %v3596
        %3598 = vmatprep.mubr.bf16.mxu0 0
        %3599 = vmatmul.mubr.bf16.gmra.mrb[0].mxu0 %v2756
        %v3600 = vpop.f32.mrb[0].mxu0
        %v3601 = vadd.f32 %v2192, %v3600
        %v3602 = vpop.f32.mrb[0].mxu0
        %v3603 = vadd.f32 %v2192, %v3602
        %v3604 = vpop.f32.mrb[0].mxu0
        %v3605 = vadd.f32 %v2197, %v3604
        %v3606 = vpop.f32.mrb[0].mxu0
        %v3607 = vadd.f32 %v2197, %v3606
        %3608 = vmatprep.mubr.bf16.mxu0 0
        %3609 = vmatmul.mubr.bf16.gmra.mrb[0].mxu0 %v2759
        %v3610 = vpop.f32.mrb[0].mxu0
        %v3611 = vadd.f32 %v2202, %v3610
        %v3612 = vpop.f32.mrb[0].mxu0
        %v3613 = vadd.f32 %v2202, %v3612
        %v3614 = vpop.f32.mrb[0].mxu0
        %v3615 = vadd.f32 %v2207, %v3614
        %v3616 = vpop.f32.mrb[0].mxu0
        %v3617 = vadd.f32 %v2207, %v3616
        %3618 = vmatprep.mubr.bf16.mxu0 0
        %3619 = vmatmul.mubr.bf16.gmra.mrb[0].mxu0 %v2762
        %v3620 = vpop.f32.mrb[0].mxu0
        %v3621 = vadd.f32 %v2212, %v3620
        %v3622 = vpop.f32.mrb[0].mxu0
        %v3623 = vadd.f32 %v2212, %v3622
        %v3624 = vpop.f32.mrb[0].mxu0
        %v3625 = vadd.f32 %v2217, %v3624
        %v3626 = vpop.f32.mrb[0].mxu0
        %v3627 = vadd.f32 %v2217, %v3626
        %3628 = vmatprep.mubr.bf16.mxu0 0
        %3629 = vmatmul.mubr.bf16.gmra.mrb[0].mxu0 %v2765
        %v3630 = vpop.f32.mrb[0].mxu0
        %v3631 = vadd.f32 %v2222, %v3630
        %v3632 = vpop.f32.mrb[0].mxu0
        %v3633 = vadd.f32 %v2222, %v3632
        %v3634 = vpop.f32.mrb[0].mxu0
        %v3635 = vadd.f32 %v2227, %v3634
        %v3636 = vpop.f32.mrb[0].mxu0
        %v3637 = vadd.f32 %v2227, %v3636
        %3638 = vmatprep.mubr.bf16.mxu0 0
        %3639 = vmatmul.mubr.bf16.gmra.mrb[0].mxu0 %v2768
        %v3640 = vpop.f32.mrb[0].mxu0
        %v3641 = vadd.f32 %v2232, %v3640
        %v3642 = vpop.f32.mrb[0].mxu0
        %v3643 = vadd.f32 %v2232, %v3642
        %v3644 = vpop.f32.mrb[0].mxu0
        %v3645 = vadd.f32 %v2237, %v3644
        %v3646 = vpop.f32.mrb[0].mxu0
        %v3647 = vadd.f32 %v2237, %v3646
        %3648 = vmatprep.mubr.bf16.mxu0 0
        %3649 = vmatmul.mubr.bf16.gmra.mrb[0].mxu0 %v2771
        %v3650 = vpop.f32.mrb[0].mxu0
        %v3651 = vadd.f32 %v2242, %v3650
        %v3652 = vpop.f32.mrb[0].mxu0
        %v3653 = vadd.f32 %v2242, %v3652
        %v3654 = vpop.f32.mrb[0].mxu0
        %v3655 = vadd.f32 %v2247, %v3654
        %v3656 = vpop.f32.mrb[0].mxu0
        %v3657 = vadd.f32 %v2247, %v3656
        %3658 = vmatprep.mubr.bf16.mxu0 0
        %3659 = vmatmul.mubr.bf16.gmra.mrb[0].mxu0 %v2774
        %v3660 = vpop.f32.mrb[0].mxu0
        %v3661 = vadd.f32 %v2252, %v3660
        %v3662 = vpop.f32.mrb[0].mxu0
        %v3663 = vadd.f32 %v2252, %v3662
        %v3664 = vpop.f32.mrb[0].mxu0
        %v3665 = vadd.f32 %v2257, %v3664
        %v3666 = vpop.f32.mrb[0].mxu0
        %v3667 = vadd.f32 %v2257, %v3666
        %3668 = vmatprep.mubr.bf16.mxu0 0
        %3669 = vmatmul.mubr.bf16.gmra.mrb[0].mxu0 %v2777
        %v3670 = vpop.f32.mrb[0].mxu0
        %v3671 = vadd.f32 %v2262, %v3670
        %v3672 = vpop.f32.mrb[0].mxu0
        %v3673 = vadd.f32 %v2262, %v3672
        %v3674 = vpop.f32.mrb[0].mxu0
        %v3675 = vadd.f32 %v2267, %v3674
        %v3676 = vpop.f32.mrb[0].mxu0
        %v3677 = vadd.f32 %v2267, %v3676
        %3678 = vmatprep.mubr.bf16.mxu0 0
        %3679 = vmatmul.mubr.bf16.gmra.mrb[0].mxu0 %v2780
        %v3680 = vpop.f32.mrb[0].mxu0
        %v3681 = vadd.f32 %v2272, %v3680
        %v3682 = vpop.f32.mrb[0].mxu0
        %v3683 = vadd.f32 %v2272, %v3682
        %v3684 = vpop.f32.mrb[0].mxu0
        %v3685 = vadd.f32 %v2277, %v3684
        %v3686 = vpop.f32.mrb[0].mxu0
        %v3687 = vadd.f32 %v2277, %v3686
        %3688 = vmatprep.mubr.bf16.mxu0 0
        %3689 = vmatmul.mubr.bf16.gmra.mrb[0].mxu0 %v2783
        %v3690 = vpop.f32.mrb[0].mxu0
        %v3691 = vadd.f32 %v2282, %v3690
        %v3692 = vpop.f32.mrb[0].mxu0
        %v3693 = vadd.f32 %v2282, %v3692
        %v3694 = vpop.f32.mrb[0].mxu0
        %v3695 = vadd.f32 %v2287, %v3694
        %v3696 = vpop.f32.mrb[0].mxu0
        %v3697 = vadd.f32 %v2287, %v3696
        %3698 = vmatprep.mubr.bf16.mxu0 0
        %3699 = vmatmul.mubr.bf16.gmra.mrb[0].mxu0 %v2786
        %v3700 = vpop.f32.mrb[0].mxu0
        %v3701 = vadd.f32 %v2292, %v3700
        %v3702 = vpop.f32.mrb[0].mxu0
        %v3703 = vadd.f32 %v2292, %v3702
        %v3704 = vpop.f32.mrb[0].mxu0
        %v3705 = vadd.f32 %v2297, %v3704
        %v3706 = vpop.f32.mrb[0].mxu0
        %v3707 = vadd.f32 %v2297, %v3706
        %3708 = vmatprep.mubr.bf16.mxu0 0
        %3709 = vmatmul.mubr.bf16.gmra.mrb[0].mxu0 %v2789
        %v3710 = vpop.f32.mrb[0].mxu0
        %v3711 = vadd.f32 %v2302, %v3710
        %v3712 = vpop.f32.mrb[0].mxu0
        %v3713 = vadd.f32 %v2302, %v3712
        %v3714 = vpop.f32.mrb[0].mxu0
        %v3715 = vadd.f32 %v2307, %v3714
        %v3716 = vpop.f32.mrb[0].mxu0
        %v3717 = vadd.f32 %v2307, %v3716
        %3718 = vmatprep.mubr.bf16.mxu0 0
        %3719 = vmatmul.mubr.bf16.gmra.mrb[0].mxu0 %v2792
        %v3720 = vpop.f32.mrb[0].mxu0
        %v3721 = vadd.f32 %v2312, %v3720
        %v3722 = vpop.f32.mrb[0].mxu0
        %v3723 = vadd.f32 %v2312, %v3722
        %v3724 = vpop.f32.mrb[0].mxu0
        %v3725 = vadd.f32 %v2317, %v3724
        %v3726 = vpop.f32.mrb[0].mxu0
        %v3727 = vadd.f32 %v2317, %v3726
        %3728 = vmatprep.mubr.bf16.mxu0 0
        %3729 = vmatmul.mubr.bf16.gmra.mrb[0].mxu0 %v2795
        %v3730 = vpop.f32.mrb[0].mxu0
        %v3731 = vadd.f32 %v2322, %v3730
        %v3732 = vpop.f32.mrb[0].mxu0
        %v3733 = vadd.f32 %v2322, %v3732
        %v3734 = vpop.f32.mrb[0].mxu0
        %v3735 = vadd.f32 %v2327, %v3734
        %v3736 = vpop.f32.mrb[0].mxu0
        %v3737 = vadd.f32 %v2327, %v3736
        %3738 = vmatprep.mubr.bf16.mxu0 0
        %3739 = vmatmul.mubr.bf16.gmra.mrb[0].mxu0 %v2798
        %v3740 = vpop.f32.mrb[0].mxu0
        %v3741 = vadd.f32 %v2332, %v3740
        %v3742 = vpop.f32.mrb[0].mxu0
        %v3743 = vadd.f32 %v2332, %v3742
        %v3744 = vpop.f32.mrb[0].mxu0
        %v3745 = vadd.f32 %v2337, %v3744
        %v3746 = vpop.f32.mrb[0].mxu0
        %v3747 = vadd.f32 %v2337, %v3746
        %3748 = vmatprep.mubr.bf16.mxu0 0
        %3749 = vmatmul.mubr.bf16.gmra.mrb[0].mxu0 %v2801
        %v3750 = vpop.f32.mrb[0].mxu0
        %v3751 = vadd.f32 %v2342, %v3750
        %v3752 = vpop.f32.mrb[0].mxu0
        %v3753 = vadd.f32 %v2342, %v3752
        %v3754 = vpop.f32.mrb[0].mxu0
        %v3755 = vadd.f32 %v2347, %v3754
        %v3756 = vpop.f32.mrb[0].mxu0
        %v3757 = vadd.f32 %v2347, %v3756
        %3758 = vmatprep.mubr.bf16.mxu0 0
        %3759 = vmatmul.mubr.bf16.gmra.mrb[0].mxu0 %v2804
        %v3760 = vpop.f32.mrb[0].mxu0
        %v3761 = vadd.f32 %v2352, %v3760
        %v3762 = vpop.f32.mrb[0].mxu0
        %v3763 = vadd.f32 %v2352, %v3762
        %v3764 = vpop.f32.mrb[0].mxu0
        %v3765 = vadd.f32 %v2357, %v3764
        %v3766 = vpop.f32.mrb[0].mxu0
        %v3767 = vadd.f32 %v2357, %v3766
        %3768 = vmatprep.mubr.bf16.mxu0 0
        %3769 = vmatmul.mubr.bf16.gmra.mrb[0].mxu0 %v2807
        %v3770 = vpop.f32.mrb[0].mxu0
        %v3771 = vadd.f32 %v2362, %v3770
        %v3772 = vpop.f32.mrb[0].mxu0
        %v3773 = vadd.f32 %v2362, %v3772
        %v3774 = vpop.f32.mrb[0].mxu0
        %v3775 = vadd.f32 %v2367, %v3774
        %v3776 = vpop.f32.mrb[0].mxu0
        %v3777 = vadd.f32 %v2367, %v3776
        %3778 = vmatprep.mubr.bf16.mxu0 0
        %3779 = vmatmul.mubr.bf16.gmra.mrb[0].mxu0 %v2810
        %v3780 = vpop.f32.mrb[0].mxu0
        %v3781 = vadd.f32 %v2372, %v3780
        %v3782 = vpop.f32.mrb[0].mxu0
        %v3783 = vadd.f32 %v2372, %v3782
        %v3784 = vpop.f32.mrb[0].mxu0
        %v3785 = vadd.f32 %v2377, %v3784
        %v3786 = vpop.f32.mrb[0].mxu0
        %v3787 = vadd.f32 %v2377, %v3786
        %3788 = vmatprep.mubr.bf16.mxu0 0
        %3789 = vmatmul.mubr.bf16.gmra.mrb[0].mxu0 %v2813
        %v3790 = vpop.f32.mrb[0].mxu0
        %v3791 = vadd.f32 %v2382, %v3790
        %v3792 = vpop.f32.mrb[0].mxu0
        %v3793 = vadd.f32 %v2382, %v3792
        %v3794 = vpop.f32.mrb[0].mxu0
        %v3795 = vadd.f32 %v2387, %v3794
        %v3796 = vpop.f32.mrb[0].mxu0
        %v3797 = vadd.f32 %v2387, %v3796
        %3798 = vmatprep.mubr.bf16.mxu0 0
        %3799 = vmatmul.mubr.bf16.gmra.mrb[0].mxu0 %v2816
        %v3800 = vpop.f32.mrb[0].mxu0
        %v3801 = vadd.f32 %v2392, %v3800
        %v3802 = vpop.f32.mrb[0].mxu0
        %v3803 = vadd.f32 %v2392, %v3802
        %v3804 = vpop.f32.mrb[0].mxu0
        %v3805 = vadd.f32 %v2397, %v3804
        %v3806 = vpop.f32.mrb[0].mxu0
        %v3807 = vadd.f32 %v2397, %v3806
        %3808 = vmatprep.mubr.bf16.mxu0 0
        %3809 = vmatmul.mubr.bf16.gmra.mrb[0].mxu0 %v2819
        %v3810 = vpop.f32.mrb[0].mxu0
        %v3811 = vadd.f32 %v2402, %v3810
        %v3812 = vpop.f32.mrb[0].mxu0
        %v3813 = vadd.f32 %v2402, %v3812
        %v3814 = vpop.f32.mrb[0].mxu0
        %v3815 = vadd.f32 %v2407, %v3814
        %v3816 = vpop.f32.mrb[0].mxu0
        %v3817 = vadd.f32 %v2407, %v3816
        %3818 = vmatprep.mubr.bf16.mxu0 0
        %3819 = vmatmul.mubr.bf16.gmra.mrb[0].mxu0 %v2822
        %v3820 = vpop.f32.mrb[0].mxu0
        %v3821 = vadd.f32 %v2412, %v3820
        %v3822 = vpop.f32.mrb[0].mxu0
        %v3823 = vadd.f32 %v2412, %v3822
        %v3824 = vpop.f32.mrb[0].mxu0
        %v3825 = vadd.f32 %v2417, %v3824
        %v3826 = vpop.f32.mrb[0].mxu0
        %v3827 = vadd.f32 %v2417, %v3826
        %3828 = vmatprep.mubr.bf16.mxu0 0
        %3829 = vmatmul.mubr.bf16.gmra.mrb[0].mxu0 %v2825
        %v3830 = vpop.f32.mrb[0].mxu0
        %v3831 = vadd.f32 %v2422, %v3830
        %v3832 = vpop.f32.mrb[0].mxu0
        %v3833 = vadd.f32 %v2422, %v3832
        %v3834 = vpop.f32.mrb[0].mxu0
        %v3835 = vadd.f32 %v2427, %v3834
        %v3836 = vpop.f32.mrb[0].mxu0
        %v3837 = vadd.f32 %v2427, %v3836
        %3838 = vmatprep.mubr.bf16.mxu0 0
        %3839 = vmatmul.mubr.bf16.gmra.mrb[0].mxu0 %v2828
        %v3840 = vpop.f32.mrb[0].mxu0
        %v3841 = vadd.f32 %v2432, %v3840
        %v3842 = vpop.f32.mrb[0].mxu0
        %v3843 = vadd.f32 %v2432, %v3842
        %v3844 = vpop.f32.mrb[0].mxu0
        %v3845 = vadd.f32 %v2437, %v3844
        %v3846 = vpop.f32.mrb[0].mxu0
        %v3847 = vadd.f32 %v2437, %v3846
        %3848 = vmatprep.mubr.bf16.mxu0 0
        %3849 = vmatmul.mubr.bf16.gmra.mrb[0].mxu0 %v2831
        %v3850 = vpop.f32.mrb[0].mxu0
        %v3851 = vadd.f32 %v2442, %v3850
        %v3852 = vpop.f32.mrb[0].mxu0
        %v3853 = vadd.f32 %v2442, %v3852
        %v3854 = vpop.f32.mrb[0].mxu0
        %v3855 = vadd.f32 %v2447, %v3854
        %v3856 = vpop.f32.mrb[0].mxu0
        %v3857 = vadd.f32 %v2447, %v3856
        %3858 = vdwg.mxu0
        %v3859 = vmul.f32 %v2868, 0.5
        %v3860 = vmul.f32 %v2870, 0.5
        %v3861 = vmul.f32 %v3381, 0.5
        %v3862 = vmul.f32 %v3383, 0.5
        %v3863 = vmul.f32 %v2872, 0.5
        %v3864 = vmul.f32 %v2874, 0.5
        %v3865 = vmul.f32 %v3385, 0.5
        %v3866 = vmul.f32 %v3387, 0.5
        %v3867 = vmul.f32 %v2878, 0.5
        %v3868 = vmul.f32 %v2880, 0.5
        %v3869 = vmul.f32 %v3391, 0.5
        %v3870 = vmul.f32 %v3393, 0.5
        %v3871 = vmul.f32 %v2882, 0.5
        %v3872 = vmul.f32 %v2884, 0.5
        %v3873 = vmul.f32 %v3395, 0.5
        %v3874 = vmul.f32 %v3397, 0.5
        %v3875 = vmul.f32 %v2888, 0.5
        %v3876 = vmul.f32 %v2890, 0.5
        %v3877 = vmul.f32 %v3401, 0.5
        %v3878 = vmul.f32 %v3403, 0.5
        %v3879 = vmul.f32 %v2892, 0.5
        %v3880 = vmul.f32 %v2894, 0.5
        %v3881 = vmul.f32 %v3405, 0.5
        %v3882 = vmul.f32 %v3407, 0.5
        %v3883 = vmul.f32 %v2898, 0.5
        %v3884 = vmul.f32 %v2900, 0.5
        %v3885 = vmul.f32 %v3411, 0.5
        %v3886 = vmul.f32 %v3413, 0.5
        %v3887 = vmul.f32 %v2902, 0.5
        %v3888 = vmul.f32 %v2904, 0.5
        %v3889 = vmul.f32 %v3415, 0.5
        %v3890 = vmul.f32 %v3417, 0.5
        %v3891 = vmul.f32 %v2908, 0.5
        %v3892 = vmul.f32 %v2910, 0.5
        %v3893 = vmul.f32 %v3421, 0.5
        %v3894 = vmul.f32 %v3423, 0.5
        %v3895 = vmul.f32 %v2912, 0.5
        %v3896 = vmul.f32 %v2914, 0.5
        %v3897 = vmul.f32 %v3425, 0.5
        %v3898 = vmul.f32 %v3427, 0.5
        %v3899 = vmul.f32 %v2918, 0.5
        %v3900 = vmul.f32 %v2920, 0.5
        %v3901 = vmul.f32 %v3431, 0.5
        %v3902 = vmul.f32 %v3433, 0.5
        %v3903 = vmul.f32 %v2922, 0.5
        %v3904 = vmul.f32 %v2924, 0.5
        %v3905 = vmul.f32 %v3435, 0.5
        %v3906 = vmul.f32 %v3437, 0.5
        %v3907 = vmul.f32 %v2928, 0.5
        %v3908 = vmul.f32 %v2930, 0.5
        %v3909 = vmul.f32 %v3441, 0.5
        %v3910 = vmul.f32 %v3443, 0.5
        %v3911 = vmul.f32 %v2932, 0.5
        %v3912 = vmul.f32 %v2934, 0.5
        %v3913 = vmul.f32 %v3445, 0.5
        %v3914 = vmul.f32 %v3447, 0.5
        %v3915 = vmul.f32 %v2938, 0.5
        %v3916 = vmul.f32 %v2940, 0.5
        %v3917 = vmul.f32 %v3451, 0.5
        %v3918 = vmul.f32 %v3453, 0.5
        %v3919 = vmul.f32 %v2942, 0.5
        %v3920 = vmul.f32 %v2944, 0.5
        %v3921 = vmul.f32 %v3455, 0.5
        %v3922 = vmul.f32 %v3457, 0.5
        %v3923 = vmul.f32 %v2948, 0.5
        %v3924 = vmul.f32 %v2950, 0.5
        %v3925 = vmul.f32 %v3461, 0.5
        %v3926 = vmul.f32 %v3463, 0.5
        %v3927 = vmul.f32 %v2952, 0.5
        %v3928 = vmul.f32 %v2954, 0.5
        %v3929 = vmul.f32 %v3465, 0.5
        %v3930 = vmul.f32 %v3467, 0.5
        %v3931 = vmul.f32 %v2958, 0.5
        %v3932 = vmul.f32 %v2960, 0.5
        %v3933 = vmul.f32 %v3471, 0.5
        %v3934 = vmul.f32 %v3473, 0.5
        %v3935 = vmul.f32 %v2962, 0.5
        %v3936 = vmul.f32 %v2964, 0.5
        %v3937 = vmul.f32 %v3475, 0.5
        %v3938 = vmul.f32 %v3477, 0.5
        %v3939 = vmul.f32 %v2968, 0.5
        %v3940 = vmul.f32 %v2970, 0.5
        %v3941 = vmul.f32 %v3481, 0.5
        %v3942 = vmul.f32 %v3483, 0.5
        %v3943 = vmul.f32 %v2972, 0.5
        %v3944 = vmul.f32 %v2974, 0.5
        %v3945 = vmul.f32 %v3485, 0.5
        %v3946 = vmul.f32 %v3487, 0.5
        %v3947 = vmul.f32 %v2978, 0.5
        %v3948 = vmul.f32 %v2980, 0.5
        %v3949 = vmul.f32 %v3491, 0.5
        %v3950 = vmul.f32 %v3493, 0.5
        %v3951 = vmul.f32 %v2982, 0.5
        %v3952 = vmul.f32 %v2984, 0.5
        %v3953 = vmul.f32 %v3495, 0.5
        %v3954 = vmul.f32 %v3497, 0.5
        %v3955 = vmul.f32 %v2988, 0.5
        %v3956 = vmul.f32 %v2990, 0.5
        %v3957 = vmul.f32 %v3501, 0.5
        %v3958 = vmul.f32 %v3503, 0.5
        %v3959 = vmul.f32 %v2992, 0.5
        %v3960 = vmul.f32 %v2994, 0.5
        %v3961 = vmul.f32 %v3505, 0.5
        %v3962 = vmul.f32 %v3507, 0.5
        %v3963 = vmul.f32 %v2998, 0.5
        %v3964 = vmul.f32 %v3000, 0.5
        %v3965 = vmul.f32 %v3511, 0.5
        %v3966 = vmul.f32 %v3513, 0.5
        %v3967 = vmul.f32 %v3002, 0.5
        %v3968 = vmul.f32 %v3004, 0.5
        %v3969 = vmul.f32 %v3515, 0.5
        %v3970 = vmul.f32 %v3517, 0.5
        %v3971 = vmul.f32 %v3008, 0.5
        %v3972 = vmul.f32 %v3010, 0.5
        %v3973 = vmul.f32 %v3521, 0.5
        %v3974 = vmul.f32 %v3523, 0.5
        %v3975 = vmul.f32 %v3012, 0.5
        %v3976 = vmul.f32 %v3014, 0.5
        %v3977 = vmul.f32 %v3525, 0.5
        %v3978 = vmul.f32 %v3527, 0.5
        %v3979 = vmul.f32 %v3018, 0.5
        %v3980 = vmul.f32 %v3020, 0.5
        %v3981 = vmul.f32 %v3531, 0.5
        %v3982 = vmul.f32 %v3533, 0.5
        %v3983 = vmul.f32 %v3022, 0.5
        %v3984 = vmul.f32 %v3024, 0.5
        %v3985 = vmul.f32 %v3535, 0.5
        %v3986 = vmul.f32 %v3537, 0.5
        %v3987 = vmul.f32 %v3028, 0.5
        %v3988 = vmul.f32 %v3030, 0.5
        %v3989 = vmul.f32 %v3541, 0.5
        %v3990 = vmul.f32 %v3543, 0.5
        %v3991 = vmul.f32 %v3032, 0.5
        %v3992 = vmul.f32 %v3034, 0.5
        %v3993 = vmul.f32 %v3545, 0.5
        %v3994 = vmul.f32 %v3547, 0.5
        %v3995 = vmul.f32 %v3038, 0.5
        %v3996 = vmul.f32 %v3040, 0.5
        %v3997 = vmul.f32 %v3551, 0.5
        %v3998 = vmul.f32 %v3553, 0.5
        %v3999 = vmul.f32 %v3042, 0.5
        %v4000 = vmul.f32 %v3044, 0.5
        %v4001 = vmul.f32 %v3555, 0.5
        %v4002 = vmul.f32 %v3557, 0.5
        %v4003 = vmul.f32 %v3048, 0.5
        %v4004 = vmul.f32 %v3050, 0.5
        %v4005 = vmul.f32 %v3561, 0.5
        %v4006 = vmul.f32 %v3563, 0.5
        %v4007 = vmul.f32 %v3052, 0.5
        %v4008 = vmul.f32 %v3054, 0.5
        %v4009 = vmul.f32 %v3565, 0.5
        %v4010 = vmul.f32 %v3567, 0.5
        %v4011 = vmul.f32 %v3058, 0.5
        %v4012 = vmul.f32 %v3060, 0.5
        %v4013 = vmul.f32 %v3571, 0.5
        %v4014 = vmul.f32 %v3573, 0.5
        %v4015 = vmul.f32 %v3062, 0.5
        %v4016 = vmul.f32 %v3064, 0.5
        %v4017 = vmul.f32 %v3575, 0.5
        %v4018 = vmul.f32 %v3577, 0.5
        %v4019 = vmul.f32 %v3068, 0.5
        %v4020 = vmul.f32 %v3070, 0.5
        %v4021 = vmul.f32 %v3581, 0.5
        %v4022 = vmul.f32 %v3583, 0.5
        %v4023 = vmul.f32 %v3072, 0.5
        %v4024 = vmul.f32 %v3074, 0.5
        %v4025 = vmul.f32 %v3585, 0.5
        %v4026 = vmul.f32 %v3587, 0.5
        %v4027 = vmul.f32 %v3078, 0.5
        %v4028 = vmul.f32 %v3080, 0.5
        %v4029 = vmul.f32 %v3591, 0.5
        %v4030 = vmul.f32 %v3593, 0.5
        %v4031 = vmul.f32 %v3082, 0.5
        %v4032 = vmul.f32 %v3084, 0.5
        %v4033 = vmul.f32 %v3595, 0.5
        %v4034 = vmul.f32 %v3597, 0.5
        %v4035 = vmul.f32 %v3088, 0.5
        %v4036 = vmul.f32 %v3090, 0.5
        %v4037 = vmul.f32 %v3601, 0.5
        %v4038 = vmul.f32 %v3603, 0.5
        %v4039 = vmul.f32 %v3092, 0.5
        %v4040 = vmul.f32 %v3094, 0.5
        %v4041 = vmul.f32 %v3605, 0.5
        %v4042 = vmul.f32 %v3607, 0.5
        %v4043 = vmul.f32 %v3098, 0.5
        %v4044 = vmul.f32 %v3100, 0.5
        %v4045 = vmul.f32 %v3611, 0.5
        %v4046 = vmul.f32 %v3613, 0.5
        %v4047 = vmul.f32 %v3102, 0.5
        %v4048 = vmul.f32 %v3104, 0.5
        %v4049 = vmul.f32 %v3615, 0.5
        %v4050 = vmul.f32 %v3617, 0.5
        %v4051 = vmul.f32 %v3108, 0.5
        %v4052 = vmul.f32 %v3110, 0.5
        %v4053 = vmul.f32 %v3621, 0.5
        %v4054 = vmul.f32 %v3623, 0.5
        %v4055 = vmul.f32 %v3112, 0.5
        %v4056 = vmul.f32 %v3114, 0.5
        %v4057 = vmul.f32 %v3625, 0.5
        %v4058 = vmul.f32 %v3627, 0.5
        %v4059 = vmul.f32 %v3118, 0.5
        %v4060 = vmul.f32 %v3120, 0.5
        %v4061 = vmul.f32 %v3631, 0.5
        %v4062 = vmul.f32 %v3633, 0.5
        %v4063 = vmul.f32 %v3122, 0.5
        %v4064 = vmul.f32 %v3124, 0.5
        %v4065 = vmul.f32 %v3635, 0.5
        %v4066 = vmul.f32 %v3637, 0.5
        %v4067 = vmul.f32 %v3128, 0.5
        %v4068 = vmul.f32 %v3130, 0.5
        %v4069 = vmul.f32 %v3641, 0.5
        %v4070 = vmul.f32 %v3643, 0.5
        %v4071 = vmul.f32 %v3132, 0.5
        %v4072 = vmul.f32 %v3134, 0.5
        %v4073 = vmul.f32 %v3645, 0.5
        %v4074 = vmul.f32 %v3647, 0.5
        %v4075 = vmul.f32 %v3138, 0.5
        %v4076 = vmul.f32 %v3140, 0.5
        %v4077 = vmul.f32 %v3651, 0.5
        %v4078 = vmul.f32 %v3653, 0.5
        %v4079 = vmul.f32 %v3142, 0.5
        %v4080 = vmul.f32 %v3144, 0.5
        %v4081 = vmul.f32 %v3655, 0.5
        %v4082 = vmul.f32 %v3657, 0.5
        %v4083 = vmul.f32 %v3148, 0.5
        %v4084 = vmul.f32 %v3150, 0.5
        %v4085 = vmul.f32 %v3661, 0.5
        %v4086 = vmul.f32 %v3663, 0.5
        %v4087 = vmul.f32 %v3152, 0.5
        %v4088 = vmul.f32 %v3154, 0.5
        %v4089 = vmul.f32 %v3665, 0.5
        %v4090 = vmul.f32 %v3667, 0.5
        %v4091 = vmul.f32 %v3158, 0.5
        %v4092 = vmul.f32 %v3160, 0.5
        %v4093 = vmul.f32 %v3671, 0.5
        %v4094 = vmul.f32 %v3673, 0.5
        %v4095 = vmul.f32 %v3162, 0.5
        %v4096 = vmul.f32 %v3164, 0.5
        %v4097 = vmul.f32 %v3675, 0.5
        %v4098 = vmul.f32 %v3677, 0.5
        %v4099 = vmul.f32 %v3168, 0.5
        %v4100 = vmul.f32 %v3170, 0.5
        %v4101 = vmul.f32 %v3681, 0.5
        %v4102 = vmul.f32 %v3683, 0.5
        %v4103 = vmul.f32 %v3172, 0.5
        %v4104 = vmul.f32 %v3174, 0.5
        %v4105 = vmul.f32 %v3685, 0.5
        %v4106 = vmul.f32 %v3687, 0.5
        %v4107 = vmul.f32 %v3178, 0.5
        %v4108 = vmul.f32 %v3180, 0.5
        %v4109 = vmul.f32 %v3691, 0.5
        %v4110 = vmul.f32 %v3693, 0.5
        %v4111 = vmul.f32 %v3182, 0.5
        %v4112 = vmul.f32 %v3184, 0.5
        %v4113 = vmul.f32 %v3695, 0.5
        %v4114 = vmul.f32 %v3697, 0.5
        %v4115 = vmul.f32 %v3188, 0.5
        %v4116 = vmul.f32 %v3190, 0.5
        %v4117 = vmul.f32 %v3701, 0.5
        %v4118 = vmul.f32 %v3703, 0.5
        %v4119 = vmul.f32 %v3192, 0.5
        %v4120 = vmul.f32 %v3194, 0.5
        %v4121 = vmul.f32 %v3705, 0.5
        %v4122 = vmul.f32 %v3707, 0.5
        %v4123 = vmul.f32 %v3198, 0.5
        %v4124 = vmul.f32 %v3200, 0.5
        %v4125 = vmul.f32 %v3711, 0.5
        %v4126 = vmul.f32 %v3713, 0.5
        %v4127 = vmul.f32 %v3202, 0.5
        %v4128 = vmul.f32 %v3204, 0.5
        %v4129 = vmul.f32 %v3715, 0.5
        %v4130 = vmul.f32 %v3717, 0.5
        %v4131 = vmul.f32 %v3208, 0.5
        %v4132 = vmul.f32 %v3210, 0.5
        %v4133 = vmul.f32 %v3721, 0.5
        %v4134 = vmul.f32 %v3723, 0.5
        %v4135 = vmul.f32 %v3212, 0.5
        %v4136 = vmul.f32 %v3214, 0.5
        %v4137 = vmul.f32 %v3725, 0.5
        %v4138 = vmul.f32 %v3727, 0.5
        %v4139 = vmul.f32 %v3218, 0.5
        %v4140 = vmul.f32 %v3220, 0.5
        %v4141 = vmul.f32 %v3731, 0.5
        %v4142 = vmul.f32 %v3733, 0.5
        %v4143 = vmul.f32 %v3222, 0.5
        %v4144 = vmul.f32 %v3224, 0.5
        %v4145 = vmul.f32 %v3735, 0.5
        %v4146 = vmul.f32 %v3737, 0.5
        %v4147 = vmul.f32 %v3228, 0.5
        %v4148 = vmul.f32 %v3230, 0.5
        %v4149 = vmul.f32 %v3741, 0.5
        %v4150 = vmul.f32 %v3743, 0.5
        %v4151 = vmul.f32 %v3232, 0.5
        %v4152 = vmul.f32 %v3234, 0.5
        %v4153 = vmul.f32 %v3745, 0.5
        %v4154 = vmul.f32 %v3747, 0.5
        %v4155 = vmul.f32 %v3238, 0.5
        %v4156 = vmul.f32 %v3240, 0.5
        %v4157 = vmul.f32 %v3751, 0.5
        %v4158 = vmul.f32 %v3753, 0.5
        %v4159 = vmul.f32 %v3242, 0.5
        %v4160 = vmul.f32 %v3244, 0.5
        %v4161 = vmul.f32 %v3755, 0.5
        %v4162 = vmul.f32 %v3757, 0.5
        %v4163 = vmul.f32 %v3248, 0.5
        %v4164 = vmul.f32 %v3250, 0.5
        %v4165 = vmul.f32 %v3761, 0.5
        %v4166 = vmul.f32 %v3763, 0.5
        %v4167 = vmul.f32 %v3252, 0.5
        %v4168 = vmul.f32 %v3254, 0.5
        %v4169 = vmul.f32 %v3765, 0.5
        %v4170 = vmul.f32 %v3767, 0.5
        %v4171 = vmul.f32 %v3258, 0.5
        %v4172 = vmul.f32 %v3260, 0.5
        %v4173 = vmul.f32 %v3771, 0.5
        %v4174 = vmul.f32 %v3773, 0.5
        %v4175 = vmul.f32 %v3262, 0.5
        %v4176 = vmul.f32 %v3264, 0.5
        %v4177 = vmul.f32 %v3775, 0.5
        %v4178 = vmul.f32 %v3777, 0.5
        %v4179 = vmul.f32 %v3268, 0.5
        %v4180 = vmul.f32 %v3270, 0.5
        %v4181 = vmul.f32 %v3781, 0.5
        %v4182 = vmul.f32 %v3783, 0.5
        %v4183 = vmul.f32 %v3272, 0.5
        %v4184 = vmul.f32 %v3274, 0.5
        %v4185 = vmul.f32 %v3785, 0.5
        %v4186 = vmul.f32 %v3787, 0.5
        %v4187 = vmul.f32 %v3278, 0.5
        %v4188 = vmul.f32 %v3280, 0.5
        %v4189 = vmul.f32 %v3791, 0.5
        %v4190 = vmul.f32 %v3793, 0.5
        %v4191 = vmul.f32 %v3282, 0.5
        %v4192 = vmul.f32 %v3284, 0.5
        %v4193 = vmul.f32 %v3795, 0.5
        %v4194 = vmul.f32 %v3797, 0.5
        %v4195 = vmul.f32 %v3288, 0.5
        %v4196 = vmul.f32 %v3290, 0.5
        %v4197 = vmul.f32 %v3801, 0.5
        %v4198 = vmul.f32 %v3803, 0.5
        %v4199 = vmul.f32 %v3292, 0.5
        %v4200 = vmul.f32 %v3294, 0.5
        %v4201 = vmul.f32 %v3805, 0.5
        %v4202 = vmul.f32 %v3807, 0.5
        %v4203 = vmul.f32 %v3298, 0.5
        %v4204 = vmul.f32 %v3300, 0.5
        %v4205 = vmul.f32 %v3811, 0.5
        %v4206 = vmul.f32 %v3813, 0.5
        %v4207 = vmul.f32 %v3302, 0.5
        %v4208 = vmul.f32 %v3304, 0.5
        %v4209 = vmul.f32 %v3815, 0.5
        %v4210 = vmul.f32 %v3817, 0.5
        %v4211 = vmul.f32 %v3308, 0.5
        %v4212 = vmul.f32 %v3310, 0.5
        %v4213 = vmul.f32 %v3821, 0.5
        %v4214 = vmul.f32 %v3823, 0.5
        %v4215 = vmul.f32 %v3312, 0.5
        %v4216 = vmul.f32 %v3314, 0.5
        %v4217 = vmul.f32 %v3825, 0.5
        %v4218 = vmul.f32 %v3827, 0.5
        %v4219 = vmul.f32 %v3318, 0.5
        %v4220 = vmul.f32 %v3320, 0.5
        %v4221 = vmul.f32 %v3831, 0.5
        %v4222 = vmul.f32 %v3833, 0.5
        %v4223 = vmul.f32 %v3322, 0.5
        %v4224 = vmul.f32 %v3324, 0.5
        %v4225 = vmul.f32 %v3835, 0.5
        %v4226 = vmul.f32 %v3837, 0.5
        %v4227 = vmul.f32 %v3328, 0.5
        %v4228 = vmul.f32 %v3330, 0.5
        %v4229 = vmul.f32 %v3841, 0.5
        %v4230 = vmul.f32 %v3843, 0.5
        %v4231 = vmul.f32 %v3332, 0.5
        %v4232 = vmul.f32 %v3334, 0.5
        %v4233 = vmul.f32 %v3845, 0.5
        %v4234 = vmul.f32 %v3847, 0.5
        %v4235 = vmul.f32 %v3338, 0.5
        %v4236 = vmul.f32 %v3340, 0.5
        %v4237 = vmul.f32 %v3851, 0.5
        %v4238 = vmul.f32 %v3853, 0.5
        %v4239 = vmul.f32 %v3342, 0.5
        %v4240 = vmul.f32 %v3344, 0.5
        %v4241 = vmul.f32 %v3855, 0.5
        %v4242 = vmul.f32 %v3857, 0.5
        %v4243 = vmul.f32 %v2868, 0.044715
        %v4244 = vmul.f32 %v2870, 0.044715
        %v4245 = vmul.f32 %v3381, 0.044715
        %v4246 = vmul.f32 %v3383, 0.044715
        %v4247 = vmul.f32 %v2872, 0.044715
        %v4248 = vmul.f32 %v2874, 0.044715
        %v4249 = vmul.f32 %v3385, 0.044715
        %v4250 = vmul.f32 %v3387, 0.044715
        %v4251 = vmul.f32 %v2878, 0.044715
        %v4252 = vmul.f32 %v2880, 0.044715
        %v4253 = vmul.f32 %v3391, 0.044715
        %v4254 = vmul.f32 %v3393, 0.044715
        %v4255 = vmul.f32 %v2882, 0.044715
        %v4256 = vmul.f32 %v2884, 0.044715
        %v4257 = vmul.f32 %v3395, 0.044715
        %v4258 = vmul.f32 %v3397, 0.044715
        %v4259 = vmul.f32 %v2888, 0.044715
        %v4260 = vmul.f32 %v2890, 0.044715
        %v4261 = vmul.f32 %v3401, 0.044715
        %v4262 = vmul.f32 %v3403, 0.044715
        %v4263 = vmul.f32 %v2892, 0.044715
        %v4264 = vmul.f32 %v2894, 0.044715
        %v4265 = vmul.f32 %v3405, 0.044715
        %v4266 = vmul.f32 %v3407, 0.044715
        %v4267 = vmul.f32 %v2898, 0.044715
        %v4268 = vmul.f32 %v2900, 0.044715
        %v4269 = vmul.f32 %v3411, 0.044715
        %v4270 = vmul.f32 %v3413, 0.044715
        %v4271 = vmul.f32 %v2902, 0.044715
        %v4272 = vmul.f32 %v2904, 0.044715
        %v4273 = vmul.f32 %v3415, 0.044715
        %v4274 = vmul.f32 %v3417, 0.044715
        %v4275 = vmul.f32 %v2908, 0.044715
        %v4276 = vmul.f32 %v2910, 0.044715
        %v4277 = vmul.f32 %v3421, 0.044715
        %v4278 = vmul.f32 %v3423, 0.044715
        %v4279 = vmul.f32 %v2912, 0.044715
        %v4280 = vmul.f32 %v2914, 0.044715
        %v4281 = vmul.f32 %v3425, 0.044715
        %v4282 = vmul.f32 %v3427, 0.044715
        %v4283 = vmul.f32 %v2918, 0.044715
        %v4284 = vmul.f32 %v2920, 0.044715
        %v4285 = vmul.f32 %v3431, 0.044715
        %v4286 = vmul.f32 %v3433, 0.044715
        %v4287 = vmul.f32 %v2922, 0.044715
        %v4288 = vmul.f32 %v2924, 0.044715
        %v4289 = vmul.f32 %v3435, 0.044715
        %v4290 = vmul.f32 %v3437, 0.044715
        %v4291 = vmul.f32 %v2928, 0.044715
        %v4292 = vmul.f32 %v2930, 0.044715
        %v4293 = vmul.f32 %v3441, 0.044715
        %v4294 = vmul.f32 %v3443, 0.044715
        %v4295 = vmul.f32 %v2932, 0.044715
        %v4296 = vmul.f32 %v2934, 0.044715
        %v4297 = vmul.f32 %v3445, 0.044715
        %v4298 = vmul.f32 %v3447, 0.044715
        %v4299 = vmul.f32 %v2938, 0.044715
        %v4300 = vmul.f32 %v2940, 0.044715
        %v4301 = vmul.f32 %v3451, 0.044715
        %v4302 = vmul.f32 %v3453, 0.044715
        %v4303 = vmul.f32 %v2942, 0.044715
        %v4304 = vmul.f32 %v2944, 0.044715
        %v4305 = vmul.f32 %v3455, 0.044715
        %v4306 = vmul.f32 %v3457, 0.044715
        %v4307 = vmul.f32 %v2948, 0.044715
        %v4308 = vmul.f32 %v2950, 0.044715
        %v4309 = vmul.f32 %v3461, 0.044715
        %v4310 = vmul.f32 %v3463, 0.044715
        %v4311 = vmul.f32 %v2952, 0.044715
        %v4312 = vmul.f32 %v2954, 0.044715
        %v4313 = vmul.f32 %v3465, 0.044715
        %v4314 = vmul.f32 %v3467, 0.044715
        %v4315 = vmul.f32 %v2958, 0.044715
        %v4316 = vmul.f32 %v2960, 0.044715
        %v4317 = vmul.f32 %v3471, 0.044715
        %v4318 = vmul.f32 %v3473, 0.044715
        %v4319 = vmul.f32 %v2962, 0.044715
        %v4320 = vmul.f32 %v2964, 0.044715
        %v4321 = vmul.f32 %v3475, 0.044715
        %v4322 = vmul.f32 %v3477, 0.044715
        %v4323 = vmul.f32 %v2968, 0.044715
        %v4324 = vmul.f32 %v2970, 0.044715
        %v4325 = vmul.f32 %v3481, 0.044715
        %v4326 = vmul.f32 %v3483, 0.044715
        %v4327 = vmul.f32 %v2972, 0.044715
        %v4328 = vmul.f32 %v2974, 0.044715
        %v4329 = vmul.f32 %v3485, 0.044715
        %v4330 = vmul.f32 %v3487, 0.044715
        %v4331 = vmul.f32 %v2978, 0.044715
        %v4332 = vmul.f32 %v2980, 0.044715
        %v4333 = vmul.f32 %v3491, 0.044715
        %v4334 = vmul.f32 %v3493, 0.044715
        %v4335 = vmul.f32 %v2982, 0.044715
        %v4336 = vmul.f32 %v2984, 0.044715
        %v4337 = vmul.f32 %v3495, 0.044715
        %v4338 = vmul.f32 %v3497, 0.044715
        %v4339 = vmul.f32 %v2988, 0.044715
        %v4340 = vmul.f32 %v2990, 0.044715
        %v4341 = vmul.f32 %v3501, 0.044715
        %v4342 = vmul.f32 %v3503, 0.044715
        %v4343 = vmul.f32 %v2992, 0.044715
        %v4344 = vmul.f32 %v2994, 0.044715
        %v4345 = vmul.f32 %v3505, 0.044715
        %v4346 = vmul.f32 %v3507, 0.044715
        %v4347 = vmul.f32 %v2998, 0.044715
        %v4348 = vmul.f32 %v3000, 0.044715
        %v4349 = vmul.f32 %v3511, 0.044715
        %v4350 = vmul.f32 %v3513, 0.044715
        %v4351 = vmul.f32 %v3002, 0.044715
        %v4352 = vmul.f32 %v3004, 0.044715
        %v4353 = vmul.f32 %v3515, 0.044715
        %v4354 = vmul.f32 %v3517, 0.044715
        %v4355 = vmul.f32 %v3008, 0.044715
        %v4356 = vmul.f32 %v3010, 0.044715
        %v4357 = vmul.f32 %v3521, 0.044715
        %v4358 = vmul.f32 %v3523, 0.044715
        %v4359 = vmul.f32 %v3012, 0.044715
        %v4360 = vmul.f32 %v3014, 0.044715
        %v4361 = vmul.f32 %v3525, 0.044715
        %v4362 = vmul.f32 %v3527, 0.044715
        %v4363 = vmul.f32 %v3018, 0.044715
        %v4364 = vmul.f32 %v3020, 0.044715
        %v4365 = vmul.f32 %v3531, 0.044715
        %v4366 = vmul.f32 %v3533, 0.044715
        %v4367 = vmul.f32 %v3022, 0.044715
        %v4368 = vmul.f32 %v3024, 0.044715
        %v4369 = vmul.f32 %v3535, 0.044715
        %v4370 = vmul.f32 %v3537, 0.044715
        %v4371 = vmul.f32 %v3028, 0.044715
        %v4372 = vmul.f32 %v3030, 0.044715
        %v4373 = vmul.f32 %v3541, 0.044715
        %v4374 = vmul.f32 %v3543, 0.044715
        %v4375 = vmul.f32 %v3032, 0.044715
        %v4376 = vmul.f32 %v3034, 0.044715
        %v4377 = vmul.f32 %v3545, 0.044715
        %v4378 = vmul.f32 %v3547, 0.044715
        %v4379 = vmul.f32 %v3038, 0.044715
        %v4380 = vmul.f32 %v3040, 0.044715
        %v4381 = vmul.f32 %v3551, 0.044715
        %v4382 = vmul.f32 %v3553, 0.044715
        %v4383 = vmul.f32 %v3042, 0.044715
        %v4384 = vmul.f32 %v3044, 0.044715
        %v4385 = vmul.f32 %v3555, 0.044715
        %v4386 = vmul.f32 %v3557, 0.044715
        %v4387 = vmul.f32 %v3048, 0.044715
        %v4388 = vmul.f32 %v3050, 0.044715
        %v4389 = vmul.f32 %v3561, 0.044715
        %v4390 = vmul.f32 %v3563, 0.044715
        %v4391 = vmul.f32 %v3052, 0.044715
        %v4392 = vmul.f32 %v3054, 0.044715
        %v4393 = vmul.f32 %v3565, 0.044715
        %v4394 = vmul.f32 %v3567, 0.044715
        %v4395 = vmul.f32 %v3058, 0.044715
        %v4396 = vmul.f32 %v3060, 0.044715
        %v4397 = vmul.f32 %v3571, 0.044715
        %v4398 = vmul.f32 %v3573, 0.044715
        %v4399 = vmul.f32 %v3062, 0.044715
        %v4400 = vmul.f32 %v3064, 0.044715
        %v4401 = vmul.f32 %v3575, 0.044715
        %v4402 = vmul.f32 %v3577, 0.044715
        %v4403 = vmul.f32 %v3068, 0.044715
        %v4404 = vmul.f32 %v3070, 0.044715
        %v4405 = vmul.f32 %v3581, 0.044715
        %v4406 = vmul.f32 %v3583, 0.044715
        %v4407 = vmul.f32 %v3072, 0.044715
        %v4408 = vmul.f32 %v3074, 0.044715
        %v4409 = vmul.f32 %v3585, 0.044715
        %v4410 = vmul.f32 %v3587, 0.044715
        %v4411 = vmul.f32 %v3078, 0.044715
        %v4412 = vmul.f32 %v3080, 0.044715
        %v4413 = vmul.f32 %v3591, 0.044715
        %v4414 = vmul.f32 %v3593, 0.044715
        %v4415 = vmul.f32 %v3082, 0.044715
        %v4416 = vmul.f32 %v3084, 0.044715
        %v4417 = vmul.f32 %v3595, 0.044715
        %v4418 = vmul.f32 %v3597, 0.044715
        %v4419 = vmul.f32 %v3088, 0.044715
        %v4420 = vmul.f32 %v3090, 0.044715
        %v4421 = vmul.f32 %v3601, 0.044715
        %v4422 = vmul.f32 %v3603, 0.044715
        %v4423 = vmul.f32 %v3092, 0.044715
        %v4424 = vmul.f32 %v3094, 0.044715
        %v4425 = vmul.f32 %v3605, 0.044715
        %v4426 = vmul.f32 %v3607, 0.044715
        %v4427 = vmul.f32 %v3098, 0.044715
        %v4428 = vmul.f32 %v3100, 0.044715
        %v4429 = vmul.f32 %v3611, 0.044715
        %v4430 = vmul.f32 %v3613, 0.044715
        %v4431 = vmul.f32 %v3102, 0.044715
        %v4432 = vmul.f32 %v3104, 0.044715
        %v4433 = vmul.f32 %v3615, 0.044715
        %v4434 = vmul.f32 %v3617, 0.044715
        %v4435 = vmul.f32 %v3108, 0.044715
        %v4436 = vmul.f32 %v3110, 0.044715
        %v4437 = vmul.f32 %v3621, 0.044715
        %v4438 = vmul.f32 %v3623, 0.044715
        %v4439 = vmul.f32 %v3112, 0.044715
        %v4440 = vmul.f32 %v3114, 0.044715
        %v4441 = vmul.f32 %v3625, 0.044715
        %v4442 = vmul.f32 %v3627, 0.044715
        %v4443 = vmul.f32 %v3118, 0.044715
        %v4444 = vmul.f32 %v3120, 0.044715
        %v4445 = vmul.f32 %v3631, 0.044715
        %v4446 = vmul.f32 %v3633, 0.044715
        %v4447 = vmul.f32 %v3122, 0.044715
        %v4448 = vmul.f32 %v3124, 0.044715
        %v4449 = vmul.f32 %v3635, 0.044715
        %v4450 = vmul.f32 %v3637, 0.044715
        %v4451 = vmul.f32 %v3128, 0.044715
        %v4452 = vmul.f32 %v3130, 0.044715
        %v4453 = vmul.f32 %v3641, 0.044715
        %v4454 = vmul.f32 %v3643, 0.044715
        %v4455 = vmul.f32 %v3132, 0.044715
        %v4456 = vmul.f32 %v3134, 0.044715
        %v4457 = vmul.f32 %v3645, 0.044715
        %v4458 = vmul.f32 %v3647, 0.044715
        %v4459 = vmul.f32 %v3138, 0.044715
        %v4460 = vmul.f32 %v3140, 0.044715
        %v4461 = vmul.f32 %v3651, 0.044715
        %v4462 = vmul.f32 %v3653, 0.044715
        %v4463 = vmul.f32 %v3142, 0.044715
        %v4464 = vmul.f32 %v3144, 0.044715
        %v4465 = vmul.f32 %v3655, 0.044715
        %v4466 = vmul.f32 %v3657, 0.044715
        %v4467 = vmul.f32 %v3148, 0.044715
        %v4468 = vmul.f32 %v3150, 0.044715
        %v4469 = vmul.f32 %v3661, 0.044715
        %v4470 = vmul.f32 %v3663, 0.044715
        %v4471 = vmul.f32 %v3152, 0.044715
        %v4472 = vmul.f32 %v3154, 0.044715
        %v4473 = vmul.f32 %v3665, 0.044715
        %v4474 = vmul.f32 %v3667, 0.044715
        %v4475 = vmul.f32 %v3158, 0.044715
        %v4476 = vmul.f32 %v3160, 0.044715
        %v4477 = vmul.f32 %v3671, 0.044715
        %v4478 = vmul.f32 %v3673, 0.044715
        %v4479 = vmul.f32 %v3162, 0.044715
        %v4480 = vmul.f32 %v3164, 0.044715
        %v4481 = vmul.f32 %v3675, 0.044715
        %v4482 = vmul.f32 %v3677, 0.044715
        %v4483 = vmul.f32 %v3168, 0.044715
        %v4484 = vmul.f32 %v3170, 0.044715
        %v4485 = vmul.f32 %v3681, 0.044715
        %v4486 = vmul.f32 %v3683, 0.044715
        %v4487 = vmul.f32 %v3172, 0.044715
        %v4488 = vmul.f32 %v3174, 0.044715
        %v4489 = vmul.f32 %v3685, 0.044715
        %v4490 = vmul.f32 %v3687, 0.044715
        %v4491 = vmul.f32 %v3178, 0.044715
        %v4492 = vmul.f32 %v3180, 0.044715
        %v4493 = vmul.f32 %v3691, 0.044715
        %v4494 = vmul.f32 %v3693, 0.044715
        %v4495 = vmul.f32 %v3182, 0.044715
        %v4496 = vmul.f32 %v3184, 0.044715
        %v4497 = vmul.f32 %v3695, 0.044715
        %v4498 = vmul.f32 %v3697, 0.044715
        %v4499 = vmul.f32 %v3188, 0.044715
        %v4500 = vmul.f32 %v3190, 0.044715
        %v4501 = vmul.f32 %v3701, 0.044715
        %v4502 = vmul.f32 %v3703, 0.044715
        %v4503 = vmul.f32 %v3192, 0.044715
        %v4504 = vmul.f32 %v3194, 0.044715
        %v4505 = vmul.f32 %v3705, 0.044715
        %v4506 = vmul.f32 %v3707, 0.044715
        %v4507 = vmul.f32 %v3198, 0.044715
        %v4508 = vmul.f32 %v3200, 0.044715
        %v4509 = vmul.f32 %v3711, 0.044715
        %v4510 = vmul.f32 %v3713, 0.044715
        %v4511 = vmul.f32 %v3202, 0.044715
        %v4512 = vmul.f32 %v3204, 0.044715
        %v4513 = vmul.f32 %v3715, 0.044715
        %v4514 = vmul.f32 %v3717, 0.044715
        %v4515 = vmul.f32 %v3208, 0.044715
        %v4516 = vmul.f32 %v3210, 0.044715
        %v4517 = vmul.f32 %v3721, 0.044715
        %v4518 = vmul.f32 %v3723, 0.044715
        %v4519 = vmul.f32 %v3212, 0.044715
        %v4520 = vmul.f32 %v3214, 0.044715
        %v4521 = vmul.f32 %v3725, 0.044715
        %v4522 = vmul.f32 %v3727, 0.044715
        %v4523 = vmul.f32 %v3218, 0.044715
        %v4524 = vmul.f32 %v3220, 0.044715
        %v4525 = vmul.f32 %v3731, 0.044715
        %v4526 = vmul.f32 %v3733, 0.044715
        %v4527 = vmul.f32 %v3222, 0.044715
        %v4528 = vmul.f32 %v3224, 0.044715
        %v4529 = vmul.f32 %v3735, 0.044715
        %v4530 = vmul.f32 %v3737, 0.044715
        %v4531 = vmul.f32 %v3228, 0.044715
        %v4532 = vmul.f32 %v3230, 0.044715
        %v4533 = vmul.f32 %v3741, 0.044715
        %v4534 = vmul.f32 %v3743, 0.044715
        %v4535 = vmul.f32 %v3232, 0.044715
        %v4536 = vmul.f32 %v3234, 0.044715
        %v4537 = vmul.f32 %v3745, 0.044715
        %v4538 = vmul.f32 %v3747, 0.044715
        %v4539 = vmul.f32 %v3238, 0.044715
        %v4540 = vmul.f32 %v3240, 0.044715
        %v4541 = vmul.f32 %v3751, 0.044715
        %v4542 = vmul.f32 %v3753, 0.044715
        %v4543 = vmul.f32 %v3242, 0.044715
        %v4544 = vmul.f32 %v3244, 0.044715
        %v4545 = vmul.f32 %v3755, 0.044715
        %v4546 = vmul.f32 %v3757, 0.044715
        %v4547 = vmul.f32 %v3248, 0.044715
        %v4548 = vmul.f32 %v3250, 0.044715
        %v4549 = vmul.f32 %v3761, 0.044715
        %v4550 = vmul.f32 %v3763, 0.044715
        %v4551 = vmul.f32 %v3252, 0.044715
        %v4552 = vmul.f32 %v3254, 0.044715
        %v4553 = vmul.f32 %v3765, 0.044715
        %v4554 = vmul.f32 %v3767, 0.044715
        %v4555 = vmul.f32 %v3258, 0.044715
        %v4556 = vmul.f32 %v3260, 0.044715
        %v4557 = vmul.f32 %v3771, 0.044715
        %v4558 = vmul.f32 %v3773, 0.044715
        %v4559 = vmul.f32 %v3262, 0.044715
        %v4560 = vmul.f32 %v3264, 0.044715
        %v4561 = vmul.f32 %v3775, 0.044715
        %v4562 = vmul.f32 %v3777, 0.044715
        %v4563 = vmul.f32 %v3268, 0.044715
        %v4564 = vmul.f32 %v3270, 0.044715
        %v4565 = vmul.f32 %v3781, 0.044715
        %v4566 = vmul.f32 %v3783, 0.044715
        %v4567 = vmul.f32 %v3272, 0.044715
        %v4568 = vmul.f32 %v3274, 0.044715
        %v4569 = vmul.f32 %v3785, 0.044715
        %v4570 = vmul.f32 %v3787, 0.044715
        %v4571 = vmul.f32 %v3278, 0.044715
        %v4572 = vmul.f32 %v3280, 0.044715
        %v4573 = vmul.f32 %v3791, 0.044715
        %v4574 = vmul.f32 %v3793, 0.044715
        %v4575 = vmul.f32 %v3282, 0.044715
        %v4576 = vmul.f32 %v3284, 0.044715
        %v4577 = vmul.f32 %v3795, 0.044715
        %v4578 = vmul.f32 %v3797, 0.044715
        %v4579 = vmul.f32 %v3288, 0.044715
        %v4580 = vmul.f32 %v3290, 0.044715
        %v4581 = vmul.f32 %v3801, 0.044715
        %v4582 = vmul.f32 %v3803, 0.044715
        %v4583 = vmul.f32 %v3292, 0.044715
        %v4584 = vmul.f32 %v3294, 0.044715
        %v4585 = vmul.f32 %v3805, 0.044715
        %v4586 = vmul.f32 %v3807, 0.044715
        %v4587 = vmul.f32 %v3298, 0.044715
        %v4588 = vmul.f32 %v3300, 0.044715
        %v4589 = vmul.f32 %v3811, 0.044715
        %v4590 = vmul.f32 %v3813, 0.044715
        %v4591 = vmul.f32 %v3302, 0.044715
        %v4592 = vmul.f32 %v3304, 0.044715
        %v4593 = vmul.f32 %v3815, 0.044715
        %v4594 = vmul.f32 %v3817, 0.044715
        %v4595 = vmul.f32 %v3308, 0.044715
        %v4596 = vmul.f32 %v3310, 0.044715
        %v4597 = vmul.f32 %v3821, 0.044715
        %v4598 = vmul.f32 %v3823, 0.044715
        %v4599 = vmul.f32 %v3312, 0.044715
        %v4600 = vmul.f32 %v3314, 0.044715
        %v4601 = vmul.f32 %v3825, 0.044715
        %v4602 = vmul.f32 %v3827, 0.044715
        %v4603 = vmul.f32 %v3318, 0.044715
        %v4604 = vmul.f32 %v3320, 0.044715
        %v4605 = vmul.f32 %v3831, 0.044715
        %v4606 = vmul.f32 %v3833, 0.044715
        %v4607 = vmul.f32 %v3322, 0.044715
        %v4608 = vmul.f32 %v3324, 0.044715
        %v4609 = vmul.f32 %v3835, 0.044715
        %v4610 = vmul.f32 %v3837, 0.044715
        %v4611 = vmul.f32 %v3328, 0.044715
        %v4612 = vmul.f32 %v3330, 0.044715
        %v4613 = vmul.f32 %v3841, 0.044715
        %v4614 = vmul.f32 %v3843, 0.044715
        %v4615 = vmul.f32 %v3332, 0.044715
        %v4616 = vmul.f32 %v3334, 0.044715
        %v4617 = vmul.f32 %v3845, 0.044715
        %v4618 = vmul.f32 %v3847, 0.044715
        %v4619 = vmul.f32 %v3338, 0.044715
        %v4620 = vmul.f32 %v3340, 0.044715
        %v4621 = vmul.f32 %v3851, 0.044715
        %v4622 = vmul.f32 %v3853, 0.044715
        %v4623 = vmul.f32 %v3342, 0.044715
        %v4624 = vmul.f32 %v3344, 0.044715
        %v4625 = vmul.f32 %v3855, 0.044715
        %v4626 = vmul.f32 %v3857, 0.044715
        %v4627 = vmul.f32 %v4243, %v2868
        %v4628 = vmul.f32 %v4244, %v2870
        %v4629 = vmul.f32 %v4245, %v3381
        %v4630 = vmul.f32 %v4246, %v3383
        %v4631 = vmul.f32 %v4247, %v2872
        %v4632 = vmul.f32 %v4248, %v2874
        %v4633 = vmul.f32 %v4249, %v3385
        %v4634 = vmul.f32 %v4250, %v3387
        %v4635 = vmul.f32 %v4251, %v2878
        %v4636 = vmul.f32 %v4252, %v2880
        %v4637 = vmul.f32 %v4253, %v3391
        %v4638 = vmul.f32 %v4254, %v3393
        %v4639 = vmul.f32 %v4255, %v2882
        %v4640 = vmul.f32 %v4256, %v2884
        %v4641 = vmul.f32 %v4257, %v3395
        %v4642 = vmul.f32 %v4258, %v3397
        %v4643 = vmul.f32 %v4259, %v2888
        %v4644 = vmul.f32 %v4260, %v2890
        %v4645 = vmul.f32 %v4261, %v3401
        %v4646 = vmul.f32 %v4262, %v3403
        %v4647 = vmul.f32 %v4263, %v2892
        %v4648 = vmul.f32 %v4264, %v2894
        %v4649 = vmul.f32 %v4265, %v3405
        %v4650 = vmul.f32 %v4266, %v3407
        %v4651 = vmul.f32 %v4267, %v2898
        %v4652 = vmul.f32 %v4268, %v2900
        %v4653 = vmul.f32 %v4269, %v3411
        %v4654 = vmul.f32 %v4270, %v3413
        %v4655 = vmul.f32 %v4271, %v2902
        %v4656 = vmul.f32 %v4272, %v2904
        %v4657 = vmul.f32 %v4273, %v3415
        %v4658 = vmul.f32 %v4274, %v3417
        %v4659 = vmul.f32 %v4275, %v2908
        %v4660 = vmul.f32 %v4276, %v2910
        %v4661 = vmul.f32 %v4277, %v3421
        %v4662 = vmul.f32 %v4278, %v3423
        %v4663 = vmul.f32 %v4279, %v2912
        %v4664 = vmul.f32 %v4280, %v2914
        %v4665 = vmul.f32 %v4281, %v3425
        %v4666 = vmul.f32 %v4282, %v3427
        %v4667 = vmul.f32 %v4283, %v2918
        %v4668 = vmul.f32 %v4284, %v2920
        %v4669 = vmul.f32 %v4285, %v3431
        %v4670 = vmul.f32 %v4286, %v3433
        %v4671 = vmul.f32 %v4287, %v2922
        %v4672 = vmul.f32 %v4288, %v2924
        %v4673 = vmul.f32 %v4289, %v3435
        %v4674 = vmul.f32 %v4290, %v3437
        %v4675 = vmul.f32 %v4291, %v2928
        %v4676 = vmul.f32 %v4292, %v2930
        %v4677 = vmul.f32 %v4293, %v3441
        %v4678 = vmul.f32 %v4294, %v3443
        %v4679 = vmul.f32 %v4295, %v2932
        %v4680 = vmul.f32 %v4296, %v2934
        %v4681 = vmul.f32 %v4297, %v3445
        %v4682 = vmul.f32 %v4298, %v3447
        %v4683 = vmul.f32 %v4299, %v2938
        %v4684 = vmul.f32 %v4300, %v2940
        %v4685 = vmul.f32 %v4301, %v3451
        %v4686 = vmul.f32 %v4302, %v3453
        %v4687 = vmul.f32 %v4303, %v2942
        %v4688 = vmul.f32 %v4304, %v2944
        %v4689 = vmul.f32 %v4305, %v3455
        %v4690 = vmul.f32 %v4306, %v3457
        %v4691 = vmul.f32 %v4307, %v2948
        %v4692 = vmul.f32 %v4308, %v2950
        %v4693 = vmul.f32 %v4309, %v3461
        %v4694 = vmul.f32 %v4310, %v3463
        %v4695 = vmul.f32 %v4311, %v2952
        %v4696 = vmul.f32 %v4312, %v2954
        %v4697 = vmul.f32 %v4313, %v3465
        %v4698 = vmul.f32 %v4314, %v3467
        %v4699 = vmul.f32 %v4315, %v2958
        %v4700 = vmul.f32 %v4316, %v2960
        %v4701 = vmul.f32 %v4317, %v3471
        %v4702 = vmul.f32 %v4318, %v3473
        %v4703 = vmul.f32 %v4319, %v2962
        %v4704 = vmul.f32 %v4320, %v2964
        %v4705 = vmul.f32 %v4321, %v3475
        %v4706 = vmul.f32 %v4322, %v3477
        %v4707 = vmul.f32 %v4323, %v2968
        %v4708 = vmul.f32 %v4324, %v2970
        %v4709 = vmul.f32 %v4325, %v3481
        %v4710 = vmul.f32 %v4326, %v3483
        %v4711 = vmul.f32 %v4327, %v2972
        %v4712 = vmul.f32 %v4328, %v2974
        %v4713 = vmul.f32 %v4329, %v3485
        %v4714 = vmul.f32 %v4330, %v3487
        %v4715 = vmul.f32 %v4331, %v2978
        %v4716 = vmul.f32 %v4332, %v2980
        %v4717 = vmul.f32 %v4333, %v3491
        %v4718 = vmul.f32 %v4334, %v3493
        %v4719 = vmul.f32 %v4335, %v2982
        %v4720 = vmul.f32 %v4336, %v2984
        %v4721 = vmul.f32 %v4337, %v3495
        %v4722 = vmul.f32 %v4338, %v3497
        %v4723 = vmul.f32 %v4339, %v2988
        %v4724 = vmul.f32 %v4340, %v2990
        %v4725 = vmul.f32 %v4341, %v3501
        %v4726 = vmul.f32 %v4342, %v3503
        %v4727 = vmul.f32 %v4343, %v2992
        %v4728 = vmul.f32 %v4344, %v2994
        %v4729 = vmul.f32 %v4345, %v3505
        %v4730 = vmul.f32 %v4346, %v3507
        %v4731 = vmul.f32 %v4347, %v2998
        %v4732 = vmul.f32 %v4348, %v3000
        %v4733 = vmul.f32 %v4349, %v3511
        %v4734 = vmul.f32 %v4350, %v3513
        %v4735 = vmul.f32 %v4351, %v3002
        %v4736 = vmul.f32 %v4352, %v3004
        %v4737 = vmul.f32 %v4353, %v3515
        %v4738 = vmul.f32 %v4354, %v3517
        %v4739 = vmul.f32 %v4355, %v3008
        %v4740 = vmul.f32 %v4356, %v3010
        %v4741 = vmul.f32 %v4357, %v3521
        %v4742 = vmul.f32 %v4358, %v3523
        %v4743 = vmul.f32 %v4359, %v3012
        %v4744 = vmul.f32 %v4360, %v3014
        %v4745 = vmul.f32 %v4361, %v3525
        %v4746 = vmul.f32 %v4362, %v3527
        %v4747 = vmul.f32 %v4363, %v3018
        %v4748 = vmul.f32 %v4364, %v3020
        %v4749 = vmul.f32 %v4365, %v3531
        %v4750 = vmul.f32 %v4366, %v3533
        %v4751 = vmul.f32 %v4367, %v3022
        %v4752 = vmul.f32 %v4368, %v3024
        %v4753 = vmul.f32 %v4369, %v3535
        %v4754 = vmul.f32 %v4370, %v3537
        %v4755 = vmul.f32 %v4371, %v3028
        %v4756 = vmul.f32 %v4372, %v3030
        %v4757 = vmul.f32 %v4373, %v3541
        %v4758 = vmul.f32 %v4374, %v3543
        %v4759 = vmul.f32 %v4375, %v3032
        %v4760 = vmul.f32 %v4376, %v3034
        %v4761 = vmul.f32 %v4377, %v3545
        %v4762 = vmul.f32 %v4378, %v3547
        %v4763 = vmul.f32 %v4379, %v3038
        %v4764 = vmul.f32 %v4380, %v3040
        %v4765 = vmul.f32 %v4381, %v3551
        %v4766 = vmul.f32 %v4382, %v3553
        %v4767 = vmul.f32 %v4383, %v3042
        %v4768 = vmul.f32 %v4384, %v3044
        %v4769 = vmul.f32 %v4385, %v3555
        %v4770 = vmul.f32 %v4386, %v3557
        %v4771 = vmul.f32 %v4387, %v3048
        %v4772 = vmul.f32 %v4388, %v3050
        %v4773 = vmul.f32 %v4389, %v3561
        %v4774 = vmul.f32 %v4390, %v3563
        %v4775 = vmul.f32 %v4391, %v3052
        %v4776 = vmul.f32 %v4392, %v3054
        %v4777 = vmul.f32 %v4393, %v3565
        %v4778 = vmul.f32 %v4394, %v3567
        %v4779 = vmul.f32 %v4395, %v3058
        %v4780 = vmul.f32 %v4396, %v3060
        %v4781 = vmul.f32 %v4397, %v3571
        %v4782 = vmul.f32 %v4398, %v3573
        %v4783 = vmul.f32 %v4399, %v3062
        %v4784 = vmul.f32 %v4400, %v3064
        %v4785 = vmul.f32 %v4401, %v3575
        %v4786 = vmul.f32 %v4402, %v3577
        %v4787 = vmul.f32 %v4403, %v3068
        %v4788 = vmul.f32 %v4404, %v3070
        %v4789 = vmul.f32 %v4405, %v3581
        %v4790 = vmul.f32 %v4406, %v3583
        %v4791 = vmul.f32 %v4407, %v3072
        %v4792 = vmul.f32 %v4408, %v3074
        %v4793 = vmul.f32 %v4409, %v3585
        %v4794 = vmul.f32 %v4410, %v3587
        %v4795 = vmul.f32 %v4411, %v3078
        %v4796 = vmul.f32 %v4412, %v3080
        %v4797 = vmul.f32 %v4413, %v3591
        %v4798 = vmul.f32 %v4414, %v3593
        %v4799 = vmul.f32 %v4415, %v3082
        %v4800 = vmul.f32 %v4416, %v3084
        %v4801 = vmul.f32 %v4417, %v3595
        %v4802 = vmul.f32 %v4418, %v3597
        %v4803 = vmul.f32 %v4419, %v3088
        %v4804 = vmul.f32 %v4420, %v3090
        %v4805 = vmul.f32 %v4421, %v3601
        %v4806 = vmul.f32 %v4422, %v3603
        %v4807 = vmul.f32 %v4423, %v3092
        %v4808 = vmul.f32 %v4424, %v3094
        %v4809 = vmul.f32 %v4425, %v3605
        %v4810 = vmul.f32 %v4426, %v3607
        %v4811 = vmul.f32 %v4427, %v3098
        %v4812 = vmul.f32 %v4428, %v3100
        %v4813 = vmul.f32 %v4429, %v3611
        %v4814 = vmul.f32 %v4430, %v3613
        %v4815 = vmul.f32 %v4431, %v3102
        %v4816 = vmul.f32 %v4432, %v3104
        %v4817 = vmul.f32 %v4433, %v3615
        %v4818 = vmul.f32 %v4434, %v3617
        %v4819 = vmul.f32 %v4435, %v3108
        %v4820 = vmul.f32 %v4436, %v3110
        %v4821 = vmul.f32 %v4437, %v3621
        %v4822 = vmul.f32 %v4438, %v3623
        %v4823 = vmul.f32 %v4439, %v3112
        %v4824 = vmul.f32 %v4440, %v3114
        %v4825 = vmul.f32 %v4441, %v3625
        %v4826 = vmul.f32 %v4442, %v3627
        %v4827 = vmul.f32 %v4443, %v3118
        %v4828 = vmul.f32 %v4444, %v3120
        %v4829 = vmul.f32 %v4445, %v3631
        %v4830 = vmul.f32 %v4446, %v3633
        %v4831 = vmul.f32 %v4447, %v3122
        %v4832 = vmul.f32 %v4448, %v3124
        %v4833 = vmul.f32 %v4449, %v3635
        %v4834 = vmul.f32 %v4450, %v3637
        %v4835 = vmul.f32 %v4451, %v3128
        %v4836 = vmul.f32 %v4452, %v3130
        %v4837 = vmul.f32 %v4453, %v3641
        %v4838 = vmul.f32 %v4454, %v3643
        %v4839 = vmul.f32 %v4455, %v3132
        %v4840 = vmul.f32 %v4456, %v3134
        %v4841 = vmul.f32 %v4457, %v3645
        %v4842 = vmul.f32 %v4458, %v3647
        %v4843 = vmul.f32 %v4459, %v3138
        %v4844 = vmul.f32 %v4460, %v3140
        %v4845 = vmul.f32 %v4461, %v3651
        %v4846 = vmul.f32 %v4462, %v3653
        %v4847 = vmul.f32 %v4463, %v3142
        %v4848 = vmul.f32 %v4464, %v3144
        %v4849 = vmul.f32 %v4465, %v3655
        %v4850 = vmul.f32 %v4466, %v3657
        %v4851 = vmul.f32 %v4467, %v3148
        %v4852 = vmul.f32 %v4468, %v3150
        %v4853 = vmul.f32 %v4469, %v3661
        %v4854 = vmul.f32 %v4470, %v3663
        %v4855 = vmul.f32 %v4471, %v3152
        %v4856 = vmul.f32 %v4472, %v3154
        %v4857 = vmul.f32 %v4473, %v3665
        %v4858 = vmul.f32 %v4474, %v3667
        %v4859 = vmul.f32 %v4475, %v3158
        %v4860 = vmul.f32 %v4476, %v3160
        %v4861 = vmul.f32 %v4477, %v3671
        %v4862 = vmul.f32 %v4478, %v3673
        %v4863 = vmul.f32 %v4479, %v3162
        %v4864 = vmul.f32 %v4480, %v3164
        %v4865 = vmul.f32 %v4481, %v3675
        %v4866 = vmul.f32 %v4482, %v3677
        %v4867 = vmul.f32 %v4483, %v3168
        %v4868 = vmul.f32 %v4484, %v3170
        %v4869 = vmul.f32 %v4485, %v3681
        %v4870 = vmul.f32 %v4486, %v3683
        %v4871 = vmul.f32 %v4487, %v3172
        %v4872 = vmul.f32 %v4488, %v3174
        %v4873 = vmul.f32 %v4489, %v3685
        %v4874 = vmul.f32 %v4490, %v3687
        %v4875 = vmul.f32 %v4491, %v3178
        %v4876 = vmul.f32 %v4492, %v3180
        %v4877 = vmul.f32 %v4493, %v3691
        %v4878 = vmul.f32 %v4494, %v3693
        %v4879 = vmul.f32 %v4495, %v3182
        %v4880 = vmul.f32 %v4496, %v3184
        %v4881 = vmul.f32 %v4497, %v3695
        %v4882 = vmul.f32 %v4498, %v3697
        %v4883 = vmul.f32 %v4499, %v3188
        %v4884 = vmul.f32 %v4500, %v3190
        %v4885 = vmul.f32 %v4501, %v3701
        %v4886 = vmul.f32 %v4502, %v3703
        %v4887 = vmul.f32 %v4503, %v3192
        %v4888 = vmul.f32 %v4504, %v3194
        %v4889 = vmul.f32 %v4505, %v3705
        %v4890 = vmul.f32 %v4506, %v3707
        %v4891 = vmul.f32 %v4507, %v3198
        %v4892 = vmul.f32 %v4508, %v3200
        %v4893 = vmul.f32 %v4509, %v3711
        %v4894 = vmul.f32 %v4510, %v3713
        %v4895 = vmul.f32 %v4511, %v3202
        %v4896 = vmul.f32 %v4512, %v3204
        %v4897 = vmul.f32 %v4513, %v3715
        %v4898 = vmul.f32 %v4514, %v3717
        %v4899 = vmul.f32 %v4515, %v3208
        %v4900 = vmul.f32 %v4516, %v3210
        %v4901 = vmul.f32 %v4517, %v3721
        %v4902 = vmul.f32 %v4518, %v3723
        %v4903 = vmul.f32 %v4519, %v3212
        %v4904 = vmul.f32 %v4520, %v3214
        %v4905 = vmul.f32 %v4521, %v3725
        %v4906 = vmul.f32 %v4522, %v3727
        %v4907 = vmul.f32 %v4523, %v3218
        %v4908 = vmul.f32 %v4524, %v3220
        %v4909 = vmul.f32 %v4525, %v3731
        %v4910 = vmul.f32 %v4526, %v3733
        %v4911 = vmul.f32 %v4527, %v3222
        %v4912 = vmul.f32 %v4528, %v3224
        %v4913 = vmul.f32 %v4529, %v3735
        %v4914 = vmul.f32 %v4530, %v3737
        %v4915 = vmul.f32 %v4531, %v3228
        %v4916 = vmul.f32 %v4532, %v3230
        %v4917 = vmul.f32 %v4533, %v3741
        %v4918 = vmul.f32 %v4534, %v3743
        %v4919 = vmul.f32 %v4535, %v3232
        %v4920 = vmul.f32 %v4536, %v3234
        %v4921 = vmul.f32 %v4537, %v3745
        %v4922 = vmul.f32 %v4538, %v3747
        %v4923 = vmul.f32 %v4539, %v3238
        %v4924 = vmul.f32 %v4540, %v3240
        %v4925 = vmul.f32 %v4541, %v3751
        %v4926 = vmul.f32 %v4542, %v3753
        %v4927 = vmul.f32 %v4543, %v3242
        %v4928 = vmul.f32 %v4544, %v3244
        %v4929 = vmul.f32 %v4545, %v3755
        %v4930 = vmul.f32 %v4546, %v3757
        %v4931 = vmul.f32 %v4547, %v3248
        %v4932 = vmul.f32 %v4548, %v3250
        %v4933 = vmul.f32 %v4549, %v3761
        %v4934 = vmul.f32 %v4550, %v3763
        %v4935 = vmul.f32 %v4551, %v3252
        %v4936 = vmul.f32 %v4552, %v3254
        %v4937 = vmul.f32 %v4553, %v3765
        %v4938 = vmul.f32 %v4554, %v3767
        %v4939 = vmul.f32 %v4555, %v3258
        %v4940 = vmul.f32 %v4556, %v3260
        %v4941 = vmul.f32 %v4557, %v3771
        %v4942 = vmul.f32 %v4558, %v3773
        %v4943 = vmul.f32 %v4559, %v3262
        %v4944 = vmul.f32 %v4560, %v3264
        %v4945 = vmul.f32 %v4561, %v3775
        %v4946 = vmul.f32 %v4562, %v3777
        %v4947 = vmul.f32 %v4563, %v3268
        %v4948 = vmul.f32 %v4564, %v3270
        %v4949 = vmul.f32 %v4565, %v3781
        %v4950 = vmul.f32 %v4566, %v3783
        %v4951 = vmul.f32 %v4567, %v3272
        %v4952 = vmul.f32 %v4568, %v3274
        %v4953 = vmul.f32 %v4569, %v3785
        %v4954 = vmul.f32 %v4570, %v3787
        %v4955 = vmul.f32 %v4571, %v3278
        %v4956 = vmul.f32 %v4572, %v3280
        %v4957 = vmul.f32 %v4573, %v3791
        %v4958 = vmul.f32 %v4574, %v3793
        %v4959 = vmul.f32 %v4575, %v3282
        %v4960 = vmul.f32 %v4576, %v3284
        %v4961 = vmul.f32 %v4577, %v3795
        %v4962 = vmul.f32 %v4578, %v3797
        %v4963 = vmul.f32 %v4579, %v3288
        %v4964 = vmul.f32 %v4580, %v3290
        %v4965 = vmul.f32 %v4581, %v3801
        %v4966 = vmul.f32 %v4582, %v3803
        %v4967 = vmul.f32 %v4583, %v3292
        %v4968 = vmul.f32 %v4584, %v3294
        %v4969 = vmul.f32 %v4585, %v3805
        %v4970 = vmul.f32 %v4586, %v3807
        %v4971 = vmul.f32 %v4587, %v3298
        %v4972 = vmul.f32 %v4588, %v3300
        %v4973 = vmul.f32 %v4589, %v3811
        %v4974 = vmul.f32 %v4590, %v3813
        %v4975 = vmul.f32 %v4591, %v3302
        %v4976 = vmul.f32 %v4592, %v3304
        %v4977 = vmul.f32 %v4593, %v3815
        %v4978 = vmul.f32 %v4594, %v3817
        %v4979 = vmul.f32 %v4595, %v3308
        %v4980 = vmul.f32 %v4596, %v3310
        %v4981 = vmul.f32 %v4597, %v3821
        %v4982 = vmul.f32 %v4598, %v3823
        %v4983 = vmul.f32 %v4599, %v3312
        %v4984 = vmul.f32 %v4600, %v3314
        %v4985 = vmul.f32 %v4601, %v3825
        %v4986 = vmul.f32 %v4602, %v3827
        %v4987 = vmul.f32 %v4603, %v3318
        %v4988 = vmul.f32 %v4604, %v3320
        %v4989 = vmul.f32 %v4605, %v3831
        %v4990 = vmul.f32 %v4606, %v3833
        %v4991 = vmul.f32 %v4607, %v3322
        %v4992 = vmul.f32 %v4608, %v3324
        %v4993 = vmul.f32 %v4609, %v3835
        %v4994 = vmul.f32 %v4610, %v3837
        %v4995 = vmul.f32 %v4611, %v3328
        %v4996 = vmul.f32 %v4612, %v3330
        %v4997 = vmul.f32 %v4613, %v3841
        %v4998 = vmul.f32 %v4614, %v3843
        %v4999 = vmul.f32 %v4615, %v3332
        %v5000 = vmul.f32 %v4616, %v3334
        %v5001 = vmul.f32 %v4617, %v3845
        %v5002 = vmul.f32 %v4618, %v3847
        %v5003 = vmul.f32 %v4619, %v3338
        %v5004 = vmul.f32 %v4620, %v3340
        %v5005 = vmul.f32 %v4621, %v3851
        %v5006 = vmul.f32 %v4622, %v3853
        %v5007 = vmul.f32 %v4623, %v3342
        %v5008 = vmul.f32 %v4624, %v3344
        %v5009 = vmul.f32 %v4625, %v3855
        %v5010 = vmul.f32 %v4626, %v3857
        %v5011 = vmul.f32 %v4627, %v2868
        %v5012 = vmul.f32 %v4628, %v2870
        %v5013 = vmul.f32 %v4629, %v3381
        %v5014 = vmul.f32 %v4630, %v3383
        %v5015 = vmul.f32 %v4631, %v2872
        %v5016 = vmul.f32 %v4632, %v2874
        %v5017 = vmul.f32 %v4633, %v3385
        %v5018 = vmul.f32 %v4634, %v3387
        %v5019 = vmul.f32 %v4635, %v2878
        %v5020 = vmul.f32 %v4636, %v2880
        %v5021 = vmul.f32 %v4637, %v3391
        %v5022 = vmul.f32 %v4638, %v3393
        %v5023 = vmul.f32 %v4639, %v2882
        %v5024 = vmul.f32 %v4640, %v2884
        %v5025 = vmul.f32 %v4641, %v3395
        %v5026 = vmul.f32 %v4642, %v3397
        %v5027 = vmul.f32 %v4643, %v2888
        %v5028 = vmul.f32 %v4644, %v2890
        %v5029 = vmul.f32 %v4645, %v3401
        %v5030 = vmul.f32 %v4646, %v3403
        %v5031 = vmul.f32 %v4647, %v2892
        %v5032 = vmul.f32 %v4648, %v2894
        %v5033 = vmul.f32 %v4649, %v3405
        %v5034 = vmul.f32 %v4650, %v3407
        %v5035 = vmul.f32 %v4651, %v2898
        %v5036 = vmul.f32 %v4652, %v2900
        %v5037 = vmul.f32 %v4653, %v3411
        %v5038 = vmul.f32 %v4654, %v3413
        %v5039 = vmul.f32 %v4655, %v2902
        %v5040 = vmul.f32 %v4656, %v2904
        %v5041 = vmul.f32 %v4657, %v3415
        %v5042 = vmul.f32 %v4658, %v3417
        %v5043 = vmul.f32 %v4659, %v2908
        %v5044 = vmul.f32 %v4660, %v2910
        %v5045 = vmul.f32 %v4661, %v3421
        %v5046 = vmul.f32 %v4662, %v3423
        %v5047 = vmul.f32 %v4663, %v2912
        %v5048 = vmul.f32 %v4664, %v2914
        %v5049 = vmul.f32 %v4665, %v3425
        %v5050 = vmul.f32 %v4666, %v3427
        %v5051 = vmul.f32 %v4667, %v2918
        %v5052 = vmul.f32 %v4668, %v2920
        %v5053 = vmul.f32 %v4669, %v3431
        %v5054 = vmul.f32 %v4670, %v3433
        %v5055 = vmul.f32 %v4671, %v2922
        %v5056 = vmul.f32 %v4672, %v2924
        %v5057 = vmul.f32 %v4673, %v3435
        %v5058 = vmul.f32 %v4674, %v3437
        %v5059 = vmul.f32 %v4675, %v2928
        %v5060 = vmul.f32 %v4676, %v2930
        %v5061 = vmul.f32 %v4677, %v3441
        %v5062 = vmul.f32 %v4678, %v3443
        %v5063 = vmul.f32 %v4679, %v2932
        %v5064 = vmul.f32 %v4680, %v2934
        %v5065 = vmul.f32 %v4681, %v3445
        %v5066 = vmul.f32 %v4682, %v3447
        %v5067 = vmul.f32 %v4683, %v2938
        %v5068 = vmul.f32 %v4684, %v2940
        %v5069 = vmul.f32 %v4685, %v3451
        %v5070 = vmul.f32 %v4686, %v3453
        %v5071 = vmul.f32 %v4687, %v2942
        %v5072 = vmul.f32 %v4688, %v2944
        %v5073 = vmul.f32 %v4689, %v3455
        %v5074 = vmul.f32 %v4690, %v3457
        %v5075 = vmul.f32 %v4691, %v2948
        %v5076 = vmul.f32 %v4692, %v2950
        %v5077 = vmul.f32 %v4693, %v3461
        %v5078 = vmul.f32 %v4694, %v3463
        %v5079 = vmul.f32 %v4695, %v2952
        %v5080 = vmul.f32 %v4696, %v2954
        %v5081 = vmul.f32 %v4697, %v3465
        %v5082 = vmul.f32 %v4698, %v3467
        %v5083 = vmul.f32 %v4699, %v2958
        %v5084 = vmul.f32 %v4700, %v2960
        %v5085 = vmul.f32 %v4701, %v3471
        %v5086 = vmul.f32 %v4702, %v3473
        %v5087 = vmul.f32 %v4703, %v2962
        %v5088 = vmul.f32 %v4704, %v2964
        %v5089 = vmul.f32 %v4705, %v3475
        %v5090 = vmul.f32 %v4706, %v3477
        %v5091 = vmul.f32 %v4707, %v2968
        %v5092 = vmul.f32 %v4708, %v2970
        %v5093 = vmul.f32 %v4709, %v3481
        %v5094 = vmul.f32 %v4710, %v3483
        %v5095 = vmul.f32 %v4711, %v2972
        %v5096 = vmul.f32 %v4712, %v2974
        %v5097 = vmul.f32 %v4713, %v3485
        %v5098 = vmul.f32 %v4714, %v3487
        %v5099 = vmul.f32 %v4715, %v2978
        %v5100 = vmul.f32 %v4716, %v2980
        %v5101 = vmul.f32 %v4717, %v3491
        %v5102 = vmul.f32 %v4718, %v3493
        %v5103 = vmul.f32 %v4719, %v2982
        %v5104 = vmul.f32 %v4720, %v2984
        %v5105 = vmul.f32 %v4721, %v3495
        %v5106 = vmul.f32 %v4722, %v3497
        %v5107 = vmul.f32 %v4723, %v2988
        %v5108 = vmul.f32 %v4724, %v2990
        %v5109 = vmul.f32 %v4725, %v3501
        %v5110 = vmul.f32 %v4726, %v3503
        %v5111 = vmul.f32 %v4727, %v2992
        %v5112 = vmul.f32 %v4728, %v2994
        %v5113 = vmul.f32 %v4729, %v3505
        %v5114 = vmul.f32 %v4730, %v3507
        %v5115 = vmul.f32 %v4731, %v2998
        %v5116 = vmul.f32 %v4732, %v3000
        %v5117 = vmul.f32 %v4733, %v3511
        %v5118 = vmul.f32 %v4734, %v3513
        %v5119 = vmul.f32 %v4735, %v3002
        %v5120 = vmul.f32 %v4736, %v3004
        %v5121 = vmul.f32 %v4737, %v3515
        %v5122 = vmul.f32 %v4738, %v3517
        %v5123 = vmul.f32 %v4739, %v3008
        %v5124 = vmul.f32 %v4740, %v3010
        %v5125 = vmul.f32 %v4741, %v3521
        %v5126 = vmul.f32 %v4742, %v3523
        %v5127 = vmul.f32 %v4743, %v3012
        %v5128 = vmul.f32 %v4744, %v3014
        %v5129 = vmul.f32 %v4745, %v3525
        %v5130 = vmul.f32 %v4746, %v3527
        %v5131 = vmul.f32 %v4747, %v3018
        %v5132 = vmul.f32 %v4748, %v3020
        %v5133 = vmul.f32 %v4749, %v3531
        %v5134 = vmul.f32 %v4750, %v3533
        %v5135 = vmul.f32 %v4751, %v3022
        %v5136 = vmul.f32 %v4752, %v3024
        %v5137 = vmul.f32 %v4753, %v3535
        %v5138 = vmul.f32 %v4754, %v3537
        %v5139 = vmul.f32 %v4755, %v3028
        %v5140 = vmul.f32 %v4756, %v3030
        %v5141 = vmul.f32 %v4757, %v3541
        %v5142 = vmul.f32 %v4758, %v3543
        %v5143 = vmul.f32 %v4759, %v3032
        %v5144 = vmul.f32 %v4760, %v3034
        %v5145 = vmul.f32 %v4761, %v3545
        %v5146 = vmul.f32 %v4762, %v3547
        %v5147 = vmul.f32 %v4763, %v3038
        %v5148 = vmul.f32 %v4764, %v3040
        %v5149 = vmul.f32 %v4765, %v3551
        %v5150 = vmul.f32 %v4766, %v3553
        %v5151 = vmul.f32 %v4767, %v3042
        %v5152 = vmul.f32 %v4768, %v3044
        %v5153 = vmul.f32 %v4769, %v3555
        %v5154 = vmul.f32 %v4770, %v3557
        %v5155 = vmul.f32 %v4771, %v3048
        %v5156 = vmul.f32 %v4772, %v3050
        %v5157 = vmul.f32 %v4773, %v3561
        %v5158 = vmul.f32 %v4774, %v3563
        %v5159 = vmul.f32 %v4775, %v3052
        %v5160 = vmul.f32 %v4776, %v3054
        %v5161 = vmul.f32 %v4777, %v3565
        %v5162 = vmul.f32 %v4778, %v3567
        %v5163 = vmul.f32 %v4779, %v3058
        %v5164 = vmul.f32 %v4780, %v3060
        %v5165 = vmul.f32 %v4781, %v3571
        %v5166 = vmul.f32 %v4782, %v3573
        %v5167 = vmul.f32 %v4783, %v3062
        %v5168 = vmul.f32 %v4784, %v3064
        %v5169 = vmul.f32 %v4785, %v3575
        %v5170 = vmul.f32 %v4786, %v3577
        %v5171 = vmul.f32 %v4787, %v3068
        %v5172 = vmul.f32 %v4788, %v3070
        %v5173 = vmul.f32 %v4789, %v3581
        %v5174 = vmul.f32 %v4790, %v3583
        %v5175 = vmul.f32 %v4791, %v3072
        %v5176 = vmul.f32 %v4792, %v3074
        %v5177 = vmul.f32 %v4793, %v3585
        %v5178 = vmul.f32 %v4794, %v3587
        %v5179 = vmul.f32 %v4795, %v3078
        %v5180 = vmul.f32 %v4796, %v3080
        %v5181 = vmul.f32 %v4797, %v3591
        %v5182 = vmul.f32 %v4798, %v3593
        %v5183 = vmul.f32 %v4799, %v3082
        %v5184 = vmul.f32 %v4800, %v3084
        %v5185 = vmul.f32 %v4801, %v3595
        %v5186 = vmul.f32 %v4802, %v3597
        %v5187 = vmul.f32 %v4803, %v3088
        %v5188 = vmul.f32 %v4804, %v3090
        %v5189 = vmul.f32 %v4805, %v3601
        %v5190 = vmul.f32 %v4806, %v3603
        %v5191 = vmul.f32 %v4807, %v3092
        %v5192 = vmul.f32 %v4808, %v3094
        %v5193 = vmul.f32 %v4809, %v3605
        %v5194 = vmul.f32 %v4810, %v3607
        %v5195 = vmul.f32 %v4811, %v3098
        %v5196 = vmul.f32 %v4812, %v3100
        %v5197 = vmul.f32 %v4813, %v3611
        %v5198 = vmul.f32 %v4814, %v3613
        %v5199 = vmul.f32 %v4815, %v3102
        %v5200 = vmul.f32 %v4816, %v3104
        %v5201 = vmul.f32 %v4817, %v3615
        %v5202 = vmul.f32 %v4818, %v3617
        %v5203 = vmul.f32 %v4819, %v3108
        %v5204 = vmul.f32 %v4820, %v3110
        %v5205 = vmul.f32 %v4821, %v3621
        %v5206 = vmul.f32 %v4822, %v3623
        %v5207 = vmul.f32 %v4823, %v3112
        %v5208 = vmul.f32 %v4824, %v3114
        %v5209 = vmul.f32 %v4825, %v3625
        %v5210 = vmul.f32 %v4826, %v3627
        %v5211 = vmul.f32 %v4827, %v3118
        %v5212 = vmul.f32 %v4828, %v3120
        %v5213 = vmul.f32 %v4829, %v3631
        %v5214 = vmul.f32 %v4830, %v3633
        %v5215 = vmul.f32 %v4831, %v3122
        %v5216 = vmul.f32 %v4832, %v3124
        %v5217 = vmul.f32 %v4833, %v3635
        %v5218 = vmul.f32 %v4834, %v3637
        %v5219 = vmul.f32 %v4835, %v3128
        %v5220 = vmul.f32 %v4836, %v3130
        %v5221 = vmul.f32 %v4837, %v3641
        %v5222 = vmul.f32 %v4838, %v3643
        %v5223 = vmul.f32 %v4839, %v3132
        %v5224 = vmul.f32 %v4840, %v3134
        %v5225 = vmul.f32 %v4841, %v3645
        %v5226 = vmul.f32 %v4842, %v3647
        %v5227 = vmul.f32 %v4843, %v3138
        %v5228 = vmul.f32 %v4844, %v3140
        %v5229 = vmul.f32 %v4845, %v3651
        %v5230 = vmul.f32 %v4846, %v3653
        %v5231 = vmul.f32 %v4847, %v3142
        %v5232 = vmul.f32 %v4848, %v3144
        %v5233 = vmul.f32 %v4849, %v3655
        %v5234 = vmul.f32 %v4850, %v3657
        %v5235 = vmul.f32 %v4851, %v3148
        %v5236 = vmul.f32 %v4852, %v3150
        %v5237 = vmul.f32 %v4853, %v3661
        %v5238 = vmul.f32 %v4854, %v3663
        %v5239 = vmul.f32 %v4855, %v3152
        %v5240 = vmul.f32 %v4856, %v3154
        %v5241 = vmul.f32 %v4857, %v3665
        %v5242 = vmul.f32 %v4858, %v3667
        %v5243 = vmul.f32 %v4859, %v3158
        %v5244 = vmul.f32 %v4860, %v3160
        %v5245 = vmul.f32 %v4861, %v3671
        %v5246 = vmul.f32 %v4862, %v3673
        %v5247 = vmul.f32 %v4863, %v3162
        %v5248 = vmul.f32 %v4864, %v3164
        %v5249 = vmul.f32 %v4865, %v3675
        %v5250 = vmul.f32 %v4866, %v3677
        %v5251 = vmul.f32 %v4867, %v3168
        %v5252 = vmul.f32 %v4868, %v3170
        %v5253 = vmul.f32 %v4869, %v3681
        %v5254 = vmul.f32 %v4870, %v3683
        %v5255 = vmul.f32 %v4871, %v3172
        %v5256 = vmul.f32 %v4872, %v3174
        %v5257 = vmul.f32 %v4873, %v3685
        %v5258 = vmul.f32 %v4874, %v3687
        %v5259 = vmul.f32 %v4875, %v3178
        %v5260 = vmul.f32 %v4876, %v3180
        %v5261 = vmul.f32 %v4877, %v3691
        %v5262 = vmul.f32 %v4878, %v3693
        %v5263 = vmul.f32 %v4879, %v3182
        %v5264 = vmul.f32 %v4880, %v3184
        %v5265 = vmul.f32 %v4881, %v3695
        %v5266 = vmul.f32 %v4882, %v3697
        %v5267 = vmul.f32 %v4883, %v3188
        %v5268 = vmul.f32 %v4884, %v3190
        %v5269 = vmul.f32 %v4885, %v3701
        %v5270 = vmul.f32 %v4886, %v3703
        %v5271 = vmul.f32 %v4887, %v3192
        %v5272 = vmul.f32 %v4888, %v3194
        %v5273 = vmul.f32 %v4889, %v3705
        %v5274 = vmul.f32 %v4890, %v3707
        %v5275 = vmul.f32 %v4891, %v3198
        %v5276 = vmul.f32 %v4892, %v3200
        %v5277 = vmul.f32 %v4893, %v3711
        %v5278 = vmul.f32 %v4894, %v3713
        %v5279 = vmul.f32 %v4895, %v3202
        %v5280 = vmul.f32 %v4896, %v3204
        %v5281 = vmul.f32 %v4897, %v3715
        %v5282 = vmul.f32 %v4898, %v3717
        %v5283 = vmul.f32 %v4899, %v3208
        %v5284 = vmul.f32 %v4900, %v3210
        %v5285 = vmul.f32 %v4901, %v3721
        %v5286 = vmul.f32 %v4902, %v3723
        %v5287 = vmul.f32 %v4903, %v3212
        %v5288 = vmul.f32 %v4904, %v3214
        %v5289 = vmul.f32 %v4905, %v3725
        %v5290 = vmul.f32 %v4906, %v3727
        %v5291 = vmul.f32 %v4907, %v3218
        %v5292 = vmul.f32 %v4908, %v3220
        %v5293 = vmul.f32 %v4909, %v3731
        %v5294 = vmul.f32 %v4910, %v3733
        %v5295 = vmul.f32 %v4911, %v3222
        %v5296 = vmul.f32 %v4912, %v3224
        %v5297 = vmul.f32 %v4913, %v3735
        %v5298 = vmul.f32 %v4914, %v3737
        %v5299 = vmul.f32 %v4915, %v3228
        %v5300 = vmul.f32 %v4916, %v3230
        %v5301 = vmul.f32 %v4917, %v3741
        %v5302 = vmul.f32 %v4918, %v3743
        %v5303 = vmul.f32 %v4919, %v3232
        %v5304 = vmul.f32 %v4920, %v3234
        %v5305 = vmul.f32 %v4921, %v3745
        %v5306 = vmul.f32 %v4922, %v3747
        %v5307 = vmul.f32 %v4923, %v3238
        %v5308 = vmul.f32 %v4924, %v3240
        %v5309 = vmul.f32 %v4925, %v3751
        %v5310 = vmul.f32 %v4926, %v3753
        %v5311 = vmul.f32 %v4927, %v3242
        %v5312 = vmul.f32 %v4928, %v3244
        %v5313 = vmul.f32 %v4929, %v3755
        %v5314 = vmul.f32 %v4930, %v3757
        %v5315 = vmul.f32 %v4931, %v3248
        %v5316 = vmul.f32 %v4932, %v3250
        %v5317 = vmul.f32 %v4933, %v3761
        %v5318 = vmul.f32 %v4934, %v3763
        %v5319 = vmul.f32 %v4935, %v3252
        %v5320 = vmul.f32 %v4936, %v3254
        %v5321 = vmul.f32 %v4937, %v3765
        %v5322 = vmul.f32 %v4938, %v3767
        %v5323 = vmul.f32 %v4939, %v3258
        %v5324 = vmul.f32 %v4940, %v3260
        %v5325 = vmul.f32 %v4941, %v3771
        %v5326 = vmul.f32 %v4942, %v3773
        %v5327 = vmul.f32 %v4943, %v3262
        %v5328 = vmul.f32 %v4944, %v3264
        %v5329 = vmul.f32 %v4945, %v3775
        %v5330 = vmul.f32 %v4946, %v3777
        %v5331 = vmul.f32 %v4947, %v3268
        %v5332 = vmul.f32 %v4948, %v3270
        %v5333 = vmul.f32 %v4949, %v3781
        %v5334 = vmul.f32 %v4950, %v3783
        %v5335 = vmul.f32 %v4951, %v3272
        %v5336 = vmul.f32 %v4952, %v3274
        %v5337 = vmul.f32 %v4953, %v3785
        %v5338 = vmul.f32 %v4954, %v3787
        %v5339 = vmul.f32 %v4955, %v3278
        %v5340 = vmul.f32 %v4956, %v3280
        %v5341 = vmul.f32 %v4957, %v3791
        %v5342 = vmul.f32 %v4958, %v3793
        %v5343 = vmul.f32 %v4959, %v3282
        %v5344 = vmul.f32 %v4960, %v3284
        %v5345 = vmul.f32 %v4961, %v3795
        %v5346 = vmul.f32 %v4962, %v3797
        %v5347 = vmul.f32 %v4963, %v3288
        %v5348 = vmul.f32 %v4964, %v3290
        %v5349 = vmul.f32 %v4965, %v3801
        %v5350 = vmul.f32 %v4966, %v3803
        %v5351 = vmul.f32 %v4967, %v3292
        %v5352 = vmul.f32 %v4968, %v3294
        %v5353 = vmul.f32 %v4969, %v3805
        %v5354 = vmul.f32 %v4970, %v3807
        %v5355 = vmul.f32 %v4971, %v3298
        %v5356 = vmul.f32 %v4972, %v3300
        %v5357 = vmul.f32 %v4973, %v3811
        %v5358 = vmul.f32 %v4974, %v3813
        %v5359 = vmul.f32 %v4975, %v3302
        %v5360 = vmul.f32 %v4976, %v3304
        %v5361 = vmul.f32 %v4977, %v3815
        %v5362 = vmul.f32 %v4978, %v3817
        %v5363 = vmul.f32 %v4979, %v3308
        %v5364 = vmul.f32 %v4980, %v3310
        %v5365 = vmul.f32 %v4981, %v3821
        %v5366 = vmul.f32 %v4982, %v3823
        %v5367 = vmul.f32 %v4983, %v3312
        %v5368 = vmul.f32 %v4984, %v3314
        %v5369 = vmul.f32 %v4985, %v3825
        %v5370 = vmul.f32 %v4986, %v3827
        %v5371 = vmul.f32 %v4987, %v3318
        %v5372 = vmul.f32 %v4988, %v3320
        %v5373 = vmul.f32 %v4989, %v3831
        %v5374 = vmul.f32 %v4990, %v3833
        %v5375 = vmul.f32 %v4991, %v3322
        %v5376 = vmul.f32 %v4992, %v3324
        %v5377 = vmul.f32 %v4993, %v3835
        %v5378 = vmul.f32 %v4994, %v3837
        %v5379 = vmul.f32 %v4995, %v3328
        %v5380 = vmul.f32 %v4996, %v3330
        %v5381 = vmul.f32 %v4997, %v3841
        %v5382 = vmul.f32 %v4998, %v3843
        %v5383 = vmul.f32 %v4999, %v3332
        %v5384 = vmul.f32 %v5000, %v3334
        %v5385 = vmul.f32 %v5001, %v3845
        %v5386 = vmul.f32 %v5002, %v3847
        %v5387 = vmul.f32 %v5003, %v3338
        %v5388 = vmul.f32 %v5004, %v3340
        %v5389 = vmul.f32 %v5005, %v3851
        %v5390 = vmul.f32 %v5006, %v3853
        %v5391 = vmul.f32 %v5007, %v3342
        %v5392 = vmul.f32 %v5008, %v3344
        %v5393 = vmul.f32 %v5009, %v3855
        %v5394 = vmul.f32 %v5010, %v3857
        %v5395 = vadd.f32 %v2868, %v5011
        %v5396 = vadd.f32 %v2870, %v5012
        %v5397 = vadd.f32 %v3381, %v5013
        %v5398 = vadd.f32 %v3383, %v5014
        %v5399 = vadd.f32 %v2872, %v5015
        %v5400 = vadd.f32 %v2874, %v5016
        %v5401 = vadd.f32 %v3385, %v5017
        %v5402 = vadd.f32 %v3387, %v5018
        %v5403 = vadd.f32 %v2878, %v5019
        %v5404 = vadd.f32 %v2880, %v5020
        %v5405 = vadd.f32 %v3391, %v5021
        %v5406 = vadd.f32 %v3393, %v5022
        %v5407 = vadd.f32 %v2882, %v5023
        %v5408 = vadd.f32 %v2884, %v5024
        %v5409 = vadd.f32 %v3395, %v5025
        %v5410 = vadd.f32 %v3397, %v5026
        %v5411 = vadd.f32 %v2888, %v5027
        %v5412 = vadd.f32 %v2890, %v5028
        %v5413 = vadd.f32 %v3401, %v5029
        %v5414 = vadd.f32 %v3403, %v5030
        %v5415 = vadd.f32 %v2892, %v5031
        %v5416 = vadd.f32 %v2894, %v5032
        %v5417 = vadd.f32 %v3405, %v5033
        %v5418 = vadd.f32 %v3407, %v5034
        %v5419 = vadd.f32 %v2898, %v5035
        %v5420 = vadd.f32 %v2900, %v5036
        %v5421 = vadd.f32 %v3411, %v5037
        %v5422 = vadd.f32 %v3413, %v5038
        %v5423 = vadd.f32 %v2902, %v5039
        %v5424 = vadd.f32 %v2904, %v5040
        %v5425 = vadd.f32 %v3415, %v5041
        %v5426 = vadd.f32 %v3417, %v5042
        %v5427 = vadd.f32 %v2908, %v5043
        %v5428 = vadd.f32 %v2910, %v5044
        %v5429 = vadd.f32 %v3421, %v5045
        %v5430 = vadd.f32 %v3423, %v5046
        %v5431 = vadd.f32 %v2912, %v5047
        %v5432 = vadd.f32 %v2914, %v5048
        %v5433 = vadd.f32 %v3425, %v5049
        %v5434 = vadd.f32 %v3427, %v5050
        %v5435 = vadd.f32 %v2918, %v5051
        %v5436 = vadd.f32 %v2920, %v5052
        %v5437 = vadd.f32 %v3431, %v5053
        %v5438 = vadd.f32 %v3433, %v5054
        %v5439 = vadd.f32 %v2922, %v5055
        %v5440 = vadd.f32 %v2924, %v5056
        %v5441 = vadd.f32 %v3435, %v5057
        %v5442 = vadd.f32 %v3437, %v5058
        %v5443 = vadd.f32 %v2928, %v5059
        %v5444 = vadd.f32 %v2930, %v5060
        %v5445 = vadd.f32 %v3441, %v5061
        %v5446 = vadd.f32 %v3443, %v5062
        %v5447 = vadd.f32 %v2932, %v5063
        %v5448 = vadd.f32 %v2934, %v5064
        %v5449 = vadd.f32 %v3445, %v5065
        %v5450 = vadd.f32 %v3447, %v5066
        %v5451 = vadd.f32 %v2938, %v5067
        %v5452 = vadd.f32 %v2940, %v5068
        %v5453 = vadd.f32 %v3451, %v5069
        %v5454 = vadd.f32 %v3453, %v5070
        %v5455 = vadd.f32 %v2942, %v5071
        %v5456 = vadd.f32 %v2944, %v5072
        %v5457 = vadd.f32 %v3455, %v5073
        %v5458 = vadd.f32 %v3457, %v5074
        %v5459 = vadd.f32 %v2948, %v5075
        %v5460 = vadd.f32 %v2950, %v5076
        %v5461 = vadd.f32 %v3461, %v5077
        %v5462 = vadd.f32 %v3463, %v5078
        %v5463 = vadd.f32 %v2952, %v5079
        %v5464 = vadd.f32 %v2954, %v5080
        %v5465 = vadd.f32 %v3465, %v5081
        %v5466 = vadd.f32 %v3467, %v5082
        %v5467 = vadd.f32 %v2958, %v5083
        %v5468 = vadd.f32 %v2960, %v5084
        %v5469 = vadd.f32 %v3471, %v5085
        %v5470 = vadd.f32 %v3473, %v5086
        %v5471 = vadd.f32 %v2962, %v5087
        %v5472 = vadd.f32 %v2964, %v5088
        %v5473 = vadd.f32 %v3475, %v5089
        %v5474 = vadd.f32 %v3477, %v5090
        %v5475 = vadd.f32 %v2968, %v5091
        %v5476 = vadd.f32 %v2970, %v5092
        %v5477 = vadd.f32 %v3481, %v5093
        %v5478 = vadd.f32 %v3483, %v5094
        %v5479 = vadd.f32 %v2972, %v5095
        %v5480 = vadd.f32 %v2974, %v5096
        %v5481 = vadd.f32 %v3485, %v5097
        %v5482 = vadd.f32 %v3487, %v5098
        %v5483 = vadd.f32 %v2978, %v5099
        %v5484 = vadd.f32 %v2980, %v5100
        %v5485 = vadd.f32 %v3491, %v5101
        %v5486 = vadd.f32 %v3493, %v5102
        %v5487 = vadd.f32 %v2982, %v5103
        %v5488 = vadd.f32 %v2984, %v5104
        %v5489 = vadd.f32 %v3495, %v5105
        %v5490 = vadd.f32 %v3497, %v5106
        %v5491 = vadd.f32 %v2988, %v5107
        %v5492 = vadd.f32 %v2990, %v5108
        %v5493 = vadd.f32 %v3501, %v5109
        %v5494 = vadd.f32 %v3503, %v5110
        %v5495 = vadd.f32 %v2992, %v5111
        %v5496 = vadd.f32 %v2994, %v5112
        %v5497 = vadd.f32 %v3505, %v5113
        %v5498 = vadd.f32 %v3507, %v5114
        %v5499 = vadd.f32 %v2998, %v5115
        %v5500 = vadd.f32 %v3000, %v5116
        %v5501 = vadd.f32 %v3511, %v5117
        %v5502 = vadd.f32 %v3513, %v5118
        %v5503 = vadd.f32 %v3002, %v5119
        %v5504 = vadd.f32 %v3004, %v5120
        %v5505 = vadd.f32 %v3515, %v5121
        %v5506 = vadd.f32 %v3517, %v5122
        %v5507 = vadd.f32 %v3008, %v5123
        %v5508 = vadd.f32 %v3010, %v5124
        %v5509 = vadd.f32 %v3521, %v5125
        %v5510 = vadd.f32 %v3523, %v5126
        %v5511 = vadd.f32 %v3012, %v5127
        %v5512 = vadd.f32 %v3014, %v5128
        %v5513 = vadd.f32 %v3525, %v5129
        %v5514 = vadd.f32 %v3527, %v5130
        %v5515 = vadd.f32 %v3018, %v5131
        %v5516 = vadd.f32 %v3020, %v5132
        %v5517 = vadd.f32 %v3531, %v5133
        %v5518 = vadd.f32 %v3533, %v5134
        %v5519 = vadd.f32 %v3022, %v5135
        %v5520 = vadd.f32 %v3024, %v5136
        %v5521 = vadd.f32 %v3535, %v5137
        %v5522 = vadd.f32 %v3537, %v5138
        %v5523 = vadd.f32 %v3028, %v5139
        %v5524 = vadd.f32 %v3030, %v5140
        %v5525 = vadd.f32 %v3541, %v5141
        %v5526 = vadd.f32 %v3543, %v5142
        %v5527 = vadd.f32 %v3032, %v5143
        %v5528 = vadd.f32 %v3034, %v5144
        %v5529 = vadd.f32 %v3545, %v5145
        %v5530 = vadd.f32 %v3547, %v5146
        %v5531 = vadd.f32 %v3038, %v5147
        %v5532 = vadd.f32 %v3040, %v5148
        %v5533 = vadd.f32 %v3551, %v5149
        %v5534 = vadd.f32 %v3553, %v5150
        %v5535 = vadd.f32 %v3042, %v5151
        %v5536 = vadd.f32 %v3044, %v5152
        %v5537 = vadd.f32 %v3555, %v5153
        %v5538 = vadd.f32 %v3557, %v5154
        %v5539 = vadd.f32 %v3048, %v5155
        %v5540 = vadd.f32 %v3050, %v5156
        %v5541 = vadd.f32 %v3561, %v5157
        %v5542 = vadd.f32 %v3563, %v5158
        %v5543 = vadd.f32 %v3052, %v5159
        %v5544 = vadd.f32 %v3054, %v5160
        %v5545 = vadd.f32 %v3565, %v5161
        %v5546 = vadd.f32 %v3567, %v5162
        %v5547 = vadd.f32 %v3058, %v5163
        %v5548 = vadd.f32 %v3060, %v5164
        %v5549 = vadd.f32 %v3571, %v5165
        %v5550 = vadd.f32 %v3573, %v5166
        %v5551 = vadd.f32 %v3062, %v5167
        %v5552 = vadd.f32 %v3064, %v5168
        %v5553 = vadd.f32 %v3575, %v5169
        %v5554 = vadd.f32 %v3577, %v5170
        %v5555 = vadd.f32 %v3068, %v5171
        %v5556 = vadd.f32 %v3070, %v5172
        %v5557 = vadd.f32 %v3581, %v5173
        %v5558 = vadd.f32 %v3583, %v5174
        %v5559 = vadd.f32 %v3072, %v5175
        %v5560 = vadd.f32 %v3074, %v5176
        %v5561 = vadd.f32 %v3585, %v5177
        %v5562 = vadd.f32 %v3587, %v5178
        %v5563 = vadd.f32 %v3078, %v5179
        %v5564 = vadd.f32 %v3080, %v5180
        %v5565 = vadd.f32 %v3591, %v5181
        %v5566 = vadd.f32 %v3593, %v5182
        %v5567 = vadd.f32 %v3082, %v5183
        %v5568 = vadd.f32 %v3084, %v5184
        %v5569 = vadd.f32 %v3595, %v5185
        %v5570 = vadd.f32 %v3597, %v5186
        %v5571 = vadd.f32 %v3088, %v5187
        %v5572 = vadd.f32 %v3090, %v5188
        %v5573 = vadd.f32 %v3601, %v5189
        %v5574 = vadd.f32 %v3603, %v5190
        %v5575 = vadd.f32 %v3092, %v5191
        %v5576 = vadd.f32 %v3094, %v5192
        %v5577 = vadd.f32 %v3605, %v5193
        %v5578 = vadd.f32 %v3607, %v5194
        %v5579 = vadd.f32 %v3098, %v5195
        %v5580 = vadd.f32 %v3100, %v5196
        %v5581 = vadd.f32 %v3611, %v5197
        %v5582 = vadd.f32 %v3613, %v5198
        %v5583 = vadd.f32 %v3102, %v5199
        %v5584 = vadd.f32 %v3104, %v5200
        %v5585 = vadd.f32 %v3615, %v5201
        %v5586 = vadd.f32 %v3617, %v5202
        %v5587 = vadd.f32 %v3108, %v5203
        %v5588 = vadd.f32 %v3110, %v5204
        %v5589 = vadd.f32 %v3621, %v5205
        %v5590 = vadd.f32 %v3623, %v5206
        %v5591 = vadd.f32 %v3112, %v5207
        %v5592 = vadd.f32 %v3114, %v5208
        %v5593 = vadd.f32 %v3625, %v5209
        %v5594 = vadd.f32 %v3627, %v5210
        %v5595 = vadd.f32 %v3118, %v5211
        %v5596 = vadd.f32 %v3120, %v5212
        %v5597 = vadd.f32 %v3631, %v5213
        %v5598 = vadd.f32 %v3633, %v5214
        %v5599 = vadd.f32 %v3122, %v5215
        %v5600 = vadd.f32 %v3124, %v5216
        %v5601 = vadd.f32 %v3635, %v5217
        %v5602 = vadd.f32 %v3637, %v5218
        %v5603 = vadd.f32 %v3128, %v5219
        %v5604 = vadd.f32 %v3130, %v5220
        %v5605 = vadd.f32 %v3641, %v5221
        %v5606 = vadd.f32 %v3643, %v5222
        %v5607 = vadd.f32 %v3132, %v5223
        %v5608 = vadd.f32 %v3134, %v5224
        %v5609 = vadd.f32 %v3645, %v5225
        %v5610 = vadd.f32 %v3647, %v5226
        %v5611 = vadd.f32 %v3138, %v5227
        %v5612 = vadd.f32 %v3140, %v5228
        %v5613 = vadd.f32 %v3651, %v5229
        %v5614 = vadd.f32 %v3653, %v5230
        %v5615 = vadd.f32 %v3142, %v5231
        %v5616 = vadd.f32 %v3144, %v5232
        %v5617 = vadd.f32 %v3655, %v5233
        %v5618 = vadd.f32 %v3657, %v5234
        %v5619 = vadd.f32 %v3148, %v5235
        %v5620 = vadd.f32 %v3150, %v5236
        %v5621 = vadd.f32 %v3661, %v5237
        %v5622 = vadd.f32 %v3663, %v5238
        %v5623 = vadd.f32 %v3152, %v5239
        %v5624 = vadd.f32 %v3154, %v5240
        %v5625 = vadd.f32 %v3665, %v5241
        %v5626 = vadd.f32 %v3667, %v5242
        %v5627 = vadd.f32 %v3158, %v5243
        %v5628 = vadd.f32 %v3160, %v5244
        %v5629 = vadd.f32 %v3671, %v5245
        %v5630 = vadd.f32 %v3673, %v5246
        %v5631 = vadd.f32 %v3162, %v5247
        %v5632 = vadd.f32 %v3164, %v5248
        %v5633 = vadd.f32 %v3675, %v5249
        %v5634 = vadd.f32 %v3677, %v5250
        %v5635 = vadd.f32 %v3168, %v5251
        %v5636 = vadd.f32 %v3170, %v5252
        %v5637 = vadd.f32 %v3681, %v5253
        %v5638 = vadd.f32 %v3683, %v5254
        %v5639 = vadd.f32 %v3172, %v5255
        %v5640 = vadd.f32 %v3174, %v5256
        %v5641 = vadd.f32 %v3685, %v5257
        %v5642 = vadd.f32 %v3687, %v5258
        %v5643 = vadd.f32 %v3178, %v5259
        %v5644 = vadd.f32 %v3180, %v5260
        %v5645 = vadd.f32 %v3691, %v5261
        %v5646 = vadd.f32 %v3693, %v5262
        %v5647 = vadd.f32 %v3182, %v5263
        %v5648 = vadd.f32 %v3184, %v5264
        %v5649 = vadd.f32 %v3695, %v5265
        %v5650 = vadd.f32 %v3697, %v5266
        %v5651 = vadd.f32 %v3188, %v5267
        %v5652 = vadd.f32 %v3190, %v5268
        %v5653 = vadd.f32 %v3701, %v5269
        %v5654 = vadd.f32 %v3703, %v5270
        %v5655 = vadd.f32 %v3192, %v5271
        %v5656 = vadd.f32 %v3194, %v5272
        %v5657 = vadd.f32 %v3705, %v5273
        %v5658 = vadd.f32 %v3707, %v5274
        %v5659 = vadd.f32 %v3198, %v5275
        %v5660 = vadd.f32 %v3200, %v5276
        %v5661 = vadd.f32 %v3711, %v5277
        %v5662 = vadd.f32 %v3713, %v5278
        %v5663 = vadd.f32 %v3202, %v5279
        %v5664 = vadd.f32 %v3204, %v5280
        %v5665 = vadd.f32 %v3715, %v5281
        %v5666 = vadd.f32 %v3717, %v5282
        %v5667 = vadd.f32 %v3208, %v5283
        %v5668 = vadd.f32 %v3210, %v5284
        %v5669 = vadd.f32 %v3721, %v5285
        %v5670 = vadd.f32 %v3723, %v5286
        %v5671 = vadd.f32 %v3212, %v5287
        %v5672 = vadd.f32 %v3214, %v5288
        %v5673 = vadd.f32 %v3725, %v5289
        %v5674 = vadd.f32 %v3727, %v5290
        %v5675 = vadd.f32 %v3218, %v5291
        %v5676 = vadd.f32 %v3220, %v5292
        %v5677 = vadd.f32 %v3731, %v5293
        %v5678 = vadd.f32 %v3733, %v5294
        %v5679 = vadd.f32 %v3222, %v5295
        %v5680 = vadd.f32 %v3224, %v5296
        %v5681 = vadd.f32 %v3735, %v5297
        %v5682 = vadd.f32 %v3737, %v5298
        %v5683 = vadd.f32 %v3228, %v5299
        %v5684 = vadd.f32 %v3230, %v5300
        %v5685 = vadd.f32 %v3741, %v5301
        %v5686 = vadd.f32 %v3743, %v5302
        %v5687 = vadd.f32 %v3232, %v5303
        %v5688 = vadd.f32 %v3234, %v5304
        %v5689 = vadd.f32 %v3745, %v5305
        %v5690 = vadd.f32 %v3747, %v5306
        %v5691 = vadd.f32 %v3238, %v5307
        %v5692 = vadd.f32 %v3240, %v5308
        %v5693 = vadd.f32 %v3751, %v5309
        %v5694 = vadd.f32 %v3753, %v5310
        %v5695 = vadd.f32 %v3242, %v5311
        %v5696 = vadd.f32 %v3244, %v5312
        %v5697 = vadd.f32 %v3755, %v5313
        %v5698 = vadd.f32 %v3757, %v5314
        %v5699 = vadd.f32 %v3248, %v5315
        %v5700 = vadd.f32 %v3250, %v5316
        %v5701 = vadd.f32 %v3761, %v5317
        %v5702 = vadd.f32 %v3763, %v5318
        %v5703 = vadd.f32 %v3252, %v5319
        %v5704 = vadd.f32 %v3254, %v5320
        %v5705 = vadd.f32 %v3765, %v5321
        %v5706 = vadd.f32 %v3767, %v5322
        %v5707 = vadd.f32 %v3258, %v5323
        %v5708 = vadd.f32 %v3260, %v5324
        %v5709 = vadd.f32 %v3771, %v5325
        %v5710 = vadd.f32 %v3773, %v5326
        %v5711 = vadd.f32 %v3262, %v5327
        %v5712 = vadd.f32 %v3264, %v5328
        %v5713 = vadd.f32 %v3775, %v5329
        %v5714 = vadd.f32 %v3777, %v5330
        %v5715 = vadd.f32 %v3268, %v5331
        %v5716 = vadd.f32 %v3270, %v5332
        %v5717 = vadd.f32 %v3781, %v5333
        %v5718 = vadd.f32 %v3783, %v5334
        %v5719 = vadd.f32 %v3272, %v5335
        %v5720 = vadd.f32 %v3274, %v5336
        %v5721 = vadd.f32 %v3785, %v5337
        %v5722 = vadd.f32 %v3787, %v5338
        %v5723 = vadd.f32 %v3278, %v5339
        %v5724 = vadd.f32 %v3280, %v5340
        %v5725 = vadd.f32 %v3791, %v5341
        %v5726 = vadd.f32 %v3793, %v5342
        %v5727 = vadd.f32 %v3282, %v5343
        %v5728 = vadd.f32 %v3284, %v5344
        %v5729 = vadd.f32 %v3795, %v5345
        %v5730 = vadd.f32 %v3797, %v5346
        %v5731 = vadd.f32 %v3288, %v5347
        %v5732 = vadd.f32 %v3290, %v5348
        %v5733 = vadd.f32 %v3801, %v5349
        %v5734 = vadd.f32 %v3803, %v5350
        %v5735 = vadd.f32 %v3292, %v5351
        %v5736 = vadd.f32 %v3294, %v5352
        %v5737 = vadd.f32 %v3805, %v5353
        %v5738 = vadd.f32 %v3807, %v5354
        %v5739 = vadd.f32 %v3298, %v5355
        %v5740 = vadd.f32 %v3300, %v5356
        %v5741 = vadd.f32 %v3811, %v5357
        %v5742 = vadd.f32 %v3813, %v5358
        %v5743 = vadd.f32 %v3302, %v5359
        %v5744 = vadd.f32 %v3304, %v5360
        %v5745 = vadd.f32 %v3815, %v5361
        %v5746 = vadd.f32 %v3817, %v5362
        %v5747 = vadd.f32 %v3308, %v5363
        %v5748 = vadd.f32 %v3310, %v5364
        %v5749 = vadd.f32 %v3821, %v5365
        %v5750 = vadd.f32 %v3823, %v5366
        %v5751 = vadd.f32 %v3312, %v5367
        %v5752 = vadd.f32 %v3314, %v5368
        %v5753 = vadd.f32 %v3825, %v5369
        %v5754 = vadd.f32 %v3827, %v5370
        %v5755 = vadd.f32 %v3318, %v5371
        %v5756 = vadd.f32 %v3320, %v5372
        %v5757 = vadd.f32 %v3831, %v5373
        %v5758 = vadd.f32 %v3833, %v5374
        %v5759 = vadd.f32 %v3322, %v5375
        %v5760 = vadd.f32 %v3324, %v5376
        %v5761 = vadd.f32 %v3835, %v5377
        %v5762 = vadd.f32 %v3837, %v5378
        %v5763 = vadd.f32 %v3328, %v5379
        %v5764 = vadd.f32 %v3330, %v5380
        %v5765 = vadd.f32 %v3841, %v5381
        %v5766 = vadd.f32 %v3843, %v5382
        %v5767 = vadd.f32 %v3332, %v5383
        %v5768 = vadd.f32 %v3334, %v5384
        %v5769 = vadd.f32 %v3845, %v5385
        %v5770 = vadd.f32 %v3847, %v5386
        %v5771 = vadd.f32 %v3338, %v5387
        %v5772 = vadd.f32 %v3340, %v5388
        %v5773 = vadd.f32 %v3851, %v5389
        %v5774 = vadd.f32 %v3853, %v5390
        %v5775 = vadd.f32 %v3342, %v5391
        %v5776 = vadd.f32 %v3344, %v5392
        %v5777 = vadd.f32 %v3855, %v5393
        %v5778 = vadd.f32 %v3857, %v5394
        %v5779 = vmul.f32 %v5395, 0.7978846
        %v5780 = vmul.f32 %v5396, 0.7978846
        %v5781 = vmul.f32 %v5397, 0.7978846
        %v5782 = vmul.f32 %v5398, 0.7978846
        %v5783 = vmul.f32 %v5399, 0.7978846
        %v5784 = vmul.f32 %v5400, 0.7978846
        %v5785 = vmul.f32 %v5401, 0.7978846
        %v5786 = vmul.f32 %v5402, 0.7978846
        %v5787 = vmul.f32 %v5403, 0.7978846
        %v5788 = vmul.f32 %v5404, 0.7978846
        %v5789 = vmul.f32 %v5405, 0.7978846
        %v5790 = vmul.f32 %v5406, 0.7978846
        %v5791 = vmul.f32 %v5407, 0.7978846
        %v5792 = vmul.f32 %v5408, 0.7978846
        %v5793 = vmul.f32 %v5409, 0.7978846
        %v5794 = vmul.f32 %v5410, 0.7978846
        %v5795 = vmul.f32 %v5411, 0.7978846
        %v5796 = vmul.f32 %v5412, 0.7978846
        %v5797 = vmul.f32 %v5413, 0.7978846
        %v5798 = vmul.f32 %v5414, 0.7978846
        %v5799 = vmul.f32 %v5415, 0.7978846
        %v5800 = vmul.f32 %v5416, 0.7978846
        %v5801 = vmul.f32 %v5417, 0.7978846
        %v5802 = vmul.f32 %v5418, 0.7978846
        %v5803 = vmul.f32 %v5419, 0.7978846
        %v5804 = vmul.f32 %v5420, 0.7978846
        %v5805 = vmul.f32 %v5421, 0.7978846
        %v5806 = vmul.f32 %v5422, 0.7978846
        %v5807 = vmul.f32 %v5423, 0.7978846
        %v5808 = vmul.f32 %v5424, 0.7978846
        %v5809 = vmul.f32 %v5425, 0.7978846
        %v5810 = vmul.f32 %v5426, 0.7978846
        %v5811 = vmul.f32 %v5427, 0.7978846
        %v5812 = vmul.f32 %v5428, 0.7978846
        %v5813 = vmul.f32 %v5429, 0.7978846
        %v5814 = vmul.f32 %v5430, 0.7978846
        %v5815 = vmul.f32 %v5431, 0.7978846
        %v5816 = vmul.f32 %v5432, 0.7978846
        %v5817 = vmul.f32 %v5433, 0.7978846
        %v5818 = vmul.f32 %v5434, 0.7978846
        %v5819 = vmul.f32 %v5435, 0.7978846
        %v5820 = vmul.f32 %v5436, 0.7978846
        %v5821 = vmul.f32 %v5437, 0.7978846
        %v5822 = vmul.f32 %v5438, 0.7978846
        %v5823 = vmul.f32 %v5439, 0.7978846
        %v5824 = vmul.f32 %v5440, 0.7978846
        %v5825 = vmul.f32 %v5441, 0.7978846
        %v5826 = vmul.f32 %v5442, 0.7978846
        %v5827 = vmul.f32 %v5443, 0.7978846
        %v5828 = vmul.f32 %v5444, 0.7978846
        %v5829 = vmul.f32 %v5445, 0.7978846
        %v5830 = vmul.f32 %v5446, 0.7978846
        %v5831 = vmul.f32 %v5447, 0.7978846
        %v5832 = vmul.f32 %v5448, 0.7978846
        %v5833 = vmul.f32 %v5449, 0.7978846
        %v5834 = vmul.f32 %v5450, 0.7978846
        %v5835 = vmul.f32 %v5451, 0.7978846
        %v5836 = vmul.f32 %v5452, 0.7978846
        %v5837 = vmul.f32 %v5453, 0.7978846
        %v5838 = vmul.f32 %v5454, 0.7978846
        %v5839 = vmul.f32 %v5455, 0.7978846
        %v5840 = vmul.f32 %v5456, 0.7978846
        %v5841 = vmul.f32 %v5457, 0.7978846
        %v5842 = vmul.f32 %v5458, 0.7978846
        %v5843 = vmul.f32 %v5459, 0.7978846
        %v5844 = vmul.f32 %v5460, 0.7978846
        %v5845 = vmul.f32 %v5461, 0.7978846
        %v5846 = vmul.f32 %v5462, 0.7978846
        %v5847 = vmul.f32 %v5463, 0.7978846
        %v5848 = vmul.f32 %v5464, 0.7978846
        %v5849 = vmul.f32 %v5465, 0.7978846
        %v5850 = vmul.f32 %v5466, 0.7978846
        %v5851 = vmul.f32 %v5467, 0.7978846
        %v5852 = vmul.f32 %v5468, 0.7978846
        %v5853 = vmul.f32 %v5469, 0.7978846
        %v5854 = vmul.f32 %v5470, 0.7978846
        %v5855 = vmul.f32 %v5471, 0.7978846
        %v5856 = vmul.f32 %v5472, 0.7978846
        %v5857 = vmul.f32 %v5473, 0.7978846
        %v5858 = vmul.f32 %v5474, 0.7978846
        %v5859 = vmul.f32 %v5475, 0.7978846
        %v5860 = vmul.f32 %v5476, 0.7978846
        %v5861 = vmul.f32 %v5477, 0.7978846
        %v5862 = vmul.f32 %v5478, 0.7978846
        %v5863 = vmul.f32 %v5479, 0.7978846
        %v5864 = vmul.f32 %v5480, 0.7978846
        %v5865 = vmul.f32 %v5481, 0.7978846
        %v5866 = vmul.f32 %v5482, 0.7978846
        %v5867 = vmul.f32 %v5483, 0.7978846
        %v5868 = vmul.f32 %v5484, 0.7978846
        %v5869 = vmul.f32 %v5485, 0.7978846
        %v5870 = vmul.f32 %v5486, 0.7978846
        %v5871 = vmul.f32 %v5487, 0.7978846
        %v5872 = vmul.f32 %v5488, 0.7978846
        %v5873 = vmul.f32 %v5489, 0.7978846
        %v5874 = vmul.f32 %v5490, 0.7978846
        %v5875 = vmul.f32 %v5491, 0.7978846
        %v5876 = vmul.f32 %v5492, 0.7978846
        %v5877 = vmul.f32 %v5493, 0.7978846
        %v5878 = vmul.f32 %v5494, 0.7978846
        %v5879 = vmul.f32 %v5495, 0.7978846
        %v5880 = vmul.f32 %v5496, 0.7978846
        %v5881 = vmul.f32 %v5497, 0.7978846
        %v5882 = vmul.f32 %v5498, 0.7978846
        %v5883 = vmul.f32 %v5499, 0.7978846
        %v5884 = vmul.f32 %v5500, 0.7978846
        %v5885 = vmul.f32 %v5501, 0.7978846
        %v5886 = vmul.f32 %v5502, 0.7978846
        %v5887 = vmul.f32 %v5503, 0.7978846
        %v5888 = vmul.f32 %v5504, 0.7978846
        %v5889 = vmul.f32 %v5505, 0.7978846
        %v5890 = vmul.f32 %v5506, 0.7978846
        %v5891 = vmul.f32 %v5507, 0.7978846
        %v5892 = vmul.f32 %v5508, 0.7978846
        %v5893 = vmul.f32 %v5509, 0.7978846
        %v5894 = vmul.f32 %v5510, 0.7978846
        %v5895 = vmul.f32 %v5511, 0.7978846
        %v5896 = vmul.f32 %v5512, 0.7978846
        %v5897 = vmul.f32 %v5513, 0.7978846
        %v5898 = vmul.f32 %v5514, 0.7978846
        %v5899 = vmul.f32 %v5515, 0.7978846
        %v5900 = vmul.f32 %v5516, 0.7978846
        %v5901 = vmul.f32 %v5517, 0.7978846
        %v5902 = vmul.f32 %v5518, 0.7978846
        %v5903 = vmul.f32 %v5519, 0.7978846
        %v5904 = vmul.f32 %v5520, 0.7978846
        %v5905 = vmul.f32 %v5521, 0.7978846
        %v5906 = vmul.f32 %v5522, 0.7978846
        %v5907 = vmul.f32 %v5523, 0.7978846
        %v5908 = vmul.f32 %v5524, 0.7978846
        %v5909 = vmul.f32 %v5525, 0.7978846
        %v5910 = vmul.f32 %v5526, 0.7978846
        %v5911 = vmul.f32 %v5527, 0.7978846
        %v5912 = vmul.f32 %v5528, 0.7978846
        %v5913 = vmul.f32 %v5529, 0.7978846
        %v5914 = vmul.f32 %v5530, 0.7978846
        %v5915 = vmul.f32 %v5531, 0.7978846
        %v5916 = vmul.f32 %v5532, 0.7978846
        %v5917 = vmul.f32 %v5533, 0.7978846
        %v5918 = vmul.f32 %v5534, 0.7978846
        %v5919 = vmul.f32 %v5535, 0.7978846
        %v5920 = vmul.f32 %v5536, 0.7978846
        %v5921 = vmul.f32 %v5537, 0.7978846
        %v5922 = vmul.f32 %v5538, 0.7978846
        %v5923 = vmul.f32 %v5539, 0.7978846
        %v5924 = vmul.f32 %v5540, 0.7978846
        %v5925 = vmul.f32 %v5541, 0.7978846
        %v5926 = vmul.f32 %v5542, 0.7978846
        %v5927 = vmul.f32 %v5543, 0.7978846
        %v5928 = vmul.f32 %v5544, 0.7978846
        %v5929 = vmul.f32 %v5545, 0.7978846
        %v5930 = vmul.f32 %v5546, 0.7978846
        %v5931 = vmul.f32 %v5547, 0.7978846
        %v5932 = vmul.f32 %v5548, 0.7978846
        %v5933 = vmul.f32 %v5549, 0.7978846
        %v5934 = vmul.f32 %v5550, 0.7978846
        %v5935 = vmul.f32 %v5551, 0.7978846
        %v5936 = vmul.f32 %v5552, 0.7978846
        %v5937 = vmul.f32 %v5553, 0.7978846
        %v5938 = vmul.f32 %v5554, 0.7978846
        %v5939 = vmul.f32 %v5555, 0.7978846
        %v5940 = vmul.f32 %v5556, 0.7978846
        %v5941 = vmul.f32 %v5557, 0.7978846
        %v5942 = vmul.f32 %v5558, 0.7978846
        %v5943 = vmul.f32 %v5559, 0.7978846
        %v5944 = vmul.f32 %v5560, 0.7978846
        %v5945 = vmul.f32 %v5561, 0.7978846
        %v5946 = vmul.f32 %v5562, 0.7978846
        %v5947 = vmul.f32 %v5563, 0.7978846
        %v5948 = vmul.f32 %v5564, 0.7978846
        %v5949 = vmul.f32 %v5565, 0.7978846
        %v5950 = vmul.f32 %v5566, 0.7978846
        %v5951 = vmul.f32 %v5567, 0.7978846
        %v5952 = vmul.f32 %v5568, 0.7978846
        %v5953 = vmul.f32 %v5569, 0.7978846
        %v5954 = vmul.f32 %v5570, 0.7978846
        %v5955 = vmul.f32 %v5571, 0.7978846
        %v5956 = vmul.f32 %v5572, 0.7978846
        %v5957 = vmul.f32 %v5573, 0.7978846
        %v5958 = vmul.f32 %v5574, 0.7978846
        %v5959 = vmul.f32 %v5575, 0.7978846
        %v5960 = vmul.f32 %v5576, 0.7978846
        %v5961 = vmul.f32 %v5577, 0.7978846
        %v5962 = vmul.f32 %v5578, 0.7978846
        %v5963 = vmul.f32 %v5579, 0.7978846
        %v5964 = vmul.f32 %v5580, 0.7978846
        %v5965 = vmul.f32 %v5581, 0.7978846
        %v5966 = vmul.f32 %v5582, 0.7978846
        %v5967 = vmul.f32 %v5583, 0.7978846
        %v5968 = vmul.f32 %v5584, 0.7978846
        %v5969 = vmul.f32 %v5585, 0.7978846
        %v5970 = vmul.f32 %v5586, 0.7978846
        %v5971 = vmul.f32 %v5587, 0.7978846
        %v5972 = vmul.f32 %v5588, 0.7978846
        %v5973 = vmul.f32 %v5589, 0.7978846
        %v5974 = vmul.f32 %v5590, 0.7978846
        %v5975 = vmul.f32 %v5591, 0.7978846
        %v5976 = vmul.f32 %v5592, 0.7978846
        %v5977 = vmul.f32 %v5593, 0.7978846
        %v5978 = vmul.f32 %v5594, 0.7978846
        %v5979 = vmul.f32 %v5595, 0.7978846
        %v5980 = vmul.f32 %v5596, 0.7978846
        %v5981 = vmul.f32 %v5597, 0.7978846
        %v5982 = vmul.f32 %v5598, 0.7978846
        %v5983 = vmul.f32 %v5599, 0.7978846
        %v5984 = vmul.f32 %v5600, 0.7978846
        %v5985 = vmul.f32 %v5601, 0.7978846
        %v5986 = vmul.f32 %v5602, 0.7978846
        %v5987 = vmul.f32 %v5603, 0.7978846
        %v5988 = vmul.f32 %v5604, 0.7978846
        %v5989 = vmul.f32 %v5605, 0.7978846
        %v5990 = vmul.f32 %v5606, 0.7978846
        %v5991 = vmul.f32 %v5607, 0.7978846
        %v5992 = vmul.f32 %v5608, 0.7978846
        %v5993 = vmul.f32 %v5609, 0.7978846
        %v5994 = vmul.f32 %v5610, 0.7978846
        %v5995 = vmul.f32 %v5611, 0.7978846
        %v5996 = vmul.f32 %v5612, 0.7978846
        %v5997 = vmul.f32 %v5613, 0.7978846
        %v5998 = vmul.f32 %v5614, 0.7978846
        %v5999 = vmul.f32 %v5615, 0.7978846
        %v6000 = vmul.f32 %v5616, 0.7978846
        %v6001 = vmul.f32 %v5617, 0.7978846
        %v6002 = vmul.f32 %v5618, 0.7978846
        %v6003 = vmul.f32 %v5619, 0.7978846
        %v6004 = vmul.f32 %v5620, 0.7978846
        %v6005 = vmul.f32 %v5621, 0.7978846
        %v6006 = vmul.f32 %v5622, 0.7978846
        %v6007 = vmul.f32 %v5623, 0.7978846
        %v6008 = vmul.f32 %v5624, 0.7978846
        %v6009 = vmul.f32 %v5625, 0.7978846
        %v6010 = vmul.f32 %v5626, 0.7978846
        %v6011 = vmul.f32 %v5627, 0.7978846
        %v6012 = vmul.f32 %v5628, 0.7978846
        %v6013 = vmul.f32 %v5629, 0.7978846
        %v6014 = vmul.f32 %v5630, 0.7978846
        %v6015 = vmul.f32 %v5631, 0.7978846
        %v6016 = vmul.f32 %v5632, 0.7978846
        %v6017 = vmul.f32 %v5633, 0.7978846
        %v6018 = vmul.f32 %v5634, 0.7978846
        %v6019 = vmul.f32 %v5635, 0.7978846
        %v6020 = vmul.f32 %v5636, 0.7978846
        %v6021 = vmul.f32 %v5637, 0.7978846
        %v6022 = vmul.f32 %v5638, 0.7978846
        %v6023 = vmul.f32 %v5639, 0.7978846
        %v6024 = vmul.f32 %v5640, 0.7978846
        %v6025 = vmul.f32 %v5641, 0.7978846
        %v6026 = vmul.f32 %v5642, 0.7978846
        %v6027 = vmul.f32 %v5643, 0.7978846
        %v6028 = vmul.f32 %v5644, 0.7978846
        %v6029 = vmul.f32 %v5645, 0.7978846
        %v6030 = vmul.f32 %v5646, 0.7978846
        %v6031 = vmul.f32 %v5647, 0.7978846
        %v6032 = vmul.f32 %v5648, 0.7978846
        %v6033 = vmul.f32 %v5649, 0.7978846
        %v6034 = vmul.f32 %v5650, 0.7978846
        %v6035 = vmul.f32 %v5651, 0.7978846
        %v6036 = vmul.f32 %v5652, 0.7978846
        %v6037 = vmul.f32 %v5653, 0.7978846
        %v6038 = vmul.f32 %v5654, 0.7978846
        %v6039 = vmul.f32 %v5655, 0.7978846
        %v6040 = vmul.f32 %v5656, 0.7978846
        %v6041 = vmul.f32 %v5657, 0.7978846
        %v6042 = vmul.f32 %v5658, 0.7978846
        %v6043 = vmul.f32 %v5659, 0.7978846
        %v6044 = vmul.f32 %v5660, 0.7978846
        %v6045 = vmul.f32 %v5661, 0.7978846
        %v6046 = vmul.f32 %v5662, 0.7978846
        %v6047 = vmul.f32 %v5663, 0.7978846
        %v6048 = vmul.f32 %v5664, 0.7978846
        %v6049 = vmul.f32 %v5665, 0.7978846
        %v6050 = vmul.f32 %v5666, 0.7978846
        %v6051 = vmul.f32 %v5667, 0.7978846
        %v6052 = vmul.f32 %v5668, 0.7978846
        %v6053 = vmul.f32 %v5669, 0.7978846
        %v6054 = vmul.f32 %v5670, 0.7978846
        %v6055 = vmul.f32 %v5671, 0.7978846
        %v6056 = vmul.f32 %v5672, 0.7978846
        %v6057 = vmul.f32 %v5673, 0.7978846
        %v6058 = vmul.f32 %v5674, 0.7978846
        %v6059 = vmul.f32 %v5675, 0.7978846
        %v6060 = vmul.f32 %v5676, 0.7978846
        %v6061 = vmul.f32 %v5677, 0.7978846
        %v6062 = vmul.f32 %v5678, 0.7978846
        %v6063 = vmul.f32 %v5679, 0.7978846
        %v6064 = vmul.f32 %v5680, 0.7978846
        %v6065 = vmul.f32 %v5681, 0.7978846
        %v6066 = vmul.f32 %v5682, 0.7978846
        %v6067 = vmul.f32 %v5683, 0.7978846
        %v6068 = vmul.f32 %v5684, 0.7978846
        %v6069 = vmul.f32 %v5685, 0.7978846
        %v6070 = vmul.f32 %v5686, 0.7978846
        %v6071 = vmul.f32 %v5687, 0.7978846
        %v6072 = vmul.f32 %v5688, 0.7978846
        %v6073 = vmul.f32 %v5689, 0.7978846
        %v6074 = vmul.f32 %v5690, 0.7978846
        %v6075 = vmul.f32 %v5691, 0.7978846
        %v6076 = vmul.f32 %v5692, 0.7978846
        %v6077 = vmul.f32 %v5693, 0.7978846
        %v6078 = vmul.f32 %v5694, 0.7978846
        %v6079 = vmul.f32 %v5695, 0.7978846
        %v6080 = vmul.f32 %v5696, 0.7978846
        %v6081 = vmul.f32 %v5697, 0.7978846
        %v6082 = vmul.f32 %v5698, 0.7978846
        %v6083 = vmul.f32 %v5699, 0.7978846
        %v6084 = vmul.f32 %v5700, 0.7978846
        %v6085 = vmul.f32 %v5701, 0.7978846
        %v6086 = vmul.f32 %v5702, 0.7978846
        %v6087 = vmul.f32 %v5703, 0.7978846
        %v6088 = vmul.f32 %v5704, 0.7978846
        %v6089 = vmul.f32 %v5705, 0.7978846
        %v6090 = vmul.f32 %v5706, 0.7978846
        %v6091 = vmul.f32 %v5707, 0.7978846
        %v6092 = vmul.f32 %v5708, 0.7978846
        %v6093 = vmul.f32 %v5709, 0.7978846
        %v6094 = vmul.f32 %v5710, 0.7978846
        %v6095 = vmul.f32 %v5711, 0.7978846
        %v6096 = vmul.f32 %v5712, 0.7978846
        %v6097 = vmul.f32 %v5713, 0.7978846
        %v6098 = vmul.f32 %v5714, 0.7978846
        %v6099 = vmul.f32 %v5715, 0.7978846
        %v6100 = vmul.f32 %v5716, 0.7978846
        %v6101 = vmul.f32 %v5717, 0.7978846
        %v6102 = vmul.f32 %v5718, 0.7978846
        %v6103 = vmul.f32 %v5719, 0.7978846
        %v6104 = vmul.f32 %v5720, 0.7978846
        %v6105 = vmul.f32 %v5721, 0.7978846
        %v6106 = vmul.f32 %v5722, 0.7978846
        %v6107 = vmul.f32 %v5723, 0.7978846
        %v6108 = vmul.f32 %v5724, 0.7978846
        %v6109 = vmul.f32 %v5725, 0.7978846
        %v6110 = vmul.f32 %v5726, 0.7978846
        %v6111 = vmul.f32 %v5727, 0.7978846
        %v6112 = vmul.f32 %v5728, 0.7978846
        %v6113 = vmul.f32 %v5729, 0.7978846
        %v6114 = vmul.f32 %v5730, 0.7978846
        %v6115 = vmul.f32 %v5731, 0.7978846
        %v6116 = vmul.f32 %v5732, 0.7978846
        %v6117 = vmul.f32 %v5733, 0.7978846
        %v6118 = vmul.f32 %v5734, 0.7978846
        %v6119 = vmul.f32 %v5735, 0.7978846
        %v6120 = vmul.f32 %v5736, 0.7978846
        %v6121 = vmul.f32 %v5737, 0.7978846
        %v6122 = vmul.f32 %v5738, 0.7978846
        %v6123 = vmul.f32 %v5739, 0.7978846
        %v6124 = vmul.f32 %v5740, 0.7978846
        %v6125 = vmul.f32 %v5741, 0.7978846
        %v6126 = vmul.f32 %v5742, 0.7978846
        %v6127 = vmul.f32 %v5743, 0.7978846
        %v6128 = vmul.f32 %v5744, 0.7978846
        %v6129 = vmul.f32 %v5745, 0.7978846
        %v6130 = vmul.f32 %v5746, 0.7978846
        %v6131 = vmul.f32 %v5747, 0.7978846
        %v6132 = vmul.f32 %v5748, 0.7978846
        %v6133 = vmul.f32 %v5749, 0.7978846
        %v6134 = vmul.f32 %v5750, 0.7978846
        %v6135 = vmul.f32 %v5751, 0.7978846
        %v6136 = vmul.f32 %v5752, 0.7978846
        %v6137 = vmul.f32 %v5753, 0.7978846
        %v6138 = vmul.f32 %v5754, 0.7978846
        %v6139 = vmul.f32 %v5755, 0.7978846
        %v6140 = vmul.f32 %v5756, 0.7978846
        %v6141 = vmul.f32 %v5757, 0.7978846
        %v6142 = vmul.f32 %v5758, 0.7978846
        %v6143 = vmul.f32 %v5759, 0.7978846
        %v6144 = vmul.f32 %v5760, 0.7978846
        %v6145 = vmul.f32 %v5761, 0.7978846
        %v6146 = vmul.f32 %v5762, 0.7978846
        %v6147 = vmul.f32 %v5763, 0.7978846
        %v6148 = vmul.f32 %v5764, 0.7978846
        %v6149 = vmul.f32 %v5765, 0.7978846
        %v6150 = vmul.f32 %v5766, 0.7978846
        %v6151 = vmul.f32 %v5767, 0.7978846
        %v6152 = vmul.f32 %v5768, 0.7978846
        %v6153 = vmul.f32 %v5769, 0.7978846
        %v6154 = vmul.f32 %v5770, 0.7978846
        %v6155 = vmul.f32 %v5771, 0.7978846
        %v6156 = vmul.f32 %v5772, 0.7978846
        %v6157 = vmul.f32 %v5773, 0.7978846
        %v6158 = vmul.f32 %v5774, 0.7978846
        %v6159 = vmul.f32 %v5775, 0.7978846
        %v6160 = vmul.f32 %v5776, 0.7978846
        %v6161 = vmul.f32 %v5777, 0.7978846
        %v6162 = vmul.f32 %v5778, 0.7978846
        %v6163 = vtanh.pop %v5779
        %v6164 = vtanh.pop %v5780
        %v6165 = vtanh.pop %v5781
        %v6166 = vtanh.pop %v5782
        %v6167 = vtanh.pop %v5783
        %v6168 = vtanh.pop %v5784
        %v6169 = vtanh.pop %v5785
        %v6170 = vtanh.pop %v5786
        %v6171 = vtanh.pop %v5787
        %v6172 = vtanh.pop %v5788
        %v6173 = vtanh.pop %v5789
        %v6174 = vtanh.pop %v5790
        %v6175 = vtanh.pop %v5791
        %v6176 = vtanh.pop %v5792
        %v6177 = vtanh.pop %v5793
        %v6178 = vtanh.pop %v5794
        %v6179 = vtanh.pop %v5795
        %v6180 = vtanh.pop %v5796
        %v6181 = vtanh.pop %v5797
        %v6182 = vtanh.pop %v5798
        %v6183 = vtanh.pop %v5799
        %v6184 = vtanh.pop %v5800
        %v6185 = vtanh.pop %v5801
        %v6186 = vtanh.pop %v5802
        %v6187 = vtanh.pop %v5803
        %v6188 = vtanh.pop %v5804
        %v6189 = vtanh.pop %v5805
        %v6190 = vtanh.pop %v5806
        %v6191 = vtanh.pop %v5807
        %v6192 = vtanh.pop %v5808
        %v6193 = vtanh.pop %v5809
        %v6194 = vtanh.pop %v5810
        %v6195 = vtanh.pop %v5811
        %v6196 = vtanh.pop %v5812
        %v6197 = vtanh.pop %v5813
        %v6198 = vtanh.pop %v5814
        %v6199 = vtanh.pop %v5815
        %v6200 = vtanh.pop %v5816
        %v6201 = vtanh.pop %v5817
        %v6202 = vtanh.pop %v5818
        %v6203 = vtanh.pop %v5819
        %v6204 = vtanh.pop %v5820
        %v6205 = vtanh.pop %v5821
        %v6206 = vtanh.pop %v5822
        %v6207 = vtanh.pop %v5823
        %v6208 = vtanh.pop %v5824
        %v6209 = vtanh.pop %v5825
        %v6210 = vtanh.pop %v5826
        %v6211 = vtanh.pop %v5827
        %v6212 = vtanh.pop %v5828
        %v6213 = vtanh.pop %v5829
        %v6214 = vtanh.pop %v5830
        %v6215 = vtanh.pop %v5831
        %v6216 = vtanh.pop %v5832
        %v6217 = vtanh.pop %v5833
        %v6218 = vtanh.pop %v5834
        %v6219 = vtanh.pop %v5835
        %v6220 = vtanh.pop %v5836
        %v6221 = vtanh.pop %v5837
        %v6222 = vtanh.pop %v5838
        %v6223 = vtanh.pop %v5839
        %v6224 = vtanh.pop %v5840
        %v6225 = vtanh.pop %v5841
        %v6226 = vtanh.pop %v5842
        %v6227 = vtanh.pop %v5843
        %v6228 = vtanh.pop %v5844
        %v6229 = vtanh.pop %v5845
        %v6230 = vtanh.pop %v5846
        %v6231 = vtanh.pop %v5847
        %v6232 = vtanh.pop %v5848
        %v6233 = vtanh.pop %v5849
        %v6234 = vtanh.pop %v5850
        %v6235 = vtanh.pop %v5851
        %v6236 = vtanh.pop %v5852
        %v6237 = vtanh.pop %v5853
        %v6238 = vtanh.pop %v5854
        %v6239 = vtanh.pop %v5855
        %v6240 = vtanh.pop %v5856
        %v6241 = vtanh.pop %v5857
        %v6242 = vtanh.pop %v5858
        %v6243 = vtanh.pop %v5859
        %v6244 = vtanh.pop %v5860
        %v6245 = vtanh.pop %v5861
        %v6246 = vtanh.pop %v5862
        %v6247 = vtanh.pop %v5863
        %v6248 = vtanh.pop %v5864
        %v6249 = vtanh.pop %v5865
        %v6250 = vtanh.pop %v5866
        %v6251 = vtanh.pop %v5867
        %v6252 = vtanh.pop %v5868
        %v6253 = vtanh.pop %v5869
        %v6254 = vtanh.pop %v5870
        %v6255 = vtanh.pop %v5871
        %v6256 = vtanh.pop %v5872
        %v6257 = vtanh.pop %v5873
        %v6258 = vtanh.pop %v5874
        %v6259 = vtanh.pop %v5875
        %v6260 = vtanh.pop %v5876
        %v6261 = vtanh.pop %v5877
        %v6262 = vtanh.pop %v5878
        %v6263 = vtanh.pop %v5879
        %v6264 = vtanh.pop %v5880
        %v6265 = vtanh.pop %v5881
        %v6266 = vtanh.pop %v5882
        %v6267 = vtanh.pop %v5883
        %v6268 = vtanh.pop %v5884
        %v6269 = vtanh.pop %v5885
        %v6270 = vtanh.pop %v5886
        %v6271 = vtanh.pop %v5887
        %v6272 = vtanh.pop %v5888
        %v6273 = vtanh.pop %v5889
        %v6274 = vtanh.pop %v5890
        %v6275 = vtanh.pop %v5891
        %v6276 = vtanh.pop %v5892
        %v6277 = vtanh.pop %v5893
        %v6278 = vtanh.pop %v5894
        %v6279 = vtanh.pop %v5895
        %v6280 = vtanh.pop %v5896
        %v6281 = vtanh.pop %v5897
        %v6282 = vtanh.pop %v5898
        %v6283 = vtanh.pop %v5899
        %v6284 = vtanh.pop %v5900
        %v6285 = vtanh.pop %v5901
        %v6286 = vtanh.pop %v5902
        %v6287 = vtanh.pop %v5903
        %v6288 = vtanh.pop %v5904
        %v6289 = vtanh.pop %v5905
        %v6290 = vtanh.pop %v5906
        %v6291 = vtanh.pop %v5907
        %v6292 = vtanh.pop %v5908
        %v6293 = vtanh.pop %v5909
        %v6294 = vtanh.pop %v5910
        %v6295 = vtanh.pop %v5911
        %v6296 = vtanh.pop %v5912
        %v6297 = vtanh.pop %v5913
        %v6298 = vtanh.pop %v5914
        %v6299 = vtanh.pop %v5915
        %v6300 = vtanh.pop %v5916
        %v6301 = vtanh.pop %v5917
        %v6302 = vtanh.pop %v5918
        %v6303 = vtanh.pop %v5919
        %v6304 = vtanh.pop %v5920
        %v6305 = vtanh.pop %v5921
        %v6306 = vtanh.pop %v5922
        %v6307 = vtanh.pop %v5923
        %v6308 = vtanh.pop %v5924
        %v6309 = vtanh.pop %v5925
        %v6310 = vtanh.pop %v5926
        %v6311 = vtanh.pop %v5927
        %v6312 = vtanh.pop %v5928
        %v6313 = vtanh.pop %v5929
        %v6314 = vtanh.pop %v5930
        %v6315 = vtanh.pop %v5931
        %v6316 = vtanh.pop %v5932
        %v6317 = vtanh.pop %v5933
        %v6318 = vtanh.pop %v5934
        %v6319 = vtanh.pop %v5935
        %v6320 = vtanh.pop %v5936
        %v6321 = vtanh.pop %v5937
        %v6322 = vtanh.pop %v5938
        %v6323 = vtanh.pop %v5939
        %v6324 = vtanh.pop %v5940
        %v6325 = vtanh.pop %v5941
        %v6326 = vtanh.pop %v5942
        %v6327 = vtanh.pop %v5943
        %v6328 = vtanh.pop %v5944
        %v6329 = vtanh.pop %v5945
        %v6330 = vtanh.pop %v5946
        %v6331 = vtanh.pop %v5947
        %v6332 = vtanh.pop %v5948
        %v6333 = vtanh.pop %v5949
        %v6334 = vtanh.pop %v5950
        %v6335 = vtanh.pop %v5951
        %v6336 = vtanh.pop %v5952
        %v6337 = vtanh.pop %v5953
        %v6338 = vtanh.pop %v5954
        %v6339 = vtanh.pop %v5955
        %v6340 = vtanh.pop %v5956
        %v6341 = vtanh.pop %v5957
        %v6342 = vtanh.pop %v5958
        %v6343 = vtanh.pop %v5959
        %v6344 = vtanh.pop %v5960
        %v6345 = vtanh.pop %v5961
        %v6346 = vtanh.pop %v5962
        %v6347 = vtanh.pop %v5963
        %v6348 = vtanh.pop %v5964
        %v6349 = vtanh.pop %v5965
        %v6350 = vtanh.pop %v5966
        %v6351 = vtanh.pop %v5967
        %v6352 = vtanh.pop %v5968
        %v6353 = vtanh.pop %v5969
        %v6354 = vtanh.pop %v5970
        %v6355 = vtanh.pop %v5971
        %v6356 = vtanh.pop %v5972
        %v6357 = vtanh.pop %v5973
        %v6358 = vtanh.pop %v5974
        %v6359 = vtanh.pop %v5975
        %v6360 = vtanh.pop %v5976
        %v6361 = vtanh.pop %v5977
        %v6362 = vtanh.pop %v5978
        %v6363 = vtanh.pop %v5979
        %v6364 = vtanh.pop %v5980
        %v6365 = vtanh.pop %v5981
        %v6366 = vtanh.pop %v5982
        %v6367 = vtanh.pop %v5983
        %v6368 = vtanh.pop %v5984
        %v6369 = vtanh.pop %v5985
        %v6370 = vtanh.pop %v5986
        %v6371 = vtanh.pop %v5987
        %v6372 = vtanh.pop %v5988
        %v6373 = vtanh.pop %v5989
        %v6374 = vtanh.pop %v5990
        %v6375 = vtanh.pop %v5991
        %v6376 = vtanh.pop %v5992
        %v6377 = vtanh.pop %v5993
        %v6378 = vtanh.pop %v5994
        %v6379 = vtanh.pop %v5995
        %v6380 = vtanh.pop %v5996
        %v6381 = vtanh.pop %v5997
        %v6382 = vtanh.pop %v5998
        %v6383 = vtanh.pop %v5999
        %v6384 = vtanh.pop %v6000
        %v6385 = vtanh.pop %v6001
        %v6386 = vtanh.pop %v6002
        %v6387 = vtanh.pop %v6003
        %v6388 = vtanh.pop %v6004
        %v6389 = vtanh.pop %v6005
        %v6390 = vtanh.pop %v6006
        %v6391 = vtanh.pop %v6007
        %v6392 = vtanh.pop %v6008
        %v6393 = vtanh.pop %v6009
        %v6394 = vtanh.pop %v6010
        %v6395 = vtanh.pop %v6011
        %v6396 = vtanh.pop %v6012
        %v6397 = vtanh.pop %v6013
        %v6398 = vtanh.pop %v6014
        %v6399 = vtanh.pop %v6015
        %v6400 = vtanh.pop %v6016
        %v6401 = vtanh.pop %v6017
        %v6402 = vtanh.pop %v6018
        %v6403 = vtanh.pop %v6019
        %v6404 = vtanh.pop %v6020
        %v6405 = vtanh.pop %v6021
        %v6406 = vtanh.pop %v6022
        %v6407 = vtanh.pop %v6023
        %v6408 = vtanh.pop %v6024
        %v6409 = vtanh.pop %v6025
        %v6410 = vtanh.pop %v6026
        %v6411 = vtanh.pop %v6027
        %v6412 = vtanh.pop %v6028
        %v6413 = vtanh.pop %v6029
        %v6414 = vtanh.pop %v6030
        %v6415 = vtanh.pop %v6031
        %v6416 = vtanh.pop %v6032
        %v6417 = vtanh.pop %v6033
        %v6418 = vtanh.pop %v6034
        %v6419 = vtanh.pop %v6035
        %v6420 = vtanh.pop %v6036
        %v6421 = vtanh.pop %v6037
        %v6422 = vtanh.pop %v6038
        %v6423 = vtanh.pop %v6039
        %v6424 = vtanh.pop %v6040
        %v6425 = vtanh.pop %v6041
        %v6426 = vtanh.pop %v6042
        %v6427 = vtanh.pop %v6043
        %v6428 = vtanh.pop %v6044
        %v6429 = vtanh.pop %v6045
        %v6430 = vtanh.pop %v6046
        %v6431 = vtanh.pop %v6047
        %v6432 = vtanh.pop %v6048
        %v6433 = vtanh.pop %v6049
        %v6434 = vtanh.pop %v6050
        %v6435 = vtanh.pop %v6051
        %v6436 = vtanh.pop %v6052
        %v6437 = vtanh.pop %v6053
        %v6438 = vtanh.pop %v6054
        %v6439 = vtanh.pop %v6055
        %v6440 = vtanh.pop %v6056
        %v6441 = vtanh.pop %v6057
        %v6442 = vtanh.pop %v6058
        %v6443 = vtanh.pop %v6059
        %v6444 = vtanh.pop %v6060
        %v6445 = vtanh.pop %v6061
        %v6446 = vtanh.pop %v6062
        %v6447 = vtanh.pop %v6063
        %v6448 = vtanh.pop %v6064
        %v6449 = vtanh.pop %v6065
        %v6450 = vtanh.pop %v6066
        %v6451 = vtanh.pop %v6067
        %v6452 = vtanh.pop %v6068
        %v6453 = vtanh.pop %v6069
        %v6454 = vtanh.pop %v6070
        %v6455 = vtanh.pop %v6071
        %v6456 = vtanh.pop %v6072
        %v6457 = vtanh.pop %v6073
        %v6458 = vtanh.pop %v6074
        %v6459 = vtanh.pop %v6075
        %v6460 = vtanh.pop %v6076
        %v6461 = vtanh.pop %v6077
        %v6462 = vtanh.pop %v6078
        %v6463 = vtanh.pop %v6079
        %v6464 = vtanh.pop %v6080
        %v6465 = vtanh.pop %v6081
        %v6466 = vtanh.pop %v6082
        %v6467 = vtanh.pop %v6083
        %v6468 = vtanh.pop %v6084
        %v6469 = vtanh.pop %v6085
        %v6470 = vtanh.pop %v6086
        %v6471 = vtanh.pop %v6087
        %v6472 = vtanh.pop %v6088
        %v6473 = vtanh.pop %v6089
        %v6474 = vtanh.pop %v6090
        %v6475 = vtanh.pop %v6091
        %v6476 = vtanh.pop %v6092
        %v6477 = vtanh.pop %v6093
        %v6478 = vtanh.pop %v6094
        %v6479 = vtanh.pop %v6095
        %v6480 = vtanh.pop %v6096
        %v6481 = vtanh.pop %v6097
        %v6482 = vtanh.pop %v6098
        %v6483 = vtanh.pop %v6099
        %v6484 = vtanh.pop %v6100
        %v6485 = vtanh.pop %v6101
        %v6486 = vtanh.pop %v6102
        %v6487 = vtanh.pop %v6103
        %v6488 = vtanh.pop %v6104
        %v6489 = vtanh.pop %v6105
        %v6490 = vtanh.pop %v6106
        %v6491 = vtanh.pop %v6107
        %v6492 = vtanh.pop %v6108
        %v6493 = vtanh.pop %v6109
        %v6494 = vtanh.pop %v6110
        %v6495 = vtanh.pop %v6111
        %v6496 = vtanh.pop %v6112
        %v6497 = vtanh.pop %v6113
        %v6498 = vtanh.pop %v6114
        %v6499 = vtanh.pop %v6115
        %v6500 = vtanh.pop %v6116
        %v6501 = vtanh.pop %v6117
        %v6502 = vtanh.pop %v6118
        %v6503 = vtanh.pop %v6119
        %v6504 = vtanh.pop %v6120
        %v6505 = vtanh.pop %v6121
        %v6506 = vtanh.pop %v6122
        %v6507 = vtanh.pop %v6123
        %v6508 = vtanh.pop %v6124
        %v6509 = vtanh.pop %v6125
        %v6510 = vtanh.pop %v6126
        %v6511 = vtanh.pop %v6127
        %v6512 = vtanh.pop %v6128
        %v6513 = vtanh.pop %v6129
        %v6514 = vtanh.pop %v6130
        %v6515 = vtanh.pop %v6131
        %v6516 = vtanh.pop %v6132
        %v6517 = vtanh.pop %v6133
        %v6518 = vtanh.pop %v6134
        %v6519 = vtanh.pop %v6135
        %v6520 = vtanh.pop %v6136
        %v6521 = vtanh.pop %v6137
        %v6522 = vtanh.pop %v6138
        %v6523 = vtanh.pop %v6139
        %v6524 = vtanh.pop %v6140
        %v6525 = vtanh.pop %v6141
        %v6526 = vtanh.pop %v6142
        %v6527 = vtanh.pop %v6143
        %v6528 = vtanh.pop %v6144
        %v6529 = vtanh.pop %v6145
        %v6530 = vtanh.pop %v6146
        %v6531 = vtanh.pop %v6147
        %v6532 = vtanh.pop %v6148
        %v6533 = vtanh.pop %v6149
        %v6534 = vtanh.pop %v6150
        %v6535 = vtanh.pop %v6151
        %v6536 = vtanh.pop %v6152
        %v6537 = vtanh.pop %v6153
        %v6538 = vtanh.pop %v6154
        %v6539 = vtanh.pop %v6155
        %v6540 = vtanh.pop %v6156
        %v6541 = vtanh.pop %v6157
        %v6542 = vtanh.pop %v6158
        %v6543 = vtanh.pop %v6159
        %v6544 = vtanh.pop %v6160
        %v6545 = vtanh.pop %v6161
        %v6546 = vtanh.pop %v6162
        %v6547 = vadd.f32 %v6163, 1.0
        %v6548 = vadd.f32 %v6164, 1.0
        %v6549 = vadd.f32 %v6165, 1.0
        %v6550 = vadd.f32 %v6166, 1.0
        %v6551 = vadd.f32 %v6167, 1.0
        %v6552 = vadd.f32 %v6168, 1.0
        %v6553 = vadd.f32 %v6169, 1.0
        %v6554 = vadd.f32 %v6170, 1.0
        %v6555 = vadd.f32 %v6171, 1.0
        %v6556 = vadd.f32 %v6172, 1.0
        %v6557 = vadd.f32 %v6173, 1.0
        %v6558 = vadd.f32 %v6174, 1.0
        %v6559 = vadd.f32 %v6175, 1.0
        %v6560 = vadd.f32 %v6176, 1.0
        %v6561 = vadd.f32 %v6177, 1.0
        %v6562 = vadd.f32 %v6178, 1.0
        %v6563 = vadd.f32 %v6179, 1.0
        %v6564 = vadd.f32 %v6180, 1.0
        %v6565 = vadd.f32 %v6181, 1.0
        %v6566 = vadd.f32 %v6182, 1.0
        %v6567 = vadd.f32 %v6183, 1.0
        %v6568 = vadd.f32 %v6184, 1.0
        %v6569 = vadd.f32 %v6185, 1.0
        %v6570 = vadd.f32 %v6186, 1.0
        %v6571 = vadd.f32 %v6187, 1.0
        %v6572 = vadd.f32 %v6188, 1.0
        %v6573 = vadd.f32 %v6189, 1.0
        %v6574 = vadd.f32 %v6190, 1.0
        %v6575 = vadd.f32 %v6191, 1.0
        %v6576 = vadd.f32 %v6192, 1.0
        %v6577 = vadd.f32 %v6193, 1.0
        %v6578 = vadd.f32 %v6194, 1.0
        %v6579 = vadd.f32 %v6195, 1.0
        %v6580 = vadd.f32 %v6196, 1.0
        %v6581 = vadd.f32 %v6197, 1.0
        %v6582 = vadd.f32 %v6198, 1.0
        %v6583 = vadd.f32 %v6199, 1.0
        %v6584 = vadd.f32 %v6200, 1.0
        %v6585 = vadd.f32 %v6201, 1.0
        %v6586 = vadd.f32 %v6202, 1.0
        %v6587 = vadd.f32 %v6203, 1.0
        %v6588 = vadd.f32 %v6204, 1.0
        %v6589 = vadd.f32 %v6205, 1.0
        %v6590 = vadd.f32 %v6206, 1.0
        %v6591 = vadd.f32 %v6207, 1.0
        %v6592 = vadd.f32 %v6208, 1.0
        %v6593 = vadd.f32 %v6209, 1.0
        %v6594 = vadd.f32 %v6210, 1.0
        %v6595 = vadd.f32 %v6211, 1.0
        %v6596 = vadd.f32 %v6212, 1.0
        %v6597 = vadd.f32 %v6213, 1.0
        %v6598 = vadd.f32 %v6214, 1.0
        %v6599 = vadd.f32 %v6215, 1.0
        %v6600 = vadd.f32 %v6216, 1.0
        %v6601 = vadd.f32 %v6217, 1.0
        %v6602 = vadd.f32 %v6218, 1.0
        %v6603 = vadd.f32 %v6219, 1.0
        %v6604 = vadd.f32 %v6220, 1.0
        %v6605 = vadd.f32 %v6221, 1.0
        %v6606 = vadd.f32 %v6222, 1.0
        %v6607 = vadd.f32 %v6223, 1.0
        %v6608 = vadd.f32 %v6224, 1.0
        %v6609 = vadd.f32 %v6225, 1.0
        %v6610 = vadd.f32 %v6226, 1.0
        %v6611 = vadd.f32 %v6227, 1.0
        %v6612 = vadd.f32 %v6228, 1.0
        %v6613 = vadd.f32 %v6229, 1.0
        %v6614 = vadd.f32 %v6230, 1.0
        %v6615 = vadd.f32 %v6231, 1.0
        %v6616 = vadd.f32 %v6232, 1.0
        %v6617 = vadd.f32 %v6233, 1.0
        %v6618 = vadd.f32 %v6234, 1.0
        %v6619 = vadd.f32 %v6235, 1.0
        %v6620 = vadd.f32 %v6236, 1.0
        %v6621 = vadd.f32 %v6237, 1.0
        %v6622 = vadd.f32 %v6238, 1.0
        %v6623 = vadd.f32 %v6239, 1.0
        %v6624 = vadd.f32 %v6240, 1.0
        %v6625 = vadd.f32 %v6241, 1.0
        %v6626 = vadd.f32 %v6242, 1.0
        %v6627 = vadd.f32 %v6243, 1.0
        %v6628 = vadd.f32 %v6244, 1.0
        %v6629 = vadd.f32 %v6245, 1.0
        %v6630 = vadd.f32 %v6246, 1.0
        %v6631 = vadd.f32 %v6247, 1.0
        %v6632 = vadd.f32 %v6248, 1.0
        %v6633 = vadd.f32 %v6249, 1.0
        %v6634 = vadd.f32 %v6250, 1.0
        %v6635 = vadd.f32 %v6251, 1.0
        %v6636 = vadd.f32 %v6252, 1.0
        %v6637 = vadd.f32 %v6253, 1.0
        %v6638 = vadd.f32 %v6254, 1.0
        %v6639 = vadd.f32 %v6255, 1.0
        %v6640 = vadd.f32 %v6256, 1.0
        %v6641 = vadd.f32 %v6257, 1.0
        %v6642 = vadd.f32 %v6258, 1.0
        %v6643 = vadd.f32 %v6259, 1.0
        %v6644 = vadd.f32 %v6260, 1.0
        %v6645 = vadd.f32 %v6261, 1.0
        %v6646 = vadd.f32 %v6262, 1.0
        %v6647 = vadd.f32 %v6263, 1.0
        %v6648 = vadd.f32 %v6264, 1.0
        %v6649 = vadd.f32 %v6265, 1.0
        %v6650 = vadd.f32 %v6266, 1.0
        %v6651 = vadd.f32 %v6267, 1.0
        %v6652 = vadd.f32 %v6268, 1.0
        %v6653 = vadd.f32 %v6269, 1.0
        %v6654 = vadd.f32 %v6270, 1.0
        %v6655 = vadd.f32 %v6271, 1.0
        %v6656 = vadd.f32 %v6272, 1.0
        %v6657 = vadd.f32 %v6273, 1.0
        %v6658 = vadd.f32 %v6274, 1.0
        %v6659 = vadd.f32 %v6275, 1.0
        %v6660 = vadd.f32 %v6276, 1.0
        %v6661 = vadd.f32 %v6277, 1.0
        %v6662 = vadd.f32 %v6278, 1.0
        %v6663 = vadd.f32 %v6279, 1.0
        %v6664 = vadd.f32 %v6280, 1.0
        %v6665 = vadd.f32 %v6281, 1.0
        %v6666 = vadd.f32 %v6282, 1.0
        %v6667 = vadd.f32 %v6283, 1.0
        %v6668 = vadd.f32 %v6284, 1.0
        %v6669 = vadd.f32 %v6285, 1.0
        %v6670 = vadd.f32 %v6286, 1.0
        %v6671 = vadd.f32 %v6287, 1.0
        %v6672 = vadd.f32 %v6288, 1.0
        %v6673 = vadd.f32 %v6289, 1.0
        %v6674 = vadd.f32 %v6290, 1.0
        %v6675 = vadd.f32 %v6291, 1.0
        %v6676 = vadd.f32 %v6292, 1.0
        %v6677 = vadd.f32 %v6293, 1.0
        %v6678 = vadd.f32 %v6294, 1.0
        %v6679 = vadd.f32 %v6295, 1.0
        %v6680 = vadd.f32 %v6296, 1.0
        %v6681 = vadd.f32 %v6297, 1.0
        %v6682 = vadd.f32 %v6298, 1.0
        %v6683 = vadd.f32 %v6299, 1.0
        %v6684 = vadd.f32 %v6300, 1.0
        %v6685 = vadd.f32 %v6301, 1.0
        %v6686 = vadd.f32 %v6302, 1.0
        %v6687 = vadd.f32 %v6303, 1.0
        %v6688 = vadd.f32 %v6304, 1.0
        %v6689 = vadd.f32 %v6305, 1.0
        %v6690 = vadd.f32 %v6306, 1.0
        %v6691 = vadd.f32 %v6307, 1.0
        %v6692 = vadd.f32 %v6308, 1.0
        %v6693 = vadd.f32 %v6309, 1.0
        %v6694 = vadd.f32 %v6310, 1.0
        %v6695 = vadd.f32 %v6311, 1.0
        %v6696 = vadd.f32 %v6312, 1.0
        %v6697 = vadd.f32 %v6313, 1.0
        %v6698 = vadd.f32 %v6314, 1.0
        %v6699 = vadd.f32 %v6315, 1.0
        %v6700 = vadd.f32 %v6316, 1.0
        %v6701 = vadd.f32 %v6317, 1.0
        %v6702 = vadd.f32 %v6318, 1.0
        %v6703 = vadd.f32 %v6319, 1.0
        %v6704 = vadd.f32 %v6320, 1.0
        %v6705 = vadd.f32 %v6321, 1.0
        %v6706 = vadd.f32 %v6322, 1.0
        %v6707 = vadd.f32 %v6323, 1.0
        %v6708 = vadd.f32 %v6324, 1.0
        %v6709 = vadd.f32 %v6325, 1.0
        %v6710 = vadd.f32 %v6326, 1.0
        %v6711 = vadd.f32 %v6327, 1.0
        %v6712 = vadd.f32 %v6328, 1.0
        %v6713 = vadd.f32 %v6329, 1.0
        %v6714 = vadd.f32 %v6330, 1.0
        %v6715 = vadd.f32 %v6331, 1.0
        %v6716 = vadd.f32 %v6332, 1.0
        %v6717 = vadd.f32 %v6333, 1.0
        %v6718 = vadd.f32 %v6334, 1.0
        %v6719 = vadd.f32 %v6335, 1.0
        %v6720 = vadd.f32 %v6336, 1.0
        %v6721 = vadd.f32 %v6337, 1.0
        %v6722 = vadd.f32 %v6338, 1.0
        %v6723 = vadd.f32 %v6339, 1.0
        %v6724 = vadd.f32 %v6340, 1.0
        %v6725 = vadd.f32 %v6341, 1.0
        %v6726 = vadd.f32 %v6342, 1.0
        %v6727 = vadd.f32 %v6343, 1.0
        %v6728 = vadd.f32 %v6344, 1.0
        %v6729 = vadd.f32 %v6345, 1.0
        %v6730 = vadd.f32 %v6346, 1.0
        %v6731 = vadd.f32 %v6347, 1.0
        %v6732 = vadd.f32 %v6348, 1.0
        %v6733 = vadd.f32 %v6349, 1.0
        %v6734 = vadd.f32 %v6350, 1.0
        %v6735 = vadd.f32 %v6351, 1.0
        %v6736 = vadd.f32 %v6352, 1.0
        %v6737 = vadd.f32 %v6353, 1.0
        %v6738 = vadd.f32 %v6354, 1.0
        %v6739 = vadd.f32 %v6355, 1.0
        %v6740 = vadd.f32 %v6356, 1.0
        %v6741 = vadd.f32 %v6357, 1.0
        %v6742 = vadd.f32 %v6358, 1.0
        %v6743 = vadd.f32 %v6359, 1.0
        %v6744 = vadd.f32 %v6360, 1.0
        %v6745 = vadd.f32 %v6361, 1.0
        %v6746 = vadd.f32 %v6362, 1.0
        %v6747 = vadd.f32 %v6363, 1.0
        %v6748 = vadd.f32 %v6364, 1.0
        %v6749 = vadd.f32 %v6365, 1.0
        %v6750 = vadd.f32 %v6366, 1.0
        %v6751 = vadd.f32 %v6367, 1.0
        %v6752 = vadd.f32 %v6368, 1.0
        %v6753 = vadd.f32 %v6369, 1.0
        %v6754 = vadd.f32 %v6370, 1.0
        %v6755 = vadd.f32 %v6371, 1.0
        %v6756 = vadd.f32 %v6372, 1.0
        %v6757 = vadd.f32 %v6373, 1.0
        %v6758 = vadd.f32 %v6374, 1.0
        %v6759 = vadd.f32 %v6375, 1.0
        %v6760 = vadd.f32 %v6376, 1.0
        %v6761 = vadd.f32 %v6377, 1.0
        %v6762 = vadd.f32 %v6378, 1.0
        %v6763 = vadd.f32 %v6379, 1.0
        %v6764 = vadd.f32 %v6380, 1.0
        %v6765 = vadd.f32 %v6381, 1.0
        %v6766 = vadd.f32 %v6382, 1.0
        %v6767 = vadd.f32 %v6383, 1.0
        %v6768 = vadd.f32 %v6384, 1.0
        %v6769 = vadd.f32 %v6385, 1.0
        %v6770 = vadd.f32 %v6386, 1.0
        %v6771 = vadd.f32 %v6387, 1.0
        %v6772 = vadd.f32 %v6388, 1.0
        %v6773 = vadd.f32 %v6389, 1.0
        %v6774 = vadd.f32 %v6390, 1.0
        %v6775 = vadd.f32 %v6391, 1.0
        %v6776 = vadd.f32 %v6392, 1.0
        %v6777 = vadd.f32 %v6393, 1.0
        %v6778 = vadd.f32 %v6394, 1.0
        %v6779 = vadd.f32 %v6395, 1.0
        %v6780 = vadd.f32 %v6396, 1.0
        %v6781 = vadd.f32 %v6397, 1.0
        %v6782 = vadd.f32 %v6398, 1.0
        %v6783 = vadd.f32 %v6399, 1.0
        %v6784 = vadd.f32 %v6400, 1.0
        %v6785 = vadd.f32 %v6401, 1.0
        %v6786 = vadd.f32 %v6402, 1.0
        %v6787 = vadd.f32 %v6403, 1.0
        %v6788 = vadd.f32 %v6404, 1.0
        %v6789 = vadd.f32 %v6405, 1.0
        %v6790 = vadd.f32 %v6406, 1.0
        %v6791 = vadd.f32 %v6407, 1.0
        %v6792 = vadd.f32 %v6408, 1.0
        %v6793 = vadd.f32 %v6409, 1.0
        %v6794 = vadd.f32 %v6410, 1.0
        %v6795 = vadd.f32 %v6411, 1.0
        %v6796 = vadd.f32 %v6412, 1.0
        %v6797 = vadd.f32 %v6413, 1.0
        %v6798 = vadd.f32 %v6414, 1.0
        %v6799 = vadd.f32 %v6415, 1.0
        %v6800 = vadd.f32 %v6416, 1.0
        %v6801 = vadd.f32 %v6417, 1.0
        %v6802 = vadd.f32 %v6418, 1.0
        %v6803 = vadd.f32 %v6419, 1.0
        %v6804 = vadd.f32 %v6420, 1.0
        %v6805 = vadd.f32 %v6421, 1.0
        %v6806 = vadd.f32 %v6422, 1.0
        %v6807 = vadd.f32 %v6423, 1.0
        %v6808 = vadd.f32 %v6424, 1.0
        %v6809 = vadd.f32 %v6425, 1.0
        %v6810 = vadd.f32 %v6426, 1.0
        %v6811 = vadd.f32 %v6427, 1.0
        %v6812 = vadd.f32 %v6428, 1.0
        %v6813 = vadd.f32 %v6429, 1.0
        %v6814 = vadd.f32 %v6430, 1.0
        %v6815 = vadd.f32 %v6431, 1.0
        %v6816 = vadd.f32 %v6432, 1.0
        %v6817 = vadd.f32 %v6433, 1.0
        %v6818 = vadd.f32 %v6434, 1.0
        %v6819 = vadd.f32 %v6435, 1.0
        %v6820 = vadd.f32 %v6436, 1.0
        %v6821 = vadd.f32 %v6437, 1.0
        %v6822 = vadd.f32 %v6438, 1.0
        %v6823 = vadd.f32 %v6439, 1.0
        %v6824 = vadd.f32 %v6440, 1.0
        %v6825 = vadd.f32 %v6441, 1.0
        %v6826 = vadd.f32 %v6442, 1.0
        %v6827 = vadd.f32 %v6443, 1.0
        %v6828 = vadd.f32 %v6444, 1.0
        %v6829 = vadd.f32 %v6445, 1.0
        %v6830 = vadd.f32 %v6446, 1.0
        %v6831 = vadd.f32 %v6447, 1.0
        %v6832 = vadd.f32 %v6448, 1.0
        %v6833 = vadd.f32 %v6449, 1.0
        %v6834 = vadd.f32 %v6450, 1.0
        %v6835 = vadd.f32 %v6451, 1.0
        %v6836 = vadd.f32 %v6452, 1.0
        %v6837 = vadd.f32 %v6453, 1.0
        %v6838 = vadd.f32 %v6454, 1.0
        %v6839 = vadd.f32 %v6455, 1.0
        %v6840 = vadd.f32 %v6456, 1.0
        %v6841 = vadd.f32 %v6457, 1.0
        %v6842 = vadd.f32 %v6458, 1.0
        %v6843 = vadd.f32 %v6459, 1.0
        %v6844 = vadd.f32 %v6460, 1.0
        %v6845 = vadd.f32 %v6461, 1.0
        %v6846 = vadd.f32 %v6462, 1.0
        %v6847 = vadd.f32 %v6463, 1.0
        %v6848 = vadd.f32 %v6464, 1.0
        %v6849 = vadd.f32 %v6465, 1.0
        %v6850 = vadd.f32 %v6466, 1.0
        %v6851 = vadd.f32 %v6467, 1.0
        %v6852 = vadd.f32 %v6468, 1.0
        %v6853 = vadd.f32 %v6469, 1.0
        %v6854 = vadd.f32 %v6470, 1.0
        %v6855 = vadd.f32 %v6471, 1.0
        %v6856 = vadd.f32 %v6472, 1.0
        %v6857 = vadd.f32 %v6473, 1.0
        %v6858 = vadd.f32 %v6474, 1.0
        %v6859 = vadd.f32 %v6475, 1.0
        %v6860 = vadd.f32 %v6476, 1.0
        %v6861 = vadd.f32 %v6477, 1.0
        %v6862 = vadd.f32 %v6478, 1.0
        %v6863 = vadd.f32 %v6479, 1.0
        %v6864 = vadd.f32 %v6480, 1.0
        %v6865 = vadd.f32 %v6481, 1.0
        %v6866 = vadd.f32 %v6482, 1.0
        %v6867 = vadd.f32 %v6483, 1.0
        %v6868 = vadd.f32 %v6484, 1.0
        %v6869 = vadd.f32 %v6485, 1.0
        %v6870 = vadd.f32 %v6486, 1.0
        %v6871 = vadd.f32 %v6487, 1.0
        %v6872 = vadd.f32 %v6488, 1.0
        %v6873 = vadd.f32 %v6489, 1.0
        %v6874 = vadd.f32 %v6490, 1.0
        %v6875 = vadd.f32 %v6491, 1.0
        %v6876 = vadd.f32 %v6492, 1.0
        %v6877 = vadd.f32 %v6493, 1.0
        %v6878 = vadd.f32 %v6494, 1.0
        %v6879 = vadd.f32 %v6495, 1.0
        %v6880 = vadd.f32 %v6496, 1.0
        %v6881 = vadd.f32 %v6497, 1.0
        %v6882 = vadd.f32 %v6498, 1.0
        %v6883 = vadd.f32 %v6499, 1.0
        %v6884 = vadd.f32 %v6500, 1.0
        %v6885 = vadd.f32 %v6501, 1.0
        %v6886 = vadd.f32 %v6502, 1.0
        %v6887 = vadd.f32 %v6503, 1.0
        %v6888 = vadd.f32 %v6504, 1.0
        %v6889 = vadd.f32 %v6505, 1.0
        %v6890 = vadd.f32 %v6506, 1.0
        %v6891 = vadd.f32 %v6507, 1.0
        %v6892 = vadd.f32 %v6508, 1.0
        %v6893 = vadd.f32 %v6509, 1.0
        %v6894 = vadd.f32 %v6510, 1.0
        %v6895 = vadd.f32 %v6511, 1.0
        %v6896 = vadd.f32 %v6512, 1.0
        %v6897 = vadd.f32 %v6513, 1.0
        %v6898 = vadd.f32 %v6514, 1.0
        %v6899 = vadd.f32 %v6515, 1.0
        %v6900 = vadd.f32 %v6516, 1.0
        %v6901 = vadd.f32 %v6517, 1.0
        %v6902 = vadd.f32 %v6518, 1.0
        %v6903 = vadd.f32 %v6519, 1.0
        %v6904 = vadd.f32 %v6520, 1.0
        %v6905 = vadd.f32 %v6521, 1.0
        %v6906 = vadd.f32 %v6522, 1.0
        %v6907 = vadd.f32 %v6523, 1.0
        %v6908 = vadd.f32 %v6524, 1.0
        %v6909 = vadd.f32 %v6525, 1.0
        %v6910 = vadd.f32 %v6526, 1.0
        %v6911 = vadd.f32 %v6527, 1.0
        %v6912 = vadd.f32 %v6528, 1.0
        %v6913 = vadd.f32 %v6529, 1.0
        %v6914 = vadd.f32 %v6530, 1.0
        %v6915 = vadd.f32 %v6531, 1.0
        %v6916 = vadd.f32 %v6532, 1.0
        %v6917 = vadd.f32 %v6533, 1.0
        %v6918 = vadd.f32 %v6534, 1.0
        %v6919 = vadd.f32 %v6535, 1.0
        %v6920 = vadd.f32 %v6536, 1.0
        %v6921 = vadd.f32 %v6537, 1.0
        %v6922 = vadd.f32 %v6538, 1.0
        %v6923 = vadd.f32 %v6539, 1.0
        %v6924 = vadd.f32 %v6540, 1.0
        %v6925 = vadd.f32 %v6541, 1.0
        %v6926 = vadd.f32 %v6542, 1.0
        %v6927 = vadd.f32 %v6543, 1.0
        %v6928 = vadd.f32 %v6544, 1.0
        %v6929 = vadd.f32 %v6545, 1.0
        %v6930 = vadd.f32 %v6546, 1.0
        %v6931 = vmul.f32 %v3859, %v6547
        %v6932 = vmul.f32 %v3860, %v6548
        %v6933 = vmul.f32 %v3861, %v6549
        %v6934 = vmul.f32 %v3862, %v6550
        %v6935 = vmul.f32 %v3863, %v6551
        %v6936 = vmul.f32 %v3864, %v6552
        %v6937 = vmul.f32 %v3865, %v6553
        %v6938 = vmul.f32 %v3866, %v6554
        %v6939 = vmul.f32 %v3867, %v6555
        %v6940 = vmul.f32 %v3868, %v6556
        %v6941 = vmul.f32 %v3869, %v6557
        %v6942 = vmul.f32 %v3870, %v6558
        %v6943 = vmul.f32 %v3871, %v6559
        %v6944 = vmul.f32 %v3872, %v6560
        %v6945 = vmul.f32 %v3873, %v6561
        %v6946 = vmul.f32 %v3874, %v6562
        %v6947 = vmul.f32 %v3875, %v6563
        %v6948 = vmul.f32 %v3876, %v6564
        %v6949 = vmul.f32 %v3877, %v6565
        %v6950 = vmul.f32 %v3878, %v6566
        %v6951 = vmul.f32 %v3879, %v6567
        %v6952 = vmul.f32 %v3880, %v6568
        %v6953 = vmul.f32 %v3881, %v6569
        %v6954 = vmul.f32 %v3882, %v6570
        %v6955 = vmul.f32 %v3883, %v6571
        %v6956 = vmul.f32 %v3884, %v6572
        %v6957 = vmul.f32 %v3885, %v6573
        %v6958 = vmul.f32 %v3886, %v6574
        %v6959 = vmul.f32 %v3887, %v6575
        %v6960 = vmul.f32 %v3888, %v6576
        %v6961 = vmul.f32 %v3889, %v6577
        %v6962 = vmul.f32 %v3890, %v6578
        %v6963 = vmul.f32 %v3891, %v6579
        %v6964 = vmul.f32 %v3892, %v6580
        %v6965 = vmul.f32 %v3893, %v6581
        %v6966 = vmul.f32 %v3894, %v6582
        %v6967 = vmul.f32 %v3895, %v6583
        %v6968 = vmul.f32 %v3896, %v6584
        %v6969 = vmul.f32 %v3897, %v6585
        %v6970 = vmul.f32 %v3898, %v6586
        %v6971 = vmul.f32 %v3899, %v6587
        %v6972 = vmul.f32 %v3900, %v6588
        %v6973 = vmul.f32 %v3901, %v6589
        %v6974 = vmul.f32 %v3902, %v6590
        %v6975 = vmul.f32 %v3903, %v6591
        %v6976 = vmul.f32 %v3904, %v6592
        %v6977 = vmul.f32 %v3905, %v6593
        %v6978 = vmul.f32 %v3906, %v6594
        %v6979 = vmul.f32 %v3907, %v6595
        %v6980 = vmul.f32 %v3908, %v6596
        %v6981 = vmul.f32 %v3909, %v6597
        %v6982 = vmul.f32 %v3910, %v6598
        %v6983 = vmul.f32 %v3911, %v6599
        %v6984 = vmul.f32 %v3912, %v6600
        %v6985 = vmul.f32 %v3913, %v6601
        %v6986 = vmul.f32 %v3914, %v6602
        %v6987 = vmul.f32 %v3915, %v6603
        %v6988 = vmul.f32 %v3916, %v6604
        %v6989 = vmul.f32 %v3917, %v6605
        %v6990 = vmul.f32 %v3918, %v6606
        %v6991 = vmul.f32 %v3919, %v6607
        %v6992 = vmul.f32 %v3920, %v6608
        %v6993 = vmul.f32 %v3921, %v6609
        %v6994 = vmul.f32 %v3922, %v6610
        %v6995 = vmul.f32 %v3923, %v6611
        %v6996 = vmul.f32 %v3924, %v6612
        %v6997 = vmul.f32 %v3925, %v6613
        %v6998 = vmul.f32 %v3926, %v6614
        %v6999 = vmul.f32 %v3927, %v6615
        %v7000 = vmul.f32 %v3928, %v6616
        %v7001 = vmul.f32 %v3929, %v6617
        %v7002 = vmul.f32 %v3930, %v6618
        %v7003 = vmul.f32 %v3931, %v6619
        %v7004 = vmul.f32 %v3932, %v6620
        %v7005 = vmul.f32 %v3933, %v6621
        %v7006 = vmul.f32 %v3934, %v6622
        %v7007 = vmul.f32 %v3935, %v6623
        %v7008 = vmul.f32 %v3936, %v6624
        %v7009 = vmul.f32 %v3937, %v6625
        %v7010 = vmul.f32 %v3938, %v6626
        %v7011 = vmul.f32 %v3939, %v6627
        %v7012 = vmul.f32 %v3940, %v6628
        %v7013 = vmul.f32 %v3941, %v6629
        %v7014 = vmul.f32 %v3942, %v6630
        %v7015 = vmul.f32 %v3943, %v6631
        %v7016 = vmul.f32 %v3944, %v6632
        %v7017 = vmul.f32 %v3945, %v6633
        %v7018 = vmul.f32 %v3946, %v6634
        %v7019 = vmul.f32 %v3947, %v6635
        %v7020 = vmul.f32 %v3948, %v6636
        %v7021 = vmul.f32 %v3949, %v6637
        %v7022 = vmul.f32 %v3950, %v6638
        %v7023 = vmul.f32 %v3951, %v6639
        %v7024 = vmul.f32 %v3952, %v6640
        %v7025 = vmul.f32 %v3953, %v6641
        %v7026 = vmul.f32 %v3954, %v6642
        %v7027 = vmul.f32 %v3955, %v6643
        %v7028 = vmul.f32 %v3956, %v6644
        %v7029 = vmul.f32 %v3957, %v6645
        %v7030 = vmul.f32 %v3958, %v6646
        %v7031 = vmul.f32 %v3959, %v6647
        %v7032 = vmul.f32 %v3960, %v6648
        %v7033 = vmul.f32 %v3961, %v6649
        %v7034 = vmul.f32 %v3962, %v6650
        %v7035 = vmul.f32 %v3963, %v6651
        %v7036 = vmul.f32 %v3964, %v6652
        %v7037 = vmul.f32 %v3965, %v6653
        %v7038 = vmul.f32 %v3966, %v6654
        %v7039 = vmul.f32 %v3967, %v6655
        %v7040 = vmul.f32 %v3968, %v6656
        %v7041 = vmul.f32 %v3969, %v6657
        %v7042 = vmul.f32 %v3970, %v6658
        %v7043 = vmul.f32 %v3971, %v6659
        %v7044 = vmul.f32 %v3972, %v6660
        %v7045 = vmul.f32 %v3973, %v6661
        %v7046 = vmul.f32 %v3974, %v6662
        %v7047 = vmul.f32 %v3975, %v6663
        %v7048 = vmul.f32 %v3976, %v6664
        %v7049 = vmul.f32 %v3977, %v6665
        %v7050 = vmul.f32 %v3978, %v6666
        %v7051 = vmul.f32 %v3979, %v6667
        %v7052 = vmul.f32 %v3980, %v6668
        %v7053 = vmul.f32 %v3981, %v6669
        %v7054 = vmul.f32 %v3982, %v6670
        %v7055 = vmul.f32 %v3983, %v6671
        %v7056 = vmul.f32 %v3984, %v6672
        %v7057 = vmul.f32 %v3985, %v6673
        %v7058 = vmul.f32 %v3986, %v6674
        %v7059 = vmul.f32 %v3987, %v6675
        %v7060 = vmul.f32 %v3988, %v6676
        %v7061 = vmul.f32 %v3989, %v6677
        %v7062 = vmul.f32 %v3990, %v6678
        %v7063 = vmul.f32 %v3991, %v6679
        %v7064 = vmul.f32 %v3992, %v6680
        %v7065 = vmul.f32 %v3993, %v6681
        %v7066 = vmul.f32 %v3994, %v6682
        %v7067 = vmul.f32 %v3995, %v6683
        %v7068 = vmul.f32 %v3996, %v6684
        %v7069 = vmul.f32 %v3997, %v6685
        %v7070 = vmul.f32 %v3998, %v6686
        %v7071 = vmul.f32 %v3999, %v6687
        %v7072 = vmul.f32 %v4000, %v6688
        %v7073 = vmul.f32 %v4001, %v6689
        %v7074 = vmul.f32 %v4002, %v6690
        %v7075 = vmul.f32 %v4003, %v6691
        %v7076 = vmul.f32 %v4004, %v6692
        %v7077 = vmul.f32 %v4005, %v6693
        %v7078 = vmul.f32 %v4006, %v6694
        %v7079 = vmul.f32 %v4007, %v6695
        %v7080 = vmul.f32 %v4008, %v6696
        %v7081 = vmul.f32 %v4009, %v6697
        %v7082 = vmul.f32 %v4010, %v6698
        %v7083 = vmul.f32 %v4011, %v6699
        %v7084 = vmul.f32 %v4012, %v6700
        %v7085 = vmul.f32 %v4013, %v6701
        %v7086 = vmul.f32 %v4014, %v6702
        %v7087 = vmul.f32 %v4015, %v6703
        %v7088 = vmul.f32 %v4016, %v6704
        %v7089 = vmul.f32 %v4017, %v6705
        %v7090 = vmul.f32 %v4018, %v6706
        %v7091 = vmul.f32 %v4019, %v6707
        %v7092 = vmul.f32 %v4020, %v6708
        %v7093 = vmul.f32 %v4021, %v6709
        %v7094 = vmul.f32 %v4022, %v6710
        %v7095 = vmul.f32 %v4023, %v6711
        %v7096 = vmul.f32 %v4024, %v6712
        %v7097 = vmul.f32 %v4025, %v6713
        %v7098 = vmul.f32 %v4026, %v6714
        %v7099 = vmul.f32 %v4027, %v6715
        %v7100 = vmul.f32 %v4028, %v6716
        %v7101 = vmul.f32 %v4029, %v6717
        %v7102 = vmul.f32 %v4030, %v6718
        %v7103 = vmul.f32 %v4031, %v6719
        %v7104 = vmul.f32 %v4032, %v6720
        %v7105 = vmul.f32 %v4033, %v6721
        %v7106 = vmul.f32 %v4034, %v6722
        %v7107 = vmul.f32 %v4035, %v6723
        %v7108 = vmul.f32 %v4036, %v6724
        %v7109 = vmul.f32 %v4037, %v6725
        %v7110 = vmul.f32 %v4038, %v6726
        %v7111 = vmul.f32 %v4039, %v6727
        %v7112 = vmul.f32 %v4040, %v6728
        %v7113 = vmul.f32 %v4041, %v6729
        %v7114 = vmul.f32 %v4042, %v6730
        %v7115 = vmul.f32 %v4043, %v6731
        %v7116 = vmul.f32 %v4044, %v6732
        %v7117 = vmul.f32 %v4045, %v6733
        %v7118 = vmul.f32 %v4046, %v6734
        %v7119 = vmul.f32 %v4047, %v6735
        %v7120 = vmul.f32 %v4048, %v6736
        %v7121 = vmul.f32 %v4049, %v6737
        %v7122 = vmul.f32 %v4050, %v6738
        %v7123 = vmul.f32 %v4051, %v6739
        %v7124 = vmul.f32 %v4052, %v6740
        %v7125 = vmul.f32 %v4053, %v6741
        %v7126 = vmul.f32 %v4054, %v6742
        %v7127 = vmul.f32 %v4055, %v6743
        %v7128 = vmul.f32 %v4056, %v6744
        %v7129 = vmul.f32 %v4057, %v6745
        %v7130 = vmul.f32 %v4058, %v6746
        %v7131 = vmul.f32 %v4059, %v6747
        %v7132 = vmul.f32 %v4060, %v6748
        %v7133 = vmul.f32 %v4061, %v6749
        %v7134 = vmul.f32 %v4062, %v6750
        %v7135 = vmul.f32 %v4063, %v6751
        %v7136 = vmul.f32 %v4064, %v6752
        %v7137 = vmul.f32 %v4065, %v6753
        %v7138 = vmul.f32 %v4066, %v6754
        %v7139 = vmul.f32 %v4067, %v6755
        %v7140 = vmul.f32 %v4068, %v6756
        %v7141 = vmul.f32 %v4069, %v6757
        %v7142 = vmul.f32 %v4070, %v6758
        %v7143 = vmul.f32 %v4071, %v6759
        %v7144 = vmul.f32 %v4072, %v6760
        %v7145 = vmul.f32 %v4073, %v6761
        %v7146 = vmul.f32 %v4074, %v6762
        %v7147 = vmul.f32 %v4075, %v6763
        %v7148 = vmul.f32 %v4076, %v6764
        %v7149 = vmul.f32 %v4077, %v6765
        %v7150 = vmul.f32 %v4078, %v6766
        %v7151 = vmul.f32 %v4079, %v6767
        %v7152 = vmul.f32 %v4080, %v6768
        %v7153 = vmul.f32 %v4081, %v6769
        %v7154 = vmul.f32 %v4082, %v6770
        %v7155 = vmul.f32 %v4083, %v6771
        %v7156 = vmul.f32 %v4084, %v6772
        %v7157 = vmul.f32 %v4085, %v6773
        %v7158 = vmul.f32 %v4086, %v6774
        %v7159 = vmul.f32 %v4087, %v6775
        %v7160 = vmul.f32 %v4088, %v6776
        %v7161 = vmul.f32 %v4089, %v6777
        %v7162 = vmul.f32 %v4090, %v6778
        %v7163 = vmul.f32 %v4091, %v6779
        %v7164 = vmul.f32 %v4092, %v6780
        %v7165 = vmul.f32 %v4093, %v6781
        %v7166 = vmul.f32 %v4094, %v6782
        %v7167 = vmul.f32 %v4095, %v6783
        %v7168 = vmul.f32 %v4096, %v6784
        %v7169 = vmul.f32 %v4097, %v6785
        %v7170 = vmul.f32 %v4098, %v6786
        %v7171 = vmul.f32 %v4099, %v6787
        %v7172 = vmul.f32 %v4100, %v6788
        %v7173 = vmul.f32 %v4101, %v6789
        %v7174 = vmul.f32 %v4102, %v6790
        %v7175 = vmul.f32 %v4103, %v6791
        %v7176 = vmul.f32 %v4104, %v6792
        %v7177 = vmul.f32 %v4105, %v6793
        %v7178 = vmul.f32 %v4106, %v6794
        %v7179 = vmul.f32 %v4107, %v6795
        %v7180 = vmul.f32 %v4108, %v6796
        %v7181 = vmul.f32 %v4109, %v6797
        %v7182 = vmul.f32 %v4110, %v6798
        %v7183 = vmul.f32 %v4111, %v6799
        %v7184 = vmul.f32 %v4112, %v6800
        %v7185 = vmul.f32 %v4113, %v6801
        %v7186 = vmul.f32 %v4114, %v6802
        %v7187 = vmul.f32 %v4115, %v6803
        %v7188 = vmul.f32 %v4116, %v6804
        %v7189 = vmul.f32 %v4117, %v6805
        %v7190 = vmul.f32 %v4118, %v6806
        %v7191 = vmul.f32 %v4119, %v6807
        %v7192 = vmul.f32 %v4120, %v6808
        %v7193 = vmul.f32 %v4121, %v6809
        %v7194 = vmul.f32 %v4122, %v6810
        %v7195 = vmul.f32 %v4123, %v6811
        %v7196 = vmul.f32 %v4124, %v6812
        %v7197 = vmul.f32 %v4125, %v6813
        %v7198 = vmul.f32 %v4126, %v6814
        %v7199 = vmul.f32 %v4127, %v6815
        %v7200 = vmul.f32 %v4128, %v6816
        %v7201 = vmul.f32 %v4129, %v6817
        %v7202 = vmul.f32 %v4130, %v6818
        %v7203 = vmul.f32 %v4131, %v6819
        %v7204 = vmul.f32 %v4132, %v6820
        %v7205 = vmul.f32 %v4133, %v6821
        %v7206 = vmul.f32 %v4134, %v6822
        %v7207 = vmul.f32 %v4135, %v6823
        %v7208 = vmul.f32 %v4136, %v6824
        %v7209 = vmul.f32 %v4137, %v6825
        %v7210 = vmul.f32 %v4138, %v6826
        %v7211 = vmul.f32 %v4139, %v6827
        %v7212 = vmul.f32 %v4140, %v6828
        %v7213 = vmul.f32 %v4141, %v6829
        %v7214 = vmul.f32 %v4142, %v6830
        %v7215 = vmul.f32 %v4143, %v6831
        %v7216 = vmul.f32 %v4144, %v6832
        %v7217 = vmul.f32 %v4145, %v6833
        %v7218 = vmul.f32 %v4146, %v6834
        %v7219 = vmul.f32 %v4147, %v6835
        %v7220 = vmul.f32 %v4148, %v6836
        %v7221 = vmul.f32 %v4149, %v6837
        %v7222 = vmul.f32 %v4150, %v6838
        %v7223 = vmul.f32 %v4151, %v6839
        %v7224 = vmul.f32 %v4152, %v6840
        %v7225 = vmul.f32 %v4153, %v6841
        %v7226 = vmul.f32 %v4154, %v6842
        %v7227 = vmul.f32 %v4155, %v6843
        %v7228 = vmul.f32 %v4156, %v6844
        %v7229 = vmul.f32 %v4157, %v6845
        %v7230 = vmul.f32 %v4158, %v6846
        %v7231 = vmul.f32 %v4159, %v6847
        %v7232 = vmul.f32 %v4160, %v6848
        %v7233 = vmul.f32 %v4161, %v6849
        %v7234 = vmul.f32 %v4162, %v6850
        %v7235 = vmul.f32 %v4163, %v6851
        %v7236 = vmul.f32 %v4164, %v6852
        %v7237 = vmul.f32 %v4165, %v6853
        %v7238 = vmul.f32 %v4166, %v6854
        %v7239 = vmul.f32 %v4167, %v6855
        %v7240 = vmul.f32 %v4168, %v6856
        %v7241 = vmul.f32 %v4169, %v6857
        %v7242 = vmul.f32 %v4170, %v6858
        %v7243 = vmul.f32 %v4171, %v6859
        %v7244 = vmul.f32 %v4172, %v6860
        %v7245 = vmul.f32 %v4173, %v6861
        %v7246 = vmul.f32 %v4174, %v6862
        %v7247 = vmul.f32 %v4175, %v6863
        %v7248 = vmul.f32 %v4176, %v6864
        %v7249 = vmul.f32 %v4177, %v6865
        %v7250 = vmul.f32 %v4178, %v6866
        %v7251 = vmul.f32 %v4179, %v6867
        %v7252 = vmul.f32 %v4180, %v6868
        %v7253 = vmul.f32 %v4181, %v6869
        %v7254 = vmul.f32 %v4182, %v6870
        %v7255 = vmul.f32 %v4183, %v6871
        %v7256 = vmul.f32 %v4184, %v6872
        %v7257 = vmul.f32 %v4185, %v6873
        %v7258 = vmul.f32 %v4186, %v6874
        %v7259 = vmul.f32 %v4187, %v6875
        %v7260 = vmul.f32 %v4188, %v6876
        %v7261 = vmul.f32 %v4189, %v6877
        %v7262 = vmul.f32 %v4190, %v6878
        %v7263 = vmul.f32 %v4191, %v6879
        %v7264 = vmul.f32 %v4192, %v6880
        %v7265 = vmul.f32 %v4193, %v6881
        %v7266 = vmul.f32 %v4194, %v6882
        %v7267 = vmul.f32 %v4195, %v6883
        %v7268 = vmul.f32 %v4196, %v6884
        %v7269 = vmul.f32 %v4197, %v6885
        %v7270 = vmul.f32 %v4198, %v6886
        %v7271 = vmul.f32 %v4199, %v6887
        %v7272 = vmul.f32 %v4200, %v6888
        %v7273 = vmul.f32 %v4201, %v6889
        %v7274 = vmul.f32 %v4202, %v6890
        %v7275 = vmul.f32 %v4203, %v6891
        %v7276 = vmul.f32 %v4204, %v6892
        %v7277 = vmul.f32 %v4205, %v6893
        %v7278 = vmul.f32 %v4206, %v6894
        %v7279 = vmul.f32 %v4207, %v6895
        %v7280 = vmul.f32 %v4208, %v6896
        %v7281 = vmul.f32 %v4209, %v6897
        %v7282 = vmul.f32 %v4210, %v6898
        %v7283 = vmul.f32 %v4211, %v6899
        %v7284 = vmul.f32 %v4212, %v6900
        %v7285 = vmul.f32 %v4213, %v6901
        %v7286 = vmul.f32 %v4214, %v6902
        %v7287 = vmul.f32 %v4215, %v6903
        %v7288 = vmul.f32 %v4216, %v6904
        %v7289 = vmul.f32 %v4217, %v6905
        %v7290 = vmul.f32 %v4218, %v6906
        %v7291 = vmul.f32 %v4219, %v6907
        %v7292 = vmul.f32 %v4220, %v6908
        %v7293 = vmul.f32 %v4221, %v6909
        %v7294 = vmul.f32 %v4222, %v6910
        %v7295 = vmul.f32 %v4223, %v6911
        %v7296 = vmul.f32 %v4224, %v6912
        %v7297 = vmul.f32 %v4225, %v6913
        %v7298 = vmul.f32 %v4226, %v6914
        %v7299 = vmul.f32 %v4227, %v6915
        %v7300 = vmul.f32 %v4228, %v6916
        %v7301 = vmul.f32 %v4229, %v6917
        %v7302 = vmul.f32 %v4230, %v6918
        %v7303 = vmul.f32 %v4231, %v6919
        %v7304 = vmul.f32 %v4232, %v6920
        %v7305 = vmul.f32 %v4233, %v6921
        %v7306 = vmul.f32 %v4234, %v6922
        %v7307 = vmul.f32 %v4235, %v6923
        %v7308 = vmul.f32 %v4236, %v6924
        %v7309 = vmul.f32 %v4237, %v6925
        %v7310 = vmul.f32 %v4238, %v6926
        %v7311 = vmul.f32 %v4239, %v6927
        %v7312 = vmul.f32 %v4240, %v6928
        %v7313 = vmul.f32 %v4241, %v6929
        %v7314 = vmul.f32 %v4242, %v6930
        %v7315 = vld [vmem:[%s9] sm:$0xff]
        %v7316 = vld [vmem:[%s9 + $0x8] sm:$0xff]
        %v7317 = vld [vmem:[%s9 + $0x10] sm:$0xff]
        %v7318 = vld [vmem:[%s9 + $0x18] sm:$0xff]
        %v7319 = vld [vmem:[%s9 + $0x20] sm:$0xff]
        %v7320 = vld [vmem:[%s9 + $0x28] sm:$0xff]
        %v7321 = vld [vmem:[%s9 + $0x30] sm:$0xff]
        %v7322 = vld [vmem:[%s9 + $0x38] sm:$0xff]
        %v7323 = vld [vmem:[%s9 + $0x40] sm:$0xff]
        %v7324 = vld [vmem:[%s9 + $0x48] sm:$0xff]
        %v7325 = vld [vmem:[%s9 + $0x50] sm:$0xff]
        %v7326 = vld [vmem:[%s9 + $0x58] sm:$0xff]
        %v7327 = vld [vmem:[%s9 + $0x60] sm:$0xff]
        %v7328 = vld [vmem:[%s9 + $0x68] sm:$0xff]
        %v7329 = vld [vmem:[%s9 + $0x70] sm:$0xff]
        %v7330 = vld [vmem:[%s9 + $0x78] sm:$0xff]
        %v7331 = vld [vmem:[%s9 + $0x80] sm:$0xff]
        %v7332 = vld [vmem:[%s9 + $0x88] sm:$0xff]
        %v7333 = vld [vmem:[%s9 + $0x90] sm:$0xff]
        %v7334 = vld [vmem:[%s9 + $0x98] sm:$0xff]
        %v7335 = vld [vmem:[%s9 + $0xa0] sm:$0xff]
        %v7336 = vld [vmem:[%s9 + $0xa8] sm:$0xff]
        %v7337 = vld [vmem:[%s9 + $0xb0] sm:$0xff]
        %v7338 = vld [vmem:[%s9 + $0xb8] sm:$0xff]
        %v7339 = vpack.c.bf16 %v6935, %v6931
        %v7340 = vpack.c.bf16 %v6936, %v6932
        %v7341 = vpack.c.bf16 %v6937, %v6933
        %v7342 = vpack.c.bf16 %v6938, %v6934
        %v7343 = vpack.c.bf16 %v6943, %v6939
        %v7344 = vpack.c.bf16 %v6944, %v6940
        %v7345 = vpack.c.bf16 %v6945, %v6941
        %v7346 = vpack.c.bf16 %v6946, %v6942
        %v7347 = vpack.c.bf16 %v6951, %v6947
        %v7348 = vpack.c.bf16 %v6952, %v6948
        %v7349 = vpack.c.bf16 %v6953, %v6949
        %v7350 = vpack.c.bf16 %v6954, %v6950
        %v7351 = vpack.c.bf16 %v6959, %v6955
        %v7352 = vpack.c.bf16 %v6960, %v6956
        %v7353 = vpack.c.bf16 %v6961, %v6957
        %v7354 = vpack.c.bf16 %v6962, %v6958
        %v7355 = vpack.c.bf16 %v6967, %v6963
        %v7356 = vpack.c.bf16 %v6968, %v6964
        %v7357 = vpack.c.bf16 %v6969, %v6965
        %v7358 = vpack.c.bf16 %v6970, %v6966
        %v7359 = vpack.c.bf16 %v6975, %v6971
        %v7360 = vpack.c.bf16 %v6976, %v6972
        %v7361 = vpack.c.bf16 %v6977, %v6973
        %v7362 = vpack.c.bf16 %v6978, %v6974
        %v7363 = vpack.c.bf16 %v6983, %v6979
        %v7364 = vpack.c.bf16 %v6984, %v6980
        %v7365 = vpack.c.bf16 %v6985, %v6981
        %v7366 = vpack.c.bf16 %v6986, %v6982
        %v7367 = vpack.c.bf16 %v6991, %v6987
        %v7368 = vpack.c.bf16 %v6992, %v6988
        %v7369 = vpack.c.bf16 %v6993, %v6989
        %v7370 = vpack.c.bf16 %v6994, %v6990
        %v7371 = vpack.c.bf16 %v6999, %v6995
        %v7372 = vpack.c.bf16 %v7000, %v6996
        %v7373 = vpack.c.bf16 %v7001, %v6997
        %v7374 = vpack.c.bf16 %v7002, %v6998
        %v7375 = vpack.c.bf16 %v7007, %v7003
        %v7376 = vpack.c.bf16 %v7008, %v7004
        %v7377 = vpack.c.bf16 %v7009, %v7005
        %v7378 = vpack.c.bf16 %v7010, %v7006
        %v7379 = vpack.c.bf16 %v7015, %v7011
        %v7380 = vpack.c.bf16 %v7016, %v7012
        %v7381 = vpack.c.bf16 %v7017, %v7013
        %v7382 = vpack.c.bf16 %v7018, %v7014
        %v7383 = vpack.c.bf16 %v7023, %v7019
        %v7384 = vpack.c.bf16 %v7024, %v7020
        %v7385 = vpack.c.bf16 %v7025, %v7021
        %v7386 = vpack.c.bf16 %v7026, %v7022
        %v7387 = vpack.c.bf16 %v7031, %v7027
        %v7388 = vpack.c.bf16 %v7032, %v7028
        %v7389 = vpack.c.bf16 %v7033, %v7029
        %v7390 = vpack.c.bf16 %v7034, %v7030
        %v7391 = vpack.c.bf16 %v7039, %v7035
        %v7392 = vpack.c.bf16 %v7040, %v7036
        %v7393 = vpack.c.bf16 %v7041, %v7037
        %v7394 = vpack.c.bf16 %v7042, %v7038
        %v7395 = vpack.c.bf16 %v7047, %v7043
        %v7396 = vpack.c.bf16 %v7048, %v7044
        %v7397 = vpack.c.bf16 %v7049, %v7045
        %v7398 = vpack.c.bf16 %v7050, %v7046
        %v7399 = vpack.c.bf16 %v7055, %v7051
        %v7400 = vpack.c.bf16 %v7056, %v7052
        %v7401 = vpack.c.bf16 %v7057, %v7053
        %v7402 = vpack.c.bf16 %v7058, %v7054
        %v7403 = vpack.c.bf16 %v7063, %v7059
        %v7404 = vpack.c.bf16 %v7064, %v7060
        %v7405 = vpack.c.bf16 %v7065, %v7061
        %v7406 = vpack.c.bf16 %v7066, %v7062
        %v7407 = vpack.c.bf16 %v7071, %v7067
        %v7408 = vpack.c.bf16 %v7072, %v7068
        %v7409 = vpack.c.bf16 %v7073, %v7069
        %v7410 = vpack.c.bf16 %v7074, %v7070
        %v7411 = vpack.c.bf16 %v7079, %v7075
        %v7412 = vpack.c.bf16 %v7080, %v7076
        %v7413 = vpack.c.bf16 %v7081, %v7077
        %v7414 = vpack.c.bf16 %v7082, %v7078
        %v7415 = vpack.c.bf16 %v7087, %v7083
        %v7416 = vpack.c.bf16 %v7088, %v7084
        %v7417 = vpack.c.bf16 %v7089, %v7085
        %v7418 = vpack.c.bf16 %v7090, %v7086
        %v7419 = vpack.c.bf16 %v7095, %v7091
        %v7420 = vpack.c.bf16 %v7096, %v7092
        %v7421 = vpack.c.bf16 %v7097, %v7093
        %v7422 = vpack.c.bf16 %v7098, %v7094
        %v7423 = vpack.c.bf16 %v7103, %v7099
        %v7424 = vpack.c.bf16 %v7104, %v7100
        %v7425 = vpack.c.bf16 %v7105, %v7101
        %v7426 = vpack.c.bf16 %v7106, %v7102
        %v7427 = vpack.c.bf16 %v7111, %v7107
        %v7428 = vpack.c.bf16 %v7112, %v7108
        %v7429 = vpack.c.bf16 %v7113, %v7109
        %v7430 = vpack.c.bf16 %v7114, %v7110
        %v7431 = vpack.c.bf16 %v7119, %v7115
        %v7432 = vpack.c.bf16 %v7120, %v7116
        %v7433 = vpack.c.bf16 %v7121, %v7117
        %v7434 = vpack.c.bf16 %v7122, %v7118
        %v7435 = vpack.c.bf16 %v7127, %v7123
        %v7436 = vpack.c.bf16 %v7128, %v7124
        %v7437 = vpack.c.bf16 %v7129, %v7125
        %v7438 = vpack.c.bf16 %v7130, %v7126
        %v7439 = vpack.c.bf16 %v7135, %v7131
        %v7440 = vpack.c.bf16 %v7136, %v7132
        %v7441 = vpack.c.bf16 %v7137, %v7133
        %v7442 = vpack.c.bf16 %v7138, %v7134
        %v7443 = vpack.c.bf16 %v7143, %v7139
        %v7444 = vpack.c.bf16 %v7144, %v7140
        %v7445 = vpack.c.bf16 %v7145, %v7141
        %v7446 = vpack.c.bf16 %v7146, %v7142
        %v7447 = vpack.c.bf16 %v7151, %v7147
        %v7448 = vpack.c.bf16 %v7152, %v7148
        %v7449 = vpack.c.bf16 %v7153, %v7149
        %v7450 = vpack.c.bf16 %v7154, %v7150
        %v7451 = vpack.c.bf16 %v7159, %v7155
        %v7452 = vpack.c.bf16 %v7160, %v7156
        %v7453 = vpack.c.bf16 %v7161, %v7157
        %v7454 = vpack.c.bf16 %v7162, %v7158
        %v7455 = vpack.c.bf16 %v7167, %v7163
        %v7456 = vpack.c.bf16 %v7168, %v7164
        %v7457 = vpack.c.bf16 %v7169, %v7165
        %v7458 = vpack.c.bf16 %v7170, %v7166
        %v7459 = vpack.c.bf16 %v7175, %v7171
        %v7460 = vpack.c.bf16 %v7176, %v7172
        %v7461 = vpack.c.bf16 %v7177, %v7173
        %v7462 = vpack.c.bf16 %v7178, %v7174
        %v7463 = vpack.c.bf16 %v7183, %v7179
        %v7464 = vpack.c.bf16 %v7184, %v7180
        %v7465 = vpack.c.bf16 %v7185, %v7181
        %v7466 = vpack.c.bf16 %v7186, %v7182
        %v7467 = vpack.c.bf16 %v7191, %v7187
        %v7468 = vpack.c.bf16 %v7192, %v7188
        %v7469 = vpack.c.bf16 %v7193, %v7189
        %v7470 = vpack.c.bf16 %v7194, %v7190
        %v7471 = vpack.c.bf16 %v7199, %v7195
        %v7472 = vpack.c.bf16 %v7200, %v7196
        %v7473 = vpack.c.bf16 %v7201, %v7197
        %v7474 = vpack.c.bf16 %v7202, %v7198
        %v7475 = vpack.c.bf16 %v7207, %v7203
        %v7476 = vpack.c.bf16 %v7208, %v7204
        %v7477 = vpack.c.bf16 %v7209, %v7205
        %v7478 = vpack.c.bf16 %v7210, %v7206
        %v7479 = vpack.c.bf16 %v7215, %v7211
        %v7480 = vpack.c.bf16 %v7216, %v7212
        %v7481 = vpack.c.bf16 %v7217, %v7213
        %v7482 = vpack.c.bf16 %v7218, %v7214
        %v7483 = vpack.c.bf16 %v7223, %v7219
        %v7484 = vpack.c.bf16 %v7224, %v7220
        %v7485 = vpack.c.bf16 %v7225, %v7221
        %v7486 = vpack.c.bf16 %v7226, %v7222
        %v7487 = vpack.c.bf16 %v7231, %v7227
        %v7488 = vpack.c.bf16 %v7232, %v7228
        %v7489 = vpack.c.bf16 %v7233, %v7229
        %v7490 = vpack.c.bf16 %v7234, %v7230
        %v7491 = vpack.c.bf16 %v7239, %v7235
        %v7492 = vpack.c.bf16 %v7240, %v7236
        %v7493 = vpack.c.bf16 %v7241, %v7237
        %v7494 = vpack.c.bf16 %v7242, %v7238
        %v7495 = vpack.c.bf16 %v7247, %v7243
        %v7496 = vpack.c.bf16 %v7248, %v7244
        %v7497 = vpack.c.bf16 %v7249, %v7245
        %v7498 = vpack.c.bf16 %v7250, %v7246
        %v7499 = vpack.c.bf16 %v7255, %v7251
        %v7500 = vpack.c.bf16 %v7256, %v7252
        %v7501 = vpack.c.bf16 %v7257, %v7253
        %v7502 = vpack.c.bf16 %v7258, %v7254
        %v7503 = vpack.c.bf16 %v7263, %v7259
        %v7504 = vpack.c.bf16 %v7264, %v7260
        %v7505 = vpack.c.bf16 %v7265, %v7261
        %v7506 = vpack.c.bf16 %v7266, %v7262
        %v7507 = vpack.c.bf16 %v7271, %v7267
        %v7508 = vpack.c.bf16 %v7272, %v7268
        %v7509 = vpack.c.bf16 %v7273, %v7269
        %v7510 = vpack.c.bf16 %v7274, %v7270
        %v7511 = vpack.c.bf16 %v7279, %v7275
        %v7512 = vpack.c.bf16 %v7280, %v7276
        %v7513 = vpack.c.bf16 %v7281, %v7277
        %v7514 = vpack.c.bf16 %v7282, %v7278
        %v7515 = vpack.c.bf16 %v7287, %v7283
        %v7516 = vpack.c.bf16 %v7288, %v7284
        %v7517 = vpack.c.bf16 %v7289, %v7285
        %v7518 = vpack.c.bf16 %v7290, %v7286
        %v7519 = vpack.c.bf16 %v7295, %v7291
        %v7520 = vpack.c.bf16 %v7296, %v7292
        %v7521 = vpack.c.bf16 %v7297, %v7293
        %v7522 = vpack.c.bf16 %v7298, %v7294
        %v7523 = vpack.c.bf16 %v7303, %v7299
        %v7524 = vpack.c.bf16 %v7304, %v7300
        %v7525 = vpack.c.bf16 %v7305, %v7301
        %v7526 = vpack.c.bf16 %v7306, %v7302
        %v7527 = vpack.c.bf16 %v7311, %v7307
        %v7528 = vpack.c.bf16 %v7312, %v7308
        %v7529 = vpack.c.bf16 %v7313, %v7309
        %v7530 = vpack.c.bf16 %v7314, %v7310
        %v7531 = vld [vmem:[%s10] sm:$0xff]
        %v7532 = vld [vmem:[%s10 + $0x8] sm:$0xff]
        %v7533 = vld [vmem:[%s10 + $0x10] sm:$0xff]
        %v7534 = vld [vmem:[%s10 + $0x18] sm:$0xff]
        %v7535 = vld [vmem:[%s10 + $0x20] sm:$0xff]
        %v7536 = vld [vmem:[%s10 + $0x28] sm:$0xff]
        %v7537 = vld [vmem:[%s10 + $0x30] sm:$0xff]
        %v7538 = vld [vmem:[%s10 + $0x38] sm:$0xff]
        %7540 = vset.pattern.permute.xlu0 0
        %7541 = vperm.xlu0 %7540, %v7531
        %v7542 = vpop.permute.xlu0 %7541
        %7545 = vset.pattern.permute.xlu0 0
        %7546 = vperm.xlu0 %7545, %v7532
        %v7547 = vpop.permute.xlu0 %7546
        %7550 = vset.pattern.permute.xlu0 0
        %7551 = vperm.xlu0 %7550, %v7533
        %v7552 = vpop.permute.xlu0 %7551
        %7555 = vset.pattern.permute.xlu0 0
        %7556 = vperm.xlu0 %7555, %v7534
        %v7557 = vpop.permute.xlu0 %7556
        %7560 = vset.pattern.permute.xlu0 0
        %7561 = vperm.xlu0 %7560, %v7535
        %v7562 = vpop.permute.xlu0 %7561
        %7565 = vset.pattern.permute.xlu0 0
        %7566 = vperm.xlu0 %7565, %v7536
        %v7567 = vpop.permute.xlu0 %7566
        %7570 = vset.pattern.permute.xlu0 0
        %7571 = vperm.xlu0 %7570, %v7537
        %v7572 = vpop.permute.xlu0 %7571
        %7575 = vset.pattern.permute.xlu0 0
        %7576 = vperm.xlu0 %7575, %v7538
        %v7577 = vpop.permute.xlu0 %7576
        %v7603 = vunpack.c.l.b16 %v7315
        %v7604 = vunpack.c.h.b16 %v7315
        %v7605 = vunpack.c.l.b16 %v7316
        %v7606 = vunpack.c.h.b16 %v7316
        %v7607 = vunpack.c.l.b16 %v7317
        %v7608 = vunpack.c.h.b16 %v7317
        %v7609 = vunpack.c.l.b16 %v7318
        %v7610 = vunpack.c.h.b16 %v7318
        %v7611 = vunpack.c.l.b16 %v7319
        %v7612 = vunpack.c.h.b16 %v7319
        %v7613 = vunpack.c.l.b16 %v7320
        %v7614 = vunpack.c.h.b16 %v7320
        %v7615 = vunpack.c.l.b16 %v7321
        %v7616 = vunpack.c.h.b16 %v7321
        %v7617 = vunpack.c.l.b16 %v7322
        %v7618 = vunpack.c.h.b16 %v7322
        %v7619 = vunpack.c.l.b16 %v7323
        %v7620 = vunpack.c.h.b16 %v7323
        %v7621 = vunpack.c.l.b16 %v7324
        %v7622 = vunpack.c.h.b16 %v7324
        %v7623 = vunpack.c.l.b16 %v7325
        %v7624 = vunpack.c.h.b16 %v7325
        %v7625 = vunpack.c.l.b16 %v7326
        %v7626 = vunpack.c.h.b16 %v7326
        %v7627 = vunpack.c.l.b16 %v7327
        %v7628 = vunpack.c.h.b16 %v7327
        %v7629 = vunpack.c.l.b16 %v7328
        %v7630 = vunpack.c.h.b16 %v7328
        %v7631 = vunpack.c.l.b16 %v7329
        %v7632 = vunpack.c.h.b16 %v7329
        %v7633 = vunpack.c.l.b16 %v7330
        %v7634 = vunpack.c.h.b16 %v7330
        %v7635 = vunpack.c.l.b16 %v7331
        %v7636 = vunpack.c.h.b16 %v7331
        %v7637 = vunpack.c.l.b16 %v7332
        %v7638 = vunpack.c.h.b16 %v7332
        %v7639 = vunpack.c.l.b16 %v7333
        %v7640 = vunpack.c.h.b16 %v7333
        %v7641 = vunpack.c.l.b16 %v7334
        %v7642 = vunpack.c.h.b16 %v7334
        %v7643 = vunpack.c.l.b16 %v7335
        %v7644 = vunpack.c.h.b16 %v7335
        %v7645 = vunpack.c.l.b16 %v7336
        %v7646 = vunpack.c.h.b16 %v7336
        %v7647 = vunpack.c.l.b16 %v7337
        %v7648 = vunpack.c.h.b16 %v7337
        %v7649 = vunpack.c.l.b16 %v7338
        %v7650 = vunpack.c.h.b16 %v7338
        %v7651 = vpack.c.b16 %v7609, %v7603
        %v7652 = vpack.c.b16 %v7610, %v7604
        %v7653 = vpack.c.b16 %v7611, %v7605
        %v7654 = vpack.c.b16 %v7612, %v7606
        %v7655 = vpack.c.b16 %v7613, %v7607
        %v7656 = vpack.c.b16 %v7614, %v7608
        %v7657 = vpack.c.b16 %v7621, %v7615
        %v7658 = vpack.c.b16 %v7622, %v7616
        %v7659 = vpack.c.b16 %v7623, %v7617
        %v7660 = vpack.c.b16 %v7624, %v7618
        %v7661 = vpack.c.b16 %v7625, %v7619
        %v7662 = vpack.c.b16 %v7626, %v7620
        %v7663 = vpack.c.b16 %v7633, %v7627
        %v7664 = vpack.c.b16 %v7634, %v7628
        %v7665 = vpack.c.b16 %v7635, %v7629
        %v7666 = vpack.c.b16 %v7636, %v7630
        %v7667 = vpack.c.b16 %v7637, %v7631
        %v7668 = vpack.c.b16 %v7638, %v7632
        %v7669 = vpack.c.b16 %v7645, %v7639
        %v7670 = vpack.c.b16 %v7646, %v7640
        %v7671 = vpack.c.b16 %v7647, %v7641
        %v7672 = vpack.c.b16 %v7648, %v7642
        %v7673 = vpack.c.b16 %v7649, %v7643
        %v7674 = vpack.c.b16 %v7650, %v7644
        %7699 = vmatprep.subr.bf16.mxu0 %v7340
        %7700 = vmatpush1.bf16.msra.mxu0 %v7339
        %7701 = vmatprep.subr.bf16.mxu0 %v7344
        %7702 = vmatpush1.bf16.msra.mxu0 %v7343
        %7703 = vmatprep.subr.bf16.mxu0 %v7348
        %7704 = vmatpush1.bf16.msra.mxu0 %v7347
        %7705 = vmatprep.subr.bf16.mxu0 %v7352
        %7706 = vmatpush1.bf16.msra.mxu0 %v7351
        %7707 = vmatprep.subr.bf16.mxu0 %v7356
        %7708 = vmatpush1.bf16.msra.mxu0 %v7355
        %7709 = vmatprep.subr.bf16.mxu0 %v7360
        %7710 = vmatpush1.bf16.msra.mxu0 %v7359
        %7711 = vmatprep.subr.bf16.mxu0 %v7364
        %7712 = vmatpush1.bf16.msra.mxu0 %v7363
        %7713 = vmatprep.subr.bf16.mxu0 %v7368
        %7714 = vmatpush1.bf16.msra.mxu0 %v7367
        %7715 = vmatprep.subr.bf16.mxu0 %v7372
        %7716 = vmatpush1.bf16.msra.mxu0 %v7371
        %7717 = vmatprep.subr.bf16.mxu0 %v7376
        %7718 = vmatpush1.bf16.msra.mxu0 %v7375
        %7719 = vmatprep.subr.bf16.mxu0 %v7380
        %7720 = vmatpush1.bf16.msra.mxu0 %v7379
        %7721 = vmatprep.subr.bf16.mxu0 %v7384
        %7722 = vmatpush1.bf16.msra.mxu0 %v7383
        %7723 = vmatprep.subr.bf16.mxu0 %v7388
        %7724 = vmatpush1.bf16.msra.mxu0 %v7387
        %7725 = vmatprep.subr.bf16.mxu0 %v7392
        %7726 = vmatpush1.bf16.msra.mxu0 %v7391
        %7727 = vmatprep.subr.bf16.mxu0 %v7396
        %7728 = vmatpush1.bf16.msra.mxu0 %v7395
        %7729 = vmatprep.subr.bf16.mxu0 %v7400
        %7730 = vmatpush1.bf16.msra.mxu0 %v7399
        %7731 = vmatprep.mubr.bf16.mxu0 %v7652
        %7732 = vmatmul.mubr.bf16.gmra.mrb[0].mxu0 %v7651
        %v7733 = vpop.f32.mrb[0].mxu0
        %v7734 = vadd.f32 %v7542, %v7733
        %v7735 = vpop.f32.mrb[0].mxu0
        %v7736 = vadd.f32 %v7542, %v7735
        %v7737 = vpop.f32.mrb[0].mxu0
        %v7738 = vadd.f32 %v7547, %v7737
        %v7739 = vpop.f32.mrb[0].mxu0
        %v7740 = vadd.f32 %v7547, %v7739
        %7741 = vmatprep.mubr.bf16.mxu0 %v7658
        %7742 = vmatmul.mubr.bf16.gmra.mrb[0].mxu0 %v7657
        %v7743 = vpop.f32.mrb[0].mxu0
        %v7744 = vadd.f32 %v7552, %v7743
        %v7745 = vpop.f32.mrb[0].mxu0
        %v7746 = vadd.f32 %v7552, %v7745
        %v7747 = vpop.f32.mrb[0].mxu0
        %v7748 = vadd.f32 %v7557, %v7747
        %v7749 = vpop.f32.mrb[0].mxu0
        %v7750 = vadd.f32 %v7557, %v7749
        %7751 = vmatprep.mubr.bf16.mxu0 %v7664
        %7752 = vmatmul.mubr.bf16.gmra.mrb[0].mxu0 %v7663
        %v7753 = vpop.f32.mrb[0].mxu0
        %v7754 = vadd.f32 %v7562, %v7753
        %v7755 = vpop.f32.mrb[0].mxu0
        %v7756 = vadd.f32 %v7562, %v7755
        %v7757 = vpop.f32.mrb[0].mxu0
        %v7758 = vadd.f32 %v7567, %v7757
        %v7759 = vpop.f32.mrb[0].mxu0
        %v7760 = vadd.f32 %v7567, %v7759
        %7761 = vmatprep.mubr.bf16.mxu0 %v7670
        %7762 = vmatmul.mubr.bf16.gmra.mrb[0].mxu0 %v7669
        %v7763 = vpop.f32.mrb[0].mxu0
        %v7764 = vadd.f32 %v7572, %v7763
        %v7765 = vpop.f32.mrb[0].mxu0
        %v7766 = vadd.f32 %v7572, %v7765
        %v7767 = vpop.f32.mrb[0].mxu0
        %v7768 = vadd.f32 %v7577, %v7767
        %v7769 = vpop.f32.mrb[0].mxu0
        %v7770 = vadd.f32 %v7577, %v7769
        %7771 = vdwg.mxu0
        %7772 = vmatprep.subr.bf16.mxu0 %v7404
        %7773 = vmatpush1.bf16.msra.mxu0 %v7403
        %7774 = vmatprep.subr.bf16.mxu0 %v7408
        %7775 = vmatpush1.bf16.msra.mxu0 %v7407
        %7776 = vmatprep.subr.bf16.mxu0 %v7412
        %7777 = vmatpush1.bf16.msra.mxu0 %v7411
        %7778 = vmatprep.subr.bf16.mxu0 %v7416
        %7779 = vmatpush1.bf16.msra.mxu0 %v7415
        %7780 = vmatprep.subr.bf16.mxu0 %v7420
        %7781 = vmatpush1.bf16.msra.mxu0 %v7419
        %7782 = vmatprep.subr.bf16.mxu0 %v7424
        %7783 = vmatpush1.bf16.msra.mxu0 %v7423
        %7784 = vmatprep.subr.bf16.mxu0 %v7428
        %7785 = vmatpush1.bf16.msra.mxu0 %v7427
        %7786 = vmatprep.subr.bf16.mxu0 %v7432
        %7787 = vmatpush1.bf16.msra.mxu0 %v7431
        %7788 = vmatprep.subr.bf16.mxu0 %v7436
        %7789 = vmatpush1.bf16.msra.mxu0 %v7435
        %7790 = vmatprep.subr.bf16.mxu0 %v7440
        %7791 = vmatpush1.bf16.msra.mxu0 %v7439
        %7792 = vmatprep.subr.bf16.mxu0 %v7444
        %7793 = vmatpush1.bf16.msra.mxu0 %v7443
        %7794 = vmatprep.subr.bf16.mxu0 %v7448
        %7795 = vmatpush1.bf16.msra.mxu0 %v7447
        %7796 = vmatprep.subr.bf16.mxu0 %v7452
        %7797 = vmatpush1.bf16.msra.mxu0 %v7451
        %7798 = vmatprep.subr.bf16.mxu0 %v7456
        %7799 = vmatpush1.bf16.msra.mxu0 %v7455
        %7800 = vmatprep.subr.bf16.mxu0 %v7460
        %7801 = vmatpush1.bf16.msra.mxu0 %v7459
        %7802 = vmatprep.subr.bf16.mxu0 %v7464
        %7803 = vmatpush1.bf16.msra.mxu0 %v7463
        %7804 = vmatprep.mubr.bf16.mxu0 %v7654
        %7805 = vmatmul.mubr.bf16.gmra.mrb[0].mxu0 %v7653
        %v7806 = vpop.f32.mrb[0].mxu0
        %v7807 = vadd.f32 %v7734, %v7806
        %v7808 = vpop.f32.mrb[0].mxu0
        %v7809 = vadd.f32 %v7736, %v7808
        %v7810 = vpop.f32.mrb[0].mxu0
        %v7811 = vadd.f32 %v7738, %v7810
        %v7812 = vpop.f32.mrb[0].mxu0
        %v7813 = vadd.f32 %v7740, %v7812
        %7814 = vmatprep.mubr.bf16.mxu0 %v7660
        %7815 = vmatmul.mubr.bf16.gmra.mrb[0].mxu0 %v7659
        %v7816 = vpop.f32.mrb[0].mxu0
        %v7817 = vadd.f32 %v7744, %v7816
        %v7818 = vpop.f32.mrb[0].mxu0
        %v7819 = vadd.f32 %v7746, %v7818
        %v7820 = vpop.f32.mrb[0].mxu0
        %v7821 = vadd.f32 %v7748, %v7820
        %v7822 = vpop.f32.mrb[0].mxu0
        %v7823 = vadd.f32 %v7750, %v7822
        %7824 = vmatprep.mubr.bf16.mxu0 %v7666
        %7825 = vmatmul.mubr.bf16.gmra.mrb[0].mxu0 %v7665
        %v7826 = vpop.f32.mrb[0].mxu0
        %v7827 = vadd.f32 %v7754, %v7826
        %v7828 = vpop.f32.mrb[0].mxu0
        %v7829 = vadd.f32 %v7756, %v7828
        %v7830 = vpop.f32.mrb[0].mxu0
        %v7831 = vadd.f32 %v7758, %v7830
        %v7832 = vpop.f32.mrb[0].mxu0
        %v7833 = vadd.f32 %v7760, %v7832
        %7834 = vmatprep.mubr.bf16.mxu0 %v7672
        %7835 = vmatmul.mubr.bf16.gmra.mrb[0].mxu0 %v7671
        %v7836 = vpop.f32.mrb[0].mxu0
        %v7837 = vadd.f32 %v7764, %v7836
        %v7838 = vpop.f32.mrb[0].mxu0
        %v7839 = vadd.f32 %v7766, %v7838
        %v7840 = vpop.f32.mrb[0].mxu0
        %v7841 = vadd.f32 %v7768, %v7840
        %v7842 = vpop.f32.mrb[0].mxu0
        %v7843 = vadd.f32 %v7770, %v7842
        %7844 = vdwg.mxu0
        %7845 = vmatprep.subr.bf16.mxu0 %v7468
        %7846 = vmatpush1.bf16.msra.mxu0 %v7467
        %7847 = vmatprep.subr.bf16.mxu0 %v7472
        %7848 = vmatpush1.bf16.msra.mxu0 %v7471
        %7849 = vmatprep.subr.bf16.mxu0 %v7476
        %7850 = vmatpush1.bf16.msra.mxu0 %v7475
        %7851 = vmatprep.subr.bf16.mxu0 %v7480
        %7852 = vmatpush1.bf16.msra.mxu0 %v7479
        %7853 = vmatprep.subr.bf16.mxu0 %v7484
        %7854 = vmatpush1.bf16.msra.mxu0 %v7483
        %7855 = vmatprep.subr.bf16.mxu0 %v7488
        %7856 = vmatpush1.bf16.msra.mxu0 %v7487
        %7857 = vmatprep.subr.bf16.mxu0 %v7492
        %7858 = vmatpush1.bf16.msra.mxu0 %v7491
        %7859 = vmatprep.subr.bf16.mxu0 %v7496
        %7860 = vmatpush1.bf16.msra.mxu0 %v7495
        %7861 = vmatprep.subr.bf16.mxu0 %v7500
        %7862 = vmatpush1.bf16.msra.mxu0 %v7499
        %7863 = vmatprep.subr.bf16.mxu0 %v7504
        %7864 = vmatpush1.bf16.msra.mxu0 %v7503
        %7865 = vmatprep.subr.bf16.mxu0 %v7508
        %7866 = vmatpush1.bf16.msra.mxu0 %v7507
        %7867 = vmatprep.subr.bf16.mxu0 %v7512
        %7868 = vmatpush1.bf16.msra.mxu0 %v7511
        %7869 = vmatprep.subr.bf16.mxu0 %v7516
        %7870 = vmatpush1.bf16.msra.mxu0 %v7515
        %7871 = vmatprep.subr.bf16.mxu0 %v7520
        %7872 = vmatpush1.bf16.msra.mxu0 %v7519
        %7873 = vmatprep.subr.bf16.mxu0 %v7524
        %7874 = vmatpush1.bf16.msra.mxu0 %v7523
        %7875 = vmatprep.subr.bf16.mxu0 %v7528
        %7876 = vmatpush1.bf16.msra.mxu0 %v7527
        %7877 = vmatprep.mubr.bf16.mxu0 %v7656
        %7878 = vmatmul.mubr.bf16.gmra.mrb[0].mxu0 %v7655
        %v7879 = vpop.f32.mrb[0].mxu0
        %v7880 = vadd.f32 %v7807, %v7879
        %v7881 = vpop.f32.mrb[0].mxu0
        %v7882 = vadd.f32 %v7809, %v7881
        %v7883 = vpop.f32.mrb[0].mxu0
        %v7884 = vadd.f32 %v7811, %v7883
        %v7885 = vpop.f32.mrb[0].mxu0
        %v7886 = vadd.f32 %v7813, %v7885
        %7887 = vmatprep.mubr.bf16.mxu0 %v7662
        %7888 = vmatmul.mubr.bf16.gmra.mrb[0].mxu0 %v7661
        %v7889 = vpop.f32.mrb[0].mxu0
        %v7890 = vadd.f32 %v7817, %v7889
        %v7891 = vpop.f32.mrb[0].mxu0
        %v7892 = vadd.f32 %v7819, %v7891
        %v7893 = vpop.f32.mrb[0].mxu0
        %v7894 = vadd.f32 %v7821, %v7893
        %v7895 = vpop.f32.mrb[0].mxu0
        %v7896 = vadd.f32 %v7823, %v7895
        %7897 = vmatprep.mubr.bf16.mxu0 %v7668
        %7898 = vmatmul.mubr.bf16.gmra.mrb[0].mxu0 %v7667
        %v7899 = vpop.f32.mrb[0].mxu0
        %v7900 = vadd.f32 %v7827, %v7899
        %v7901 = vpop.f32.mrb[0].mxu0
        %v7902 = vadd.f32 %v7829, %v7901
        %v7903 = vpop.f32.mrb[0].mxu0
        %v7904 = vadd.f32 %v7831, %v7903
        %v7905 = vpop.f32.mrb[0].mxu0
        %v7906 = vadd.f32 %v7833, %v7905
        %7907 = vmatprep.mubr.bf16.mxu0 %v7674
        %7908 = vmatmul.mubr.bf16.gmra.mrb[0].mxu0 %v7673
        %v7909 = vpop.f32.mrb[0].mxu0
        %v7910 = vadd.f32 %v7837, %v7909
        %v7911 = vpop.f32.mrb[0].mxu0
        %v7912 = vadd.f32 %v7839, %v7911
        %v7913 = vpop.f32.mrb[0].mxu0
        %v7914 = vadd.f32 %v7841, %v7913
        %v7915 = vpop.f32.mrb[0].mxu0
        %v7916 = vadd.f32 %v7843, %v7915
        %7917 = vdwg.mxu0
        %7918 = vmatprep.subr.bf16.mxu0 %v7342
        %7919 = vmatpush1.bf16.msra.mxu0 %v7341
        %7920 = vmatprep.subr.bf16.mxu0 %v7346
        %7921 = vmatpush1.bf16.msra.mxu0 %v7345
        %7922 = vmatprep.subr.bf16.mxu0 %v7350
        %7923 = vmatpush1.bf16.msra.mxu0 %v7349
        %7924 = vmatprep.subr.bf16.mxu0 %v7354
        %7925 = vmatpush1.bf16.msra.mxu0 %v7353
        %7926 = vmatprep.subr.bf16.mxu0 %v7358
        %7927 = vmatpush1.bf16.msra.mxu0 %v7357
        %7928 = vmatprep.subr.bf16.mxu0 %v7362
        %7929 = vmatpush1.bf16.msra.mxu0 %v7361
        %7930 = vmatprep.subr.bf16.mxu0 %v7366
        %7931 = vmatpush1.bf16.msra.mxu0 %v7365
        %7932 = vmatprep.subr.bf16.mxu0 %v7370
        %7933 = vmatpush1.bf16.msra.mxu0 %v7369
        %7934 = vmatprep.subr.bf16.mxu0 %v7374
        %7935 = vmatpush1.bf16.msra.mxu0 %v7373
        %7936 = vmatprep.subr.bf16.mxu0 %v7378
        %7937 = vmatpush1.bf16.msra.mxu0 %v7377
        %7938 = vmatprep.subr.bf16.mxu0 %v7382
        %7939 = vmatpush1.bf16.msra.mxu0 %v7381
        %7940 = vmatprep.subr.bf16.mxu0 %v7386
        %7941 = vmatpush1.bf16.msra.mxu0 %v7385
        %7942 = vmatprep.subr.bf16.mxu0 %v7390
        %7943 = vmatpush1.bf16.msra.mxu0 %v7389
        %7944 = vmatprep.subr.bf16.mxu0 %v7394
        %7945 = vmatpush1.bf16.msra.mxu0 %v7393
        %7946 = vmatprep.subr.bf16.mxu0 %v7398
        %7947 = vmatpush1.bf16.msra.mxu0 %v7397
        %7948 = vmatprep.subr.bf16.mxu0 %v7402
        %7949 = vmatpush1.bf16.msra.mxu0 %v7401
        %7950 = vmatprep.mubr.bf16.mxu0 %v7652
        %7951 = vmatmul.mubr.bf16.gmra.mrb[0].mxu0 %v7651
        %v7952 = vpop.f32.mrb[0].mxu0
        %v7953 = vadd.f32 %v7542, %v7952
        %v7954 = vpop.f32.mrb[0].mxu0
        %v7955 = vadd.f32 %v7542, %v7954
        %v7956 = vpop.f32.mrb[0].mxu0
        %v7957 = vadd.f32 %v7547, %v7956
        %v7958 = vpop.f32.mrb[0].mxu0
        %v7959 = vadd.f32 %v7547, %v7958
        %7960 = vmatprep.mubr.bf16.mxu0 %v7658
        %7961 = vmatmul.mubr.bf16.gmra.mrb[0].mxu0 %v7657
        %v7962 = vpop.f32.mrb[0].mxu0
        %v7963 = vadd.f32 %v7552, %v7962
        %v7964 = vpop.f32.mrb[0].mxu0
        %v7965 = vadd.f32 %v7552, %v7964
        %v7966 = vpop.f32.mrb[0].mxu0
        %v7967 = vadd.f32 %v7557, %v7966
        %v7968 = vpop.f32.mrb[0].mxu0
        %v7969 = vadd.f32 %v7557, %v7968
        %7970 = vmatprep.mubr.bf16.mxu0 %v7664
        %7971 = vmatmul.mubr.bf16.gmra.mrb[0].mxu0 %v7663
        %v7972 = vpop.f32.mrb[0].mxu0
        %v7973 = vadd.f32 %v7562, %v7972
        %v7974 = vpop.f32.mrb[0].mxu0
        %v7975 = vadd.f32 %v7562, %v7974
        %v7976 = vpop.f32.mrb[0].mxu0
        %v7977 = vadd.f32 %v7567, %v7976
        %v7978 = vpop.f32.mrb[0].mxu0
        %v7979 = vadd.f32 %v7567, %v7978
        %7980 = vmatprep.mubr.bf16.mxu0 %v7670
        %7981 = vmatmul.mubr.bf16.gmra.mrb[0].mxu0 %v7669
        %v7982 = vpop.f32.mrb[0].mxu0
        %v7983 = vadd.f32 %v7572, %v7982
        %v7984 = vpop.f32.mrb[0].mxu0
        %v7985 = vadd.f32 %v7572, %v7984
        %v7986 = vpop.f32.mrb[0].mxu0
        %v7987 = vadd.f32 %v7577, %v7986
        %v7988 = vpop.f32.mrb[0].mxu0
        %v7989 = vadd.f32 %v7577, %v7988
        %7990 = vdwg.mxu0
        %7991 = vmatprep.subr.bf16.mxu0 %v7406
        %7992 = vmatpush1.bf16.msra.mxu0 %v7405
        %7993 = vmatprep.subr.bf16.mxu0 %v7410
        %7994 = vmatpush1.bf16.msra.mxu0 %v7409
        %7995 = vmatprep.subr.bf16.mxu0 %v7414
        %7996 = vmatpush1.bf16.msra.mxu0 %v7413
        %7997 = vmatprep.subr.bf16.mxu0 %v7418
        %7998 = vmatpush1.bf16.msra.mxu0 %v7417
        %7999 = vmatprep.subr.bf16.mxu0 %v7422
        %8000 = vmatpush1.bf16.msra.mxu0 %v7421
        %8001 = vmatprep.subr.bf16.mxu0 %v7426
        %8002 = vmatpush1.bf16.msra.mxu0 %v7425
        %8003 = vmatprep.subr.bf16.mxu0 %v7430
        %8004 = vmatpush1.bf16.msra.mxu0 %v7429
        %8005 = vmatprep.subr.bf16.mxu0 %v7434
        %8006 = vmatpush1.bf16.msra.mxu0 %v7433
        %8007 = vmatprep.subr.bf16.mxu0 %v7438
        %8008 = vmatpush1.bf16.msra.mxu0 %v7437
        %8009 = vmatprep.subr.bf16.mxu0 %v7442
        %8010 = vmatpush1.bf16.msra.mxu0 %v7441
        %8011 = vmatprep.subr.bf16.mxu0 %v7446
        %8012 = vmatpush1.bf16.msra.mxu0 %v7445
        %8013 = vmatprep.subr.bf16.mxu0 %v7450
        %8014 = vmatpush1.bf16.msra.mxu0 %v7449
        %8015 = vmatprep.subr.bf16.mxu0 %v7454
        %8016 = vmatpush1.bf16.msra.mxu0 %v7453
        %8017 = vmatprep.subr.bf16.mxu0 %v7458
        %8018 = vmatpush1.bf16.msra.mxu0 %v7457
        %8019 = vmatprep.subr.bf16.mxu0 %v7462
        %8020 = vmatpush1.bf16.msra.mxu0 %v7461
        %8021 = vmatprep.subr.bf16.mxu0 %v7466
        %8022 = vmatpush1.bf16.msra.mxu0 %v7465
        %8023 = vmatprep.mubr.bf16.mxu0 %v7654
        %8024 = vmatmul.mubr.bf16.gmra.mrb[0].mxu0 %v7653
        %v8025 = vpop.f32.mrb[0].mxu0
        %v8026 = vadd.f32 %v7953, %v8025
        %v8027 = vpop.f32.mrb[0].mxu0
        %v8028 = vadd.f32 %v7955, %v8027
        %v8029 = vpop.f32.mrb[0].mxu0
        %v8030 = vadd.f32 %v7957, %v8029
        %v8031 = vpop.f32.mrb[0].mxu0
        %v8032 = vadd.f32 %v7959, %v8031
        %8033 = vmatprep.mubr.bf16.mxu0 %v7660
        %8034 = vmatmul.mubr.bf16.gmra.mrb[0].mxu0 %v7659
        %v8035 = vpop.f32.mrb[0].mxu0
        %v8036 = vadd.f32 %v7963, %v8035
        %v8037 = vpop.f32.mrb[0].mxu0
        %v8038 = vadd.f32 %v7965, %v8037
        %v8039 = vpop.f32.mrb[0].mxu0
        %v8040 = vadd.f32 %v7967, %v8039
        %v8041 = vpop.f32.mrb[0].mxu0
        %v8042 = vadd.f32 %v7969, %v8041
        %8043 = vmatprep.mubr.bf16.mxu0 %v7666
        %8044 = vmatmul.mubr.bf16.gmra.mrb[0].mxu0 %v7665
        %v8045 = vpop.f32.mrb[0].mxu0
        %v8046 = vadd.f32 %v7973, %v8045
        %v8047 = vpop.f32.mrb[0].mxu0
        %v8048 = vadd.f32 %v7975, %v8047
        %v8049 = vpop.f32.mrb[0].mxu0
        %v8050 = vadd.f32 %v7977, %v8049
        %v8051 = vpop.f32.mrb[0].mxu0
        %v8052 = vadd.f32 %v7979, %v8051
        %8053 = vmatprep.mubr.bf16.mxu0 %v7672
        %8054 = vmatmul.mubr.bf16.gmra.mrb[0].mxu0 %v7671
        %v8055 = vpop.f32.mrb[0].mxu0
        %v8056 = vadd.f32 %v7983, %v8055
        %v8057 = vpop.f32.mrb[0].mxu0
        %v8058 = vadd.f32 %v7985, %v8057
        %v8059 = vpop.f32.mrb[0].mxu0
        %v8060 = vadd.f32 %v7987, %v8059
        %v8061 = vpop.f32.mrb[0].mxu0
        %v8062 = vadd.f32 %v7989, %v8061
        %8063 = vdwg.mxu0
        %8064 = vmatprep.subr.bf16.mxu0 %v7470
        %8065 = vmatpush1.bf16.msra.mxu0 %v7469
        %8066 = vmatprep.subr.bf16.mxu0 %v7474
        %8067 = vmatpush1.bf16.msra.mxu0 %v7473
        %8068 = vmatprep.subr.bf16.mxu0 %v7478
        %8069 = vmatpush1.bf16.msra.mxu0 %v7477
        %8070 = vmatprep.subr.bf16.mxu0 %v7482
        %8071 = vmatpush1.bf16.msra.mxu0 %v7481
        %8072 = vmatprep.subr.bf16.mxu0 %v7486
        %8073 = vmatpush1.bf16.msra.mxu0 %v7485
        %8074 = vmatprep.subr.bf16.mxu0 %v7490
        %8075 = vmatpush1.bf16.msra.mxu0 %v7489
        %8076 = vmatprep.subr.bf16.mxu0 %v7494
        %8077 = vmatpush1.bf16.msra.mxu0 %v7493
        %8078 = vmatprep.subr.bf16.mxu0 %v7498
        %8079 = vmatpush1.bf16.msra.mxu0 %v7497
        %8080 = vmatprep.subr.bf16.mxu0 %v7502
        %8081 = vmatpush1.bf16.msra.mxu0 %v7501
        %8082 = vmatprep.subr.bf16.mxu0 %v7506
        %8083 = vmatpush1.bf16.msra.mxu0 %v7505
        %8084 = vmatprep.subr.bf16.mxu0 %v7510
        %8085 = vmatpush1.bf16.msra.mxu0 %v7509
        %8086 = vmatprep.subr.bf16.mxu0 %v7514
        %8087 = vmatpush1.bf16.msra.mxu0 %v7513
        %8088 = vmatprep.subr.bf16.mxu0 %v7518
        %8089 = vmatpush1.bf16.msra.mxu0 %v7517
        %8090 = vmatprep.subr.bf16.mxu0 %v7522
        %8091 = vmatpush1.bf16.msra.mxu0 %v7521
        %8092 = vmatprep.subr.bf16.mxu0 %v7526
        %8093 = vmatpush1.bf16.msra.mxu0 %v7525
        %8094 = vmatprep.subr.bf16.mxu0 %v7530
        %8095 = vmatpush1.bf16.msra.mxu0 %v7529
        %8096 = vmatprep.mubr.bf16.mxu0 %v7656
        %8097 = vmatmul.mubr.bf16.gmra.mrb[0].mxu0 %v7655
        %v8098 = vpop.f32.mrb[0].mxu0
        %v8099 = vadd.f32 %v8026, %v8098
        %v8100 = vpop.f32.mrb[0].mxu0
        %v8101 = vadd.f32 %v8028, %v8100
        %v8102 = vpop.f32.mrb[0].mxu0
        %v8103 = vadd.f32 %v8030, %v8102
        %v8104 = vpop.f32.mrb[0].mxu0
        %v8105 = vadd.f32 %v8032, %v8104
        %8106 = vmatprep.mubr.bf16.mxu0 %v7662
        %8107 = vmatmul.mubr.bf16.gmra.mrb[0].mxu0 %v7661
        %v8108 = vpop.f32.mrb[0].mxu0
        %v8109 = vadd.f32 %v8036, %v8108
        %v8110 = vpop.f32.mrb[0].mxu0
        %v8111 = vadd.f32 %v8038, %v8110
        %v8112 = vpop.f32.mrb[0].mxu0
        %v8113 = vadd.f32 %v8040, %v8112
        %v8114 = vpop.f32.mrb[0].mxu0
        %v8115 = vadd.f32 %v8042, %v8114
        %8116 = vmatprep.mubr.bf16.mxu0 %v7668
        %8117 = vmatmul.mubr.bf16.gmra.mrb[0].mxu0 %v7667
        %v8118 = vpop.f32.mrb[0].mxu0
        %v8119 = vadd.f32 %v8046, %v8118
        %v8120 = vpop.f32.mrb[0].mxu0
        %v8121 = vadd.f32 %v8048, %v8120
        %v8122 = vpop.f32.mrb[0].mxu0
        %v8123 = vadd.f32 %v8050, %v8122
        %v8124 = vpop.f32.mrb[0].mxu0
        %v8125 = vadd.f32 %v8052, %v8124
        %8126 = vmatprep.mubr.bf16.mxu0 %v7674
        %8127 = vmatmul.mubr.bf16.gmra.mrb[0].mxu0 %v7673
        %v8128 = vpop.f32.mrb[0].mxu0
        %v8129 = vadd.f32 %v8056, %v8128
        %v8130 = vpop.f32.mrb[0].mxu0
        %v8131 = vadd.f32 %v8058, %v8130
        %v8132 = vpop.f32.mrb[0].mxu0
        %v8133 = vadd.f32 %v8060, %v8132
        %v8134 = vpop.f32.mrb[0].mxu0
        %v8135 = vadd.f32 %v8062, %v8134
        %8136 = vdwg.mxu0
        %v8137 = vld [vmem:[%s11] sm:$0xf]
        %v8138 = vld [vmem:[%s12] sm:$0xf]
        %v8139 = vadd.f32 %v7880, %v7882
        %v8140 = vadd.f32 %v8139, %v8099
        %v8141 = vadd.f32 %v8140, %v8101
        %8142 = vadd.xlane.f32.xlu0 %v8141
        %v8143 = vpop.xlane.xlu0 %8142
        %v8144 = vadd.f32 %v7884, %v7886
        %v8145 = vadd.f32 %v8144, %v8103
        %v8146 = vadd.f32 %v8145, %v8105
        %8147 = vadd.xlane.f32.xlu0 %v8146
        %v8148 = vpop.xlane.xlu0 %8147
        %v8149 = vadd.f32 %v7890, %v7892
        %v8150 = vadd.f32 %v8149, %v8109
        %v8151 = vadd.f32 %v8150, %v8111
        %8152 = vadd.xlane.f32.xlu0 %v8151
        %v8153 = vpop.xlane.xlu0 %8152
        %v8154 = vadd.f32 %v7894, %v7896
        %v8155 = vadd.f32 %v8154, %v8113
        %v8156 = vadd.f32 %v8155, %v8115
        %8157 = vadd.xlane.f32.xlu0 %v8156
        %v8158 = vpop.xlane.xlu0 %8157
        %v8159 = vadd.f32 %v7900, %v7902
        %v8160 = vadd.f32 %v8159, %v8119
        %v8161 = vadd.f32 %v8160, %v8121
        %8162 = vadd.xlane.f32.xlu0 %v8161
        %v8163 = vpop.xlane.xlu0 %8162
        %v8164 = vadd.f32 %v7904, %v7906
        %v8165 = vadd.f32 %v8164, %v8123
        %v8166 = vadd.f32 %v8165, %v8125
        %8167 = vadd.xlane.f32.xlu0 %v8166
        %v8168 = vpop.xlane.xlu0 %8167
        %v8169 = vadd.f32 %v7910, %v7912
        %v8170 = vadd.f32 %v8169, %v8129
        %v8171 = vadd.f32 %v8170, %v8131
        %8172 = vadd.xlane.f32.xlu0 %v8171
        %v8173 = vpop.xlane.xlu0 %8172
        %v8174 = vadd.f32 %v7914, %v7916
        %v8175 = vadd.f32 %v8174, %v8133
        %v8176 = vadd.f32 %v8175, %v8135
        %8177 = vadd.xlane.f32.xlu0 %v8176
        %v8178 = vpop.xlane.xlu0 %8177
        %v8179 = vmul.f32 %v7880, %v7880
        %v8180 = vmul.f32 %v7882, %v7882
        %v8181 = vmul.f32 %v8099, %v8099
        %v8182 = vmul.f32 %v8101, %v8101
        %v8183 = vmul.f32 %v7884, %v7884
        %v8184 = vmul.f32 %v7886, %v7886
        %v8185 = vmul.f32 %v8103, %v8103
        %v8186 = vmul.f32 %v8105, %v8105
        %v8187 = vmul.f32 %v7890, %v7890
        %v8188 = vmul.f32 %v7892, %v7892
        %v8189 = vmul.f32 %v8109, %v8109
        %v8190 = vmul.f32 %v8111, %v8111
        %v8191 = vmul.f32 %v7894, %v7894
        %v8192 = vmul.f32 %v7896, %v7896
        %v8193 = vmul.f32 %v8113, %v8113
        %v8194 = vmul.f32 %v8115, %v8115
        %v8195 = vmul.f32 %v7900, %v7900
        %v8196 = vmul.f32 %v7902, %v7902
        %v8197 = vmul.f32 %v8119, %v8119
        %v8198 = vmul.f32 %v8121, %v8121
        %v8199 = vmul.f32 %v7904, %v7904
        %v8200 = vmul.f32 %v7906, %v7906
        %v8201 = vmul.f32 %v8123, %v8123
        %v8202 = vmul.f32 %v8125, %v8125
        %v8203 = vmul.f32 %v7910, %v7910
        %v8204 = vmul.f32 %v7912, %v7912
        %v8205 = vmul.f32 %v8129, %v8129
        %v8206 = vmul.f32 %v8131, %v8131
        %v8207 = vmul.f32 %v7914, %v7914
        %v8208 = vmul.f32 %v7916, %v7916
        %v8209 = vmul.f32 %v8133, %v8133
        %v8210 = vmul.f32 %v8135, %v8135
        %v8211 = vadd.f32 %v8179, %v8180
        %v8212 = vadd.f32 %v8211, %v8181
        %v8213 = vadd.f32 %v8212, %v8182
        %8214 = vadd.xlane.f32.xlu0 %v8213
        %v8215 = vpop.xlane.xlu0 %8214
        %v8216 = vadd.f32 %v8183, %v8184
        %v8217 = vadd.f32 %v8216, %v8185
        %v8218 = vadd.f32 %v8217, %v8186
        %8219 = vadd.xlane.f32.xlu0 %v8218
        %v8220 = vpop.xlane.xlu0 %8219
        %v8221 = vadd.f32 %v8187, %v8188
        %v8222 = vadd.f32 %v8221, %v8189
        %v8223 = vadd.f32 %v8222, %v8190
        %8224 = vadd.xlane.f32.xlu0 %v8223
        %v8225 = vpop.xlane.xlu0 %8224
        %v8226 = vadd.f32 %v8191, %v8192
        %v8227 = vadd.f32 %v8226, %v8193
        %v8228 = vadd.f32 %v8227, %v8194
        %8229 = vadd.xlane.f32.xlu0 %v8228
        %v8230 = vpop.xlane.xlu0 %8229
        %v8231 = vadd.f32 %v8195, %v8196
        %v8232 = vadd.f32 %v8231, %v8197
        %v8233 = vadd.f32 %v8232, %v8198
        %8234 = vadd.xlane.f32.xlu0 %v8233
        %v8235 = vpop.xlane.xlu0 %8234
        %v8236 = vadd.f32 %v8199, %v8200
        %v8237 = vadd.f32 %v8236, %v8201
        %v8238 = vadd.f32 %v8237, %v8202
        %8239 = vadd.xlane.f32.xlu0 %v8238
        %v8240 = vpop.xlane.xlu0 %8239
        %v8241 = vadd.f32 %v8203, %v8204
        %v8242 = vadd.f32 %v8241, %v8205
        %v8243 = vadd.f32 %v8242, %v8206
        %8244 = vadd.xlane.f32.xlu0 %v8243
        %v8245 = vpop.xlane.xlu0 %8244
        %v8246 = vadd.f32 %v8207, %v8208
        %v8247 = vadd.f32 %v8246, %v8209
        %v8248 = vadd.f32 %v8247, %v8210
        %8249 = vadd.xlane.f32.xlu0 %v8248
        %v8250 = vpop.xlane.xlu0 %8249
        %v8251 = vmul.f32 %v8143, 0.001953125
        %v8252 = vmul.f32 %v8148, 0.001953125
        %v8253 = vmul.f32 %v8153, 0.001953125
        %v8254 = vmul.f32 %v8158, 0.001953125
        %v8255 = vmul.f32 %v8163, 0.001953125
        %v8256 = vmul.f32 %v8168, 0.001953125
        %v8257 = vmul.f32 %v8173, 0.001953125
        %v8258 = vmul.f32 %v8178, 0.001953125
        %v8259 = vmul.f32 %v8215, 0.001953125
        %v8260 = vmul.f32 %v8220, 0.001953125
        %v8261 = vmul.f32 %v8225, 0.001953125
        %v8262 = vmul.f32 %v8230, 0.001953125
        %v8263 = vmul.f32 %v8235, 0.001953125
        %v8264 = vmul.f32 %v8240, 0.001953125
        %v8265 = vmul.f32 %v8245, 0.001953125
        %v8266 = vmul.f32 %v8250, 0.001953125
        %v8267 = vmul.f32 %v8251, %v8251
        %v8268 = vmul.f32 %v8252, %v8252
        %v8269 = vmul.f32 %v8253, %v8253
        %v8270 = vmul.f32 %v8254, %v8254
        %v8271 = vmul.f32 %v8255, %v8255
        %v8272 = vmul.f32 %v8256, %v8256
        %v8273 = vmul.f32 %v8257, %v8257
        %v8274 = vmul.f32 %v8258, %v8258
        %v8275 = vsub.f32 %v8259, %v8267
        %v8276 = vsub.f32 %v8260, %v8268
        %v8277 = vsub.f32 %v8261, %v8269
        %v8278 = vsub.f32 %v8262, %v8270
        %v8279 = vsub.f32 %v8263, %v8271
        %v8280 = vsub.f32 %v8264, %v8272
        %v8281 = vsub.f32 %v8265, %v8273
        %v8282 = vsub.f32 %v8266, %v8274
        %v8283 = vadd.f32 %v8275, 1e-05
        %v8284 = vadd.f32 %v8276, 1e-05
        %v8285 = vadd.f32 %v8277, 1e-05
        %v8286 = vadd.f32 %v8278, 1e-05
        %v8287 = vadd.f32 %v8279, 1e-05
        %v8288 = vadd.f32 %v8280, 1e-05
        %v8289 = vadd.f32 %v8281, 1e-05
        %v8290 = vadd.f32 %v8282, 1e-05
        %v8291 = vrsqrt.pop %v8283
        %v8292 = vrsqrt.pop %v8284
        %v8293 = vrsqrt.pop %v8285
        %v8294 = vrsqrt.pop %v8286
        %v8295 = vrsqrt.pop %v8287
        %v8296 = vrsqrt.pop %v8288
        %v8297 = vrsqrt.pop %v8289
        %v8298 = vrsqrt.pop %v8290
        %v8299 = vsub.f32 %v7880, %v8251
        %v8300 = vsub.f32 %v7882, %v8251
        %v8301 = vsub.f32 %v8099, %v8251
        %v8302 = vsub.f32 %v8101, %v8251
        %v8303 = vsub.f32 %v7884, %v8252
        %v8304 = vsub.f32 %v7886, %v8252
        %v8305 = vsub.f32 %v8103, %v8252
        %v8306 = vsub.f32 %v8105, %v8252
        %v8307 = vsub.f32 %v7890, %v8253
        %v8308 = vsub.f32 %v7892, %v8253
        %v8309 = vsub.f32 %v8109, %v8253
        %v8310 = vsub.f32 %v8111, %v8253
        %v8311 = vsub.f32 %v7894, %v8254
        %v8312 = vsub.f32 %v7896, %v8254
        %v8313 = vsub.f32 %v8113, %v8254
        %v8314 = vsub.f32 %v8115, %v8254
        %v8315 = vsub.f32 %v7900, %v8255
        %v8316 = vsub.f32 %v7902, %v8255
        %v8317 = vsub.f32 %v8119, %v8255
        %v8318 = vsub.f32 %v8121, %v8255
        %v8319 = vsub.f32 %v7904, %v8256
        %v8320 = vsub.f32 %v7906, %v8256
        %v8321 = vsub.f32 %v8123, %v8256
        %v8322 = vsub.f32 %v8125, %v8256
        %v8323 = vsub.f32 %v7910, %v8257
        %v8324 = vsub.f32 %v7912, %v8257
        %v8325 = vsub.f32 %v8129, %v8257
        %v8326 = vsub.f32 %v8131, %v8257
        %v8327 = vsub.f32 %v7914, %v8258
        %v8328 = vsub.f32 %v7916, %v8258
        %v8329 = vsub.f32 %v8133, %v8258
        %v8330 = vsub.f32 %v8135, %v8258
        %v8331 = vmul.f32 %v8299, %v8291
        %v8332 = vmul.f32 %v8300, %v8291
        %v8333 = vmul.f32 %v8301, %v8291
        %v8334 = vmul.f32 %v8302, %v8291
        %v8335 = vmul.f32 %v8303, %v8292
        %v8336 = vmul.f32 %v8304, %v8292
        %v8337 = vmul.f32 %v8305, %v8292
        %v8338 = vmul.f32 %v8306, %v8292
        %v8339 = vmul.f32 %v8307, %v8293
        %v8340 = vmul.f32 %v8308, %v8293
        %v8341 = vmul.f32 %v8309, %v8293
        %v8342 = vmul.f32 %v8310, %v8293
        %v8343 = vmul.f32 %v8311, %v8294
        %v8344 = vmul.f32 %v8312, %v8294
        %v8345 = vmul.f32 %v8313, %v8294
        %v8346 = vmul.f32 %v8314, %v8294
        %v8347 = vmul.f32 %v8315, %v8295
        %v8348 = vmul.f32 %v8316, %v8295
        %v8349 = vmul.f32 %v8317, %v8295
        %v8350 = vmul.f32 %v8318, %v8295
        %v8351 = vmul.f32 %v8319, %v8296
        %v8352 = vmul.f32 %v8320, %v8296
        %v8353 = vmul.f32 %v8321, %v8296
        %v8354 = vmul.f32 %v8322, %v8296
        %v8355 = vmul.f32 %v8323, %v8297
        %v8356 = vmul.f32 %v8324, %v8297
        %v8357 = vmul.f32 %v8325, %v8297
        %v8358 = vmul.f32 %v8326, %v8297
        %v8359 = vmul.f32 %v8327, %v8298
        %v8360 = vmul.f32 %v8328, %v8298
        %v8361 = vmul.f32 %v8329, %v8298
        %v8362 = vmul.f32 %v8330, %v8298
        %v8364 = vlaneseq
        %v8365 = vshrl.u32 %v8364, 7
        %v8366 = vsub.s32 0, %v8365
        %v8367 = vrot.slane %v8137, %v8366
        %v8368 = vlaneseq
        %v8369 = vshrl.u32 %v8368, 7
        %v8370 = vsub.s32 1, %v8369
        %v8371 = vrot.slane %v8137, %v8370
        %v8372 = vlaneseq
        %v8373 = vshrl.u32 %v8372, 7
        %v8374 = vsub.s32 2, %v8373
        %v8375 = vrot.slane %v8137, %v8374
        %v8376 = vlaneseq
        %v8377 = vshrl.u32 %v8376, 7
        %v8378 = vsub.s32 3, %v8377
        %v8379 = vrot.slane %v8137, %v8378
        %v8384 = vmul.f32 %v8331, %v8367
        %v8385 = vmul.f32 %v8332, %v8371
        %v8386 = vmul.f32 %v8333, %v8375
        %v8387 = vmul.f32 %v8334, %v8379
        %v8388 = vmul.f32 %v8335, %v8367
        %v8389 = vmul.f32 %v8336, %v8371
        %v8390 = vmul.f32 %v8337, %v8375
        %v8391 = vmul.f32 %v8338, %v8379
        %v8392 = vmul.f32 %v8339, %v8367
        %v8393 = vmul.f32 %v8340, %v8371
        %v8394 = vmul.f32 %v8341, %v8375
        %v8395 = vmul.f32 %v8342, %v8379
        %v8396 = vmul.f32 %v8343, %v8367
        %v8397 = vmul.f32 %v8344, %v8371
        %v8398 = vmul.f32 %v8345, %v8375
        %v8399 = vmul.f32 %v8346, %v8379
        %v8400 = vmul.f32 %v8347, %v8367
        %v8401 = vmul.f32 %v8348, %v8371
        %v8402 = vmul.f32 %v8349, %v8375
        %v8403 = vmul.f32 %v8350, %v8379
        %v8404 = vmul.f32 %v8351, %v8367
        %v8405 = vmul.f32 %v8352, %v8371
        %v8406 = vmul.f32 %v8353, %v8375
        %v8407 = vmul.f32 %v8354, %v8379
        %v8408 = vmul.f32 %v8355, %v8367
        %v8409 = vmul.f32 %v8356, %v8371
        %v8410 = vmul.f32 %v8357, %v8375
        %v8411 = vmul.f32 %v8358, %v8379
        %v8412 = vmul.f32 %v8359, %v8367
        %v8413 = vmul.f32 %v8360, %v8371
        %v8414 = vmul.f32 %v8361, %v8375
        %v8415 = vmul.f32 %v8362, %v8379
        %v8417 = vlaneseq
        %v8418 = vshrl.u32 %v8417, 7
        %v8419 = vsub.s32 0, %v8418
        %v8420 = vrot.slane %v8138, %v8419
        %v8421 = vlaneseq
        %v8422 = vshrl.u32 %v8421, 7
        %v8423 = vsub.s32 1, %v8422
        %v8424 = vrot.slane %v8138, %v8423
        %v8425 = vlaneseq
        %v8426 = vshrl.u32 %v8425, 7
        %v8427 = vsub.s32 2, %v8426
        %v8428 = vrot.slane %v8138, %v8427
        %v8429 = vlaneseq
        %v8430 = vshrl.u32 %v8429, 7
        %v8431 = vsub.s32 3, %v8430
        %v8432 = vrot.slane %v8138, %v8431
        %v8437 = vadd.f32 %v8384, %v8420
        %v8438 = vadd.f32 %v8385, %v8424
        %v8439 = vadd.f32 %v8386, %v8428
        %v8440 = vadd.f32 %v8387, %v8432
        %v8441 = vadd.f32 %v8388, %v8420
        %v8442 = vadd.f32 %v8389, %v8424
        %v8443 = vadd.f32 %v8390, %v8428
        %v8444 = vadd.f32 %v8391, %v8432
        %v8445 = vadd.f32 %v8392, %v8420
        %v8446 = vadd.f32 %v8393, %v8424
        %v8447 = vadd.f32 %v8394, %v8428
        %v8448 = vadd.f32 %v8395, %v8432
        %v8449 = vadd.f32 %v8396, %v8420
        %v8450 = vadd.f32 %v8397, %v8424
        %v8451 = vadd.f32 %v8398, %v8428
        %v8452 = vadd.f32 %v8399, %v8432
        %v8453 = vadd.f32 %v8400, %v8420
        %v8454 = vadd.f32 %v8401, %v8424
        %v8455 = vadd.f32 %v8402, %v8428
        %v8456 = vadd.f32 %v8403, %v8432
        %v8457 = vadd.f32 %v8404, %v8420
        %v8458 = vadd.f32 %v8405, %v8424
        %v8459 = vadd.f32 %v8406, %v8428
        %v8460 = vadd.f32 %v8407, %v8432
        %v8461 = vadd.f32 %v8408, %v8420
        %v8462 = vadd.f32 %v8409, %v8424
        %v8463 = vadd.f32 %v8410, %v8428
        %v8464 = vadd.f32 %v8411, %v8432
        %v8465 = vadd.f32 %v8412, %v8420
        %v8466 = vadd.f32 %v8413, %v8424
        %v8467 = vadd.f32 %v8414, %v8428
        %v8468 = vadd.f32 %v8415, %v8432
        %v8469 = vadd.f32 %v524, %v8437
        %v8470 = vadd.f32 %v525, %v8438
        %v8471 = vadd.f32 %v526, %v8439
        %v8472 = vadd.f32 %v527, %v8440
        %v8473 = vadd.f32 %v528, %v8441
        %v8474 = vadd.f32 %v529, %v8442
        %v8475 = vadd.f32 %v530, %v8443
        %v8476 = vadd.f32 %v531, %v8444
        %v8477 = vadd.f32 %v532, %v8445
        %v8478 = vadd.f32 %v533, %v8446
        %v8479 = vadd.f32 %v534, %v8447
        %v8480 = vadd.f32 %v535, %v8448
        %v8481 = vadd.f32 %v536, %v8449
        %v8482 = vadd.f32 %v537, %v8450
        %v8483 = vadd.f32 %v538, %v8451
        %v8484 = vadd.f32 %v539, %v8452
        %v8485 = vadd.f32 %v540, %v8453
        %v8486 = vadd.f32 %v541, %v8454
        %v8487 = vadd.f32 %v542, %v8455
        %v8488 = vadd.f32 %v543, %v8456
        %v8489 = vadd.f32 %v544, %v8457
        %v8490 = vadd.f32 %v545, %v8458
        %v8491 = vadd.f32 %v546, %v8459
        %v8492 = vadd.f32 %v547, %v8460
        %v8493 = vadd.f32 %v548, %v8461
        %v8494 = vadd.f32 %v549, %v8462
        %v8495 = vadd.f32 %v550, %v8463
        %v8496 = vadd.f32 %v551, %v8464
        %v8497 = vadd.f32 %v552, %v8465
        %v8498 = vadd.f32 %v553, %v8466
        %v8499 = vadd.f32 %v554, %v8467
        %v8500 = vadd.f32 %v555, %v8468
        %8501 = vst [vmem:[%s520] sm:$0xff] %v8469
        %8502 = vst [vmem:[%s520 + $0x8] sm:$0xff] %v8470
        %8503 = vst [vmem:[%s520 + $0x10] sm:$0xff] %v8471
        %8504 = vst [vmem:[%s520 + $0x18] sm:$0xff] %v8472
        %8505 = vst [vmem:[%s520 + $0x20] sm:$0xff] %v8473
        %8506 = vst [vmem:[%s520 + $0x28] sm:$0xff] %v8474
        %8507 = vst [vmem:[%s520 + $0x30] sm:$0xff] %v8475
        %8508 = vst [vmem:[%s520 + $0x38] sm:$0xff] %v8476
        %8509 = vst [vmem:[%s520 + $0x40] sm:$0xff] %v8477
        %8510 = vst [vmem:[%s520 + $0x48] sm:$0xff] %v8478
        %8511 = vst [vmem:[%s520 + $0x50] sm:$0xff] %v8479
        %8512 = vst [vmem:[%s520 + $0x58] sm:$0xff] %v8480
        %8513 = vst [vmem:[%s520 + $0x60] sm:$0xff] %v8481
        %8514 = vst [vmem:[%s520 + $0x68] sm:$0xff] %v8482
        %8515 = vst [vmem:[%s520 + $0x70] sm:$0xff] %v8483
        %8516 = vst [vmem:[%s520 + $0x78] sm:$0xff] %v8484
        %8517 = vst [vmem:[%s520 + $0x80] sm:$0xff] %v8485
        %8518 = vst [vmem:[%s520 + $0x88] sm:$0xff] %v8486
        %8519 = vst [vmem:[%s520 + $0x90] sm:$0xff] %v8487
        %8520 = vst [vmem:[%s520 + $0x98] sm:$0xff] %v8488
        %8521 = vst [vmem:[%s520 + $0xa0] sm:$0xff] %v8489
        %8522 = vst [vmem:[%s520 + $0xa8] sm:$0xff] %v8490
        %8523 = vst [vmem:[%s520 + $0xb0] sm:$0xff] %v8491
        %8524 = vst [vmem:[%s520 + $0xb8] sm:$0xff] %v8492
        %8525 = vst [vmem:[%s520 + $0xc0] sm:$0xff] %v8493
        %8526 = vst [vmem:[%s520 + $0xc8] sm:$0xff] %v8494
        %8527 = vst [vmem:[%s520 + $0xd0] sm:$0xff] %v8495
        %8528 = vst [vmem:[%s520 + $0xd8] sm:$0xff] %v8496
        %8529 = vst [vmem:[%s520 + $0xe0] sm:$0xff] %v8497
        %8530 = vst [vmem:[%s520 + $0xe8] sm:$0xff] %v8498
        %8531 = vst [vmem:[%s520 + $0xf0] sm:$0xff] %v8499
        %8532 = vst [vmem:[%s520 + $0xf8] sm:$0xff] %v8500
        %s8533 = sand.u32 %s313, 1
        %s8534 = scalar_lea.sflag [#allocation4], %s8533
        %s8535 = sand.u32 %s313, 1
        %s8536 = smul.addr %s8535, 256
        %s8537 = scalar_lea.vmem [#allocation3], %s8536
        // Predicated region
        $region96: #{tpu_custom_call.1} parent=90 // pred_check
          %p8538 = pneg %p323
        $region97: #{tpu_custom_call.1} parent=90 // pred_check_branch
          %8540 = sbr.rel (%p8538) target = $region99
        $region98: #{tpu_custom_call.1} parent=90 // pred_region
          %s8541 = smul.u32 4, %s27
          %s8543 = ssub.s32 4096, 4096
          %8544 = vsyncadd %s8534, %s8543
          %s8545 = smul.addr %s8541, 128
          %s8546 = scalar_lea.hbm %s13, %s8545
          %s8547 = sshll.u32 %s8537, 4
          %s8548 = int_to_ptr.vmem [resolvable:$true] %s8547
          %8553 = dma.vmem_to_hbm [thread:$0]  %s8548, 4096, %s8546, %s8534, 512, 1024, 32
        $region99: #{tpu_custom_call.1} parent=90 // pred_fallthru
          _
      $region91: #{tpu_custom_call.1} parent=5 // pred_fallthru
        _
      %p8554 = scmp.le.s32.totalorder 2, %s22
      // Predicated region
      $region100: #{tpu_custom_call.1} parent=5 // pred_check
        %p8555 = pneg %p8554
      $region101: #{tpu_custom_call.1} parent=5 // pred_check_branch
        %8557 = sbr.rel (%p8555) target = $region103
      $region102: #{tpu_custom_call.1} parent=5 // pred_region
        %s8558 = ssub.s32 %s22, 2
        // Predicated region
        $region104: #{tpu_custom_call.1} parent=102 // pred_check
          %p8559 = pneg %p329
        $region105: #{tpu_custom_call.1} parent=102 // pred_check_branch
          %8561 = sbr.rel (%p8559) target = $region107
        $region106: #{tpu_custom_call.1} parent=102 // pred_region
          %s8562 = sand.u32 %s314, 1
          %s8563 = scalar_lea.sflag [#allocation4], %s8562
          %s8564 = sand.u32 %s314, 1
          %s8565 = smul.addr %s8564, 256
          %s8566 = scalar_lea.vmem [#allocation3], %s8565
          %8567 = dma.done %s8563, 4096
        $region107: #{tpu_custom_call.1} parent=102 // pred_fallthru
          _
      $region103: #{tpu_custom_call.1} parent=5 // pred_fallthru
        _
    $region6: #{tpu_custom_call.1} parent=1 // loop_footer
      %s26 = sadd.s32 1, %s22
    $region7: #{tpu_custom_call.1} parent=1 // loop_footer_branch
      %21 = sbr.rel target = $region3
    $region8: #{tpu_custom_call.1} parent=1 // loop_exit
      _
    %8568 = vsyncpa [#allocation4], 1
    %s8569 = scalar_lea.sflag [#allocation4], 1
    %8570 = vsyncpa %s8569, 1

</llo_original>
